<compile_context>
chip_gen: v7x
topology: tpu7x:2x2x1
jax: 0.10.0
libtpu: 0.0.40
codegen_flags: <defaults>
</compile_context>

<pallas_src>
import numpy as np
import jax
import jax.numpy as jnp
from jax.experimental import pallas as pl
from jax.experimental.pallas import tpu as pltpu


# ----------------------------------------------------------------------------
# Stand-in for the PyTorch `config` module referenced by the original code.
# ----------------------------------------------------------------------------
class config:
    fc_input = 4                          # spatial size after the FC layer
    kernel_size = 5
    padding = 2
    stride = 2
    maria_decoder_channels = [16, 8, 8, 3]
    output_pad_dec = [True, True, True]   # output_padding=1 for every block


# ----------------------------------------------------------------------------
# Host-side weight preprocessing (runs once, outside the kernel)
# ----------------------------------------------------------------------------
def _fc_col_perm(size, fc_in):
    # new column p = h*(fc_in*size) + w*size + c  <-  old feature c*fc_in^2 + h*fc_in + w
    idx = np.empty((fc_in * fc_in * size,), np.int32)
    p = 0
    for h in range(fc_in):
        for w in range(fc_in):
            for c in range(size):
                idx[p] = c * fc_in * fc_in + h * fc_in + w
                p += 1
    return idx


def _deconv_row_panels(wt, win):
    """Banded RHS for one stride-2/pad-2/k-5/output_padding-1 ConvTranspose2d.

    wt: (Cin, Cout, 5, 5) PyTorch layout.  Returns (2, 3, Win*Cin, 2*Win*Cout):
      out[b, 2i+ph, ow, co] =
          sum_{dh,iw,ci} xpad[b, i+dh, iw, ci] * R[ph, dh, iw*Cin+ci, ow*Cout+co]
    with xpad = input padded by one zero row on top/bottom (H only).
    """
    cin, cout, K, _ = wt.shape
    wout = 2 * win
    r = np.zeros((2, 3, win * cin, wout * cout), np.float32)
    for ph in range(2):
        for dh in range(3):
            kh = ph + 4 - 2 * dh
            if not (0 <= kh < K):
                continue                     # (ph=1, dh=0) never contributes
            for ow in range(wout):
                for iw in range(win):
                    kw = ow + 2 - 2 * iw
                    if 0 <= kw < K:
                        r[ph, dh,
                          iw * cin:(iw + 1) * cin,
                          ow * cout:(ow + 1) * cout] = wt[:, :, kh, kw]
    return r


def _conv_row_panels(w, win):
    """Banded RHS for the final 5x5 / stride-1 / pad-2 Conv2d.

    w: (Cout, Cin, 5, 5).  Returns (5, Win*Cin, Cout*Win); output lanes ordered
    (co major, ow minor) so the NCHW channel planes are contiguous lane slices.
    """
    cout, cin, K, _ = w.shape
    r = np.zeros((K, win * cin, cout * win), np.float32)
    for dh in range(K):
        for ow in range(win):
            for kw in range(K):
                iw = ow + kw - 2
                if 0 <= iw < win:
                    r[dh, iw * cin:(iw + 1) * cin, ow::win] = w[:, :, dh, kw].T
    return r


def prepare_params(params, size):
    fi = config.fc_input
    ch = config.maria_decoder_channels
    assert config.kernel_size == 5 and config.stride == 2 and config.padding == 2
    # TODO(synk): output_padding=0 blocks are not needed by this config.
    assert all(config.output_pad_dec)
    for c in ch[:3]:
        assert c & (c - 1) == 0, "BN channel counts assumed power-of-two"

    idx = _fc_col_perm(size, fi)
    fc_w = np.asarray(params["fc_w"])
    prep = {
        "fc_w": jnp.asarray(fc_w[:, idx]),
        "fc_g": jnp.asarray(np.asarray(params["fc_bn_g"])[idx]).reshape(1, -1),
        "fc_b": jnp.asarray(np.asarray(params["fc_bn_b"])[idx]).reshape(1, -1),
    }
    win = fi
    for i in range(3):
        prep[f"wd{i}"] = jnp.asarray(
            _deconv_row_panels(np.asarray(params[f"block{i}_w"]), win))
        prep[f"g{i}"] = jnp.asarray(params[f"block{i}_bn_g"]).reshape(1, -1)
        prep[f"b{i}"] = jnp.asarray(params[f"block{i}_bn_b"]).reshape(1, -1)
        win *= 2
    prep["wf"] = jnp.asarray(_conv_row_panels(np.asarray(params["out_w"]), win))
    prep["fbias"] = jnp.asarray(
        np.repeat(np.asarray(params["out_b"]), win)).reshape(1, -1)
    return prep


# ----------------------------------------------------------------------------
# The single fused decoder kernel
# ----------------------------------------------------------------------------
def _decoder_kernel(z_ref, fcw_ref, fcg_ref, fcb_ref,
                    wd0_ref, g0_ref, b0_ref,
                    wd1_ref, g1_ref, b1_ref,
                    wd2_ref, g2_ref, b2_ref,
                    wf_ref, fb_ref,
                    out_ref, xp0_ref):
    f32 = jnp.float32
    eps = 1e-5
    B = z_ref.shape[0]
    fi = config.fc_input

    # ---------------- FC -> BatchNorm1d (batch stats) -> ReLU ----------------
    a = jnp.dot(z_ref[...], fcw_ref[...], preferred_element_type=f32)   # (B, fi*fi*size)
    mu = jnp.mean(a, axis=0, keepdims=True)
    var = jnp.mean((a - mu) * (a - mu), axis=0, keepdims=True)          # biased
    a = jnp.maximum((a - mu) * jax.lax.rsqrt(var + eps) * fcg_ref[...]
                    + fcb_ref[...], 0.0)

    # Scatter the (h, w, c)-ordered FC features into the stage-0 padded image
    # scratch xp0[b, 1+h, w*C+c]; rows 0 and fi+1 stay zero (H padding).
    wc0 = a.shape[1] // fi
    xp0_ref[...] = jnp.zeros(xp0_ref.shape, f32)
    for b in range(B):
        for h in range(fi):
            xp0_ref[b, 1 + h:2 + h, :] = a[b:b + 1, h * wc0:(h + 1) * wc0]

    # --------------- one phase-decomposed ConvTranspose2d block --------------
    def deconv_block(load_lhs, wd_ref, g_ref, b_ref, h_in, pad_next):
        c_out = g_ref.shape[1]
        wc_out = wd_ref.shape[3]            # Wout*Cout, lanes ordered (ow, co)
        w_out = wc_out // c_out
        h_out = 2 * h_in

        # phase-domain accumulation: acc[b][ph] holds output rows 2i+ph
        acc = []
        for b in range(B):
            row = []
            for ph in range(2):
                s = jnp.zeros((h_in, wc_out), f32)
                for dh in range(3):
                    if ph == 1 and dh == 0:
                        continue            # kernel row index 5 -> no contribution
                    s = s + jnp.dot(load_lhs(b, dh), wd_ref[ph, dh],
                                    preferred_element_type=f32)
                row.append(s)
            acc.append(row)

        # BatchNorm2d statistics per channel (training mode, biased variance)
        tot = jnp.zeros((1, wc_out), f32)
        tot2 = jnp.zeros((1, wc_out), f32)
        for b in range(B):
            for ph in range(2):
                tot = tot + jnp.sum(acc[b][ph], axis=0, keepdims=True)
                tot2 = tot2 + jnp.sum(acc[b][ph] * acc[b][ph], axis=0,
                                      keepdims=True)
        # 0/1 selector summing W positions per channel (c_out is a power of 2)
        lane_c = jax.lax.broadcasted_iota(jnp.int32, (wc_out, c_out), 0) & (c_out - 1)
        chan = jax.lax.broadcasted_iota(jnp.int32, (wc_out, c_out), 1)
        sel = (lane_c == chan).astype(f32)                      # (WC, C)
        lane_ct = jax.lax.broadcasted_iota(jnp.int32, (c_out, wc_out), 1) & (c_out - 1)
        chan_t = jax.lax.broadcasted_iota(jnp.int32, (c_out, wc_out), 0)
        sel_t = (lane_ct == chan_t).astype(f32)                 # (C, WC)

        n = float(B * h_out * w_out)
        mean_c = jnp.dot(tot, sel, preferred_element_type=f32) / n
        var_c = jnp.dot(tot2, sel, preferred_element_type=f32) / n - mean_c * mean_c
        scale_c = g_ref[...] * jax.lax.rsqrt(var_c + eps)
        shift_c = b_ref[...] - mean_c * scale_c
        scale_l = jnp.dot(scale_c, sel_t, preferred_element_type=f32)   # (1, WC)
        shift_l = jnp.dot(shift_c, sel_t, preferred_element_type=f32)

        # BN + ReLU in the phase domain, then interleave the two H phases and
        # add `pad_next` zero rows on each side via a tiny 0/1 matmul.
        hp = h_out + 2 * pad_next
        r_i = jax.lax.broadcasted_iota(jnp.int32, (hp, h_in), 0)
        c_i = jax.lax.broadcasted_iota(jnp.int32, (hp, h_in), 1)
        outs = []
        for b in range(B):
            xb = jnp.zeros((hp, wc_out), f32)
            for ph in range(2):
                y = jnp.maximum(acc[b][ph] * scale_l + shift_l, 0.0)
                perm = (r_i == 2 * c_i + ph + pad_next).astype(f32)
                xb = xb + jnp.dot(perm, y, preferred_element_type=f32)
            outs.append(xb)
        return outs

    h0 = fi
    x1 = deconv_block(lambda b, dh: xp0_ref[b, dh:dh + h0, :],
                      wd0_ref, g0_ref, b0_ref, h_in=h0, pad_next=1)
    h1 = 2 * h0
    x2 = deconv_block(lambda b, dh: x1[b][dh:dh + h1, :],
                      wd1_ref, g1_ref, b1_ref, h_in=h1, pad_next=1)
    h2 = 2 * h1
    x3 = deconv_block(lambda b, dh: x2[b][dh:dh + h2, :],
                      wd2_ref, g2_ref, b2_ref, h_in=h2, pad_next=2)

    # ---------------- final Conv2d(k=5, s=1, p=2) + bias + tanh --------------
    h3 = 2 * h2                              # 32
    c_f = out_ref.shape[1]                   # 3
    for b in range(B):
        s = jnp.zeros((h3, c_f * h3), f32)
        for dh in range(5):
            s = s + jnp.dot(x3[b][dh:dh + h3, :], wf_ref[dh],
                            preferred_element_type=f32)
        y = jnp.tanh(s + fb_ref[...])
        for c in range(c_f):                 # lanes are (co major, ow minor)
            out_ref[b, c, :, :] = y[:, c * h3:(c + 1) * h3]


def decoder_forward(prep, z):
    B = z.shape[0]
    fi = config.fc_input
    size = prep["fc_w"].shape[1] // (fi * fi)
    out_hw = fi * 8                          # 4 -> 8 -> 16 -> 32
    vspec = pl.BlockSpec(memory_space=pltpu.MemorySpace.VMEM)
    fn = pl.pallas_call(
        _decoder_kernel,
        out_shape=jax.ShapeDtypeStruct(
            (B, config.maria_decoder_channels[3], out_hw, out_hw), jnp.float32),
        in_specs=[vspec] * 15,
        out_specs=vspec,
        scratch_shapes=[pltpu.VMEM((B, fi + 2, fi * size), jnp.float32)],
    )
    return fn(z, prep["fc_w"], prep["fc_g"], prep["fc_b"],
              prep["wd0"], prep["g0"], prep["b0"],
              prep["wd1"], prep["g1"], prep["b1"],
              prep["wd2"], prep["g2"], prep["b2"],
              prep["wf"], prep["fbias"])


# ----------------------------------------------------------------------------
# Deterministic synthetic parameters (PyTorch layout; no checkpoint loading)
# ----------------------------------------------------------------------------
def init_params(key, z_size, size):
    ch = config.maria_decoder_channels
    K = config.kernel_size
    F = config.fc_input * config.fc_input * size
    keys = jax.random.split(key, 16)
    p = {}
    p["fc_w"] = 0.05 * jax.random.normal(keys[0], (z_size, F), jnp.float32)
    p["fc_bn_g"] = 1.0 + 0.1 * jax.random.normal(keys[1], (F,), jnp.float32)
    p["fc_bn_b"] = 0.1 * jax.random.normal(keys[2], (F,), jnp.float32)
    c_in = size
    for i in range(3):
        c_out = ch[i]
        p[f"block{i}_w"] = 0.05 * jax.random.normal(
            keys[3 + 3 * i], (c_in, c_out, K, K), jnp.float32)
        p[f"block{i}_bn_g"] = 1.0 + 0.1 * jax.random.normal(
            keys[4 + 3 * i], (c_out,), jnp.float32)
        p[f"block{i}_bn_b"] = 0.1 * jax.random.normal(
            keys[5 + 3 * i], (c_out,), jnp.float32)
        c_in = c_out
    p["out_w"] = 0.05 * jax.random.normal(keys[12], (ch[3], c_in, K, K), jnp.float32)
    p["out_b"] = 0.1 * jax.random.normal(keys[13], (ch[3],), jnp.float32)
    return p


# ----------------------------------------------------------------------------
# Pure-XLA reference (independent formulation: dilated conv + flipped weights)
# ----------------------------------------------------------------------------
def _reference_decoder(params, z, size):
    hi = jax.lax.Precision.HIGHEST
    fi = config.fc_input
    eps = 1e-5
    h = jnp.dot(z, params["fc_w"], precision=hi)
    mu = h.mean(0, keepdims=True)
    var = ((h - mu) ** 2).mean(0, keepdims=True)
    h = jax.nn.relu((h - mu) / jnp.sqrt(var + eps) * params["fc_bn_g"]
                    + params["fc_bn_b"])
    x = h.reshape(h.shape[0], size, fi, fi)
    K, p, s = config.kernel_size, config.padding, config.stride
    for i in range(3):
        wt = params[f"block{i}_w"]
        wf = jnp.transpose(wt, (1, 0, 2, 3))[:, :, ::-1, ::-1]
        lo, hi_pad = K - 1 - p, K - 1 - p + 1
        x = jax.lax.conv_general_dilated(
            x, wf, window_strides=(1, 1), padding=[(lo, hi_pad), (lo, hi_pad)],
            lhs_dilation=(s, s), rhs_dilation=(1, 1),
            dimension_numbers=("NCHW", "OIHW", "NCHW"), precision=hi)
        mu = x.mean(axis=(0, 2, 3), keepdims=True)
        var = ((x - mu) ** 2).mean(axis=(0, 2, 3), keepdims=True)
        g = params[f"block{i}_bn_g"].reshape(1, -1, 1, 1)
        b = params[f"block{i}_bn_b"].reshape(1, -1, 1, 1)
        x = jax.nn.relu((x - mu) / jnp.sqrt(var + eps) * g + b)
    x = jax.lax.conv_general_dilated(
        x, params["out_w"], window_strides=(1, 1), padding=[(2, 2), (2, 2)],
        dimension_numbers=("NCHW", "OIHW", "NCHW"), precision=hi)
    return jnp.tanh(x + params["out_b"].reshape(1, -1, 1, 1))


if __name__ == "__main__":
    # TODO(synk): BatchNorm running-stat updates (momentum=0.9) are a training
    # side effect and are not reproduced; only the forward output is computed.
    key = jax.random.PRNGKey(0)
    z_size, size, batch = 32, 16, 2
    pkey, zkey = jax.random.split(key)
    params = init_params(pkey, z_size, size)
    z = jax.random.normal(zkey, (batch, z_size), jnp.float32)

    prep = prepare_params(params, size)
    out = jax.block_until_ready(decoder_forward(prep, z))

    expected = (batch, config.maria_decoder_channels[3],
                config.fc_input * 8, config.fc_input * 8)  # (2, 3, 32, 32)
    assert out.shape == expected, (out.shape, expected)
    assert bool(jnp.all(jnp.isfinite(out)))

    ref = jax.block_until_ready(_reference_decoder(params, z, size))
    max_err = float(jnp.max(jnp.abs(out - ref)))
    assert max_err < 5e-2, max_err

    print("KERNEL_OK")
</pallas_src>

<mosaic_0001>
module attributes {stable_mosaic.version = 11 : i64} {
  func.func @_decoder_kernel(%arg0: memref<2x32xf32, #tpu.memory_space<vmem>>, %arg1: memref<32x256xf32, #tpu.memory_space<vmem>>, %arg2: memref<1x256xf32, #tpu.memory_space<vmem>>, %arg3: memref<1x256xf32, #tpu.memory_space<vmem>>, %arg4: memref<2x3x64x128xf32, #tpu.memory_space<vmem>>, %arg5: memref<1x16xf32, #tpu.memory_space<vmem>>, %arg6: memref<1x16xf32, #tpu.memory_space<vmem>>, %arg7: memref<2x3x128x128xf32, #tpu.memory_space<vmem>>, %arg8: memref<1x8xf32, #tpu.memory_space<vmem>>, %arg9: memref<1x8xf32, #tpu.memory_space<vmem>>, %arg10: memref<2x3x128x256xf32, #tpu.memory_space<vmem>>, %arg11: memref<1x8xf32, #tpu.memory_space<vmem>>, %arg12: memref<1x8xf32, #tpu.memory_space<vmem>>, %arg13: memref<5x256x96xf32, #tpu.memory_space<vmem>>, %arg14: memref<1x96xf32, #tpu.memory_space<vmem>>, %arg15: memref<2x3x32x32xf32, #tpu.memory_space<vmem>>, %arg16: memref<2x6x64xf32, #tpu.memory_space<vmem>>) attributes {dimension_semantics = [], scalar_prefetch = 0 : i64, scratch_operands = 1 : i64, tpu.core_type = #tpu.core_type<tc>} {
    %c0 = arith.constant 0 : index
    %c0_0 = arith.constant 0 : index
    %0 = vector.load %arg0[%c0, %c0_0] : memref<2x32xf32, #tpu.memory_space<vmem>>, vector<2x32xf32>
    %c0_1 = arith.constant 0 : index
    %c0_2 = arith.constant 0 : index
    %1 = vector.load %arg1[%c0_1, %c0_2] : memref<32x256xf32, #tpu.memory_space<vmem>>, vector<32x256xf32>
    %cst = arith.constant dense<0.000000e+00> : vector<2x256xf32>
    %2 = tpu.matmul %0, %1, %cst {dimension_numbers = #tpu.dot_dimension_numbers<[1], [0], [0], [1], [0, 0, 1, 1], [], []>} : vector<2x32xf32>, vector<32x256xf32>, vector<2x256xf32> -> vector<2x256xf32>
    %cst_3 = arith.constant dense<0.000000e+00> : vector<256xf32>
    %3 = vector.multi_reduction <add>, %2, %cst_3 [0] : vector<2x256xf32> to vector<256xf32>
    %4 = vector.shape_cast %3 : vector<256xf32> to vector<1x256xf32>
    %cst_4 = arith.constant 2.000000e+00 : f32
    %5 = vector.broadcast %cst_4 : f32 to vector<1x256xf32>
    %6 = arith.divf %4, %5 : vector<1x256xf32>
    %7 = vector.broadcast %6 : vector<1x256xf32> to vector<2x256xf32>
    %8 = arith.subf %2, %7 : vector<2x256xf32>
    %9 = vector.broadcast %6 : vector<1x256xf32> to vector<2x256xf32>
    %10 = arith.subf %2, %9 : vector<2x256xf32>
    %11 = arith.mulf %8, %10 : vector<2x256xf32>
    %cst_5 = arith.constant dense<0.000000e+00> : vector<256xf32>
    %12 = vector.multi_reduction <add>, %11, %cst_5 [0] : vector<2x256xf32> to vector<256xf32>
    %13 = vector.shape_cast %12 : vector<256xf32> to vector<1x256xf32>
    %cst_6 = arith.constant 2.000000e+00 : f32
    %14 = vector.broadcast %cst_6 : f32 to vector<1x256xf32>
    %15 = arith.divf %13, %14 : vector<1x256xf32>
    %16 = vector.broadcast %6 : vector<1x256xf32> to vector<2x256xf32>
    %17 = arith.subf %2, %16 : vector<2x256xf32>
    %cst_7 = arith.constant 9.99999974E-6 : f32
    %18 = vector.broadcast %cst_7 : f32 to vector<1x256xf32>
    %19 = arith.addf %15, %18 : vector<1x256xf32>
    %20 = math.rsqrt %19 : vector<1x256xf32>
    %21 = vector.broadcast %20 : vector<1x256xf32> to vector<2x256xf32>
    %22 = arith.mulf %17, %21 : vector<2x256xf32>
    %c0_8 = arith.constant 0 : index
    %c0_9 = arith.constant 0 : index
    %23 = vector.load %arg2[%c0_8, %c0_9] : memref<1x256xf32, #tpu.memory_space<vmem>>, vector<1x256xf32>
    %24 = vector.broadcast %23 : vector<1x256xf32> to vector<2x256xf32>
    %25 = arith.mulf %22, %24 : vector<2x256xf32>
    %c0_10 = arith.constant 0 : index
    %c0_11 = arith.constant 0 : index
    %26 = vector.load %arg3[%c0_10, %c0_11] : memref<1x256xf32, #tpu.memory_space<vmem>>, vector<1x256xf32>
    %27 = vector.broadcast %26 : vector<1x256xf32> to vector<2x256xf32>
    %28 = arith.addf %25, %27 : vector<2x256xf32>
    %cst_12 = arith.constant 0.000000e+00 : f32
    %29 = vector.broadcast %cst_12 : f32 to vector<2x256xf32>
    %30 = arith.maximumf %28, %29 : vector<2x256xf32>
    %cst_13 = arith.constant 0.000000e+00 : f32
    %31 = vector.broadcast %cst_13 : f32 to vector<2x6x64xf32>
    %c0_14 = arith.constant 0 : index
    %c0_15 = arith.constant 0 : index
    %c0_16 = arith.constant 0 : index
    %32 = vector.load %arg16[%c0_14, %c0_15, %c0_16] : memref<2x6x64xf32, #tpu.memory_space<vmem>>, vector<2x6x64xf32>
    tpu.vector_store %arg16[%c0_14, %c0_15, %c0_16], %31 {strides = array<i32>} : memref<2x6x64xf32, #tpu.memory_space<vmem>>, vector<2x6x64xf32>,
    %33 = vector.extract_strided_slice %30 {offsets = [0, 0], sizes = [1, 64], strides = [1, 1]} : vector<2x256xf32> to vector<1x64xf32>
    %c0_17 = arith.constant 0 : index
    %c1 = arith.constant 1 : index
    %c0_18 = arith.constant 0 : index
    %34 = vector.load %arg16[%c0_17, %c1, %c0_18] : memref<2x6x64xf32, #tpu.memory_space<vmem>>, vector<1x1x64xf32>
    %35 = vector.shape_cast %34 : vector<1x1x64xf32> to vector<1x64xf32>
    %36 = vector.shape_cast %33 : vector<1x64xf32> to vector<1x1x64xf32>
    tpu.vector_store %arg16[%c0_17, %c1, %c0_18], %36 {strides = array<i32>} : memref<2x6x64xf32, #tpu.memory_space<vmem>>, vector<1x1x64xf32>,
    %37 = vector.extract_strided_slice %30 {offsets = [0, 64], sizes = [1, 64], strides = [1, 1]} : vector<2x256xf32> to vector<1x64xf32>
    %c0_19 = arith.constant 0 : index
    %c2 = arith.constant 2 : index
    %c0_20 = arith.constant 0 : index
    %38 = vector.load %arg16[%c0_19, %c2, %c0_20] : memref<2x6x64xf32, #tpu.memory_space<vmem>>, vector<1x1x64xf32>
    %39 = vector.shape_cast %38 : vector<1x1x64xf32> to vector<1x64xf32>
    %40 = vector.shape_cast %37 : vector<1x64xf32> to vector<1x1x64xf32>
    tpu.vector_store %arg16[%c0_19, %c2, %c0_20], %40 {strides = array<i32>} : memref<2x6x64xf32, #tpu.memory_space<vmem>>, vector<1x1x64xf32>,
    %41 = vector.extract_strided_slice %30 {offsets = [0, 128], sizes = [1, 64], strides = [1, 1]} : vector<2x256xf32> to vector<1x64xf32>
    %c0_21 = arith.constant 0 : index
    %c3 = arith.constant 3 : index
    %c0_22 = arith.constant 0 : index
    %42 = vector.load %arg16[%c0_21, %c3, %c0_22] : memref<2x6x64xf32, #tpu.memory_space<vmem>>, vector<1x1x64xf32>
    %43 = vector.shape_cast %42 : vector<1x1x64xf32> to vector<1x64xf32>
    %44 = vector.shape_cast %41 : vector<1x64xf32> to vector<1x1x64xf32>
    tpu.vector_store %arg16[%c0_21, %c3, %c0_22], %44 {strides = array<i32>} : memref<2x6x64xf32, #tpu.memory_space<vmem>>, vector<1x1x64xf32>,
    %45 = vector.extract_strided_slice %30 {offsets = [0, 192], sizes = [1, 64], strides = [1, 1]} : vector<2x256xf32> to vector<1x64xf32>
    %c0_23 = arith.constant 0 : index
    %c4 = arith.constant 4 : index
    %c0_24 = arith.constant 0 : index
    %46 = vector.load %arg16[%c0_23, %c4, %c0_24] : memref<2x6x64xf32, #tpu.memory_space<vmem>>, vector<1x1x64xf32>
    %47 = vector.shape_cast %46 : vector<1x1x64xf32> to vector<1x64xf32>
    %48 = vector.shape_cast %45 : vector<1x64xf32> to vector<1x1x64xf32>
    tpu.vector_store %arg16[%c0_23, %c4, %c0_24], %48 {strides = array<i32>} : memref<2x6x64xf32, #tpu.memory_space<vmem>>, vector<1x1x64xf32>,
    %49 = vector.extract_strided_slice %30 {offsets = [1, 0], sizes = [1, 64], strides = [1, 1]} : vector<2x256xf32> to vector<1x64xf32>
    %c1_25 = arith.constant 1 : index
    %c1_26 = arith.constant 1 : index
    %c0_27 = arith.constant 0 : index
    %50 = vector.load %arg16[%c1_25, %c1_26, %c0_27] : memref<2x6x64xf32, #tpu.memory_space<vmem>>, vector<1x1x64xf32>
    %51 = vector.shape_cast %50 : vector<1x1x64xf32> to vector<1x64xf32>
    %52 = vector.shape_cast %49 : vector<1x64xf32> to vector<1x1x64xf32>
    tpu.vector_store %arg16[%c1_25, %c1_26, %c0_27], %52 {strides = array<i32>} : memref<2x6x64xf32, #tpu.memory_space<vmem>>, vector<1x1x64xf32>,
    %53 = vector.extract_strided_slice %30 {offsets = [1, 64], sizes = [1, 64], strides = [1, 1]} : vector<2x256xf32> to vector<1x64xf32>
    %c1_28 = arith.constant 1 : index
    %c2_29 = arith.constant 2 : index
    %c0_30 = arith.constant 0 : index
    %54 = vector.load %arg16[%c1_28, %c2_29, %c0_30] : memref<2x6x64xf32, #tpu.memory_space<vmem>>, vector<1x1x64xf32>
    %55 = vector.shape_cast %54 : vector<1x1x64xf32> to vector<1x64xf32>
    %56 = vector.shape_cast %53 : vector<1x64xf32> to vector<1x1x64xf32>
    tpu.vector_store %arg16[%c1_28, %c2_29, %c0_30], %56 {strides = array<i32>} : memref<2x6x64xf32, #tpu.memory_space<vmem>>, vector<1x1x64xf32>,
    %57 = vector.extract_strided_slice %30 {offsets = [1, 128], sizes = [1, 64], strides = [1, 1]} : vector<2x256xf32> to vector<1x64xf32>
    %c1_31 = arith.constant 1 : index
    %c3_32 = arith.constant 3 : index
    %c0_33 = arith.constant 0 : index
    %58 = vector.load %arg16[%c1_31, %c3_32, %c0_33] : memref<2x6x64xf32, #tpu.memory_space<vmem>>, vector<1x1x64xf32>
    %59 = vector.shape_cast %58 : vector<1x1x64xf32> to vector<1x64xf32>
    %60 = vector.shape_cast %57 : vector<1x64xf32> to vector<1x1x64xf32>
    tpu.vector_store %arg16[%c1_31, %c3_32, %c0_33], %60 {strides = array<i32>} : memref<2x6x64xf32, #tpu.memory_space<vmem>>, vector<1x1x64xf32>,
    %61 = vector.extract_strided_slice %30 {offsets = [1, 192], sizes = [1, 64], strides = [1, 1]} : vector<2x256xf32> to vector<1x64xf32>
    %c1_34 = arith.constant 1 : index
    %c4_35 = arith.constant 4 : index
    %c0_36 = arith.constant 0 : index
    %62 = vector.load %arg16[%c1_34, %c4_35, %c0_36] : memref<2x6x64xf32, #tpu.memory_space<vmem>>, vector<1x1x64xf32>
    %63 = vector.shape_cast %62 : vector<1x1x64xf32> to vector<1x64xf32>
    %64 = vector.shape_cast %61 : vector<1x64xf32> to vector<1x1x64xf32>
    tpu.vector_store %arg16[%c1_34, %c4_35, %c0_36], %64 {strides = array<i32>} : memref<2x6x64xf32, #tpu.memory_space<vmem>>, vector<1x1x64xf32>,
    %cst_37 = arith.constant 0.000000e+00 : f32
    %65 = vector.broadcast %cst_37 : f32 to vector<4x128xf32>
    %c0_38 = arith.constant 0 : index
    %c0_39 = arith.constant 0 : index
    %c0_40 = arith.constant 0 : index
    %66 = vector.load %arg16[%c0_38, %c0_39, %c0_40] : memref<2x6x64xf32, #tpu.memory_space<vmem>>, vector<1x4x64xf32>
    %67 = vector.shape_cast %66 : vector<1x4x64xf32> to vector<4x64xf32>
    %c0_41 = arith.constant 0 : index
    %c0_42 = arith.constant 0 : index
    %c0_43 = arith.constant 0 : index
    %c0_44 = arith.constant 0 : index
    %68 = vector.load %arg4[%c0_41, %c0_42, %c0_43, %c0_44] : memref<2x3x64x128xf32, #tpu.memory_space<vmem>>, vector<1x1x64x128xf32>
    %69 = vector.shape_cast %68 : vector<1x1x64x128xf32> to vector<64x128xf32>
    %cst_45 = arith.constant dense<0.000000e+00> : vector<4x128xf32>
    %70 = tpu.matmul %67, %69, %cst_45 {dimension_numbers = #tpu.dot_dimension_numbers<[1], [0], [0], [1], [0, 0, 1, 1], [], []>} : vector<4x64xf32>, vector<64x128xf32>, vector<4x128xf32> -> vector<4x128xf32>
    %71 = arith.addf %65, %70 : vector<4x128xf32>
    %c0_46 = arith.constant 0 : index
    %c1_47 = arith.constant 1 : index
    %c0_48 = arith.constant 0 : index
    %72 = vector.load %arg16[%c0_46, %c1_47, %c0_48] : memref<2x6x64xf32, #tpu.memory_space<vmem>>, vector<1x4x64xf32>
    %73 = vector.shape_cast %72 : vector<1x4x64xf32> to vector<4x64xf32>
    %c0_49 = arith.constant 0 : index
    %c1_50 = arith.constant 1 : index
    %c0_51 = arith.constant 0 : index
    %c0_52 = arith.constant 0 : index
    %74 = vector.load %arg4[%c0_49, %c1_50, %c0_51, %c0_52] : memref<2x3x64x128xf32, #tpu.memory_space<vmem>>, vector<1x1x64x128xf32>
    %75 = vector.shape_cast %74 : vector<1x1x64x128xf32> to vector<64x128xf32>
    %cst_53 = arith.constant dense<0.000000e+00> : vector<4x128xf32>
    %76 = tpu.matmul %73, %75, %cst_53 {dimension_numbers = #tpu.dot_dimension_numbers<[1], [0], [0], [1], [0, 0, 1, 1], [], []>} : vector<4x64xf32>, vector<64x128xf32>, vector<4x128xf32> -> vector<4x128xf32>
    %77 = arith.addf %71, %76 : vector<4x128xf32>
    %c0_54 = arith.constant 0 : index
    %c2_55 = arith.constant 2 : index
    %c0_56 = arith.constant 0 : index
    %78 = vector.load %arg16[%c0_54, %c2_55, %c0_56] : memref<2x6x64xf32, #tpu.memory_space<vmem>>, vector<1x4x64xf32>
    %79 = vector.shape_cast %78 : vector<1x4x64xf32> to vector<4x64xf32>
    %c0_57 = arith.constant 0 : index
    %c2_58 = arith.constant 2 : index
    %c0_59 = arith.constant 0 : index
    %c0_60 = arith.constant 0 : index
    %80 = vector.load %arg4[%c0_57, %c2_58, %c0_59, %c0_60] : memref<2x3x64x128xf32, #tpu.memory_space<vmem>>, vector<1x1x64x128xf32>
    %81 = vector.shape_cast %80 : vector<1x1x64x128xf32> to vector<64x128xf32>
    %cst_61 = arith.constant dense<0.000000e+00> : vector<4x128xf32>
    %82 = tpu.matmul %79, %81, %cst_61 {dimension_numbers = #tpu.dot_dimension_numbers<[1], [0], [0], [1], [0, 0, 1, 1], [], []>} : vector<4x64xf32>, vector<64x128xf32>, vector<4x128xf32> -> vector<4x128xf32>
    %83 = arith.addf %77, %82 : vector<4x128xf32>
    %cst_62 = arith.constant 0.000000e+00 : f32
    %84 = vector.broadcast %cst_62 : f32 to vector<4x128xf32>
    %c0_63 = arith.constant 0 : index
    %c1_64 = arith.constant 1 : index
    %c0_65 = arith.constant 0 : index
    %85 = vector.load %arg16[%c0_63, %c1_64, %c0_65] : memref<2x6x64xf32, #tpu.memory_space<vmem>>, vector<1x4x64xf32>
    %86 = vector.shape_cast %85 : vector<1x4x64xf32> to vector<4x64xf32>
    %c1_66 = arith.constant 1 : index
    %c1_67 = arith.constant 1 : index
    %c0_68 = arith.constant 0 : index
    %c0_69 = arith.constant 0 : index
    %87 = vector.load %arg4[%c1_66, %c1_67, %c0_68, %c0_69] : memref<2x3x64x128xf32, #tpu.memory_space<vmem>>, vector<1x1x64x128xf32>
    %88 = vector.shape_cast %87 : vector<1x1x64x128xf32> to vector<64x128xf32>
    %cst_70 = arith.constant dense<0.000000e+00> : vector<4x128xf32>
    %89 = tpu.matmul %86, %88, %cst_70 {dimension_numbers = #tpu.dot_dimension_numbers<[1], [0], [0], [1], [0, 0, 1, 1], [], []>} : vector<4x64xf32>, vector<64x128xf32>, vector<4x128xf32> -> vector<4x128xf32>
    %90 = arith.addf %84, %89 : vector<4x128xf32>
    %c0_71 = arith.constant 0 : index
    %c2_72 = arith.constant 2 : index
    %c0_73 = arith.constant 0 : index
    %91 = vector.load %arg16[%c0_71, %c2_72, %c0_73] : memref<2x6x64xf32, #tpu.memory_space<vmem>>, vector<1x4x64xf32>
    %92 = vector.shape_cast %91 : vector<1x4x64xf32> to vector<4x64xf32>
    %c1_74 = arith.constant 1 : index
    %c2_75 = arith.constant 2 : index
    %c0_76 = arith.constant 0 : index
    %c0_77 = arith.constant 0 : index
    %93 = vector.load %arg4[%c1_74, %c2_75, %c0_76, %c0_77] : memref<2x3x64x128xf32, #tpu.memory_space<vmem>>, vector<1x1x64x128xf32>
    %94 = vector.shape_cast %93 : vector<1x1x64x128xf32> to vector<64x128xf32>
    %cst_78 = arith.constant dense<0.000000e+00> : vector<4x128xf32>
    %95 = tpu.matmul %92, %94, %cst_78 {dimension_numbers = #tpu.dot_dimension_numbers<[1], [0], [0], [1], [0, 0, 1, 1], [], []>} : vector<4x64xf32>, vector<64x128xf32>, vector<4x128xf32> -> vector<4x128xf32>
    %96 = arith.addf %90, %95 : vector<4x128xf32>
    %cst_79 = arith.constant 0.000000e+00 : f32
    %97 = vector.broadcast %cst_79 : f32 to vector<4x128xf32>
    %c1_80 = arith.constant 1 : index
    %c0_81 = arith.constant 0 : index
    %c0_82 = arith.constant 0 : index
    %98 = vector.load %arg16[%c1_80, %c0_81, %c0_82] : memref<2x6x64xf32, #tpu.memory_space<vmem>>, vector<1x4x64xf32>
    %99 = vector.shape_cast %98 : vector<1x4x64xf32> to vector<4x64xf32>
    %c0_83 = arith.constant 0 : index
    %c0_84 = arith.constant 0 : index
    %c0_85 = arith.constant 0 : index
    %c0_86 = arith.constant 0 : index
    %100 = vector.load %arg4[%c0_83, %c0_84, %c0_85, %c0_86] : memref<2x3x64x128xf32, #tpu.memory_space<vmem>>, vector<1x1x64x128xf32>
    %101 = vector.shape_cast %100 : vector<1x1x64x128xf32> to vector<64x128xf32>
    %cst_87 = arith.constant dense<0.000000e+00> : vector<4x128xf32>
    %102 = tpu.matmul %99, %101, %cst_87 {dimension_numbers = #tpu.dot_dimension_numbers<[1], [0], [0], [1], [0, 0, 1, 1], [], []>} : vector<4x64xf32>, vector<64x128xf32>, vector<4x128xf32> -> vector<4x128xf32>
    %103 = arith.addf %97, %102 : vector<4x128xf32>
    %c1_88 = arith.constant 1 : index
    %c1_89 = arith.constant 1 : index
    %c0_90 = arith.constant 0 : index
    %104 = vector.load %arg16[%c1_88, %c1_89, %c0_90] : memref<2x6x64xf32, #tpu.memory_space<vmem>>, vector<1x4x64xf32>
    %105 = vector.shape_cast %104 : vector<1x4x64xf32> to vector<4x64xf32>
    %c0_91 = arith.constant 0 : index
    %c1_92 = arith.constant 1 : index
    %c0_93 = arith.constant 0 : index
    %c0_94 = arith.constant 0 : index
    %106 = vector.load %arg4[%c0_91, %c1_92, %c0_93, %c0_94] : memref<2x3x64x128xf32, #tpu.memory_space<vmem>>, vector<1x1x64x128xf32>
    %107 = vector.shape_cast %106 : vector<1x1x64x128xf32> to vector<64x128xf32>
    %cst_95 = arith.constant dense<0.000000e+00> : vector<4x128xf32>
    %108 = tpu.matmul %105, %107, %cst_95 {dimension_numbers = #tpu.dot_dimension_numbers<[1], [0], [0], [1], [0, 0, 1, 1], [], []>} : vector<4x64xf32>, vector<64x128xf32>, vector<4x128xf32> -> vector<4x128xf32>
    %109 = arith.addf %103, %108 : vector<4x128xf32>
    %c1_96 = arith.constant 1 : index
    %c2_97 = arith.constant 2 : index
    %c0_98 = arith.constant 0 : index
    %110 = vector.load %arg16[%c1_96, %c2_97, %c0_98] : memref<2x6x64xf32, #tpu.memory_space<vmem>>, vector<1x4x64xf32>
    %111 = vector.shape_cast %110 : vector<1x4x64xf32> to vector<4x64xf32>
    %c0_99 = arith.constant 0 : index
    %c2_100 = arith.constant 2 : index
    %c0_101 = arith.constant 0 : index
    %c0_102 = arith.constant 0 : index
    %112 = vector.load %arg4[%c0_99, %c2_100, %c0_101, %c0_102] : memref<2x3x64x128xf32, #tpu.memory_space<vmem>>, vector<1x1x64x128xf32>
    %113 = vector.shape_cast %112 : vector<1x1x64x128xf32> to vector<64x128xf32>
    %cst_103 = arith.constant dense<0.000000e+00> : vector<4x128xf32>
    %114 = tpu.matmul %111, %113, %cst_103 {dimension_numbers = #tpu.dot_dimension_numbers<[1], [0], [0], [1], [0, 0, 1, 1], [], []>} : vector<4x64xf32>, vector<64x128xf32>, vector<4x128xf32> -> vector<4x128xf32>
    %115 = arith.addf %109, %114 : vector<4x128xf32>
    %cst_104 = arith.constant 0.000000e+00 : f32
    %116 = vector.broadcast %cst_104 : f32 to vector<4x128xf32>
    %c1_105 = arith.constant 1 : index
    %c1_106 = arith.constant 1 : index
    %c0_107 = arith.constant 0 : index
    %117 = vector.load %arg16[%c1_105, %c1_106, %c0_107] : memref<2x6x64xf32, #tpu.memory_space<vmem>>, vector<1x4x64xf32>
    %118 = vector.shape_cast %117 : vector<1x4x64xf32> to vector<4x64xf32>
    %c1_108 = arith.constant 1 : index
    %c1_109 = arith.constant 1 : index
    %c0_110 = arith.constant 0 : index
    %c0_111 = arith.constant 0 : index
    %119 = vector.load %arg4[%c1_108, %c1_109, %c0_110, %c0_111] : memref<2x3x64x128xf32, #tpu.memory_space<vmem>>, vector<1x1x64x128xf32>
    %120 = vector.shape_cast %119 : vector<1x1x64x128xf32> to vector<64x128xf32>
    %cst_112 = arith.constant dense<0.000000e+00> : vector<4x128xf32>
    %121 = tpu.matmul %118, %120, %cst_112 {dimension_numbers = #tpu.dot_dimension_numbers<[1], [0], [0], [1], [0, 0, 1, 1], [], []>} : vector<4x64xf32>, vector<64x128xf32>, vector<4x128xf32> -> vector<4x128xf32>
    %122 = arith.addf %116, %121 : vector<4x128xf32>
    %c1_113 = arith.constant 1 : index
    %c2_114 = arith.constant 2 : index
    %c0_115 = arith.constant 0 : index
    %123 = vector.load %arg16[%c1_113, %c2_114, %c0_115] : memref<2x6x64xf32, #tpu.memory_space<vmem>>, vector<1x4x64xf32>
    %124 = vector.shape_cast %123 : vector<1x4x64xf32> to vector<4x64xf32>
    %c1_116 = arith.constant 1 : index
    %c2_117 = arith.constant 2 : index
    %c0_118 = arith.constant 0 : index
    %c0_119 = arith.constant 0 : index
    %125 = vector.load %arg4[%c1_116, %c2_117, %c0_118, %c0_119] : memref<2x3x64x128xf32, #tpu.memory_space<vmem>>, vector<1x1x64x128xf32>
    %126 = vector.shape_cast %125 : vector<1x1x64x128xf32> to vector<64x128xf32>
    %cst_120 = arith.constant dense<0.000000e+00> : vector<4x128xf32>
    %127 = tpu.matmul %124, %126, %cst_120 {dimension_numbers = #tpu.dot_dimension_numbers<[1], [0], [0], [1], [0, 0, 1, 1], [], []>} : vector<4x64xf32>, vector<64x128xf32>, vector<4x128xf32> -> vector<4x128xf32>
    %128 = arith.addf %122, %127 : vector<4x128xf32>
    %cst_121 = arith.constant 0.000000e+00 : f32
    %129 = vector.broadcast %cst_121 : f32 to vector<1x128xf32>
    %cst_122 = arith.constant 0.000000e+00 : f32
    %130 = vector.broadcast %cst_122 : f32 to vector<1x128xf32>
    %cst_123 = arith.constant dense<0.000000e+00> : vector<128xf32>
    %131 = vector.multi_reduction <add>, %83, %cst_123 [0] : vector<4x128xf32> to vector<128xf32>
    %132 = vector.shape_cast %131 : vector<128xf32> to vector<1x128xf32>
    %133 = arith.addf %129, %132 : vector<1x128xf32>
    %134 = arith.mulf %83, %83 : vector<4x128xf32>
    %cst_124 = arith.constant dense<0.000000e+00> : vector<128xf32>
    %135 = vector.multi_reduction <add>, %134, %cst_124 [0] : vector<4x128xf32> to vector<128xf32>
    %136 = vector.shape_cast %135 : vector<128xf32> to vector<1x128xf32>
    %137 = arith.addf %130, %136 : vector<1x128xf32>
    %cst_125 = arith.constant dense<0.000000e+00> : vector<128xf32>
    %138 = vector.multi_reduction <add>, %96, %cst_125 [0] : vector<4x128xf32> to vector<128xf32>
    %139 = vector.shape_cast %138 : vector<128xf32> to vector<1x128xf32>
    %140 = arith.addf %133, %139 : vector<1x128xf32>
    %141 = arith.mulf %96, %96 : vector<4x128xf32>
    %cst_126 = arith.constant dense<0.000000e+00> : vector<128xf32>
    %142 = vector.multi_reduction <add>, %141, %cst_126 [0] : vector<4x128xf32> to vector<128xf32>
    %143 = vector.shape_cast %142 : vector<128xf32> to vector<1x128xf32>
    %144 = arith.addf %137, %143 : vector<1x128xf32>
    %cst_127 = arith.constant dense<0.000000e+00> : vector<128xf32>
    %145 = vector.multi_reduction <add>, %115, %cst_127 [0] : vector<4x128xf32> to vector<128xf32>
    %146 = vector.shape_cast %145 : vector<128xf32> to vector<1x128xf32>
    %147 = arith.addf %140, %146 : vector<1x128xf32>
    %148 = arith.mulf %115, %115 : vector<4x128xf32>
    %cst_128 = arith.constant dense<0.000000e+00> : vector<128xf32>
    %149 = vector.multi_reduction <add>, %148, %cst_128 [0] : vector<4x128xf32> to vector<128xf32>
    %150 = vector.shape_cast %149 : vector<128xf32> to vector<1x128xf32>
    %151 = arith.addf %144, %150 : vector<1x128xf32>
    %cst_129 = arith.constant dense<0.000000e+00> : vector<128xf32>
    %152 = vector.multi_reduction <add>, %128, %cst_129 [0] : vector<4x128xf32> to vector<128xf32>
    %153 = vector.shape_cast %152 : vector<128xf32> to vector<1x128xf32>
    %154 = arith.addf %147, %153 : vector<1x128xf32>
    %155 = arith.mulf %128, %128 : vector<4x128xf32>
    %cst_130 = arith.constant dense<0.000000e+00> : vector<128xf32>
    %156 = vector.multi_reduction <add>, %155, %cst_130 [0] : vector<4x128xf32> to vector<128xf32>
    %157 = vector.shape_cast %156 : vector<128xf32> to vector<1x128xf32>
    %158 = arith.addf %151, %157 : vector<1x128xf32>
    %159 = tpu.iota {dimensions = array<i32: 0>} : vector<128x16xi32>
    %c15_i32 = arith.constant 15 : i32
    %160 = vector.broadcast %c15_i32 : i32 to vector<128x16xi32>
    %161 = arith.andi %159, %160 : vector<128x16xi32>
    %162 = tpu.iota {dimensions = array<i32: 1>} : vector<128x16xi32>
    %163 = arith.cmpi eq, %161, %162 : vector<128x16xi32>
    %164 = arith.extui %163 : vector<128x16xi1> to vector<128x16xi32>
    %165 = arith.sitofp %164 : vector<128x16xi32> to vector<128x16xf32>
    %166 = tpu.iota {dimensions = array<i32: 1>} : vector<16x128xi32>
    %c15_i32_131 = arith.constant 15 : i32
    %167 = vector.broadcast %c15_i32_131 : i32 to vector<16x128xi32>
    %168 = arith.andi %166, %167 : vector<16x128xi32>
    %169 = tpu.iota {dimensions = array<i32: 0>} : vector<16x128xi32>
    %170 = arith.cmpi eq, %168, %169 : vector<16x128xi32>
    %171 = arith.extui %170 : vector<16x128xi1> to vector<16x128xi32>
    %172 = arith.sitofp %171 : vector<16x128xi32> to vector<16x128xf32>
    %cst_132 = arith.constant dense<0.000000e+00> : vector<1x16xf32>
    %173 = tpu.matmul %154, %165, %cst_132 {dimension_numbers = #tpu.dot_dimension_numbers<[1], [0], [0], [1], [0, 0, 1, 1], [], []>} : vector<1x128xf32>, vector<128x16xf32>, vector<1x16xf32> -> vector<1x16xf32>
    %cst_133 = arith.constant 1.280000e+02 : f32
    %174 = vector.broadcast %cst_133 : f32 to vector<1x16xf32>
    %175 = arith.divf %173, %174 : vector<1x16xf32>
    %cst_134 = arith.constant dense<0.000000e+00> : vector<1x16xf32>
    %176 = tpu.matmul %158, %165, %cst_134 {dimension_numbers = #tpu.dot_dimension_numbers<[1], [0], [0], [1], [0, 0, 1, 1], [], []>} : vector<1x128xf32>, vector<128x16xf32>, vector<1x16xf32> -> vector<1x16xf32>
    %cst_135 = arith.constant 1.280000e+02 : f32
    %177 = vector.broadcast %cst_135 : f32 to vector<1x16xf32>
    %178 = arith.divf %176, %177 : vector<1x16xf32>
    %179 = arith.mulf %175, %175 : vector<1x16xf32>
    %180 = arith.subf %178, %179 : vector<1x16xf32>
    %c0_136 = arith.constant 0 : index
    %c0_137 = arith.constant 0 : index
    %181 = vector.load %arg5[%c0_136, %c0_137] : memref<1x16xf32, #tpu.memory_space<vmem>>, vector<1x16xf32>
    %cst_138 = arith.constant 9.99999974E-6 : f32
    %182 = vector.broadcast %cst_138 : f32 to vector<1x16xf32>
    %183 = arith.addf %180, %182 : vector<1x16xf32>
    %184 = math.rsqrt %183 : vector<1x16xf32>
    %185 = arith.mulf %181, %184 : vector<1x16xf32>
    %c0_139 = arith.constant 0 : index
    %c0_140 = arith.constant 0 : index
    %186 = vector.load %arg6[%c0_139, %c0_140] : memref<1x16xf32, #tpu.memory_space<vmem>>, vector<1x16xf32>
    %187 = arith.mulf %175, %185 : vector<1x16xf32>
    %188 = arith.subf %186, %187 : vector<1x16xf32>
    %cst_141 = arith.constant dense<0.000000e+00> : vector<1x128xf32>
    %189 = tpu.matmul %185, %172, %cst_141 {dimension_numbers = #tpu.dot_dimension_numbers<[1], [0], [0], [1], [0, 0, 1, 1], [], []>} : vector<1x16xf32>, vector<16x128xf32>, vector<1x128xf32> -> vector<1x128xf32>
    %cst_142 = arith.constant dense<0.000000e+00> : vector<1x128xf32>
    %190 = tpu.matmul %188, %172, %cst_142 {dimension_numbers = #tpu.dot_dimension_numbers<[1], [0], [0], [1], [0, 0, 1, 1], [], []>} : vector<1x16xf32>, vector<16x128xf32>, vector<1x128xf32> -> vector<1x128xf32>
    %191 = tpu.iota {dimensions = array<i32: 0>} : vector<10x4xi32>
    %192 = tpu.iota {dimensions = array<i32: 1>} : vector<10x4xi32>
    %cst_143 = arith.constant 0.000000e+00 : f32
    %193 = vector.broadcast %cst_143 : f32 to vector<10x128xf32>
    %194 = vector.broadcast %189 : vector<1x128xf32> to vector<4x128xf32>
    %195 = arith.mulf %83, %194 : vector<4x128xf32>
    %196 = vector.broadcast %190 : vector<1x128xf32> to vector<4x128xf32>
    %197 = arith.addf %195, %196 : vector<4x128xf32>
    %cst_144 = arith.constant 0.000000e+00 : f32
    %198 = vector.broadcast %cst_144 : f32 to vector<4x128xf32>
    %199 = arith.maximumf %197, %198 : vector<4x128xf32>
    %c2_i32 = arith.constant 2 : i32
    %200 = vector.broadcast %c2_i32 : i32 to vector<10x4xi32>
    %201 = arith.muli %200, %192 : vector<10x4xi32>
    %c0_i32 = arith.constant 0 : i32
    %202 = vector.broadcast %c0_i32 : i32 to vector<10x4xi32>
    %203 = arith.addi %201, %202 : vector<10x4xi32>
    %c1_i32 = arith.constant 1 : i32
    %204 = vector.broadcast %c1_i32 : i32 to vector<10x4xi32>
    %205 = arith.addi %203, %204 : vector<10x4xi32>
    %206 = arith.cmpi eq, %191, %205 : vector<10x4xi32>
    %207 = arith.extui %206 : vector<10x4xi1> to vector<10x4xi32>
    %208 = arith.sitofp %207 : vector<10x4xi32> to vector<10x4xf32>
    %cst_145 = arith.constant dense<0.000000e+00> : vector<10x128xf32>
    %209 = tpu.matmul %208, %199, %cst_145 {dimension_numbers = #tpu.dot_dimension_numbers<[1], [0], [0], [1], [0, 0, 1, 1], [], []>} : vector<10x4xf32>, vector<4x128xf32>, vector<10x128xf32> -> vector<10x128xf32>
    %210 = arith.addf %193, %209 : vector<10x128xf32>
    %211 = vector.broadcast %189 : vector<1x128xf32> to vector<4x128xf32>
    %212 = arith.mulf %96, %211 : vector<4x128xf32>
    %213 = vector.broadcast %190 : vector<1x128xf32> to vector<4x128xf32>
    %214 = arith.addf %212, %213 : vector<4x128xf32>
    %cst_146 = arith.constant 0.000000e+00 : f32
    %215 = vector.broadcast %cst_146 : f32 to vector<4x128xf32>
    %216 = arith.maximumf %214, %215 : vector<4x128xf32>
    %c2_i32_147 = arith.constant 2 : i32
    %217 = vector.broadcast %c2_i32_147 : i32 to vector<10x4xi32>
    %218 = arith.muli %217, %192 : vector<10x4xi32>
    %c1_i32_148 = arith.constant 1 : i32
    %219 = vector.broadcast %c1_i32_148 : i32 to vector<10x4xi32>
    %220 = arith.addi %218, %219 : vector<10x4xi32>
    %c1_i32_149 = arith.constant 1 : i32
    %221 = vector.broadcast %c1_i32_149 : i32 to vector<10x4xi32>
    %222 = arith.addi %220, %221 : vector<10x4xi32>
    %223 = arith.cmpi eq, %191, %222 : vector<10x4xi32>
    %224 = arith.extui %223 : vector<10x4xi1> to vector<10x4xi32>
    %225 = arith.sitofp %224 : vector<10x4xi32> to vector<10x4xf32>
    %cst_150 = arith.constant dense<0.000000e+00> : vector<10x128xf32>
    %226 = tpu.matmul %225, %216, %cst_150 {dimension_numbers = #tpu.dot_dimension_numbers<[1], [0], [0], [1], [0, 0, 1, 1], [], []>} : vector<10x4xf32>, vector<4x128xf32>, vector<10x128xf32> -> vector<10x128xf32>
    %227 = arith.addf %210, %226 : vector<10x128xf32>
    %cst_151 = arith.constant 0.000000e+00 : f32
    %228 = vector.broadcast %cst_151 : f32 to vector<10x128xf32>
    %229 = vector.broadcast %189 : vector<1x128xf32> to vector<4x128xf32>
    %230 = arith.mulf %115, %229 : vector<4x128xf32>
    %231 = vector.broadcast %190 : vector<1x128xf32> to vector<4x128xf32>
    %232 = arith.addf %230, %231 : vector<4x128xf32>
    %cst_152 = arith.constant 0.000000e+00 : f32
    %233 = vector.broadcast %cst_152 : f32 to vector<4x128xf32>
    %234 = arith.maximumf %232, %233 : vector<4x128xf32>
    %c2_i32_153 = arith.constant 2 : i32
    %235 = vector.broadcast %c2_i32_153 : i32 to vector<10x4xi32>
    %236 = arith.muli %235, %192 : vector<10x4xi32>
    %c0_i32_154 = arith.constant 0 : i32
    %237 = vector.broadcast %c0_i32_154 : i32 to vector<10x4xi32>
    %238 = arith.addi %236, %237 : vector<10x4xi32>
    %c1_i32_155 = arith.constant 1 : i32
    %239 = vector.broadcast %c1_i32_155 : i32 to vector<10x4xi32>
    %240 = arith.addi %238, %239 : vector<10x4xi32>
    %241 = arith.cmpi eq, %191, %240 : vector<10x4xi32>
    %242 = arith.extui %241 : vector<10x4xi1> to vector<10x4xi32>
    %243 = arith.sitofp %242 : vector<10x4xi32> to vector<10x4xf32>
    %cst_156 = arith.constant dense<0.000000e+00> : vector<10x128xf32>
    %244 = tpu.matmul %243, %234, %cst_156 {dimension_numbers = #tpu.dot_dimension_numbers<[1], [0], [0], [1], [0, 0, 1, 1], [], []>} : vector<10x4xf32>, vector<4x128xf32>, vector<10x128xf32> -> vector<10x128xf32>
    %245 = arith.addf %228, %244 : vector<10x128xf32>
    %246 = vector.broadcast %189 : vector<1x128xf32> to vector<4x128xf32>
    %247 = arith.mulf %128, %246 : vector<4x128xf32>
    %248 = vector.broadcast %190 : vector<1x128xf32> to vector<4x128xf32>
    %249 = arith.addf %247, %248 : vector<4x128xf32>
    %cst_157 = arith.constant 0.000000e+00 : f32
    %250 = vector.broadcast %cst_157 : f32 to vector<4x128xf32>
    %251 = arith.maximumf %249, %250 : vector<4x128xf32>
    %c2_i32_158 = arith.constant 2 : i32
    %252 = vector.broadcast %c2_i32_158 : i32 to vector<10x4xi32>
    %253 = arith.muli %252, %192 : vector<10x4xi32>
    %c1_i32_159 = arith.constant 1 : i32
    %254 = vector.broadcast %c1_i32_159 : i32 to vector<10x4xi32>
    %255 = arith.addi %253, %254 : vector<10x4xi32>
    %c1_i32_160 = arith.constant 1 : i32
    %256 = vector.broadcast %c1_i32_160 : i32 to vector<10x4xi32>
    %257 = arith.addi %255, %256 : vector<10x4xi32>
    %258 = arith.cmpi eq, %191, %257 : vector<10x4xi32>
    %259 = arith.extui %258 : vector<10x4xi1> to vector<10x4xi32>
    %260 = arith.sitofp %259 : vector<10x4xi32> to vector<10x4xf32>
    %cst_161 = arith.constant dense<0.000000e+00> : vector<10x128xf32>
    %261 = tpu.matmul %260, %251, %cst_161 {dimension_numbers = #tpu.dot_dimension_numbers<[1], [0], [0], [1], [0, 0, 1, 1], [], []>} : vector<10x4xf32>, vector<4x128xf32>, vector<10x128xf32> -> vector<10x128xf32>
    %262 = arith.addf %245, %261 : vector<10x128xf32>
    %cst_162 = arith.constant 0.000000e+00 : f32
    %263 = vector.broadcast %cst_162 : f32 to vector<8x128xf32>
    %264 = vector.extract_strided_slice %227 {offsets = [0, 0], sizes = [8, 128], strides = [1, 1]} : vector<10x128xf32> to vector<8x128xf32>
    %c0_163 = arith.constant 0 : index
    %c0_164 = arith.constant 0 : index
    %c0_165 = arith.constant 0 : index
    %c0_166 = arith.constant 0 : index
    %265 = vector.load %arg7[%c0_163, %c0_164, %c0_165, %c0_166] : memref<2x3x128x128xf32, #tpu.memory_space<vmem>>, vector<1x1x128x128xf32>
    %266 = vector.shape_cast %265 : vector<1x1x128x128xf32> to vector<128x128xf32>
    %cst_167 = arith.constant dense<0.000000e+00> : vector<8x128xf32>
    %267 = tpu.matmul %264, %266, %cst_167 {dimension_numbers = #tpu.dot_dimension_numbers<[1], [0], [0], [1], [0, 0, 1, 1], [], []>} : vector<8x128xf32>, vector<128x128xf32>, vector<8x128xf32> -> vector<8x128xf32>
    %268 = arith.addf %263, %267 : vector<8x128xf32>
    %269 = vector.extract_strided_slice %227 {offsets = [1, 0], sizes = [8, 128], strides = [1, 1]} : vector<10x128xf32> to vector<8x128xf32>
    %c0_168 = arith.constant 0 : index
    %c1_169 = arith.constant 1 : index
    %c0_170 = arith.constant 0 : index
    %c0_171 = arith.constant 0 : index
    %270 = vector.load %arg7[%c0_168, %c1_169, %c0_170, %c0_171] : memref<2x3x128x128xf32, #tpu.memory_space<vmem>>, vector<1x1x128x128xf32>
    %271 = vector.shape_cast %270 : vector<1x1x128x128xf32> to vector<128x128xf32>
    %cst_172 = arith.constant dense<0.000000e+00> : vector<8x128xf32>
    %272 = tpu.matmul %269, %271, %cst_172 {dimension_numbers = #tpu.dot_dimension_numbers<[1], [0], [0], [1], [0, 0, 1, 1], [], []>} : vector<8x128xf32>, vector<128x128xf32>, vector<8x128xf32> -> vector<8x128xf32>
    %273 = arith.addf %268, %272 : vector<8x128xf32>
    %274 = vector.extract_strided_slice %227 {offsets = [2, 0], sizes = [8, 128], strides = [1, 1]} : vector<10x128xf32> to vector<8x128xf32>
    %c0_173 = arith.constant 0 : index
    %c2_174 = arith.constant 2 : index
    %c0_175 = arith.constant 0 : index
    %c0_176 = arith.constant 0 : index
    %275 = vector.load %arg7[%c0_173, %c2_174, %c0_175, %c0_176] : memref<2x3x128x128xf32, #tpu.memory_space<vmem>>, vector<1x1x128x128xf32>
    %276 = vector.shape_cast %275 : vector<1x1x128x128xf32> to vector<128x128xf32>
    %cst_177 = arith.constant dense<0.000000e+00> : vector<8x128xf32>
    %277 = tpu.matmul %274, %276, %cst_177 {dimension_numbers = #tpu.dot_dimension_numbers<[1], [0], [0], [1], [0, 0, 1, 1], [], []>} : vector<8x128xf32>, vector<128x128xf32>, vector<8x128xf32> -> vector<8x128xf32>
    %278 = arith.addf %273, %277 : vector<8x128xf32>
    %cst_178 = arith.constant 0.000000e+00 : f32
    %279 = vector.broadcast %cst_178 : f32 to vector<8x128xf32>
    %280 = vector.extract_strided_slice %227 {offsets = [1, 0], sizes = [8, 128], strides = [1, 1]} : vector<10x128xf32> to vector<8x128xf32>
    %c1_179 = arith.constant 1 : index
    %c1_180 = arith.constant 1 : index
    %c0_181 = arith.constant 0 : index
    %c0_182 = arith.constant 0 : index
    %281 = vector.load %arg7[%c1_179, %c1_180, %c0_181, %c0_182] : memref<2x3x128x128xf32, #tpu.memory_space<vmem>>, vector<1x1x128x128xf32>
    %282 = vector.shape_cast %281 : vector<1x1x128x128xf32> to vector<128x128xf32>
    %cst_183 = arith.constant dense<0.000000e+00> : vector<8x128xf32>
    %283 = tpu.matmul %280, %282, %cst_183 {dimension_numbers = #tpu.dot_dimension_numbers<[1], [0], [0], [1], [0, 0, 1, 1], [], []>} : vector<8x128xf32>, vector<128x128xf32>, vector<8x128xf32> -> vector<8x128xf32>
    %284 = arith.addf %279, %283 : vector<8x128xf32>
    %285 = vector.extract_strided_slice %227 {offsets = [2, 0], sizes = [8, 128], strides = [1, 1]} : vector<10x128xf32> to vector<8x128xf32>
    %c1_184 = arith.constant 1 : index
    %c2_185 = arith.constant 2 : index
    %c0_186 = arith.constant 0 : index
    %c0_187 = arith.constant 0 : index
    %286 = vector.load %arg7[%c1_184, %c2_185, %c0_186, %c0_187] : memref<2x3x128x128xf32, #tpu.memory_space<vmem>>, vector<1x1x128x128xf32>
    %287 = vector.shape_cast %286 : vector<1x1x128x128xf32> to vector<128x128xf32>
    %cst_188 = arith.constant dense<0.000000e+00> : vector<8x128xf32>
    %288 = tpu.matmul %285, %287, %cst_188 {dimension_numbers = #tpu.dot_dimension_numbers<[1], [0], [0], [1], [0, 0, 1, 1], [], []>} : vector<8x128xf32>, vector<128x128xf32>, vector<8x128xf32> -> vector<8x128xf32>
    %289 = arith.addf %284, %288 : vector<8x128xf32>
    %cst_189 = arith.constant 0.000000e+00 : f32
    %290 = vector.broadcast %cst_189 : f32 to vector<8x128xf32>
    %291 = vector.extract_strided_slice %262 {offsets = [0, 0], sizes = [8, 128], strides = [1, 1]} : vector<10x128xf32> to vector<8x128xf32>
    %c0_190 = arith.constant 0 : index
    %c0_191 = arith.constant 0 : index
    %c0_192 = arith.constant 0 : index
    %c0_193 = arith.constant 0 : index
    %292 = vector.load %arg7[%c0_190, %c0_191, %c0_192, %c0_193] : memref<2x3x128x128xf32, #tpu.memory_space<vmem>>, vector<1x1x128x128xf32>
    %293 = vector.shape_cast %292 : vector<1x1x128x128xf32> to vector<128x128xf32>
    %cst_194 = arith.constant dense<0.000000e+00> : vector<8x128xf32>
    %294 = tpu.matmul %291, %293, %cst_194 {dimension_numbers = #tpu.dot_dimension_numbers<[1], [0], [0], [1], [0, 0, 1, 1], [], []>} : vector<8x128xf32>, vector<128x128xf32>, vector<8x128xf32> -> vector<8x128xf32>
    %295 = arith.addf %290, %294 : vector<8x128xf32>
    %296 = vector.extract_strided_slice %262 {offsets = [1, 0], sizes = [8, 128], strides = [1, 1]} : vector<10x128xf32> to vector<8x128xf32>
    %c0_195 = arith.constant 0 : index
    %c1_196 = arith.constant 1 : index
    %c0_197 = arith.constant 0 : index
    %c0_198 = arith.constant 0 : index
    %297 = vector.load %arg7[%c0_195, %c1_196, %c0_197, %c0_198] : memref<2x3x128x128xf32, #tpu.memory_space<vmem>>, vector<1x1x128x128xf32>
    %298 = vector.shape_cast %297 : vector<1x1x128x128xf32> to vector<128x128xf32>
    %cst_199 = arith.constant dense<0.000000e+00> : vector<8x128xf32>
    %299 = tpu.matmul %296, %298, %cst_199 {dimension_numbers = #tpu.dot_dimension_numbers<[1], [0], [0], [1], [0, 0, 1, 1], [], []>} : vector<8x128xf32>, vector<128x128xf32>, vector<8x128xf32> -> vector<8x128xf32>
    %300 = arith.addf %295, %299 : vector<8x128xf32>
    %301 = vector.extract_strided_slice %262 {offsets = [2, 0], sizes = [8, 128], strides = [1, 1]} : vector<10x128xf32> to vector<8x128xf32>
    %c0_200 = arith.constant 0 : index
    %c2_201 = arith.constant 2 : index
    %c0_202 = arith.constant 0 : index
    %c0_203 = arith.constant 0 : index
    %302 = vector.load %arg7[%c0_200, %c2_201, %c0_202, %c0_203] : memref<2x3x128x128xf32, #tpu.memory_space<vmem>>, vector<1x1x128x128xf32>
    %303 = vector.shape_cast %302 : vector<1x1x128x128xf32> to vector<128x128xf32>
    %cst_204 = arith.constant dense<0.000000e+00> : vector<8x128xf32>
    %304 = tpu.matmul %301, %303, %cst_204 {dimension_numbers = #tpu.dot_dimension_numbers<[1], [0], [0], [1], [0, 0, 1, 1], [], []>} : vector<8x128xf32>, vector<128x128xf32>, vector<8x128xf32> -> vector<8x128xf32>
    %305 = arith.addf %300, %304 : vector<8x128xf32>
    %cst_205 = arith.constant 0.000000e+00 : f32
    %306 = vector.broadcast %cst_205 : f32 to vector<8x128xf32>
    %307 = vector.extract_strided_slice %262 {offsets = [1, 0], sizes = [8, 128], strides = [1, 1]} : vector<10x128xf32> to vector<8x128xf32>
    %c1_206 = arith.constant 1 : index
    %c1_207 = arith.constant 1 : index
    %c0_208 = arith.constant 0 : index
    %c0_209 = arith.constant 0 : index
    %308 = vector.load %arg7[%c1_206, %c1_207, %c0_208, %c0_209] : memref<2x3x128x128xf32, #tpu.memory_space<vmem>>, vector<1x1x128x128xf32>
    %309 = vector.shape_cast %308 : vector<1x1x128x128xf32> to vector<128x128xf32>
    %cst_210 = arith.constant dense<0.000000e+00> : vector<8x128xf32>
    %310 = tpu.matmul %307, %309, %cst_210 {dimension_numbers = #tpu.dot_dimension_numbers<[1], [0], [0], [1], [0, 0, 1, 1], [], []>} : vector<8x128xf32>, vector<128x128xf32>, vector<8x128xf32> -> vector<8x128xf32>
    %311 = arith.addf %306, %310 : vector<8x128xf32>
    %312 = vector.extract_strided_slice %262 {offsets = [2, 0], sizes = [8, 128], strides = [1, 1]} : vector<10x128xf32> to vector<8x128xf32>
    %c1_211 = arith.constant 1 : index
    %c2_212 = arith.constant 2 : index
    %c0_213 = arith.constant 0 : index
    %c0_214 = arith.constant 0 : index
    %313 = vector.load %arg7[%c1_211, %c2_212, %c0_213, %c0_214] : memref<2x3x128x128xf32, #tpu.memory_space<vmem>>, vector<1x1x128x128xf32>
    %314 = vector.shape_cast %313 : vector<1x1x128x128xf32> to vector<128x128xf32>
    %cst_215 = arith.constant dense<0.000000e+00> : vector<8x128xf32>
    %315 = tpu.matmul %312, %314, %cst_215 {dimension_numbers = #tpu.dot_dimension_numbers<[1], [0], [0], [1], [0, 0, 1, 1], [], []>} : vector<8x128xf32>, vector<128x128xf32>, vector<8x128xf32> -> vector<8x128xf32>
    %316 = arith.addf %311, %315 : vector<8x128xf32>
    %cst_216 = arith.constant 0.000000e+00 : f32
    %317 = vector.broadcast %cst_216 : f32 to vector<1x128xf32>
    %cst_217 = arith.constant 0.000000e+00 : f32
    %318 = vector.broadcast %cst_217 : f32 to vector<1x128xf32>
    %cst_218 = arith.constant dense<0.000000e+00> : vector<128xf32>
    %319 = vector.multi_reduction <add>, %278, %cst_218 [0] : vector<8x128xf32> to vector<128xf32>
    %320 = vector.shape_cast %319 : vector<128xf32> to vector<1x128xf32>
    %321 = arith.addf %317, %320 : vector<1x128xf32>
    %322 = arith.mulf %278, %278 : vector<8x128xf32>
    %cst_219 = arith.constant dense<0.000000e+00> : vector<128xf32>
    %323 = vector.multi_reduction <add>, %322, %cst_219 [0] : vector<8x128xf32> to vector<128xf32>
    %324 = vector.shape_cast %323 : vector<128xf32> to vector<1x128xf32>
    %325 = arith.addf %318, %324 : vector<1x128xf32>
    %cst_220 = arith.constant dense<0.000000e+00> : vector<128xf32>
    %326 = vector.multi_reduction <add>, %289, %cst_220 [0] : vector<8x128xf32> to vector<128xf32>
    %327 = vector.shape_cast %326 : vector<128xf32> to vector<1x128xf32>
    %328 = arith.addf %321, %327 : vector<1x128xf32>
    %329 = arith.mulf %289, %289 : vector<8x128xf32>
    %cst_221 = arith.constant dense<0.000000e+00> : vector<128xf32>
    %330 = vector.multi_reduction <add>, %329, %cst_221 [0] : vector<8x128xf32> to vector<128xf32>
    %331 = vector.shape_cast %330 : vector<128xf32> to vector<1x128xf32>
    %332 = arith.addf %325, %331 : vector<1x128xf32>
    %cst_222 = arith.constant dense<0.000000e+00> : vector<128xf32>
    %333 = vector.multi_reduction <add>, %305, %cst_222 [0] : vector<8x128xf32> to vector<128xf32>
    %334 = vector.shape_cast %333 : vector<128xf32> to vector<1x128xf32>
    %335 = arith.addf %328, %334 : vector<1x128xf32>
    %336 = arith.mulf %305, %305 : vector<8x128xf32>
    %cst_223 = arith.constant dense<0.000000e+00> : vector<128xf32>
    %337 = vector.multi_reduction <add>, %336, %cst_223 [0] : vector<8x128xf32> to vector<128xf32>
    %338 = vector.shape_cast %337 : vector<128xf32> to vector<1x128xf32>
    %339 = arith.addf %332, %338 : vector<1x128xf32>
    %cst_224 = arith.constant dense<0.000000e+00> : vector<128xf32>
    %340 = vector.multi_reduction <add>, %316, %cst_224 [0] : vector<8x128xf32> to vector<128xf32>
    %341 = vector.shape_cast %340 : vector<128xf32> to vector<1x128xf32>
    %342 = arith.addf %335, %341 : vector<1x128xf32>
    %343 = arith.mulf %316, %316 : vector<8x128xf32>
    %cst_225 = arith.constant dense<0.000000e+00> : vector<128xf32>
    %344 = vector.multi_reduction <add>, %343, %cst_225 [0] : vector<8x128xf32> to vector<128xf32>
    %345 = vector.shape_cast %344 : vector<128xf32> to vector<1x128xf32>
    %346 = arith.addf %339, %345 : vector<1x128xf32>
    %347 = tpu.iota {dimensions = array<i32: 0>} : vector<128x8xi32>
    %c7_i32 = arith.constant 7 : i32
    %348 = vector.broadcast %c7_i32 : i32 to vector<128x8xi32>
    %349 = arith.andi %347, %348 : vector<128x8xi32>
    %350 = tpu.iota {dimensions = array<i32: 1>} : vector<128x8xi32>
    %351 = arith.cmpi eq, %349, %350 : vector<128x8xi32>
    %352 = arith.extui %351 : vector<128x8xi1> to vector<128x8xi32>
    %353 = arith.sitofp %352 : vector<128x8xi32> to vector<128x8xf32>
    %354 = tpu.iota {dimensions = array<i32: 1>} : vector<8x128xi32>
    %c7_i32_226 = arith.constant 7 : i32
    %355 = vector.broadcast %c7_i32_226 : i32 to vector<8x128xi32>
    %356 = arith.andi %354, %355 : vector<8x128xi32>
    %357 = tpu.iota {dimensions = array<i32: 0>} : vector<8x128xi32>
    %358 = arith.cmpi eq, %356, %357 : vector<8x128xi32>
    %359 = arith.extui %358 : vector<8x128xi1> to vector<8x128xi32>
    %360 = arith.sitofp %359 : vector<8x128xi32> to vector<8x128xf32>
    %cst_227 = arith.constant dense<0.000000e+00> : vector<1x8xf32>
    %361 = tpu.matmul %342, %353, %cst_227 {dimension_numbers = #tpu.dot_dimension_numbers<[1], [0], [0], [1], [0, 0, 1, 1], [], []>} : vector<1x128xf32>, vector<128x8xf32>, vector<1x8xf32> -> vector<1x8xf32>
    %cst_228 = arith.constant 5.120000e+02 : f32
    %362 = vector.broadcast %cst_228 : f32 to vector<1x8xf32>
    %363 = arith.divf %361, %362 : vector<1x8xf32>
    %cst_229 = arith.constant dense<0.000000e+00> : vector<1x8xf32>
    %364 = tpu.matmul %346, %353, %cst_229 {dimension_numbers = #tpu.dot_dimension_numbers<[1], [0], [0], [1], [0, 0, 1, 1], [], []>} : vector<1x128xf32>, vector<128x8xf32>, vector<1x8xf32> -> vector<1x8xf32>
    %cst_230 = arith.constant 5.120000e+02 : f32
    %365 = vector.broadcast %cst_230 : f32 to vector<1x8xf32>
    %366 = arith.divf %364, %365 : vector<1x8xf32>
    %367 = arith.mulf %363, %363 : vector<1x8xf32>
    %368 = arith.subf %366, %367 : vector<1x8xf32>
    %c0_231 = arith.constant 0 : index
    %c0_232 = arith.constant 0 : index
    %369 = vector.load %arg8[%c0_231, %c0_232] : memref<1x8xf32, #tpu.memory_space<vmem>>, vector<1x8xf32>
    %cst_233 = arith.constant 9.99999974E-6 : f32
    %370 = vector.broadcast %cst_233 : f32 to vector<1x8xf32>
    %371 = arith.addf %368, %370 : vector<1x8xf32>
    %372 = math.rsqrt %371 : vector<1x8xf32>
    %373 = arith.mulf %369, %372 : vector<1x8xf32>
    %c0_234 = arith.constant 0 : index
    %c0_235 = arith.constant 0 : index
    %374 = vector.load %arg9[%c0_234, %c0_235] : memref<1x8xf32, #tpu.memory_space<vmem>>, vector<1x8xf32>
    %375 = arith.mulf %363, %373 : vector<1x8xf32>
    %376 = arith.subf %374, %375 : vector<1x8xf32>
    %cst_236 = arith.constant dense<0.000000e+00> : vector<1x128xf32>
    %377 = tpu.matmul %373, %360, %cst_236 {dimension_numbers = #tpu.dot_dimension_numbers<[1], [0], [0], [1], [0, 0, 1, 1], [], []>} : vector<1x8xf32>, vector<8x128xf32>, vector<1x128xf32> -> vector<1x128xf32>
    %cst_237 = arith.constant dense<0.000000e+00> : vector<1x128xf32>
    %378 = tpu.matmul %376, %360, %cst_237 {dimension_numbers = #tpu.dot_dimension_numbers<[1], [0], [0], [1], [0, 0, 1, 1], [], []>} : vector<1x8xf32>, vector<8x128xf32>, vector<1x128xf32> -> vector<1x128xf32>
    %379 = tpu.iota {dimensions = array<i32: 0>} : vector<18x8xi32>
    %380 = tpu.iota {dimensions = array<i32: 1>} : vector<18x8xi32>
    %cst_238 = arith.constant 0.000000e+00 : f32
    %381 = vector.broadcast %cst_238 : f32 to vector<18x128xf32>
    %382 = vector.broadcast %377 : vector<1x128xf32> to vector<8x128xf32>
    %383 = arith.mulf %278, %382 : vector<8x128xf32>
    %384 = vector.broadcast %378 : vector<1x128xf32> to vector<8x128xf32>
    %385 = arith.addf %383, %384 : vector<8x128xf32>
    %cst_239 = arith.constant 0.000000e+00 : f32
    %386 = vector.broadcast %cst_239 : f32 to vector<8x128xf32>
    %387 = arith.maximumf %385, %386 : vector<8x128xf32>
    %c2_i32_240 = arith.constant 2 : i32
    %388 = vector.broadcast %c2_i32_240 : i32 to vector<18x8xi32>
    %389 = arith.muli %388, %380 : vector<18x8xi32>
    %c0_i32_241 = arith.constant 0 : i32
    %390 = vector.broadcast %c0_i32_241 : i32 to vector<18x8xi32>
    %391 = arith.addi %389, %390 : vector<18x8xi32>
    %c1_i32_242 = arith.constant 1 : i32
    %392 = vector.broadcast %c1_i32_242 : i32 to vector<18x8xi32>
    %393 = arith.addi %391, %392 : vector<18x8xi32>
    %394 = arith.cmpi eq, %379, %393 : vector<18x8xi32>
    %395 = arith.extui %394 : vector<18x8xi1> to vector<18x8xi32>
    %396 = arith.sitofp %395 : vector<18x8xi32> to vector<18x8xf32>
    %cst_243 = arith.constant dense<0.000000e+00> : vector<18x128xf32>
    %397 = tpu.matmul %396, %387, %cst_243 {dimension_numbers = #tpu.dot_dimension_numbers<[1], [0], [0], [1], [0, 0, 1, 1], [], []>} : vector<18x8xf32>, vector<8x128xf32>, vector<18x128xf32> -> vector<18x128xf32>
    %398 = arith.addf %381, %397 : vector<18x128xf32>
    %399 = vector.broadcast %377 : vector<1x128xf32> to vector<8x128xf32>
    %400 = arith.mulf %289, %399 : vector<8x128xf32>
    %401 = vector.broadcast %378 : vector<1x128xf32> to vector<8x128xf32>
    %402 = arith.addf %400, %401 : vector<8x128xf32>
    %cst_244 = arith.constant 0.000000e+00 : f32
    %403 = vector.broadcast %cst_244 : f32 to vector<8x128xf32>
    %404 = arith.maximumf %402, %403 : vector<8x128xf32>
    %c2_i32_245 = arith.constant 2 : i32
    %405 = vector.broadcast %c2_i32_245 : i32 to vector<18x8xi32>
    %406 = arith.muli %405, %380 : vector<18x8xi32>
    %c1_i32_246 = arith.constant 1 : i32
    %407 = vector.broadcast %c1_i32_246 : i32 to vector<18x8xi32>
    %408 = arith.addi %406, %407 : vector<18x8xi32>
    %c1_i32_247 = arith.constant 1 : i32
    %409 = vector.broadcast %c1_i32_247 : i32 to vector<18x8xi32>
    %410 = arith.addi %408, %409 : vector<18x8xi32>
    %411 = arith.cmpi eq, %379, %410 : vector<18x8xi32>
    %412 = arith.extui %411 : vector<18x8xi1> to vector<18x8xi32>
    %413 = arith.sitofp %412 : vector<18x8xi32> to vector<18x8xf32>
    %cst_248 = arith.constant dense<0.000000e+00> : vector<18x128xf32>
    %414 = tpu.matmul %413, %404, %cst_248 {dimension_numbers = #tpu.dot_dimension_numbers<[1], [0], [0], [1], [0, 0, 1, 1], [], []>} : vector<18x8xf32>, vector<8x128xf32>, vector<18x128xf32> -> vector<18x128xf32>
    %415 = arith.addf %398, %414 : vector<18x128xf32>
    %cst_249 = arith.constant 0.000000e+00 : f32
    %416 = vector.broadcast %cst_249 : f32 to vector<18x128xf32>
    %417 = vector.broadcast %377 : vector<1x128xf32> to vector<8x128xf32>
    %418 = arith.mulf %305, %417 : vector<8x128xf32>
    %419 = vector.broadcast %378 : vector<1x128xf32> to vector<8x128xf32>
    %420 = arith.addf %418, %419 : vector<8x128xf32>
    %cst_250 = arith.constant 0.000000e+00 : f32
    %421 = vector.broadcast %cst_250 : f32 to vector<8x128xf32>
    %422 = arith.maximumf %420, %421 : vector<8x128xf32>
    %c2_i32_251 = arith.constant 2 : i32
    %423 = vector.broadcast %c2_i32_251 : i32 to vector<18x8xi32>
    %424 = arith.muli %423, %380 : vector<18x8xi32>
    %c0_i32_252 = arith.constant 0 : i32
    %425 = vector.broadcast %c0_i32_252 : i32 to vector<18x8xi32>
    %426 = arith.addi %424, %425 : vector<18x8xi32>
    %c1_i32_253 = arith.constant 1 : i32
    %427 = vector.broadcast %c1_i32_253 : i32 to vector<18x8xi32>
    %428 = arith.addi %426, %427 : vector<18x8xi32>
    %429 = arith.cmpi eq, %379, %428 : vector<18x8xi32>
    %430 = arith.extui %429 : vector<18x8xi1> to vector<18x8xi32>
    %431 = arith.sitofp %430 : vector<18x8xi32> to vector<18x8xf32>
    %cst_254 = arith.constant dense<0.000000e+00> : vector<18x128xf32>
    %432 = tpu.matmul %431, %422, %cst_254 {dimension_numbers = #tpu.dot_dimension_numbers<[1], [0], [0], [1], [0, 0, 1, 1], [], []>} : vector<18x8xf32>, vector<8x128xf32>, vector<18x128xf32> -> vector<18x128xf32>
    %433 = arith.addf %416, %432 : vector<18x128xf32>
    %434 = vector.broadcast %377 : vector<1x128xf32> to vector<8x128xf32>
    %435 = arith.mulf %316, %434 : vector<8x128xf32>
    %436 = vector.broadcast %378 : vector<1x128xf32> to vector<8x128xf32>
    %437 = arith.addf %435, %436 : vector<8x128xf32>
    %cst_255 = arith.constant 0.000000e+00 : f32
    %438 = vector.broadcast %cst_255 : f32 to vector<8x128xf32>
    %439 = arith.maximumf %437, %438 : vector<8x128xf32>
    %c2_i32_256 = arith.constant 2 : i32
    %440 = vector.broadcast %c2_i32_256 : i32 to vector<18x8xi32>
    %441 = arith.muli %440, %380 : vector<18x8xi32>
    %c1_i32_257 = arith.constant 1 : i32
    %442 = vector.broadcast %c1_i32_257 : i32 to vector<18x8xi32>
    %443 = arith.addi %441, %442 : vector<18x8xi32>
    %c1_i32_258 = arith.constant 1 : i32
    %444 = vector.broadcast %c1_i32_258 : i32 to vector<18x8xi32>
    %445 = arith.addi %443, %444 : vector<18x8xi32>
    %446 = arith.cmpi eq, %379, %445 : vector<18x8xi32>
    %447 = arith.extui %446 : vector<18x8xi1> to vector<18x8xi32>
    %448 = arith.sitofp %447 : vector<18x8xi32> to vector<18x8xf32>
    %cst_259 = arith.constant dense<0.000000e+00> : vector<18x128xf32>
    %449 = tpu.matmul %448, %439, %cst_259 {dimension_numbers = #tpu.dot_dimension_numbers<[1], [0], [0], [1], [0, 0, 1, 1], [], []>} : vector<18x8xf32>, vector<8x128xf32>, vector<18x128xf32> -> vector<18x128xf32>
    %450 = arith.addf %433, %449 : vector<18x128xf32>
    %cst_260 = arith.constant 0.000000e+00 : f32
    %451 = vector.broadcast %cst_260 : f32 to vector<16x256xf32>
    %452 = vector.extract_strided_slice %415 {offsets = [0, 0], sizes = [16, 128], strides = [1, 1]} : vector<18x128xf32> to vector<16x128xf32>
    %c0_261 = arith.constant 0 : index
    %c0_262 = arith.constant 0 : index
    %c0_263 = arith.constant 0 : index
    %c0_264 = arith.constant 0 : index
    %453 = vector.load %arg10[%c0_261, %c0_262, %c0_263, %c0_264] : memref<2x3x128x256xf32, #tpu.memory_space<vmem>>, vector<1x1x128x256xf32>
    %454 = vector.shape_cast %453 : vector<1x1x128x256xf32> to vector<128x256xf32>
    %cst_265 = arith.constant dense<0.000000e+00> : vector<16x256xf32>
    %455 = tpu.matmul %452, %454, %cst_265 {dimension_numbers = #tpu.dot_dimension_numbers<[1], [0], [0], [1], [0, 0, 1, 1], [], []>} : vector<16x128xf32>, vector<128x256xf32>, vector<16x256xf32> -> vector<16x256xf32>
    %456 = arith.addf %451, %455 : vector<16x256xf32>
    %457 = vector.extract_strided_slice %415 {offsets = [1, 0], sizes = [16, 128], strides = [1, 1]} : vector<18x128xf32> to vector<16x128xf32>
    %c0_266 = arith.constant 0 : index
    %c1_267 = arith.constant 1 : index
    %c0_268 = arith.constant 0 : index
    %c0_269 = arith.constant 0 : index
    %458 = vector.load %arg10[%c0_266, %c1_267, %c0_268, %c0_269] : memref<2x3x128x256xf32, #tpu.memory_space<vmem>>, vector<1x1x128x256xf32>
    %459 = vector.shape_cast %458 : vector<1x1x128x256xf32> to vector<128x256xf32>
    %cst_270 = arith.constant dense<0.000000e+00> : vector<16x256xf32>
    %460 = tpu.matmul %457, %459, %cst_270 {dimension_numbers = #tpu.dot_dimension_numbers<[1], [0], [0], [1], [0, 0, 1, 1], [], []>} : vector<16x128xf32>, vector<128x256xf32>, vector<16x256xf32> -> vector<16x256xf32>
    %461 = arith.addf %456, %460 : vector<16x256xf32>
    %462 = vector.extract_strided_slice %415 {offsets = [2, 0], sizes = [16, 128], strides = [1, 1]} : vector<18x128xf32> to vector<16x128xf32>
    %c0_271 = arith.constant 0 : index
    %c2_272 = arith.constant 2 : index
    %c0_273 = arith.constant 0 : index
    %c0_274 = arith.constant 0 : index
    %463 = vector.load %arg10[%c0_271, %c2_272, %c0_273, %c0_274] : memref<2x3x128x256xf32, #tpu.memory_space<vmem>>, vector<1x1x128x256xf32>
    %464 = vector.shape_cast %463 : vector<1x1x128x256xf32> to vector<128x256xf32>
    %cst_275 = arith.constant dense<0.000000e+00> : vector<16x256xf32>
    %465 = tpu.matmul %462, %464, %cst_275 {dimension_numbers = #tpu.dot_dimension_numbers<[1], [0], [0], [1], [0, 0, 1, 1], [], []>} : vector<16x128xf32>, vector<128x256xf32>, vector<16x256xf32> -> vector<16x256xf32>
    %466 = arith.addf %461, %465 : vector<16x256xf32>
    %cst_276 = arith.constant 0.000000e+00 : f32
    %467 = vector.broadcast %cst_276 : f32 to vector<16x256xf32>
    %468 = vector.extract_strided_slice %415 {offsets = [1, 0], sizes = [16, 128], strides = [1, 1]} : vector<18x128xf32> to vector<16x128xf32>
    %c1_277 = arith.constant 1 : index
    %c1_278 = arith.constant 1 : index
    %c0_279 = arith.constant 0 : index
    %c0_280 = arith.constant 0 : index
    %469 = vector.load %arg10[%c1_277, %c1_278, %c0_279, %c0_280] : memref<2x3x128x256xf32, #tpu.memory_space<vmem>>, vector<1x1x128x256xf32>
    %470 = vector.shape_cast %469 : vector<1x1x128x256xf32> to vector<128x256xf32>
    %cst_281 = arith.constant dense<0.000000e+00> : vector<16x256xf32>
    %471 = tpu.matmul %468, %470, %cst_281 {dimension_numbers = #tpu.dot_dimension_numbers<[1], [0], [0], [1], [0, 0, 1, 1], [], []>} : vector<16x128xf32>, vector<128x256xf32>, vector<16x256xf32> -> vector<16x256xf32>
    %472 = arith.addf %467, %471 : vector<16x256xf32>
    %473 = vector.extract_strided_slice %415 {offsets = [2, 0], sizes = [16, 128], strides = [1, 1]} : vector<18x128xf32> to vector<16x128xf32>
    %c1_282 = arith.constant 1 : index
    %c2_283 = arith.constant 2 : index
    %c0_284 = arith.constant 0 : index
    %c0_285 = arith.constant 0 : index
    %474 = vector.load %arg10[%c1_282, %c2_283, %c0_284, %c0_285] : memref<2x3x128x256xf32, #tpu.memory_space<vmem>>, vector<1x1x128x256xf32>
    %475 = vector.shape_cast %474 : vector<1x1x128x256xf32> to vector<128x256xf32>
    %cst_286 = arith.constant dense<0.000000e+00> : vector<16x256xf32>
    %476 = tpu.matmul %473, %475, %cst_286 {dimension_numbers = #tpu.dot_dimension_numbers<[1], [0], [0], [1], [0, 0, 1, 1], [], []>} : vector<16x128xf32>, vector<128x256xf32>, vector<16x256xf32> -> vector<16x256xf32>
    %477 = arith.addf %472, %476 : vector<16x256xf32>
    %cst_287 = arith.constant 0.000000e+00 : f32
    %478 = vector.broadcast %cst_287 : f32 to vector<16x256xf32>
    %479 = vector.extract_strided_slice %450 {offsets = [0, 0], sizes = [16, 128], strides = [1, 1]} : vector<18x128xf32> to vector<16x128xf32>
    %c0_288 = arith.constant 0 : index
    %c0_289 = arith.constant 0 : index
    %c0_290 = arith.constant 0 : index
    %c0_291 = arith.constant 0 : index
    %480 = vector.load %arg10[%c0_288, %c0_289, %c0_290, %c0_291] : memref<2x3x128x256xf32, #tpu.memory_space<vmem>>, vector<1x1x128x256xf32>
    %481 = vector.shape_cast %480 : vector<1x1x128x256xf32> to vector<128x256xf32>
    %cst_292 = arith.constant dense<0.000000e+00> : vector<16x256xf32>
    %482 = tpu.matmul %479, %481, %cst_292 {dimension_numbers = #tpu.dot_dimension_numbers<[1], [0], [0], [1], [0, 0, 1, 1], [], []>} : vector<16x128xf32>, vector<128x256xf32>, vector<16x256xf32> -> vector<16x256xf32>
    %483 = arith.addf %478, %482 : vector<16x256xf32>
    %484 = vector.extract_strided_slice %450 {offsets = [1, 0], sizes = [16, 128], strides = [1, 1]} : vector<18x128xf32> to vector<16x128xf32>
    %c0_293 = arith.constant 0 : index
    %c1_294 = arith.constant 1 : index
    %c0_295 = arith.constant 0 : index
    %c0_296 = arith.constant 0 : index
    %485 = vector.load %arg10[%c0_293, %c1_294, %c0_295, %c0_296] : memref<2x3x128x256xf32, #tpu.memory_space<vmem>>, vector<1x1x128x256xf32>
    %486 = vector.shape_cast %485 : vector<1x1x128x256xf32> to vector<128x256xf32>
    %cst_297 = arith.constant dense<0.000000e+00> : vector<16x256xf32>
    %487 = tpu.matmul %484, %486, %cst_297 {dimension_numbers = #tpu.dot_dimension_numbers<[1], [0], [0], [1], [0, 0, 1, 1], [], []>} : vector<16x128xf32>, vector<128x256xf32>, vector<16x256xf32> -> vector<16x256xf32>
    %488 = arith.addf %483, %487 : vector<16x256xf32>
    %489 = vector.extract_strided_slice %450 {offsets = [2, 0], sizes = [16, 128], strides = [1, 1]} : vector<18x128xf32> to vector<16x128xf32>
    %c0_298 = arith.constant 0 : index
    %c2_299 = arith.constant 2 : index
    %c0_300 = arith.constant 0 : index
    %c0_301 = arith.constant 0 : index
    %490 = vector.load %arg10[%c0_298, %c2_299, %c0_300, %c0_301] : memref<2x3x128x256xf32, #tpu.memory_space<vmem>>, vector<1x1x128x256xf32>
    %491 = vector.shape_cast %490 : vector<1x1x128x256xf32> to vector<128x256xf32>
    %cst_302 = arith.constant dense<0.000000e+00> : vector<16x256xf32>
    %492 = tpu.matmul %489, %491, %cst_302 {dimension_numbers = #tpu.dot_dimension_numbers<[1], [0], [0], [1], [0, 0, 1, 1], [], []>} : vector<16x128xf32>, vector<128x256xf32>, vector<16x256xf32> -> vector<16x256xf32>
    %493 = arith.addf %488, %492 : vector<16x256xf32>
    %cst_303 = arith.constant 0.000000e+00 : f32
    %494 = vector.broadcast %cst_303 : f32 to vector<16x256xf32>
    %495 = vector.extract_strided_slice %450 {offsets = [1, 0], sizes = [16, 128], strides = [1, 1]} : vector<18x128xf32> to vector<16x128xf32>
    %c1_304 = arith.constant 1 : index
    %c1_305 = arith.constant 1 : index
    %c0_306 = arith.constant 0 : index
    %c0_307 = arith.constant 0 : index
    %496 = vector.load %arg10[%c1_304, %c1_305, %c0_306, %c0_307] : memref<2x3x128x256xf32, #tpu.memory_space<vmem>>, vector<1x1x128x256xf32>
    %497 = vector.shape_cast %496 : vector<1x1x128x256xf32> to vector<128x256xf32>
    %cst_308 = arith.constant dense<0.000000e+00> : vector<16x256xf32>
    %498 = tpu.matmul %495, %497, %cst_308 {dimension_numbers = #tpu.dot_dimension_numbers<[1], [0], [0], [1], [0, 0, 1, 1], [], []>} : vector<16x128xf32>, vector<128x256xf32>, vector<16x256xf32> -> vector<16x256xf32>
    %499 = arith.addf %494, %498 : vector<16x256xf32>
    %500 = vector.extract_strided_slice %450 {offsets = [2, 0], sizes = [16, 128], strides = [1, 1]} : vector<18x128xf32> to vector<16x128xf32>
    %c1_309 = arith.constant 1 : index
    %c2_310 = arith.constant 2 : index
    %c0_311 = arith.constant 0 : index
    %c0_312 = arith.constant 0 : index
    %501 = vector.load %arg10[%c1_309, %c2_310, %c0_311, %c0_312] : memref<2x3x128x256xf32, #tpu.memory_space<vmem>>, vector<1x1x128x256xf32>
    %502 = vector.shape_cast %501 : vector<1x1x128x256xf32> to vector<128x256xf32>
    %cst_313 = arith.constant dense<0.000000e+00> : vector<16x256xf32>
    %503 = tpu.matmul %500, %502, %cst_313 {dimension_numbers = #tpu.dot_dimension_numbers<[1], [0], [0], [1], [0, 0, 1, 1], [], []>} : vector<16x128xf32>, vector<128x256xf32>, vector<16x256xf32> -> vector<16x256xf32>
    %504 = arith.addf %499, %503 : vector<16x256xf32>
    %cst_314 = arith.constant 0.000000e+00 : f32
    %505 = vector.broadcast %cst_314 : f32 to vector<1x256xf32>
    %cst_315 = arith.constant 0.000000e+00 : f32
    %506 = vector.broadcast %cst_315 : f32 to vector<1x256xf32>
    %cst_316 = arith.constant dense<0.000000e+00> : vector<256xf32>
    %507 = vector.multi_reduction <add>, %466, %cst_316 [0] : vector<16x256xf32> to vector<256xf32>
    %508 = vector.shape_cast %507 : vector<256xf32> to vector<1x256xf32>
    %509 = arith.addf %505, %508 : vector<1x256xf32>
    %510 = arith.mulf %466, %466 : vector<16x256xf32>
    %cst_317 = arith.constant dense<0.000000e+00> : vector<256xf32>
    %511 = vector.multi_reduction <add>, %510, %cst_317 [0] : vector<16x256xf32> to vector<256xf32>
    %512 = vector.shape_cast %511 : vector<256xf32> to vector<1x256xf32>
    %513 = arith.addf %506, %512 : vector<1x256xf32>
    %cst_318 = arith.constant dense<0.000000e+00> : vector<256xf32>
    %514 = vector.multi_reduction <add>, %477, %cst_318 [0] : vector<16x256xf32> to vector<256xf32>
    %515 = vector.shape_cast %514 : vector<256xf32> to vector<1x256xf32>
    %516 = arith.addf %509, %515 : vector<1x256xf32>
    %517 = arith.mulf %477, %477 : vector<16x256xf32>
    %cst_319 = arith.constant dense<0.000000e+00> : vector<256xf32>
    %518 = vector.multi_reduction <add>, %517, %cst_319 [0] : vector<16x256xf32> to vector<256xf32>
    %519 = vector.shape_cast %518 : vector<256xf32> to vector<1x256xf32>
    %520 = arith.addf %513, %519 : vector<1x256xf32>
    %cst_320 = arith.constant dense<0.000000e+00> : vector<256xf32>
    %521 = vector.multi_reduction <add>, %493, %cst_320 [0] : vector<16x256xf32> to vector<256xf32>
    %522 = vector.shape_cast %521 : vector<256xf32> to vector<1x256xf32>
    %523 = arith.addf %516, %522 : vector<1x256xf32>
    %524 = arith.mulf %493, %493 : vector<16x256xf32>
    %cst_321 = arith.constant dense<0.000000e+00> : vector<256xf32>
    %525 = vector.multi_reduction <add>, %524, %cst_321 [0] : vector<16x256xf32> to vector<256xf32>
    %526 = vector.shape_cast %525 : vector<256xf32> to vector<1x256xf32>
    %527 = arith.addf %520, %526 : vector<1x256xf32>
    %cst_322 = arith.constant dense<0.000000e+00> : vector<256xf32>
    %528 = vector.multi_reduction <add>, %504, %cst_322 [0] : vector<16x256xf32> to vector<256xf32>
    %529 = vector.shape_cast %528 : vector<256xf32> to vector<1x256xf32>
    %530 = arith.addf %523, %529 : vector<1x256xf32>
    %531 = arith.mulf %504, %504 : vector<16x256xf32>
    %cst_323 = arith.constant dense<0.000000e+00> : vector<256xf32>
    %532 = vector.multi_reduction <add>, %531, %cst_323 [0] : vector<16x256xf32> to vector<256xf32>
    %533 = vector.shape_cast %532 : vector<256xf32> to vector<1x256xf32>
    %534 = arith.addf %527, %533 : vector<1x256xf32>
    %535 = tpu.iota {dimensions = array<i32: 0>} : vector<256x8xi32>
    %c7_i32_324 = arith.constant 7 : i32
    %536 = vector.broadcast %c7_i32_324 : i32 to vector<256x8xi32>
    %537 = arith.andi %535, %536 : vector<256x8xi32>
    %538 = tpu.iota {dimensions = array<i32: 1>} : vector<256x8xi32>
    %539 = arith.cmpi eq, %537, %538 : vector<256x8xi32>
    %540 = arith.extui %539 : vector<256x8xi1> to vector<256x8xi32>
    %541 = arith.sitofp %540 : vector<256x8xi32> to vector<256x8xf32>
    %542 = tpu.iota {dimensions = array<i32: 1>} : vector<8x256xi32>
    %c7_i32_325 = arith.constant 7 : i32
    %543 = vector.broadcast %c7_i32_325 : i32 to vector<8x256xi32>
    %544 = arith.andi %542, %543 : vector<8x256xi32>
    %545 = tpu.iota {dimensions = array<i32: 0>} : vector<8x256xi32>
    %546 = arith.cmpi eq, %544, %545 : vector<8x256xi32>
    %547 = arith.extui %546 : vector<8x256xi1> to vector<8x256xi32>
    %548 = arith.sitofp %547 : vector<8x256xi32> to vector<8x256xf32>
    %cst_326 = arith.constant dense<0.000000e+00> : vector<1x8xf32>
    %549 = tpu.matmul %530, %541, %cst_326 {dimension_numbers = #tpu.dot_dimension_numbers<[1], [0], [0], [1], [0, 0, 1, 1], [], []>} : vector<1x256xf32>, vector<256x8xf32>, vector<1x8xf32> -> vector<1x8xf32>
    %cst_327 = arith.constant 2.048000e+03 : f32
    %550 = vector.broadcast %cst_327 : f32 to vector<1x8xf32>
    %551 = arith.divf %549, %550 : vector<1x8xf32>
    %cst_328 = arith.constant dense<0.000000e+00> : vector<1x8xf32>
    %552 = tpu.matmul %534, %541, %cst_328 {dimension_numbers = #tpu.dot_dimension_numbers<[1], [0], [0], [1], [0, 0, 1, 1], [], []>} : vector<1x256xf32>, vector<256x8xf32>, vector<1x8xf32> -> vector<1x8xf32>
    %cst_329 = arith.constant 2.048000e+03 : f32
    %553 = vector.broadcast %cst_329 : f32 to vector<1x8xf32>
    %554 = arith.divf %552, %553 : vector<1x8xf32>
    %555 = arith.mulf %551, %551 : vector<1x8xf32>
    %556 = arith.subf %554, %555 : vector<1x8xf32>
    %c0_330 = arith.constant 0 : index
    %c0_331 = arith.constant 0 : index
    %557 = vector.load %arg11[%c0_330, %c0_331] : memref<1x8xf32, #tpu.memory_space<vmem>>, vector<1x8xf32>
    %cst_332 = arith.constant 9.99999974E-6 : f32
    %558 = vector.broadcast %cst_332 : f32 to vector<1x8xf32>
    %559 = arith.addf %556, %558 : vector<1x8xf32>
    %560 = math.rsqrt %559 : vector<1x8xf32>
    %561 = arith.mulf %557, %560 : vector<1x8xf32>
    %c0_333 = arith.constant 0 : index
    %c0_334 = arith.constant 0 : index
    %562 = vector.load %arg12[%c0_333, %c0_334] : memref<1x8xf32, #tpu.memory_space<vmem>>, vector<1x8xf32>
    %563 = arith.mulf %551, %561 : vector<1x8xf32>
    %564 = arith.subf %562, %563 : vector<1x8xf32>
    %cst_335 = arith.constant dense<0.000000e+00> : vector<1x256xf32>
    %565 = tpu.matmul %561, %548, %cst_335 {dimension_numbers = #tpu.dot_dimension_numbers<[1], [0], [0], [1], [0, 0, 1, 1], [], []>} : vector<1x8xf32>, vector<8x256xf32>, vector<1x256xf32> -> vector<1x256xf32>
    %cst_336 = arith.constant dense<0.000000e+00> : vector<1x256xf32>
    %566 = tpu.matmul %564, %548, %cst_336 {dimension_numbers = #tpu.dot_dimension_numbers<[1], [0], [0], [1], [0, 0, 1, 1], [], []>} : vector<1x8xf32>, vector<8x256xf32>, vector<1x256xf32> -> vector<1x256xf32>
    %567 = tpu.iota {dimensions = array<i32: 0>} : vector<36x16xi32>
    %568 = tpu.iota {dimensions = array<i32: 1>} : vector<36x16xi32>
    %cst_337 = arith.constant 0.000000e+00 : f32
    %569 = vector.broadcast %cst_337 : f32 to vector<36x256xf32>
    %570 = vector.broadcast %565 : vector<1x256xf32> to vector<16x256xf32>
    %571 = arith.mulf %466, %570 : vector<16x256xf32>
    %572 = vector.broadcast %566 : vector<1x256xf32> to vector<16x256xf32>
    %573 = arith.addf %571, %572 : vector<16x256xf32>
    %cst_338 = arith.constant 0.000000e+00 : f32
    %574 = vector.broadcast %cst_338 : f32 to vector<16x256xf32>
    %575 = arith.maximumf %573, %574 : vector<16x256xf32>
    %c2_i32_339 = arith.constant 2 : i32
    %576 = vector.broadcast %c2_i32_339 : i32 to vector<36x16xi32>
    %577 = arith.muli %576, %568 : vector<36x16xi32>
    %c0_i32_340 = arith.constant 0 : i32
    %578 = vector.broadcast %c0_i32_340 : i32 to vector<36x16xi32>
    %579 = arith.addi %577, %578 : vector<36x16xi32>
    %c2_i32_341 = arith.constant 2 : i32
    %580 = vector.broadcast %c2_i32_341 : i32 to vector<36x16xi32>
    %581 = arith.addi %579, %580 : vector<36x16xi32>
    %582 = arith.cmpi eq, %567, %581 : vector<36x16xi32>
    %583 = arith.extui %582 : vector<36x16xi1> to vector<36x16xi32>
    %584 = arith.sitofp %583 : vector<36x16xi32> to vector<36x16xf32>
    %cst_342 = arith.constant dense<0.000000e+00> : vector<36x256xf32>
    %585 = tpu.matmul %584, %575, %cst_342 {dimension_numbers = #tpu.dot_dimension_numbers<[1], [0], [0], [1], [0, 0, 1, 1], [], []>} : vector<36x16xf32>, vector<16x256xf32>, vector<36x256xf32> -> vector<36x256xf32>
    %586 = arith.addf %569, %585 : vector<36x256xf32>
    %587 = vector.broadcast %565 : vector<1x256xf32> to vector<16x256xf32>
    %588 = arith.mulf %477, %587 : vector<16x256xf32>
    %589 = vector.broadcast %566 : vector<1x256xf32> to vector<16x256xf32>
    %590 = arith.addf %588, %589 : vector<16x256xf32>
    %cst_343 = arith.constant 0.000000e+00 : f32
    %591 = vector.broadcast %cst_343 : f32 to vector<16x256xf32>
    %592 = arith.maximumf %590, %591 : vector<16x256xf32>
    %c2_i32_344 = arith.constant 2 : i32
    %593 = vector.broadcast %c2_i32_344 : i32 to vector<36x16xi32>
    %594 = arith.muli %593, %568 : vector<36x16xi32>
    %c1_i32_345 = arith.constant 1 : i32
    %595 = vector.broadcast %c1_i32_345 : i32 to vector<36x16xi32>
    %596 = arith.addi %594, %595 : vector<36x16xi32>
    %c2_i32_346 = arith.constant 2 : i32
    %597 = vector.broadcast %c2_i32_346 : i32 to vector<36x16xi32>
    %598 = arith.addi %596, %597 : vector<36x16xi32>
    %599 = arith.cmpi eq, %567, %598 : vector<36x16xi32>
    %600 = arith.extui %599 : vector<36x16xi1> to vector<36x16xi32>
    %601 = arith.sitofp %600 : vector<36x16xi32> to vector<36x16xf32>
    %cst_347 = arith.constant dense<0.000000e+00> : vector<36x256xf32>
    %602 = tpu.matmul %601, %592, %cst_347 {dimension_numbers = #tpu.dot_dimension_numbers<[1], [0], [0], [1], [0, 0, 1, 1], [], []>} : vector<36x16xf32>, vector<16x256xf32>, vector<36x256xf32> -> vector<36x256xf32>
    %603 = arith.addf %586, %602 : vector<36x256xf32>
    %cst_348 = arith.constant 0.000000e+00 : f32
    %604 = vector.broadcast %cst_348 : f32 to vector<36x256xf32>
    %605 = vector.broadcast %565 : vector<1x256xf32> to vector<16x256xf32>
    %606 = arith.mulf %493, %605 : vector<16x256xf32>
    %607 = vector.broadcast %566 : vector<1x256xf32> to vector<16x256xf32>
    %608 = arith.addf %606, %607 : vector<16x256xf32>
    %cst_349 = arith.constant 0.000000e+00 : f32
    %609 = vector.broadcast %cst_349 : f32 to vector<16x256xf32>
    %610 = arith.maximumf %608, %609 : vector<16x256xf32>
    %c2_i32_350 = arith.constant 2 : i32
    %611 = vector.broadcast %c2_i32_350 : i32 to vector<36x16xi32>
    %612 = arith.muli %611, %568 : vector<36x16xi32>
    %c0_i32_351 = arith.constant 0 : i32
    %613 = vector.broadcast %c0_i32_351 : i32 to vector<36x16xi32>
    %614 = arith.addi %612, %613 : vector<36x16xi32>
    %c2_i32_352 = arith.constant 2 : i32
    %615 = vector.broadcast %c2_i32_352 : i32 to vector<36x16xi32>
    %616 = arith.addi %614, %615 : vector<36x16xi32>
    %617 = arith.cmpi eq, %567, %616 : vector<36x16xi32>
    %618 = arith.extui %617 : vector<36x16xi1> to vector<36x16xi32>
    %619 = arith.sitofp %618 : vector<36x16xi32> to vector<36x16xf32>
    %cst_353 = arith.constant dense<0.000000e+00> : vector<36x256xf32>
    %620 = tpu.matmul %619, %610, %cst_353 {dimension_numbers = #tpu.dot_dimension_numbers<[1], [0], [0], [1], [0, 0, 1, 1], [], []>} : vector<36x16xf32>, vector<16x256xf32>, vector<36x256xf32> -> vector<36x256xf32>
    %621 = arith.addf %604, %620 : vector<36x256xf32>
    %622 = vector.broadcast %565 : vector<1x256xf32> to vector<16x256xf32>
    %623 = arith.mulf %504, %622 : vector<16x256xf32>
    %624 = vector.broadcast %566 : vector<1x256xf32> to vector<16x256xf32>
    %625 = arith.addf %623, %624 : vector<16x256xf32>
    %cst_354 = arith.constant 0.000000e+00 : f32
    %626 = vector.broadcast %cst_354 : f32 to vector<16x256xf32>
    %627 = arith.maximumf %625, %626 : vector<16x256xf32>
    %c2_i32_355 = arith.constant 2 : i32
    %628 = vector.broadcast %c2_i32_355 : i32 to vector<36x16xi32>
    %629 = arith.muli %628, %568 : vector<36x16xi32>
    %c1_i32_356 = arith.constant 1 : i32
    %630 = vector.broadcast %c1_i32_356 : i32 to vector<36x16xi32>
    %631 = arith.addi %629, %630 : vector<36x16xi32>
    %c2_i32_357 = arith.constant 2 : i32
    %632 = vector.broadcast %c2_i32_357 : i32 to vector<36x16xi32>
    %633 = arith.addi %631, %632 : vector<36x16xi32>
    %634 = arith.cmpi eq, %567, %633 : vector<36x16xi32>
    %635 = arith.extui %634 : vector<36x16xi1> to vector<36x16xi32>
    %636 = arith.sitofp %635 : vector<36x16xi32> to vector<36x16xf32>
    %cst_358 = arith.constant dense<0.000000e+00> : vector<36x256xf32>
    %637 = tpu.matmul %636, %627, %cst_358 {dimension_numbers = #tpu.dot_dimension_numbers<[1], [0], [0], [1], [0, 0, 1, 1], [], []>} : vector<36x16xf32>, vector<16x256xf32>, vector<36x256xf32> -> vector<36x256xf32>
    %638 = arith.addf %621, %637 : vector<36x256xf32>
    %cst_359 = arith.constant 0.000000e+00 : f32
    %639 = vector.broadcast %cst_359 : f32 to vector<32x96xf32>
    %640 = vector.extract_strided_slice %603 {offsets = [0, 0], sizes = [32, 256], strides = [1, 1]} : vector<36x256xf32> to vector<32x256xf32>
    %c0_360 = arith.constant 0 : index
    %c0_361 = arith.constant 0 : index
    %c0_362 = arith.constant 0 : index
    %641 = vector.load %arg13[%c0_360, %c0_361, %c0_362] : memref<5x256x96xf32, #tpu.memory_space<vmem>>, vector<1x256x96xf32>
    %642 = vector.shape_cast %641 : vector<1x256x96xf32> to vector<256x96xf32>
    %cst_363 = arith.constant dense<0.000000e+00> : vector<32x96xf32>
    %643 = tpu.matmul %640, %642, %cst_363 {dimension_numbers = #tpu.dot_dimension_numbers<[1], [0], [0], [1], [0, 0, 1, 1], [], []>} : vector<32x256xf32>, vector<256x96xf32>, vector<32x96xf32> -> vector<32x96xf32>
    %644 = arith.addf %639, %643 : vector<32x96xf32>
    %645 = vector.extract_strided_slice %603 {offsets = [1, 0], sizes = [32, 256], strides = [1, 1]} : vector<36x256xf32> to vector<32x256xf32>
    %c1_364 = arith.constant 1 : index
    %c0_365 = arith.constant 0 : index
    %c0_366 = arith.constant 0 : index
    %646 = vector.load %arg13[%c1_364, %c0_365, %c0_366] : memref<5x256x96xf32, #tpu.memory_space<vmem>>, vector<1x256x96xf32>
    %647 = vector.shape_cast %646 : vector<1x256x96xf32> to vector<256x96xf32>
    %cst_367 = arith.constant dense<0.000000e+00> : vector<32x96xf32>
    %648 = tpu.matmul %645, %647, %cst_367 {dimension_numbers = #tpu.dot_dimension_numbers<[1], [0], [0], [1], [0, 0, 1, 1], [], []>} : vector<32x256xf32>, vector<256x96xf32>, vector<32x96xf32> -> vector<32x96xf32>
    %649 = arith.addf %644, %648 : vector<32x96xf32>
    %650 = vector.extract_strided_slice %603 {offsets = [2, 0], sizes = [32, 256], strides = [1, 1]} : vector<36x256xf32> to vector<32x256xf32>
    %c2_368 = arith.constant 2 : index
    %c0_369 = arith.constant 0 : index
    %c0_370 = arith.constant 0 : index
    %651 = vector.load %arg13[%c2_368, %c0_369, %c0_370] : memref<5x256x96xf32, #tpu.memory_space<vmem>>, vector<1x256x96xf32>
    %652 = vector.shape_cast %651 : vector<1x256x96xf32> to vector<256x96xf32>
    %cst_371 = arith.constant dense<0.000000e+00> : vector<32x96xf32>
    %653 = tpu.matmul %650, %652, %cst_371 {dimension_numbers = #tpu.dot_dimension_numbers<[1], [0], [0], [1], [0, 0, 1, 1], [], []>} : vector<32x256xf32>, vector<256x96xf32>, vector<32x96xf32> -> vector<32x96xf32>
    %654 = arith.addf %649, %653 : vector<32x96xf32>
    %655 = vector.extract_strided_slice %603 {offsets = [3, 0], sizes = [32, 256], strides = [1, 1]} : vector<36x256xf32> to vector<32x256xf32>
    %c3_372 = arith.constant 3 : index
    %c0_373 = arith.constant 0 : index
    %c0_374 = arith.constant 0 : index
    %656 = vector.load %arg13[%c3_372, %c0_373, %c0_374] : memref<5x256x96xf32, #tpu.memory_space<vmem>>, vector<1x256x96xf32>
    %657 = vector.shape_cast %656 : vector<1x256x96xf32> to vector<256x96xf32>
    %cst_375 = arith.constant dense<0.000000e+00> : vector<32x96xf32>
    %658 = tpu.matmul %655, %657, %cst_375 {dimension_numbers = #tpu.dot_dimension_numbers<[1], [0], [0], [1], [0, 0, 1, 1], [], []>} : vector<32x256xf32>, vector<256x96xf32>, vector<32x96xf32> -> vector<32x96xf32>
    %659 = arith.addf %654, %658 : vector<32x96xf32>
    %660 = vector.extract_strided_slice %603 {offsets = [4, 0], sizes = [32, 256], strides = [1, 1]} : vector<36x256xf32> to vector<32x256xf32>
    %c4_376 = arith.constant 4 : index
    %c0_377 = arith.constant 0 : index
    %c0_378 = arith.constant 0 : index
    %661 = vector.load %arg13[%c4_376, %c0_377, %c0_378] : memref<5x256x96xf32, #tpu.memory_space<vmem>>, vector<1x256x96xf32>
    %662 = vector.shape_cast %661 : vector<1x256x96xf32> to vector<256x96xf32>
    %cst_379 = arith.constant dense<0.000000e+00> : vector<32x96xf32>
    %663 = tpu.matmul %660, %662, %cst_379 {dimension_numbers = #tpu.dot_dimension_numbers<[1], [0], [0], [1], [0, 0, 1, 1], [], []>} : vector<32x256xf32>, vector<256x96xf32>, vector<32x96xf32> -> vector<32x96xf32>
    %664 = arith.addf %659, %663 : vector<32x96xf32>
    %c0_380 = arith.constant 0 : index
    %c0_381 = arith.constant 0 : index
    %665 = vector.load %arg14[%c0_380, %c0_381] : memref<1x96xf32, #tpu.memory_space<vmem>>, vector<1x96xf32>
    %666 = vector.broadcast %665 : vector<1x96xf32> to vector<32x96xf32>
    %667 = arith.addf %664, %666 : vector<32x96xf32>
    %668 = math.tanh %667 : vector<32x96xf32>
    %669 = vector.extract_strided_slice %668 {offsets = [0, 0], sizes = [32, 32], strides = [1, 1]} : vector<32x96xf32> to vector<32x32xf32>
    %c0_382 = arith.constant 0 : index
    %c0_383 = arith.constant 0 : index
    %c0_384 = arith.constant 0 : index
    %c0_385 = arith.constant 0 : index
    %670 = vector.load %arg15[%c0_382, %c0_383, %c0_384, %c0_385] : memref<2x3x32x32xf32, #tpu.memory_space<vmem>>, vector<1x1x32x32xf32>
    %671 = vector.shape_cast %670 : vector<1x1x32x32xf32> to vector<32x32xf32>
    %672 = vector.shape_cast %669 : vector<32x32xf32> to vector<1x1x32x32xf32>
    tpu.vector_store %arg15[%c0_382, %c0_383, %c0_384, %c0_385], %672 {strides = array<i32>} : memref<2x3x32x32xf32, #tpu.memory_space<vmem>>, vector<1x1x32x32xf32>,
    %673 = vector.extract_strided_slice %668 {offsets = [0, 32], sizes = [32, 32], strides = [1, 1]} : vector<32x96xf32> to vector<32x32xf32>
    %c0_386 = arith.constant 0 : index
    %c1_387 = arith.constant 1 : index
    %c0_388 = arith.constant 0 : index
    %c0_389 = arith.constant 0 : index
    %674 = vector.load %arg15[%c0_386, %c1_387, %c0_388, %c0_389] : memref<2x3x32x32xf32, #tpu.memory_space<vmem>>, vector<1x1x32x32xf32>
    %675 = vector.shape_cast %674 : vector<1x1x32x32xf32> to vector<32x32xf32>
    %676 = vector.shape_cast %673 : vector<32x32xf32> to vector<1x1x32x32xf32>
    tpu.vector_store %arg15[%c0_386, %c1_387, %c0_388, %c0_389], %676 {strides = array<i32>} : memref<2x3x32x32xf32, #tpu.memory_space<vmem>>, vector<1x1x32x32xf32>,
    %677 = vector.extract_strided_slice %668 {offsets = [0, 64], sizes = [32, 32], strides = [1, 1]} : vector<32x96xf32> to vector<32x32xf32>
    %c0_390 = arith.constant 0 : index
    %c2_391 = arith.constant 2 : index
    %c0_392 = arith.constant 0 : index
    %c0_393 = arith.constant 0 : index
    %678 = vector.load %arg15[%c0_390, %c2_391, %c0_392, %c0_393] : memref<2x3x32x32xf32, #tpu.memory_space<vmem>>, vector<1x1x32x32xf32>
    %679 = vector.shape_cast %678 : vector<1x1x32x32xf32> to vector<32x32xf32>
    %680 = vector.shape_cast %677 : vector<32x32xf32> to vector<1x1x32x32xf32>
    tpu.vector_store %arg15[%c0_390, %c2_391, %c0_392, %c0_393], %680 {strides = array<i32>} : memref<2x3x32x32xf32, #tpu.memory_space<vmem>>, vector<1x1x32x32xf32>,
    %cst_394 = arith.constant 0.000000e+00 : f32
    %681 = vector.broadcast %cst_394 : f32 to vector<32x96xf32>
    %682 = vector.extract_strided_slice %638 {offsets = [0, 0], sizes = [32, 256], strides = [1, 1]} : vector<36x256xf32> to vector<32x256xf32>
    %c0_395 = arith.constant 0 : index
    %c0_396 = arith.constant 0 : index
    %c0_397 = arith.constant 0 : index
    %683 = vector.load %arg13[%c0_395, %c0_396, %c0_397] : memref<5x256x96xf32, #tpu.memory_space<vmem>>, vector<1x256x96xf32>
    %684 = vector.shape_cast %683 : vector<1x256x96xf32> to vector<256x96xf32>
    %cst_398 = arith.constant dense<0.000000e+00> : vector<32x96xf32>
    %685 = tpu.matmul %682, %684, %cst_398 {dimension_numbers = #tpu.dot_dimension_numbers<[1], [0], [0], [1], [0, 0, 1, 1], [], []>} : vector<32x256xf32>, vector<256x96xf32>, vector<32x96xf32> -> vector<32x96xf32>
    %686 = arith.addf %681, %685 : vector<32x96xf32>
    %687 = vector.extract_strided_slice %638 {offsets = [1, 0], sizes = [32, 256], strides = [1, 1]} : vector<36x256xf32> to vector<32x256xf32>
    %c1_399 = arith.constant 1 : index
    %c0_400 = arith.constant 0 : index
    %c0_401 = arith.constant 0 : index
    %688 = vector.load %arg13[%c1_399, %c0_400, %c0_401] : memref<5x256x96xf32, #tpu.memory_space<vmem>>, vector<1x256x96xf32>
    %689 = vector.shape_cast %688 : vector<1x256x96xf32> to vector<256x96xf32>
    %cst_402 = arith.constant dense<0.000000e+00> : vector<32x96xf32>
    %690 = tpu.matmul %687, %689, %cst_402 {dimension_numbers = #tpu.dot_dimension_numbers<[1], [0], [0], [1], [0, 0, 1, 1], [], []>} : vector<32x256xf32>, vector<256x96xf32>, vector<32x96xf32> -> vector<32x96xf32>
    %691 = arith.addf %686, %690 : vector<32x96xf32>
    %692 = vector.extract_strided_slice %638 {offsets = [2, 0], sizes = [32, 256], strides = [1, 1]} : vector<36x256xf32> to vector<32x256xf32>
    %c2_403 = arith.constant 2 : index
    %c0_404 = arith.constant 0 : index
    %c0_405 = arith.constant 0 : index
    %693 = vector.load %arg13[%c2_403, %c0_404, %c0_405] : memref<5x256x96xf32, #tpu.memory_space<vmem>>, vector<1x256x96xf32>
    %694 = vector.shape_cast %693 : vector<1x256x96xf32> to vector<256x96xf32>
    %cst_406 = arith.constant dense<0.000000e+00> : vector<32x96xf32>
    %695 = tpu.matmul %692, %694, %cst_406 {dimension_numbers = #tpu.dot_dimension_numbers<[1], [0], [0], [1], [0, 0, 1, 1], [], []>} : vector<32x256xf32>, vector<256x96xf32>, vector<32x96xf32> -> vector<32x96xf32>
    %696 = arith.addf %691, %695 : vector<32x96xf32>
    %697 = vector.extract_strided_slice %638 {offsets = [3, 0], sizes = [32, 256], strides = [1, 1]} : vector<36x256xf32> to vector<32x256xf32>
    %c3_407 = arith.constant 3 : index
    %c0_408 = arith.constant 0 : index
    %c0_409 = arith.constant 0 : index
    %698 = vector.load %arg13[%c3_407, %c0_408, %c0_409] : memref<5x256x96xf32, #tpu.memory_space<vmem>>, vector<1x256x96xf32>
    %699 = vector.shape_cast %698 : vector<1x256x96xf32> to vector<256x96xf32>
    %cst_410 = arith.constant dense<0.000000e+00> : vector<32x96xf32>
    %700 = tpu.matmul %697, %699, %cst_410 {dimension_numbers = #tpu.dot_dimension_numbers<[1], [0], [0], [1], [0, 0, 1, 1], [], []>} : vector<32x256xf32>, vector<256x96xf32>, vector<32x96xf32> -> vector<32x96xf32>
    %701 = arith.addf %696, %700 : vector<32x96xf32>
    %702 = vector.extract_strided_slice %638 {offsets = [4, 0], sizes = [32, 256], strides = [1, 1]} : vector<36x256xf32> to vector<32x256xf32>
    %c4_411 = arith.constant 4 : index
    %c0_412 = arith.constant 0 : index
    %c0_413 = arith.constant 0 : index
    %703 = vector.load %arg13[%c4_411, %c0_412, %c0_413] : memref<5x256x96xf32, #tpu.memory_space<vmem>>, vector<1x256x96xf32>
    %704 = vector.shape_cast %703 : vector<1x256x96xf32> to vector<256x96xf32>
    %cst_414 = arith.constant dense<0.000000e+00> : vector<32x96xf32>
    %705 = tpu.matmul %702, %704, %cst_414 {dimension_numbers = #tpu.dot_dimension_numbers<[1], [0], [0], [1], [0, 0, 1, 1], [], []>} : vector<32x256xf32>, vector<256x96xf32>, vector<32x96xf32> -> vector<32x96xf32>
    %706 = arith.addf %701, %705 : vector<32x96xf32>
    %c0_415 = arith.constant 0 : index
    %c0_416 = arith.constant 0 : index
    %707 = vector.load %arg14[%c0_415, %c0_416] : memref<1x96xf32, #tpu.memory_space<vmem>>, vector<1x96xf32>
    %708 = vector.broadcast %707 : vector<1x96xf32> to vector<32x96xf32>
    %709 = arith.addf %706, %708 : vector<32x96xf32>
    %710 = math.tanh %709 : vector<32x96xf32>
    %711 = vector.extract_strided_slice %710 {offsets = [0, 0], sizes = [32, 32], strides = [1, 1]} : vector<32x96xf32> to vector<32x32xf32>
    %c1_417 = arith.constant 1 : index
    %c0_418 = arith.constant 0 : index
    %c0_419 = arith.constant 0 : index
    %c0_420 = arith.constant 0 : index
    %712 = vector.load %arg15[%c1_417, %c0_418, %c0_419, %c0_420] : memref<2x3x32x32xf32, #tpu.memory_space<vmem>>, vector<1x1x32x32xf32>
    %713 = vector.shape_cast %712 : vector<1x1x32x32xf32> to vector<32x32xf32>
    %714 = vector.shape_cast %711 : vector<32x32xf32> to vector<1x1x32x32xf32>
    tpu.vector_store %arg15[%c1_417, %c0_418, %c0_419, %c0_420], %714 {strides = array<i32>} : memref<2x3x32x32xf32, #tpu.memory_space<vmem>>, vector<1x1x32x32xf32>,
    %715 = vector.extract_strided_slice %710 {offsets = [0, 32], sizes = [32, 32], strides = [1, 1]} : vector<32x96xf32> to vector<32x32xf32>
    %c1_421 = arith.constant 1 : index
    %c1_422 = arith.constant 1 : index
    %c0_423 = arith.constant 0 : index
    %c0_424 = arith.constant 0 : index
    %716 = vector.load %arg15[%c1_421, %c1_422, %c0_423, %c0_424] : memref<2x3x32x32xf32, #tpu.memory_space<vmem>>, vector<1x1x32x32xf32>
    %717 = vector.shape_cast %716 : vector<1x1x32x32xf32> to vector<32x32xf32>
    %718 = vector.shape_cast %715 : vector<32x32xf32> to vector<1x1x32x32xf32>
    tpu.vector_store %arg15[%c1_421, %c1_422, %c0_423, %c0_424], %718 {strides = array<i32>} : memref<2x3x32x32xf32, #tpu.memory_space<vmem>>, vector<1x1x32x32xf32>,
    %719 = vector.extract_strided_slice %710 {offsets = [0, 64], sizes = [32, 32], strides = [1, 1]} : vector<32x96xf32> to vector<32x32xf32>
    %c1_425 = arith.constant 1 : index
    %c2_426 = arith.constant 2 : index
    %c0_427 = arith.constant 0 : index
    %c0_428 = arith.constant 0 : index
    %720 = vector.load %arg15[%c1_425, %c2_426, %c0_427, %c0_428] : memref<2x3x32x32xf32, #tpu.memory_space<vmem>>, vector<1x1x32x32xf32>
    %721 = vector.shape_cast %720 : vector<1x1x32x32xf32> to vector<32x32xf32>
    %722 = vector.shape_cast %719 : vector<32x32xf32> to vector<1x1x32x32xf32>
    tpu.vector_store %arg15[%c1_425, %c2_426, %c0_427, %c0_428], %722 {strides = array<i32>} : memref<2x3x32x32xf32, #tpu.memory_space<vmem>>, vector<1x1x32x32xf32>,
    return
  }
}

</mosaic_0001>

<llo_original>
// kernel: tpu_custom_call.1
$region0: #{tpu_custom_call.1}
  #allocation0 [shape = 'u32[]', space=smem, size = 0x4, offset = 0x4, fixed_abs, tag = 'smem constant byte address 0x4 - core index']
  #allocation1 [shape = 'u32[144,128]{1,0:T(1,128)}', space=vmem, size = 0x12000, scoped, tag = 'internal scratch']
  #allocation2 [shape = 'f32[2,6,64]{2,1,0:T(8,128)}', space=vmem, size = 0x2000, scoped, tag = 'scratch operand']
  %s0 = inlined_call_operand.vmem [shape: f32[2,32], index: 0, kind: input, shape index: {}]
  %s1 = inlined_call_operand.vmem [shape: f32[32,256], index: 1, kind: input, shape index: {}]
  %s2 = inlined_call_operand.vmem [shape: f32[1,256], index: 2, kind: input, shape index: {}]
  %s3 = inlined_call_operand.vmem [shape: f32[1,256], index: 3, kind: input, shape index: {}]
  %s4 = inlined_call_operand.vmem [shape: f32[2,3,64,128], index: 4, kind: input, shape index: {}]
  %s5 = inlined_call_operand.vmem [shape: f32[1,16], index: 5, kind: input, shape index: {}]
  %s6 = inlined_call_operand.vmem [shape: f32[1,16], index: 6, kind: input, shape index: {}]
  %s7 = inlined_call_operand.hbm [shape: f32[2,3,128,128], index: 7, kind: input, shape index: {}]
  %s8 = inlined_call_operand.vmem [shape: f32[1,8], index: 8, kind: input, shape index: {}]
  %s9 = inlined_call_operand.vmem [shape: f32[1,8], index: 9, kind: input, shape index: {}]
  %s10 = inlined_call_operand.vmem [shape: f32[2,3,128,256], index: 10, kind: input, shape index: {}]
  %s11 = inlined_call_operand.vmem [shape: f32[1,8], index: 11, kind: input, shape index: {}]
  %s12 = inlined_call_operand.vmem [shape: f32[1,8], index: 12, kind: input, shape index: {}]
  %s13 = inlined_call_operand.vmem [shape: f32[5,256,96], index: 13, kind: input, shape index: {}]
  %s14 = inlined_call_operand.vmem [shape: f32[1,96], index: 14, kind: input, shape index: {}]
  %s15 = inlined_call_operand.hbm [shape: f32[2,3,32,32], index: 15, kind: output, shape index: {}]
  %s16 = sld [smem:[#allocation0]]
  $region74: #{tpu_custom_call.1} parent=0
    _
  %s18 = ssub.s32 1, %s16
  %s19 = scalar_select 0, %s18, %s16
  $region1: #{tpu_custom_call.1} parent=0
    #allocation3 [shape = 'u8[393216]{0}', space=vmem, size = 0x60000, scoped, tag = 'input window, operand 7, single buffered']
    #allocation4 [shape = 's32[1]{0}', space=sflag, size = 0x4, scoped, tag = 'scoped memory for tpu_custom_call.1']
    #allocation5 [shape = 's32[1]{0}', space=sflag, size = 0x4, scoped, tag = 'scoped memory for tpu_custom_call.1']
    #allocation6 [shape = 'u8[98304]{0}', space=vmem, size = 0x18000, scoped, tag = 'output window, operand 0, single buffered']
    %20 = vsyncpa [#allocation4], 0
    %21 = vsyncpa [#allocation5], 0
    // Predicated region
    $region2: #{tpu_custom_call.1} parent=1 // pred_check
      _
    $region3: #{tpu_custom_call.1} parent=1 // pred_check_branch
      %23 = sbr.rel (0) target = $region5
    $region4: #{tpu_custom_call.1} parent=1 // pred_region
      _
    $region5: #{tpu_custom_call.1} parent=1 // pred_fallthru
      _
    // Predicated region
    $region6: #{tpu_custom_call.1} parent=1 // pred_check
      _
    $region7: #{tpu_custom_call.1} parent=1 // pred_check_branch
      %25 = sbr.rel (0) target = $region9
    $region8: #{tpu_custom_call.1} parent=1 // pred_region
      _
    $region9: #{tpu_custom_call.1} parent=1 // pred_fallthru
      _
    // Predicated region
    $region10: #{tpu_custom_call.1} parent=1 // pred_check
      _
    $region11: #{tpu_custom_call.1} parent=1 // pred_check_branch
      %27 = sbr.rel (0) target = $region13
    $region12: #{tpu_custom_call.1} parent=1 // pred_region
      _
    $region13: #{tpu_custom_call.1} parent=1 // pred_fallthru
      _
    // Predicated region
    $region14: #{tpu_custom_call.1} parent=1 // pred_check
      _
    $region15: #{tpu_custom_call.1} parent=1 // pred_check_branch
      %29 = sbr.rel (0) target = $region17
    $region16: #{tpu_custom_call.1} parent=1 // pred_region
      _
    $region17: #{tpu_custom_call.1} parent=1 // pred_fallthru
      _
    // Predicated region
    $region18: #{tpu_custom_call.1} parent=1 // pred_check
      _
    $region19: #{tpu_custom_call.1} parent=1 // pred_check_branch
      %31 = sbr.rel (0) target = $region21
    $region20: #{tpu_custom_call.1} parent=1 // pred_region
      _
    $region21: #{tpu_custom_call.1} parent=1 // pred_fallthru
      _
    // Predicated region
    $region22: #{tpu_custom_call.1} parent=1 // pred_check
      _
    $region23: #{tpu_custom_call.1} parent=1 // pred_check_branch
      %33 = sbr.rel (0) target = $region25
    $region24: #{tpu_custom_call.1} parent=1 // pred_region
      _
    $region25: #{tpu_custom_call.1} parent=1 // pred_fallthru
      _
    // Predicated region
    $region26: #{tpu_custom_call.1} parent=1 // pred_check
      _
    $region27: #{tpu_custom_call.1} parent=1 // pred_check_branch
      %35 = sbr.rel (0) target = $region29
    $region28: #{tpu_custom_call.1} parent=1 // pred_region
      _
    $region29: #{tpu_custom_call.1} parent=1 // pred_fallthru
      _
    // Predicated region
    $region30: #{tpu_custom_call.1} parent=1 // pred_check
      _
    $region31: #{tpu_custom_call.1} parent=1 // pred_check_branch
      %37 = sbr.rel (0) target = $region33
    $region32: #{tpu_custom_call.1} parent=1 // pred_region
      %s39 = ssub.s32 12288, 12288
      %40 = vsyncadd [#allocation4], %s39
      %s41 = sshll.u32 [#allocation3], 4
      %s42 = int_to_ptr.vmem [resolvable:$true] %s41
      %47 = dma.hbm_to_vmem [thread:$0]  %s7, 12288, %s42, [#allocation4], 128, 128, 8
    $region33: #{tpu_custom_call.1} parent=1 // pred_fallthru
      _
    // Predicated region
    $region34: #{tpu_custom_call.1} parent=1 // pred_check
      _
    $region35: #{tpu_custom_call.1} parent=1 // pred_check_branch
      %49 = sbr.rel (0) target = $region37
    $region36: #{tpu_custom_call.1} parent=1 // pred_region
      _
    $region37: #{tpu_custom_call.1} parent=1 // pred_fallthru
      _
    // Predicated region
    $region38: #{tpu_custom_call.1} parent=1 // pred_check
      _
    $region39: #{tpu_custom_call.1} parent=1 // pred_check_branch
      %51 = sbr.rel (0) target = $region41
    $region40: #{tpu_custom_call.1} parent=1 // pred_region
      _
    $region41: #{tpu_custom_call.1} parent=1 // pred_fallthru
      _
    // Predicated region
    $region42: #{tpu_custom_call.1} parent=1 // pred_check
      _
    $region43: #{tpu_custom_call.1} parent=1 // pred_check_branch
      %53 = sbr.rel (0) target = $region45
    $region44: #{tpu_custom_call.1} parent=1 // pred_region
      _
    $region45: #{tpu_custom_call.1} parent=1 // pred_fallthru
      _
    // Predicated region
    $region46: #{tpu_custom_call.1} parent=1 // pred_check
      _
    $region47: #{tpu_custom_call.1} parent=1 // pred_check_branch
      %55 = sbr.rel (0) target = $region49
    $region48: #{tpu_custom_call.1} parent=1 // pred_region
      _
    $region49: #{tpu_custom_call.1} parent=1 // pred_fallthru
      _
    // Predicated region
    $region50: #{tpu_custom_call.1} parent=1 // pred_check
      _
    $region51: #{tpu_custom_call.1} parent=1 // pred_check_branch
      %57 = sbr.rel (0) target = $region53
    $region52: #{tpu_custom_call.1} parent=1 // pred_region
      _
    $region53: #{tpu_custom_call.1} parent=1 // pred_fallthru
      _
    // Predicated region
    $region54: #{tpu_custom_call.1} parent=1 // pred_check
      _
    $region55: #{tpu_custom_call.1} parent=1 // pred_check_branch
      %59 = sbr.rel (0) target = $region57
    $region56: #{tpu_custom_call.1} parent=1 // pred_region
      _
    $region57: #{tpu_custom_call.1} parent=1 // pred_fallthru
      _
    // Predicated region
    $region58: #{tpu_custom_call.1} parent=1 // pred_check
      _
    $region59: #{tpu_custom_call.1} parent=1 // pred_check_branch
      %61 = sbr.rel (0) target = $region61
    $region60: #{tpu_custom_call.1} parent=1 // pred_region
      _
    $region61: #{tpu_custom_call.1} parent=1 // pred_fallthru
      _
    // Predicated region
    $region62: #{tpu_custom_call.1} parent=1 // pred_check
      _
    $region63: #{tpu_custom_call.1} parent=1 // pred_check_branch
      %63 = sbr.rel (0) target = $region65
    $region64: #{tpu_custom_call.1} parent=1 // pred_region
      %64 = dma.done [#allocation4], 12288
    $region65: #{tpu_custom_call.1} parent=1 // pred_fallthru
      _
    %v65 = vld [vmem:[%s0] sm:$0x3]
    %v66 = vld [vmem:[%s1] sm:$0xff]
    %v67 = vld [vmem:[%s1 + $0x8] sm:$0xff]
    %v68 = vld [vmem:[%s1 + $0x10] sm:$0xff]
    %v69 = vld [vmem:[%s1 + $0x18] sm:$0xff]
    %v70 = vld [vmem:[%s1 + $0x20] sm:$0xff]
    %v71 = vld [vmem:[%s1 + $0x28] sm:$0xff]
    %v72 = vld [vmem:[%s1 + $0x30] sm:$0xff]
    %v73 = vld [vmem:[%s1 + $0x38] sm:$0xff]
    %vm74 = vcmask 261120
    %v76 = vsel %vm74, %v65, 0
    %78 = vmatprep.subr.mxu0 %v67
    %79 = vmatpush1.msra.mxu0 %v66
    %80 = vmatprep.subr.mxu0 %v69
    %81 = vmatpush1.msra.mxu0 %v68
    %82 = vmatprep.subr.mxu0 %v71
    %83 = vmatpush1.msra.mxu0 %v70
    %84 = vmatprep.subr.mxu0 %v73
    %85 = vmatpush1.msra.mxu0 %v72
    %86 = vmatprep.subr.mxu0 0.0
    %87 = vmatpush1.msra.mxu0 0.0
    %88 = vmatprep.subr.mxu0 0.0
    %89 = vmatpush1.msra.mxu0 0.0
    %90 = vmatprep.subr.mxu0 0.0
    %91 = vmatpush1.msra.mxu0 0.0
    %92 = vmatprep.subr.mxu0 0.0
    %93 = vmatpush1.msra.mxu0 0.0
    %94 = vmatprep.subr.mxu0 0.0
    %95 = vmatpush1.msra.mxu0 0.0
    %96 = vmatprep.subr.mxu0 0.0
    %97 = vmatpush1.msra.mxu0 0.0
    %98 = vmatprep.subr.mxu0 0.0
    %99 = vmatpush1.msra.mxu0 0.0
    %100 = vmatprep.subr.mxu0 0.0
    %101 = vmatpush1.msra.mxu0 0.0
    %102 = vmatprep.subr.mxu0 0.0
    %103 = vmatpush1.msra.mxu0 0.0
    %104 = vmatprep.subr.mxu0 0.0
    %105 = vmatpush1.msra.mxu0 0.0
    %106 = vmatprep.subr.mxu0 0.0
    %107 = vmatpush1.msra.mxu0 0.0
    %108 = vmatprep.subr.mxu0 0.0
    %109 = vmatpush1.msra.mxu0 0.0
    %110 = vmatprep.subr.mxu0 0.0
    %111 = vmatpush1.msra.mxu0 0.0
    %112 = vmatprep.subr.mxu0 0.0
    %113 = vmatpush1.msra.mxu0 0.0
    %114 = vmatprep.subr.mxu0 0.0
    %115 = vmatpush1.msra.mxu0 0.0
    %116 = vmatprep.subr.mxu0 0.0
    %117 = vmatpush1.msra.mxu0 0.0
    %118 = vmatprep.subr.mxu0 0.0
    %119 = vmatpush1.msra.mxu0 0.0
    %120 = vmatprep.subr.mxu0 0.0
    %121 = vmatpush1.msra.mxu0 0.0
    %122 = vmatprep.subr.mxu0 0.0
    %123 = vmatpush1.msra.mxu0 0.0
    %124 = vmatprep.subr.mxu0 0.0
    %125 = vmatpush1.msra.mxu0 0.0
    %126 = vmatprep.subr.mxu0 0.0
    %127 = vmatpush1.msra.mxu0 0.0
    %128 = vmatprep.subr.mxu0 0.0
    %129 = vmatpush1.msra.mxu0 0.0
    %130 = vmatprep.subr.mxu0 0.0
    %131 = vmatpush1.msra.mxu0 0.0
    %132 = vmatprep.subr.mxu0 0.0
    %133 = vmatpush1.msra.mxu0 0.0
    %134 = vmatprep.subr.mxu0 0.0
    %135 = vmatpush1.msra.mxu0 0.0
    %136 = vmatprep.subr.mxu0 0.0
    %137 = vmatpush1.msra.mxu0 0.0
    %138 = vmatprep.subr.mxu0 0.0
    %139 = vmatpush1.msra.mxu0 0.0
    %140 = vmatprep.subr.mxu0 0.0
    %141 = vmatpush1.msra.mxu0 0.0
    %142 = vmatprep.mubr.f32.mxu0 0.0
    %143 = vmatmul.mubr.f32.gmra.mrb[0].mxu0 %v76
    %v144 = vpop.f32.mrb[0].mxu0
    %v145 = vadd.f32 0.0, %v144
    %v146 = vpop.f32.mrb[0].mxu0
    %v147 = vadd.f32 0.0, %v146
    %148 = vdwg.mxu0
    %vm149 = vcmask 1041408
    %v150 = vsel %vm149, %v145, 0.0
    %v151 = vrot.slane %v150, 4
    %v152 = vadd.f32 %v150, %v151
    %v153 = vrot.slane %v152, 2
    %v154 = vadd.f32 %v152, %v153
    %v155 = vrot.slane %v154, 1
    %v156 = vadd.f32 %v154, %v155
    %v157 = vsel %vm149, %v147, 0.0
    %v158 = vrot.slane %v157, 4
    %v159 = vadd.f32 %v157, %v158
    %v160 = vrot.slane %v159, 2
    %v161 = vadd.f32 %v159, %v160
    %v162 = vrot.slane %v161, 1
    %v163 = vadd.f32 %v161, %v162
    %v164 = vrcp.pop 2.0
    %v165 = vmul.f32 %v156, %v164
    %v166 = vmul.f32 %v163, %v164
    %v167 = vsub.f32 %v145, %v165
    %v168 = vsub.f32 %v147, %v166
    %v169 = vmul.f32 %v167, %v167
    %v170 = vmul.f32 %v168, %v168
    %v171 = vsel %vm149, %v169, 0.0
    %v172 = vrot.slane %v171, 4
    %v173 = vadd.f32 %v171, %v172
    %v174 = vrot.slane %v173, 2
    %v175 = vadd.f32 %v173, %v174
    %v176 = vrot.slane %v175, 1
    %v177 = vadd.f32 %v175, %v176
    %v178 = vsel %vm149, %v170, 0.0
    %v179 = vrot.slane %v178, 4
    %v180 = vadd.f32 %v178, %v179
    %v181 = vrot.slane %v180, 2
    %v182 = vadd.f32 %v180, %v181
    %v183 = vrot.slane %v182, 1
    %v184 = vadd.f32 %v182, %v183
    %v185 = vmul.f32 %v177, %v164
    %v186 = vmul.f32 %v184, %v164
    %v187 = vadd.f32 %v185, 1e-05
    %v188 = vadd.f32 %v186, 1e-05
    %v189 = vrsqrt.pop %v187
    %v190 = vrsqrt.pop %v188
    %v191 = vmul.f32 %v167, %v189
    %v192 = vmul.f32 %v168, %v190
    %v193 = vld [vmem:[%s2] sm:$0x3]
    %v195 = vlaneseq
    %v196 = vshrl.u32 %v195, 7
    %v197 = vsub.s32 0, %v196
    %v198 = vrot.slane %v193, %v197
    %v199 = vlaneseq
    %v200 = vshrl.u32 %v199, 7
    %v201 = vsub.s32 1, %v200
    %v202 = vrot.slane %v193, %v201
    %v205 = vmul.f32 %v191, %v198
    %v206 = vmul.f32 %v192, %v202
    %v207 = vld [vmem:[%s3] sm:$0x3]
    %v209 = vlaneseq
    %v210 = vshrl.u32 %v209, 7
    %v211 = vsub.s32 0, %v210
    %v212 = vrot.slane %v207, %v211
    %v213 = vlaneseq
    %v214 = vshrl.u32 %v213, 7
    %v215 = vsub.s32 1, %v214
    %v216 = vrot.slane %v207, %v215
    %v219 = vadd.f32 %v205, %v212
    %v220 = vadd.f32 %v206, %v216
    %v221 = vmax.f32 %v219, 0.0
    %v222 = vmax.f32 %v220, 0.0
    %vm223 = vcmask 521216
    %224 = vst.msk [vmem:[#allocation2] sm:$0x3f] %vm223, 0.0
    %225 = vst.msk [vmem:[#allocation2 + $0x8] sm:$0x3f] %vm223, 0.0
    %vm226 = vcmask 516096
    %227 = vst.msk [vmem:[#allocation2 + $0x1] sm:$0x1] %vm226, %v221
    %229 = vrot.lane.b32.xlu0 %v221, 64
    %v230 = vpop.permute.xlu0 %229
    %232 = vst.msk [vmem:[#allocation2 + $0x2] sm:$0x1] %vm226, %v230
    %233 = vst.msk [vmem:[#allocation2 + $0x3] sm:$0x1] %vm226, %v222
    %235 = vrot.lane.b32.xlu0 %v222, 64
    %v236 = vpop.permute.xlu0 %235
    %238 = vst.msk [vmem:[#allocation2 + $0x4] sm:$0x1] %vm226, %v236
    %s239 = scalar_lea.vmem [#allocation2], 8
    %vm240 = vcmask 517121
    %241 = vst.msk [vmem:[%s239] sm:$0x2] %vm240, %v221
    %242 = vst.msk [vmem:[%s239 + $0x1] sm:$0x2] %vm240, %v230
    %243 = vst.msk [vmem:[%s239 + $0x2] sm:$0x2] %vm240, %v222
    %244 = vst.msk [vmem:[%s239 + $0x3] sm:$0x2] %vm240, %v236
    %v245 = vld [vmem:[#allocation2] sm:$0xf]
    %v246 = vld [vmem:[%s4] sm:$0xff]
    %v247 = vld [vmem:[%s4 + $0x8] sm:$0xff]
    %v248 = vld [vmem:[%s4 + $0x10] sm:$0xff]
    %v249 = vld [vmem:[%s4 + $0x18] sm:$0xff]
    %v250 = vld [vmem:[%s4 + $0x20] sm:$0xff]
    %v251 = vld [vmem:[%s4 + $0x28] sm:$0xff]
    %v252 = vld [vmem:[%s4 + $0x30] sm:$0xff]
    %v253 = vld [vmem:[%s4 + $0x38] sm:$0xff]
    %v254 = vld [vmem:[#allocation2 + $0x1] sm:$0xf]
    %s255 = scalar_lea.vmem %s4, 64
    %v256 = vld [vmem:[%s255] sm:$0xff]
    %v257 = vld [vmem:[%s255 + $0x8] sm:$0xff]
    %v258 = vld [vmem:[%s255 + $0x10] sm:$0xff]
    %v259 = vld [vmem:[%s255 + $0x18] sm:$0xff]
    %v260 = vld [vmem:[%s255 + $0x20] sm:$0xff]
    %v261 = vld [vmem:[%s255 + $0x28] sm:$0xff]
    %v262 = vld [vmem:[%s255 + $0x30] sm:$0xff]
    %v263 = vld [vmem:[%s255 + $0x38] sm:$0xff]
    %vm264 = vcmask 523264
    %v266 = vsel %vm264, %v254, 0
    %268 = vmatprep.subr.mxu0 0.0
    %269 = vmatpush1.msra.mxu0 %v256
    %270 = vmatprep.subr.mxu0 0.0
    %271 = vmatpush1.msra.mxu0 %v257
    %272 = vmatprep.subr.mxu0 0.0
    %273 = vmatpush1.msra.mxu0 %v258
    %274 = vmatprep.subr.mxu0 0.0
    %275 = vmatpush1.msra.mxu0 %v259
    %276 = vmatprep.subr.mxu0 0.0
    %277 = vmatpush1.msra.mxu0 %v260
    %278 = vmatprep.subr.mxu0 0.0
    %279 = vmatpush1.msra.mxu0 %v261
    %280 = vmatprep.subr.mxu0 0.0
    %281 = vmatpush1.msra.mxu0 %v262
    %282 = vmatprep.subr.mxu0 0.0
    %283 = vmatpush1.msra.mxu0 %v263
    %284 = vmatprep.subr.mxu0 0.0
    %285 = vmatpush1.msra.mxu0 0.0
    %286 = vmatprep.subr.mxu0 0.0
    %287 = vmatpush1.msra.mxu0 0.0
    %288 = vmatprep.subr.mxu0 0.0
    %289 = vmatpush1.msra.mxu0 0.0
    %290 = vmatprep.subr.mxu0 0.0
    %291 = vmatpush1.msra.mxu0 0.0
    %292 = vmatprep.subr.mxu0 0.0
    %293 = vmatpush1.msra.mxu0 0.0
    %294 = vmatprep.subr.mxu0 0.0
    %295 = vmatpush1.msra.mxu0 0.0
    %296 = vmatprep.subr.mxu0 0.0
    %297 = vmatpush1.msra.mxu0 0.0
    %298 = vmatprep.subr.mxu0 0.0
    %299 = vmatpush1.msra.mxu0 0.0
    %300 = vmatprep.subr.mxu0 0.0
    %301 = vmatpush1.msra.mxu0 0.0
    %302 = vmatprep.subr.mxu0 0.0
    %303 = vmatpush1.msra.mxu0 0.0
    %304 = vmatprep.subr.mxu0 0.0
    %305 = vmatpush1.msra.mxu0 0.0
    %306 = vmatprep.subr.mxu0 0.0
    %307 = vmatpush1.msra.mxu0 0.0
    %308 = vmatprep.subr.mxu0 0.0
    %309 = vmatpush1.msra.mxu0 0.0
    %310 = vmatprep.subr.mxu0 0.0
    %311 = vmatpush1.msra.mxu0 0.0
    %312 = vmatprep.subr.mxu0 0.0
    %313 = vmatpush1.msra.mxu0 0.0
    %314 = vmatprep.subr.mxu0 0.0
    %315 = vmatpush1.msra.mxu0 0.0
    %316 = vmatprep.subr.mxu0 0.0
    %317 = vmatpush1.msra.mxu0 0.0
    %318 = vmatprep.subr.mxu0 0.0
    %319 = vmatpush1.msra.mxu0 0.0
    %320 = vmatprep.subr.mxu0 0.0
    %321 = vmatpush1.msra.mxu0 0.0
    %322 = vmatprep.subr.mxu0 0.0
    %323 = vmatpush1.msra.mxu0 0.0
    %324 = vmatprep.subr.mxu0 0.0
    %325 = vmatpush1.msra.mxu0 0.0
    %326 = vmatprep.subr.mxu0 0.0
    %327 = vmatpush1.msra.mxu0 0.0
    %328 = vmatprep.subr.mxu0 0.0
    %329 = vmatpush1.msra.mxu0 0.0
    %330 = vmatprep.subr.mxu0 0.0
    %331 = vmatpush1.msra.mxu0 0.0
    %332 = vmatprep.mubr.f32.mxu0 0.0
    %333 = vmatmul.mubr.f32.gmra.mrb[0].mxu0 %v266
    %v334 = vpop.f32.mrb[0].mxu0
    %v335 = vadd.f32 0.0, %v334
    %v336 = vpop.f32.mrb[0].mxu0
    %337 = vdwg.mxu0
    %v339 = vsel %vm264, %v245, 0
    %341 = vmatprep.subr.mxu0 0.0
    %342 = vmatpush1.msra.mxu0 %v246
    %343 = vmatprep.subr.mxu0 0.0
    %344 = vmatpush1.msra.mxu0 %v247
    %345 = vmatprep.subr.mxu0 0.0
    %346 = vmatpush1.msra.mxu0 %v248
    %347 = vmatprep.subr.mxu0 0.0
    %348 = vmatpush1.msra.mxu0 %v249
    %349 = vmatprep.subr.mxu0 0.0
    %350 = vmatpush1.msra.mxu0 %v250
    %351 = vmatprep.subr.mxu0 0.0
    %352 = vmatpush1.msra.mxu0 %v251
    %353 = vmatprep.subr.mxu0 0.0
    %354 = vmatpush1.msra.mxu0 %v252
    %355 = vmatprep.subr.mxu0 0.0
    %356 = vmatpush1.msra.mxu0 %v253
    %357 = vmatprep.subr.mxu0 0.0
    %358 = vmatpush1.msra.mxu0 0.0
    %359 = vmatprep.subr.mxu0 0.0
    %360 = vmatpush1.msra.mxu0 0.0
    %361 = vmatprep.subr.mxu0 0.0
    %362 = vmatpush1.msra.mxu0 0.0
    %363 = vmatprep.subr.mxu0 0.0
    %364 = vmatpush1.msra.mxu0 0.0
    %365 = vmatprep.subr.mxu0 0.0
    %366 = vmatpush1.msra.mxu0 0.0
    %367 = vmatprep.subr.mxu0 0.0
    %368 = vmatpush1.msra.mxu0 0.0
    %369 = vmatprep.subr.mxu0 0.0
    %370 = vmatpush1.msra.mxu0 0.0
    %371 = vmatprep.subr.mxu0 0.0
    %372 = vmatpush1.msra.mxu0 0.0
    %373 = vmatprep.subr.mxu0 0.0
    %374 = vmatpush1.msra.mxu0 0.0
    %375 = vmatprep.subr.mxu0 0.0
    %376 = vmatpush1.msra.mxu0 0.0
    %377 = vmatprep.subr.mxu0 0.0
    %378 = vmatpush1.msra.mxu0 0.0
    %379 = vmatprep.subr.mxu0 0.0
    %380 = vmatpush1.msra.mxu0 0.0
    %381 = vmatprep.subr.mxu0 0.0
    %382 = vmatpush1.msra.mxu0 0.0
    %383 = vmatprep.subr.mxu0 0.0
    %384 = vmatpush1.msra.mxu0 0.0
    %385 = vmatprep.subr.mxu0 0.0
    %386 = vmatpush1.msra.mxu0 0.0
    %387 = vmatprep.subr.mxu0 0.0
    %388 = vmatpush1.msra.mxu0 0.0
    %389 = vmatprep.subr.mxu0 0.0
    %390 = vmatpush1.msra.mxu0 0.0
    %391 = vmatprep.subr.mxu0 0.0
    %392 = vmatpush1.msra.mxu0 0.0
    %393 = vmatprep.subr.mxu0 0.0
    %394 = vmatpush1.msra.mxu0 0.0
    %395 = vmatprep.subr.mxu0 0.0
    %396 = vmatpush1.msra.mxu0 0.0
    %397 = vmatprep.subr.mxu0 0.0
    %398 = vmatpush1.msra.mxu0 0.0
    %399 = vmatprep.subr.mxu0 0.0
    %400 = vmatpush1.msra.mxu0 0.0
    %401 = vmatprep.subr.mxu0 0.0
    %402 = vmatpush1.msra.mxu0 0.0
    %403 = vmatprep.subr.mxu0 0.0
    %404 = vmatpush1.msra.mxu0 0.0
    %405 = vmatprep.mubr.f32.mxu0 0.0
    %406 = vmatmul.mubr.f32.gmra.mrb[0].mxu0 %v339
    %v407 = vpop.f32.mrb[0].mxu0
    %v408 = vadd.f32 %v335, %v407
    %v409 = vpop.f32.mrb[0].mxu0
    %410 = vdwg.mxu0
    %v411 = vld [vmem:[#allocation2 + $0x2] sm:$0xf]
    %s412 = scalar_lea.vmem %s4, 128
    %v413 = vld [vmem:[%s412] sm:$0xff]
    %v414 = vld [vmem:[%s412 + $0x8] sm:$0xff]
    %v415 = vld [vmem:[%s412 + $0x10] sm:$0xff]
    %v416 = vld [vmem:[%s412 + $0x18] sm:$0xff]
    %v417 = vld [vmem:[%s412 + $0x20] sm:$0xff]
    %v418 = vld [vmem:[%s412 + $0x28] sm:$0xff]
    %v419 = vld [vmem:[%s412 + $0x30] sm:$0xff]
    %v420 = vld [vmem:[%s412 + $0x38] sm:$0xff]
    %v422 = vsel %vm264, %v411, 0
    %424 = vmatprep.subr.mxu0 0.0
    %425 = vmatpush1.msra.mxu0 %v413
    %426 = vmatprep.subr.mxu0 0.0
    %427 = vmatpush1.msra.mxu0 %v414
    %428 = vmatprep.subr.mxu0 0.0
    %429 = vmatpush1.msra.mxu0 %v415
    %430 = vmatprep.subr.mxu0 0.0
    %431 = vmatpush1.msra.mxu0 %v416
    %432 = vmatprep.subr.mxu0 0.0
    %433 = vmatpush1.msra.mxu0 %v417
    %434 = vmatprep.subr.mxu0 0.0
    %435 = vmatpush1.msra.mxu0 %v418
    %436 = vmatprep.subr.mxu0 0.0
    %437 = vmatpush1.msra.mxu0 %v419
    %438 = vmatprep.subr.mxu0 0.0
    %439 = vmatpush1.msra.mxu0 %v420
    %440 = vmatprep.subr.mxu0 0.0
    %441 = vmatpush1.msra.mxu0 0.0
    %442 = vmatprep.subr.mxu0 0.0
    %443 = vmatpush1.msra.mxu0 0.0
    %444 = vmatprep.subr.mxu0 0.0
    %445 = vmatpush1.msra.mxu0 0.0
    %446 = vmatprep.subr.mxu0 0.0
    %447 = vmatpush1.msra.mxu0 0.0
    %448 = vmatprep.subr.mxu0 0.0
    %449 = vmatpush1.msra.mxu0 0.0
    %450 = vmatprep.subr.mxu0 0.0
    %451 = vmatpush1.msra.mxu0 0.0
    %452 = vmatprep.subr.mxu0 0.0
    %453 = vmatpush1.msra.mxu0 0.0
    %454 = vmatprep.subr.mxu0 0.0
    %455 = vmatpush1.msra.mxu0 0.0
    %456 = vmatprep.subr.mxu0 0.0
    %457 = vmatpush1.msra.mxu0 0.0
    %458 = vmatprep.subr.mxu0 0.0
    %459 = vmatpush1.msra.mxu0 0.0
    %460 = vmatprep.subr.mxu0 0.0
    %461 = vmatpush1.msra.mxu0 0.0
    %462 = vmatprep.subr.mxu0 0.0
    %463 = vmatpush1.msra.mxu0 0.0
    %464 = vmatprep.subr.mxu0 0.0
    %465 = vmatpush1.msra.mxu0 0.0
    %466 = vmatprep.subr.mxu0 0.0
    %467 = vmatpush1.msra.mxu0 0.0
    %468 = vmatprep.subr.mxu0 0.0
    %469 = vmatpush1.msra.mxu0 0.0
    %470 = vmatprep.subr.mxu0 0.0
    %471 = vmatpush1.msra.mxu0 0.0
    %472 = vmatprep.subr.mxu0 0.0
    %473 = vmatpush1.msra.mxu0 0.0
    %474 = vmatprep.subr.mxu0 0.0
    %475 = vmatpush1.msra.mxu0 0.0
    %476 = vmatprep.subr.mxu0 0.0
    %477 = vmatpush1.msra.mxu0 0.0
    %478 = vmatprep.subr.mxu0 0.0
    %479 = vmatpush1.msra.mxu0 0.0
    %480 = vmatprep.subr.mxu0 0.0
    %481 = vmatpush1.msra.mxu0 0.0
    %482 = vmatprep.subr.mxu0 0.0
    %483 = vmatpush1.msra.mxu0 0.0
    %484 = vmatprep.subr.mxu0 0.0
    %485 = vmatpush1.msra.mxu0 0.0
    %486 = vmatprep.subr.mxu0 0.0
    %487 = vmatpush1.msra.mxu0 0.0
    %488 = vmatprep.mubr.f32.mxu0 0.0
    %489 = vmatmul.mubr.f32.gmra.mrb[0].mxu0 %v422
    %v490 = vpop.f32.mrb[0].mxu0
    %v491 = vadd.f32 0.0, %v490
    %v492 = vpop.f32.mrb[0].mxu0
    %493 = vdwg.mxu0
    %v494 = vadd.f32 %v408, %v491
    %s495 = scalar_lea.vmem %s4, 256
    %v496 = vld [vmem:[%s495] sm:$0xff]
    %v497 = vld [vmem:[%s495 + $0x8] sm:$0xff]
    %v498 = vld [vmem:[%s495 + $0x10] sm:$0xff]
    %v499 = vld [vmem:[%s495 + $0x18] sm:$0xff]
    %v500 = vld [vmem:[%s495 + $0x20] sm:$0xff]
    %v501 = vld [vmem:[%s495 + $0x28] sm:$0xff]
    %v502 = vld [vmem:[%s495 + $0x30] sm:$0xff]
    %v503 = vld [vmem:[%s495 + $0x38] sm:$0xff]
    %s504 = scalar_lea.vmem %s4, 320
    %v505 = vld [vmem:[%s504] sm:$0xff]
    %v506 = vld [vmem:[%s504 + $0x8] sm:$0xff]
    %v507 = vld [vmem:[%s504 + $0x10] sm:$0xff]
    %v508 = vld [vmem:[%s504 + $0x18] sm:$0xff]
    %v509 = vld [vmem:[%s504 + $0x20] sm:$0xff]
    %v510 = vld [vmem:[%s504 + $0x28] sm:$0xff]
    %v511 = vld [vmem:[%s504 + $0x30] sm:$0xff]
    %v512 = vld [vmem:[%s504 + $0x38] sm:$0xff]
    %513 = vmatprep.subr.mxu0 0.0
    %514 = vmatpush1.msra.mxu0 %v505
    %515 = vmatprep.subr.mxu0 0.0
    %516 = vmatpush1.msra.mxu0 %v506
    %517 = vmatprep.subr.mxu0 0.0
    %518 = vmatpush1.msra.mxu0 %v507
    %519 = vmatprep.subr.mxu0 0.0
    %520 = vmatpush1.msra.mxu0 %v508
    %521 = vmatprep.subr.mxu0 0.0
    %522 = vmatpush1.msra.mxu0 %v509
    %523 = vmatprep.subr.mxu0 0.0
    %524 = vmatpush1.msra.mxu0 %v510
    %525 = vmatprep.subr.mxu0 0.0
    %526 = vmatpush1.msra.mxu0 %v511
    %527 = vmatprep.subr.mxu0 0.0
    %528 = vmatpush1.msra.mxu0 %v512
    %529 = vmatprep.subr.mxu0 0.0
    %530 = vmatpush1.msra.mxu0 0.0
    %531 = vmatprep.subr.mxu0 0.0
    %532 = vmatpush1.msra.mxu0 0.0
    %533 = vmatprep.subr.mxu0 0.0
    %534 = vmatpush1.msra.mxu0 0.0
    %535 = vmatprep.subr.mxu0 0.0
    %536 = vmatpush1.msra.mxu0 0.0
    %537 = vmatprep.subr.mxu0 0.0
    %538 = vmatpush1.msra.mxu0 0.0
    %539 = vmatprep.subr.mxu0 0.0
    %540 = vmatpush1.msra.mxu0 0.0
    %541 = vmatprep.subr.mxu0 0.0
    %542 = vmatpush1.msra.mxu0 0.0
    %543 = vmatprep.subr.mxu0 0.0
    %544 = vmatpush1.msra.mxu0 0.0
    %545 = vmatprep.subr.mxu0 0.0
    %546 = vmatpush1.msra.mxu0 0.0
    %547 = vmatprep.subr.mxu0 0.0
    %548 = vmatpush1.msra.mxu0 0.0
    %549 = vmatprep.subr.mxu0 0.0
    %550 = vmatpush1.msra.mxu0 0.0
    %551 = vmatprep.subr.mxu0 0.0
    %552 = vmatpush1.msra.mxu0 0.0
    %553 = vmatprep.subr.mxu0 0.0
    %554 = vmatpush1.msra.mxu0 0.0
    %555 = vmatprep.subr.mxu0 0.0
    %556 = vmatpush1.msra.mxu0 0.0
    %557 = vmatprep.subr.mxu0 0.0
    %558 = vmatpush1.msra.mxu0 0.0
    %559 = vmatprep.subr.mxu0 0.0
    %560 = vmatpush1.msra.mxu0 0.0
    %561 = vmatprep.subr.mxu0 0.0
    %562 = vmatpush1.msra.mxu0 0.0
    %563 = vmatprep.subr.mxu0 0.0
    %564 = vmatpush1.msra.mxu0 0.0
    %565 = vmatprep.subr.mxu0 0.0
    %566 = vmatpush1.msra.mxu0 0.0
    %567 = vmatprep.subr.mxu0 0.0
    %568 = vmatpush1.msra.mxu0 0.0
    %569 = vmatprep.subr.mxu0 0.0
    %570 = vmatpush1.msra.mxu0 0.0
    %571 = vmatprep.subr.mxu0 0.0
    %572 = vmatpush1.msra.mxu0 0.0
    %573 = vmatprep.subr.mxu0 0.0
    %574 = vmatpush1.msra.mxu0 0.0
    %575 = vmatprep.subr.mxu0 0.0
    %576 = vmatpush1.msra.mxu0 0.0
    %577 = vmatprep.mubr.f32.mxu0 0.0
    %578 = vmatmul.mubr.f32.gmra.mrb[0].mxu0 %v422
    %v579 = vpop.f32.mrb[0].mxu0
    %v580 = vadd.f32 0.0, %v579
    %v581 = vpop.f32.mrb[0].mxu0
    %582 = vdwg.mxu0
    %583 = vmatprep.subr.mxu0 0.0
    %584 = vmatpush1.msra.mxu0 %v496
    %585 = vmatprep.subr.mxu0 0.0
    %586 = vmatpush1.msra.mxu0 %v497
    %587 = vmatprep.subr.mxu0 0.0
    %588 = vmatpush1.msra.mxu0 %v498
    %589 = vmatprep.subr.mxu0 0.0
    %590 = vmatpush1.msra.mxu0 %v499
    %591 = vmatprep.subr.mxu0 0.0
    %592 = vmatpush1.msra.mxu0 %v500
    %593 = vmatprep.subr.mxu0 0.0
    %594 = vmatpush1.msra.mxu0 %v501
    %595 = vmatprep.subr.mxu0 0.0
    %596 = vmatpush1.msra.mxu0 %v502
    %597 = vmatprep.subr.mxu0 0.0
    %598 = vmatpush1.msra.mxu0 %v503
    %599 = vmatprep.subr.mxu0 0.0
    %600 = vmatpush1.msra.mxu0 0.0
    %601 = vmatprep.subr.mxu0 0.0
    %602 = vmatpush1.msra.mxu0 0.0
    %603 = vmatprep.subr.mxu0 0.0
    %604 = vmatpush1.msra.mxu0 0.0
    %605 = vmatprep.subr.mxu0 0.0
    %606 = vmatpush1.msra.mxu0 0.0
    %607 = vmatprep.subr.mxu0 0.0
    %608 = vmatpush1.msra.mxu0 0.0
    %609 = vmatprep.subr.mxu0 0.0
    %610 = vmatpush1.msra.mxu0 0.0
    %611 = vmatprep.subr.mxu0 0.0
    %612 = vmatpush1.msra.mxu0 0.0
    %613 = vmatprep.subr.mxu0 0.0
    %614 = vmatpush1.msra.mxu0 0.0
    %615 = vmatprep.subr.mxu0 0.0
    %616 = vmatpush1.msra.mxu0 0.0
    %617 = vmatprep.subr.mxu0 0.0
    %618 = vmatpush1.msra.mxu0 0.0
    %619 = vmatprep.subr.mxu0 0.0
    %620 = vmatpush1.msra.mxu0 0.0
    %621 = vmatprep.subr.mxu0 0.0
    %622 = vmatpush1.msra.mxu0 0.0
    %623 = vmatprep.subr.mxu0 0.0
    %624 = vmatpush1.msra.mxu0 0.0
    %625 = vmatprep.subr.mxu0 0.0
    %626 = vmatpush1.msra.mxu0 0.0
    %627 = vmatprep.subr.mxu0 0.0
    %628 = vmatpush1.msra.mxu0 0.0
    %629 = vmatprep.subr.mxu0 0.0
    %630 = vmatpush1.msra.mxu0 0.0
    %631 = vmatprep.subr.mxu0 0.0
    %632 = vmatpush1.msra.mxu0 0.0
    %633 = vmatprep.subr.mxu0 0.0
    %634 = vmatpush1.msra.mxu0 0.0
    %635 = vmatprep.subr.mxu0 0.0
    %636 = vmatpush1.msra.mxu0 0.0
    %637 = vmatprep.subr.mxu0 0.0
    %638 = vmatpush1.msra.mxu0 0.0
    %639 = vmatprep.subr.mxu0 0.0
    %640 = vmatpush1.msra.mxu0 0.0
    %641 = vmatprep.subr.mxu0 0.0
    %642 = vmatpush1.msra.mxu0 0.0
    %643 = vmatprep.subr.mxu0 0.0
    %644 = vmatpush1.msra.mxu0 0.0
    %645 = vmatprep.subr.mxu0 0.0
    %646 = vmatpush1.msra.mxu0 0.0
    %647 = vmatprep.mubr.f32.mxu0 0.0
    %648 = vmatmul.mubr.f32.gmra.mrb[0].mxu0 %v266
    %v649 = vpop.f32.mrb[0].mxu0
    %v650 = vadd.f32 %v580, %v649
    %v651 = vpop.f32.mrb[0].mxu0
    %652 = vdwg.mxu0
    %v653 = vld [vmem:[%s239] sm:$0xf]
    %v654 = vld [vmem:[%s239 + $0x1] sm:$0xf]
    %v656 = vsel %vm264, %v654, 0
    %658 = vmatprep.subr.mxu0 0.0
    %659 = vmatpush1.msra.mxu0 %v256
    %660 = vmatprep.subr.mxu0 0.0
    %661 = vmatpush1.msra.mxu0 %v257
    %662 = vmatprep.subr.mxu0 0.0
    %663 = vmatpush1.msra.mxu0 %v258
    %664 = vmatprep.subr.mxu0 0.0
    %665 = vmatpush1.msra.mxu0 %v259
    %666 = vmatprep.subr.mxu0 0.0
    %667 = vmatpush1.msra.mxu0 %v260
    %668 = vmatprep.subr.mxu0 0.0
    %669 = vmatpush1.msra.mxu0 %v261
    %670 = vmatprep.subr.mxu0 0.0
    %671 = vmatpush1.msra.mxu0 %v262
    %672 = vmatprep.subr.mxu0 0.0
    %673 = vmatpush1.msra.mxu0 %v263
    %674 = vmatprep.subr.mxu0 0.0
    %675 = vmatpush1.msra.mxu0 0.0
    %676 = vmatprep.subr.mxu0 0.0
    %677 = vmatpush1.msra.mxu0 0.0
    %678 = vmatprep.subr.mxu0 0.0
    %679 = vmatpush1.msra.mxu0 0.0
    %680 = vmatprep.subr.mxu0 0.0
    %681 = vmatpush1.msra.mxu0 0.0
    %682 = vmatprep.subr.mxu0 0.0
    %683 = vmatpush1.msra.mxu0 0.0
    %684 = vmatprep.subr.mxu0 0.0
    %685 = vmatpush1.msra.mxu0 0.0
    %686 = vmatprep.subr.mxu0 0.0
    %687 = vmatpush1.msra.mxu0 0.0
    %688 = vmatprep.subr.mxu0 0.0
    %689 = vmatpush1.msra.mxu0 0.0
    %690 = vmatprep.subr.mxu0 0.0
    %691 = vmatpush1.msra.mxu0 0.0
    %692 = vmatprep.subr.mxu0 0.0
    %693 = vmatpush1.msra.mxu0 0.0
    %694 = vmatprep.subr.mxu0 0.0
    %695 = vmatpush1.msra.mxu0 0.0
    %696 = vmatprep.subr.mxu0 0.0
    %697 = vmatpush1.msra.mxu0 0.0
    %698 = vmatprep.subr.mxu0 0.0
    %699 = vmatpush1.msra.mxu0 0.0
    %700 = vmatprep.subr.mxu0 0.0
    %701 = vmatpush1.msra.mxu0 0.0
    %702 = vmatprep.subr.mxu0 0.0
    %703 = vmatpush1.msra.mxu0 0.0
    %704 = vmatprep.subr.mxu0 0.0
    %705 = vmatpush1.msra.mxu0 0.0
    %706 = vmatprep.subr.mxu0 0.0
    %707 = vmatpush1.msra.mxu0 0.0
    %708 = vmatprep.subr.mxu0 0.0
    %709 = vmatpush1.msra.mxu0 0.0
    %710 = vmatprep.subr.mxu0 0.0
    %711 = vmatpush1.msra.mxu0 0.0
    %712 = vmatprep.subr.mxu0 0.0
    %713 = vmatpush1.msra.mxu0 0.0
    %714 = vmatprep.subr.mxu0 0.0
    %715 = vmatpush1.msra.mxu0 0.0
    %716 = vmatprep.subr.mxu0 0.0
    %717 = vmatpush1.msra.mxu0 0.0
    %718 = vmatprep.subr.mxu0 0.0
    %719 = vmatpush1.msra.mxu0 0.0
    %720 = vmatprep.subr.mxu0 0.0
    %721 = vmatpush1.msra.mxu0 0.0
    %722 = vmatprep.mubr.f32.mxu0 0.0
    %723 = vmatmul.mubr.f32.gmra.mrb[0].mxu0 %v656
    %v724 = vpop.f32.mrb[0].mxu0
    %v725 = vadd.f32 0.0, %v724
    %v726 = vpop.f32.mrb[0].mxu0
    %727 = vdwg.mxu0
    %v729 = vsel %vm264, %v653, 0
    %731 = vmatprep.subr.mxu0 0.0
    %732 = vmatpush1.msra.mxu0 %v246
    %733 = vmatprep.subr.mxu0 0.0
    %734 = vmatpush1.msra.mxu0 %v247
    %735 = vmatprep.subr.mxu0 0.0
    %736 = vmatpush1.msra.mxu0 %v248
    %737 = vmatprep.subr.mxu0 0.0
    %738 = vmatpush1.msra.mxu0 %v249
    %739 = vmatprep.subr.mxu0 0.0
    %740 = vmatpush1.msra.mxu0 %v250
    %741 = vmatprep.subr.mxu0 0.0
    %742 = vmatpush1.msra.mxu0 %v251
    %743 = vmatprep.subr.mxu0 0.0
    %744 = vmatpush1.msra.mxu0 %v252
    %745 = vmatprep.subr.mxu0 0.0
    %746 = vmatpush1.msra.mxu0 %v253
    %747 = vmatprep.subr.mxu0 0.0
    %748 = vmatpush1.msra.mxu0 0.0
    %749 = vmatprep.subr.mxu0 0.0
    %750 = vmatpush1.msra.mxu0 0.0
    %751 = vmatprep.subr.mxu0 0.0
    %752 = vmatpush1.msra.mxu0 0.0
    %753 = vmatprep.subr.mxu0 0.0
    %754 = vmatpush1.msra.mxu0 0.0
    %755 = vmatprep.subr.mxu0 0.0
    %756 = vmatpush1.msra.mxu0 0.0
    %757 = vmatprep.subr.mxu0 0.0
    %758 = vmatpush1.msra.mxu0 0.0
    %759 = vmatprep.subr.mxu0 0.0
    %760 = vmatpush1.msra.mxu0 0.0
    %761 = vmatprep.subr.mxu0 0.0
    %762 = vmatpush1.msra.mxu0 0.0
    %763 = vmatprep.subr.mxu0 0.0
    %764 = vmatpush1.msra.mxu0 0.0
    %765 = vmatprep.subr.mxu0 0.0
    %766 = vmatpush1.msra.mxu0 0.0
    %767 = vmatprep.subr.mxu0 0.0
    %768 = vmatpush1.msra.mxu0 0.0
    %769 = vmatprep.subr.mxu0 0.0
    %770 = vmatpush1.msra.mxu0 0.0
    %771 = vmatprep.subr.mxu0 0.0
    %772 = vmatpush1.msra.mxu0 0.0
    %773 = vmatprep.subr.mxu0 0.0
    %774 = vmatpush1.msra.mxu0 0.0
    %775 = vmatprep.subr.mxu0 0.0
    %776 = vmatpush1.msra.mxu0 0.0
    %777 = vmatprep.subr.mxu0 0.0
    %778 = vmatpush1.msra.mxu0 0.0
    %779 = vmatprep.subr.mxu0 0.0
    %780 = vmatpush1.msra.mxu0 0.0
    %781 = vmatprep.subr.mxu0 0.0
    %782 = vmatpush1.msra.mxu0 0.0
    %783 = vmatprep.subr.mxu0 0.0
    %784 = vmatpush1.msra.mxu0 0.0
    %785 = vmatprep.subr.mxu0 0.0
    %786 = vmatpush1.msra.mxu0 0.0
    %787 = vmatprep.subr.mxu0 0.0
    %788 = vmatpush1.msra.mxu0 0.0
    %789 = vmatprep.subr.mxu0 0.0
    %790 = vmatpush1.msra.mxu0 0.0
    %791 = vmatprep.subr.mxu0 0.0
    %792 = vmatpush1.msra.mxu0 0.0
    %793 = vmatprep.subr.mxu0 0.0
    %794 = vmatpush1.msra.mxu0 0.0
    %795 = vmatprep.mubr.f32.mxu0 0.0
    %796 = vmatmul.mubr.f32.gmra.mrb[0].mxu0 %v729
    %v797 = vpop.f32.mrb[0].mxu0
    %v798 = vadd.f32 %v725, %v797
    %v799 = vpop.f32.mrb[0].mxu0
    %800 = vdwg.mxu0
    %v801 = vld [vmem:[%s239 + $0x2] sm:$0xf]
    %v803 = vsel %vm264, %v801, 0
    %805 = vmatprep.subr.mxu0 0.0
    %806 = vmatpush1.msra.mxu0 %v413
    %807 = vmatprep.subr.mxu0 0.0
    %808 = vmatpush1.msra.mxu0 %v414
    %809 = vmatprep.subr.mxu0 0.0
    %810 = vmatpush1.msra.mxu0 %v415
    %811 = vmatprep.subr.mxu0 0.0
    %812 = vmatpush1.msra.mxu0 %v416
    %813 = vmatprep.subr.mxu0 0.0
    %814 = vmatpush1.msra.mxu0 %v417
    %815 = vmatprep.subr.mxu0 0.0
    %816 = vmatpush1.msra.mxu0 %v418
    %817 = vmatprep.subr.mxu0 0.0
    %818 = vmatpush1.msra.mxu0 %v419
    %819 = vmatprep.subr.mxu0 0.0
    %820 = vmatpush1.msra.mxu0 %v420
    %821 = vmatprep.subr.mxu0 0.0
    %822 = vmatpush1.msra.mxu0 0.0
    %823 = vmatprep.subr.mxu0 0.0
    %824 = vmatpush1.msra.mxu0 0.0
    %825 = vmatprep.subr.mxu0 0.0
    %826 = vmatpush1.msra.mxu0 0.0
    %827 = vmatprep.subr.mxu0 0.0
    %828 = vmatpush1.msra.mxu0 0.0
    %829 = vmatprep.subr.mxu0 0.0
    %830 = vmatpush1.msra.mxu0 0.0
    %831 = vmatprep.subr.mxu0 0.0
    %832 = vmatpush1.msra.mxu0 0.0
    %833 = vmatprep.subr.mxu0 0.0
    %834 = vmatpush1.msra.mxu0 0.0
    %835 = vmatprep.subr.mxu0 0.0
    %836 = vmatpush1.msra.mxu0 0.0
    %837 = vmatprep.subr.mxu0 0.0
    %838 = vmatpush1.msra.mxu0 0.0
    %839 = vmatprep.subr.mxu0 0.0
    %840 = vmatpush1.msra.mxu0 0.0
    %841 = vmatprep.subr.mxu0 0.0
    %842 = vmatpush1.msra.mxu0 0.0
    %843 = vmatprep.subr.mxu0 0.0
    %844 = vmatpush1.msra.mxu0 0.0
    %845 = vmatprep.subr.mxu0 0.0
    %846 = vmatpush1.msra.mxu0 0.0
    %847 = vmatprep.subr.mxu0 0.0
    %848 = vmatpush1.msra.mxu0 0.0
    %849 = vmatprep.subr.mxu0 0.0
    %850 = vmatpush1.msra.mxu0 0.0
    %851 = vmatprep.subr.mxu0 0.0
    %852 = vmatpush1.msra.mxu0 0.0
    %853 = vmatprep.subr.mxu0 0.0
    %854 = vmatpush1.msra.mxu0 0.0
    %855 = vmatprep.subr.mxu0 0.0
    %856 = vmatpush1.msra.mxu0 0.0
    %857 = vmatprep.subr.mxu0 0.0
    %858 = vmatpush1.msra.mxu0 0.0
    %859 = vmatprep.subr.mxu0 0.0
    %860 = vmatpush1.msra.mxu0 0.0
    %861 = vmatprep.subr.mxu0 0.0
    %862 = vmatpush1.msra.mxu0 0.0
    %863 = vmatprep.subr.mxu0 0.0
    %864 = vmatpush1.msra.mxu0 0.0
    %865 = vmatprep.subr.mxu0 0.0
    %866 = vmatpush1.msra.mxu0 0.0
    %867 = vmatprep.subr.mxu0 0.0
    %868 = vmatpush1.msra.mxu0 0.0
    %869 = vmatprep.mubr.f32.mxu0 0.0
    %870 = vmatmul.mubr.f32.gmra.mrb[0].mxu0 %v803
    %v871 = vpop.f32.mrb[0].mxu0
    %v872 = vadd.f32 0.0, %v871
    %v873 = vpop.f32.mrb[0].mxu0
    %874 = vdwg.mxu0
    %v875 = vadd.f32 %v798, %v872
    %876 = vmatprep.subr.mxu0 0.0
    %877 = vmatpush1.msra.mxu0 %v505
    %878 = vmatprep.subr.mxu0 0.0
    %879 = vmatpush1.msra.mxu0 %v506
    %880 = vmatprep.subr.mxu0 0.0
    %881 = vmatpush1.msra.mxu0 %v507
    %882 = vmatprep.subr.mxu0 0.0
    %883 = vmatpush1.msra.mxu0 %v508
    %884 = vmatprep.subr.mxu0 0.0
    %885 = vmatpush1.msra.mxu0 %v509
    %886 = vmatprep.subr.mxu0 0.0
    %887 = vmatpush1.msra.mxu0 %v510
    %888 = vmatprep.subr.mxu0 0.0
    %889 = vmatpush1.msra.mxu0 %v511
    %890 = vmatprep.subr.mxu0 0.0
    %891 = vmatpush1.msra.mxu0 %v512
    %892 = vmatprep.subr.mxu0 0.0
    %893 = vmatpush1.msra.mxu0 0.0
    %894 = vmatprep.subr.mxu0 0.0
    %895 = vmatpush1.msra.mxu0 0.0
    %896 = vmatprep.subr.mxu0 0.0
    %897 = vmatpush1.msra.mxu0 0.0
    %898 = vmatprep.subr.mxu0 0.0
    %899 = vmatpush1.msra.mxu0 0.0
    %900 = vmatprep.subr.mxu0 0.0
    %901 = vmatpush1.msra.mxu0 0.0
    %902 = vmatprep.subr.mxu0 0.0
    %903 = vmatpush1.msra.mxu0 0.0
    %904 = vmatprep.subr.mxu0 0.0
    %905 = vmatpush1.msra.mxu0 0.0
    %906 = vmatprep.subr.mxu0 0.0
    %907 = vmatpush1.msra.mxu0 0.0
    %908 = vmatprep.subr.mxu0 0.0
    %909 = vmatpush1.msra.mxu0 0.0
    %910 = vmatprep.subr.mxu0 0.0
    %911 = vmatpush1.msra.mxu0 0.0
    %912 = vmatprep.subr.mxu0 0.0
    %913 = vmatpush1.msra.mxu0 0.0
    %914 = vmatprep.subr.mxu0 0.0
    %915 = vmatpush1.msra.mxu0 0.0
    %916 = vmatprep.subr.mxu0 0.0
    %917 = vmatpush1.msra.mxu0 0.0
    %918 = vmatprep.subr.mxu0 0.0
    %919 = vmatpush1.msra.mxu0 0.0
    %920 = vmatprep.subr.mxu0 0.0
    %921 = vmatpush1.msra.mxu0 0.0
    %922 = vmatprep.subr.mxu0 0.0
    %923 = vmatpush1.msra.mxu0 0.0
    %924 = vmatprep.subr.mxu0 0.0
    %925 = vmatpush1.msra.mxu0 0.0
    %926 = vmatprep.subr.mxu0 0.0
    %927 = vmatpush1.msra.mxu0 0.0
    %928 = vmatprep.subr.mxu0 0.0
    %929 = vmatpush1.msra.mxu0 0.0
    %930 = vmatprep.subr.mxu0 0.0
    %931 = vmatpush1.msra.mxu0 0.0
    %932 = vmatprep.subr.mxu0 0.0
    %933 = vmatpush1.msra.mxu0 0.0
    %934 = vmatprep.subr.mxu0 0.0
    %935 = vmatpush1.msra.mxu0 0.0
    %936 = vmatprep.subr.mxu0 0.0
    %937 = vmatpush1.msra.mxu0 0.0
    %938 = vmatprep.subr.mxu0 0.0
    %939 = vmatpush1.msra.mxu0 0.0
    %940 = vmatprep.mubr.f32.mxu0 0.0
    %941 = vmatmul.mubr.f32.gmra.mrb[0].mxu0 %v803
    %v942 = vpop.f32.mrb[0].mxu0
    %v943 = vadd.f32 0.0, %v942
    %v944 = vpop.f32.mrb[0].mxu0
    %945 = vdwg.mxu0
    %946 = vmatprep.subr.mxu0 0.0
    %947 = vmatpush1.msra.mxu0 %v496
    %948 = vmatprep.subr.mxu0 0.0
    %949 = vmatpush1.msra.mxu0 %v497
    %950 = vmatprep.subr.mxu0 0.0
    %951 = vmatpush1.msra.mxu0 %v498
    %952 = vmatprep.subr.mxu0 0.0
    %953 = vmatpush1.msra.mxu0 %v499
    %954 = vmatprep.subr.mxu0 0.0
    %955 = vmatpush1.msra.mxu0 %v500
    %956 = vmatprep.subr.mxu0 0.0
    %957 = vmatpush1.msra.mxu0 %v501
    %958 = vmatprep.subr.mxu0 0.0
    %959 = vmatpush1.msra.mxu0 %v502
    %960 = vmatprep.subr.mxu0 0.0
    %961 = vmatpush1.msra.mxu0 %v503
    %962 = vmatprep.subr.mxu0 0.0
    %963 = vmatpush1.msra.mxu0 0.0
    %964 = vmatprep.subr.mxu0 0.0
    %965 = vmatpush1.msra.mxu0 0.0
    %966 = vmatprep.subr.mxu0 0.0
    %967 = vmatpush1.msra.mxu0 0.0
    %968 = vmatprep.subr.mxu0 0.0
    %969 = vmatpush1.msra.mxu0 0.0
    %970 = vmatprep.subr.mxu0 0.0
    %971 = vmatpush1.msra.mxu0 0.0
    %972 = vmatprep.subr.mxu0 0.0
    %973 = vmatpush1.msra.mxu0 0.0
    %974 = vmatprep.subr.mxu0 0.0
    %975 = vmatpush1.msra.mxu0 0.0
    %976 = vmatprep.subr.mxu0 0.0
    %977 = vmatpush1.msra.mxu0 0.0
    %978 = vmatprep.subr.mxu0 0.0
    %979 = vmatpush1.msra.mxu0 0.0
    %980 = vmatprep.subr.mxu0 0.0
    %981 = vmatpush1.msra.mxu0 0.0
    %982 = vmatprep.subr.mxu0 0.0
    %983 = vmatpush1.msra.mxu0 0.0
    %984 = vmatprep.subr.mxu0 0.0
    %985 = vmatpush1.msra.mxu0 0.0
    %986 = vmatprep.subr.mxu0 0.0
    %987 = vmatpush1.msra.mxu0 0.0
    %988 = vmatprep.subr.mxu0 0.0
    %989 = vmatpush1.msra.mxu0 0.0
    %990 = vmatprep.subr.mxu0 0.0
    %991 = vmatpush1.msra.mxu0 0.0
    %992 = vmatprep.subr.mxu0 0.0
    %993 = vmatpush1.msra.mxu0 0.0
    %994 = vmatprep.subr.mxu0 0.0
    %995 = vmatpush1.msra.mxu0 0.0
    %996 = vmatprep.subr.mxu0 0.0
    %997 = vmatpush1.msra.mxu0 0.0
    %998 = vmatprep.subr.mxu0 0.0
    %999 = vmatpush1.msra.mxu0 0.0
    %1000 = vmatprep.subr.mxu0 0.0
    %1001 = vmatpush1.msra.mxu0 0.0
    %1002 = vmatprep.subr.mxu0 0.0
    %1003 = vmatpush1.msra.mxu0 0.0
    %1004 = vmatprep.subr.mxu0 0.0
    %1005 = vmatpush1.msra.mxu0 0.0
    %1006 = vmatprep.subr.mxu0 0.0
    %1007 = vmatpush1.msra.mxu0 0.0
    %1008 = vmatprep.subr.mxu0 0.0
    %1009 = vmatpush1.msra.mxu0 0.0
    %1010 = vmatprep.mubr.f32.mxu0 0.0
    %1011 = vmatmul.mubr.f32.gmra.mrb[0].mxu0 %v656
    %v1012 = vpop.f32.mrb[0].mxu0
    %v1013 = vadd.f32 %v943, %v1012
    %v1014 = vpop.f32.mrb[0].mxu0
    %1015 = vdwg.mxu0
    %vm1016 = vcmask 1043456
    %v1017 = vsel %vm1016, %v494, 0.0
    %v1018 = vrot.slane %v1017, 4
    %v1019 = vadd.f32 %v1017, %v1018
    %v1020 = vrot.slane %v1019, 2
    %v1021 = vadd.f32 %v1019, %v1020
    %v1022 = vrot.slane %v1021, 1
    %v1023 = vadd.f32 %v1021, %v1022
    %v1024 = vadd.f32 %v1023, 0.0
    %v1025 = vmul.f32 %v494, %v494
    %v1026 = vsel %vm1016, %v1025, 0.0
    %v1027 = vrot.slane %v1026, 4
    %v1028 = vadd.f32 %v1026, %v1027
    %v1029 = vrot.slane %v1028, 2
    %v1030 = vadd.f32 %v1028, %v1029
    %v1031 = vrot.slane %v1030, 1
    %v1032 = vadd.f32 %v1030, %v1031
    %v1033 = vadd.f32 %v1032, 0.0
    %v1034 = vsel %vm1016, %v650, 0.0
    %v1035 = vrot.slane %v1034, 4
    %v1036 = vadd.f32 %v1034, %v1035
    %v1037 = vrot.slane %v1036, 2
    %v1038 = vadd.f32 %v1036, %v1037
    %v1039 = vrot.slane %v1038, 1
    %v1040 = vadd.f32 %v1038, %v1039
    %v1041 = vadd.f32 %v1024, %v1040
    %v1042 = vmul.f32 %v650, %v650
    %v1043 = vsel %vm1016, %v1042, 0.0
    %v1044 = vrot.slane %v1043, 4
    %v1045 = vadd.f32 %v1043, %v1044
    %v1046 = vrot.slane %v1045, 2
    %v1047 = vadd.f32 %v1045, %v1046
    %v1048 = vrot.slane %v1047, 1
    %v1049 = vadd.f32 %v1047, %v1048
    %v1050 = vadd.f32 %v1033, %v1049
    %v1051 = vsel %vm1016, %v875, 0.0
    %v1052 = vrot.slane %v1051, 4
    %v1053 = vadd.f32 %v1051, %v1052
    %v1054 = vrot.slane %v1053, 2
    %v1055 = vadd.f32 %v1053, %v1054
    %v1056 = vrot.slane %v1055, 1
    %v1057 = vadd.f32 %v1055, %v1056
    %v1058 = vadd.f32 %v1041, %v1057
    %v1059 = vmul.f32 %v875, %v875
    %v1060 = vsel %vm1016, %v1059, 0.0
    %v1061 = vrot.slane %v1060, 4
    %v1062 = vadd.f32 %v1060, %v1061
    %v1063 = vrot.slane %v1062, 2
    %v1064 = vadd.f32 %v1062, %v1063
    %v1065 = vrot.slane %v1064, 1
    %v1066 = vadd.f32 %v1064, %v1065
    %v1067 = vadd.f32 %v1050, %v1066
    %v1068 = vsel %vm1016, %v1013, 0.0
    %v1069 = vrot.slane %v1068, 4
    %v1070 = vadd.f32 %v1068, %v1069
    %v1071 = vrot.slane %v1070, 2
    %v1072 = vadd.f32 %v1070, %v1071
    %v1073 = vrot.slane %v1072, 1
    %v1074 = vadd.f32 %v1072, %v1073
    %v1075 = vadd.f32 %v1058, %v1074
    %v1076 = vmul.f32 %v1013, %v1013
    %v1077 = vsel %vm1016, %v1076, 0.0
    %v1078 = vrot.slane %v1077, 4
    %v1079 = vadd.f32 %v1077, %v1078
    %v1080 = vrot.slane %v1079, 2
    %v1081 = vadd.f32 %v1079, %v1080
    %v1082 = vrot.slane %v1081, 1
    %v1083 = vadd.f32 %v1081, %v1082
    %v1084 = vadd.f32 %v1067, %v1083
    %v1085 = vlaneseq
    %v1086 = vshrl.u32 %v1085, 7
    %v1087 = vadd.s32 %v1086, 8
    %v1088 = vadd.s32 %v1086, 16
    %v1089 = vadd.s32 %v1086, 24
    %v1090 = vadd.s32 %v1086, 32
    %v1091 = vadd.s32 %v1086, 40
    %v1092 = vadd.s32 %v1086, 48
    %v1093 = vadd.s32 %v1086, 56
    %v1094 = vadd.s32 %v1086, 64
    %v1095 = vadd.s32 %v1086, 72
    %v1096 = vadd.s32 %v1086, 80
    %v1097 = vadd.s32 %v1086, 88
    %v1098 = vadd.s32 %v1086, 96
    %v1099 = vadd.s32 %v1086, 104
    %v1100 = vadd.s32 %v1086, 112
    %v1101 = vadd.s32 %v1086, 120
    %v1102 = vand.u32 %v1086, 15
    %v1103 = vand.u32 %v1087, 15
    %v1104 = vand.u32 %v1088, 15
    %v1105 = vand.u32 %v1089, 15
    %v1106 = vand.u32 %v1090, 15
    %v1107 = vand.u32 %v1091, 15
    %v1108 = vand.u32 %v1092, 15
    %v1109 = vand.u32 %v1093, 15
    %v1110 = vand.u32 %v1094, 15
    %v1111 = vand.u32 %v1095, 15
    %v1112 = vand.u32 %v1096, 15
    %v1113 = vand.u32 %v1097, 15
    %v1114 = vand.u32 %v1098, 15
    %v1115 = vand.u32 %v1099, 15
    %v1116 = vand.u32 %v1100, 15
    %v1117 = vand.u32 %v1101, 15
    %v1118 = vlaneseq
    %v1119 = vand.u32 %v1118, 127
    %vm1120 = vcmp.eq.s32.totalorder %v1102, %v1119
    %vm1121 = vcmp.eq.s32.totalorder %v1103, %v1119
    %vm1122 = vcmp.eq.s32.totalorder %v1104, %v1119
    %vm1123 = vcmp.eq.s32.totalorder %v1105, %v1119
    %vm1124 = vcmp.eq.s32.totalorder %v1106, %v1119
    %vm1125 = vcmp.eq.s32.totalorder %v1107, %v1119
    %vm1126 = vcmp.eq.s32.totalorder %v1108, %v1119
    %vm1127 = vcmp.eq.s32.totalorder %v1109, %v1119
    %vm1128 = vcmp.eq.s32.totalorder %v1110, %v1119
    %vm1129 = vcmp.eq.s32.totalorder %v1111, %v1119
    %vm1130 = vcmp.eq.s32.totalorder %v1112, %v1119
    %vm1131 = vcmp.eq.s32.totalorder %v1113, %v1119
    %vm1132 = vcmp.eq.s32.totalorder %v1114, %v1119
    %vm1133 = vcmp.eq.s32.totalorder %v1115, %v1119
    %vm1134 = vcmp.eq.s32.totalorder %v1116, %v1119
    %vm1135 = vcmp.eq.s32.totalorder %v1117, %v1119
    %v1136 = vsel %vm1120, 1, 0
    %v1137 = vsel %vm1121, 1, 0
    %v1138 = vsel %vm1122, 1, 0
    %v1139 = vsel %vm1123, 1, 0
    %v1140 = vsel %vm1124, 1, 0
    %v1141 = vsel %vm1125, 1, 0
    %v1142 = vsel %vm1126, 1, 0
    %v1143 = vsel %vm1127, 1, 0
    %v1144 = vsel %vm1128, 1, 0
    %v1145 = vsel %vm1129, 1, 0
    %v1146 = vsel %vm1130, 1, 0
    %v1147 = vsel %vm1131, 1, 0
    %v1148 = vsel %vm1132, 1, 0
    %v1149 = vsel %vm1133, 1, 0
    %v1150 = vsel %vm1134, 1, 0
    %v1151 = vsel %vm1135, 1, 0
    %v1152 = vcvt.s32.f32 %v1136
    %v1153 = vcvt.s32.f32 %v1137
    %v1154 = vcvt.s32.f32 %v1138
    %v1155 = vcvt.s32.f32 %v1139
    %v1156 = vcvt.s32.f32 %v1140
    %v1157 = vcvt.s32.f32 %v1141
    %v1158 = vcvt.s32.f32 %v1142
    %v1159 = vcvt.s32.f32 %v1143
    %v1160 = vcvt.s32.f32 %v1144
    %v1161 = vcvt.s32.f32 %v1145
    %v1162 = vcvt.s32.f32 %v1146
    %v1163 = vcvt.s32.f32 %v1147
    %v1164 = vcvt.s32.f32 %v1148
    %v1165 = vcvt.s32.f32 %v1149
    %v1166 = vcvt.s32.f32 %v1150
    %v1167 = vcvt.s32.f32 %v1151
    %v1168 = vand.u32 %v1119, 15
    %vm1169 = vcmp.eq.s32.totalorder %v1168, %v1086
    %vm1170 = vcmp.eq.s32.totalorder %v1168, %v1087
    %v1171 = vsel %vm1169, 1, 0
    %v1172 = vsel %vm1170, 1, 0
    %v1173 = vcvt.s32.f32 %v1171
    %v1174 = vcvt.s32.f32 %v1172
    %1175 = vmatprep.subr.mxu0 0.0
    %1176 = vmatpush1.msra.mxu0 %v1152
    %1177 = vmatprep.subr.mxu0 0.0
    %1178 = vmatpush1.msra.mxu0 %v1153
    %1179 = vmatprep.subr.mxu0 0.0
    %1180 = vmatpush1.msra.mxu0 %v1154
    %1181 = vmatprep.subr.mxu0 0.0
    %1182 = vmatpush1.msra.mxu0 %v1155
    %1183 = vmatprep.subr.mxu0 0.0
    %1184 = vmatpush1.msra.mxu0 %v1156
    %1185 = vmatprep.subr.mxu0 0.0
    %1186 = vmatpush1.msra.mxu0 %v1157
    %1187 = vmatprep.subr.mxu0 0.0
    %1188 = vmatpush1.msra.mxu0 %v1158
    %1189 = vmatprep.subr.mxu0 0.0
    %1190 = vmatpush1.msra.mxu0 %v1159
    %1191 = vmatprep.subr.mxu0 0.0
    %1192 = vmatpush1.msra.mxu0 %v1160
    %1193 = vmatprep.subr.mxu0 0.0
    %1194 = vmatpush1.msra.mxu0 %v1161
    %1195 = vmatprep.subr.mxu0 0.0
    %1196 = vmatpush1.msra.mxu0 %v1162
    %1197 = vmatprep.subr.mxu0 0.0
    %1198 = vmatpush1.msra.mxu0 %v1163
    %1199 = vmatprep.subr.mxu0 0.0
    %1200 = vmatpush1.msra.mxu0 %v1164
    %1201 = vmatprep.subr.mxu0 0.0
    %1202 = vmatpush1.msra.mxu0 %v1165
    %1203 = vmatprep.subr.mxu0 0.0
    %1204 = vmatpush1.msra.mxu0 %v1166
    %1205 = vmatprep.subr.mxu0 0.0
    %1206 = vmatpush1.msra.mxu0 %v1167
    %1207 = vmatprep.subr.mxu0 0.0
    %1208 = vmatpush1.msra.mxu0 0.0
    %1209 = vmatprep.subr.mxu0 0.0
    %1210 = vmatpush1.msra.mxu0 0.0
    %1211 = vmatprep.subr.mxu0 0.0
    %1212 = vmatpush1.msra.mxu0 0.0
    %1213 = vmatprep.subr.mxu0 0.0
    %1214 = vmatpush1.msra.mxu0 0.0
    %1215 = vmatprep.subr.mxu0 0.0
    %1216 = vmatpush1.msra.mxu0 0.0
    %1217 = vmatprep.subr.mxu0 0.0
    %1218 = vmatpush1.msra.mxu0 0.0
    %1219 = vmatprep.subr.mxu0 0.0
    %1220 = vmatpush1.msra.mxu0 0.0
    %1221 = vmatprep.subr.mxu0 0.0
    %1222 = vmatpush1.msra.mxu0 0.0
    %1223 = vmatprep.subr.mxu0 0.0
    %1224 = vmatpush1.msra.mxu0 0.0
    %1225 = vmatprep.subr.mxu0 0.0
    %1226 = vmatpush1.msra.mxu0 0.0
    %1227 = vmatprep.subr.mxu0 0.0
    %1228 = vmatpush1.msra.mxu0 0.0
    %1229 = vmatprep.subr.mxu0 0.0
    %1230 = vmatpush1.msra.mxu0 0.0
    %1231 = vmatprep.subr.mxu0 0.0
    %1232 = vmatpush1.msra.mxu0 0.0
    %1233 = vmatprep.subr.mxu0 0.0
    %1234 = vmatpush1.msra.mxu0 0.0
    %1235 = vmatprep.subr.mxu0 0.0
    %1236 = vmatpush1.msra.mxu0 0.0
    %1237 = vmatprep.subr.mxu0 0.0
    %1238 = vmatpush1.msra.mxu0 0.0
    %1239 = vmatprep.mubr.f32.mxu0 0.0
    %1240 = vmatmul.mubr.f32.gmra.mrb[0].mxu0 %v1075
    %v1241 = vpop.f32.mrb[0].mxu0
    %v1242 = vadd.f32 0.0, %v1241
    %v1243 = vpop.f32.mrb[0].mxu0
    %1244 = vdwg.mxu0
    %v1245 = vrcp.pop 128.0
    %v1246 = vmul.f32 %v1242, %v1245
    %1247 = vmatprep.subr.mxu0 0.0
    %1248 = vmatpush1.msra.mxu0 %v1152
    %1249 = vmatprep.subr.mxu0 0.0
    %1250 = vmatpush1.msra.mxu0 %v1153
    %1251 = vmatprep.subr.mxu0 0.0
    %1252 = vmatpush1.msra.mxu0 %v1154
    %1253 = vmatprep.subr.mxu0 0.0
    %1254 = vmatpush1.msra.mxu0 %v1155
    %1255 = vmatprep.subr.mxu0 0.0
    %1256 = vmatpush1.msra.mxu0 %v1156
    %1257 = vmatprep.subr.mxu0 0.0
    %1258 = vmatpush1.msra.mxu0 %v1157
    %1259 = vmatprep.subr.mxu0 0.0
    %1260 = vmatpush1.msra.mxu0 %v1158
    %1261 = vmatprep.subr.mxu0 0.0
    %1262 = vmatpush1.msra.mxu0 %v1159
    %1263 = vmatprep.subr.mxu0 0.0
    %1264 = vmatpush1.msra.mxu0 %v1160
    %1265 = vmatprep.subr.mxu0 0.0
    %1266 = vmatpush1.msra.mxu0 %v1161
    %1267 = vmatprep.subr.mxu0 0.0
    %1268 = vmatpush1.msra.mxu0 %v1162
    %1269 = vmatprep.subr.mxu0 0.0
    %1270 = vmatpush1.msra.mxu0 %v1163
    %1271 = vmatprep.subr.mxu0 0.0
    %1272 = vmatpush1.msra.mxu0 %v1164
    %1273 = vmatprep.subr.mxu0 0.0
    %1274 = vmatpush1.msra.mxu0 %v1165
    %1275 = vmatprep.subr.mxu0 0.0
    %1276 = vmatpush1.msra.mxu0 %v1166
    %1277 = vmatprep.subr.mxu0 0.0
    %1278 = vmatpush1.msra.mxu0 %v1167
    %1279 = vmatprep.subr.mxu0 0.0
    %1280 = vmatpush1.msra.mxu0 0.0
    %1281 = vmatprep.subr.mxu0 0.0
    %1282 = vmatpush1.msra.mxu0 0.0
    %1283 = vmatprep.subr.mxu0 0.0
    %1284 = vmatpush1.msra.mxu0 0.0
    %1285 = vmatprep.subr.mxu0 0.0
    %1286 = vmatpush1.msra.mxu0 0.0
    %1287 = vmatprep.subr.mxu0 0.0
    %1288 = vmatpush1.msra.mxu0 0.0
    %1289 = vmatprep.subr.mxu0 0.0
    %1290 = vmatpush1.msra.mxu0 0.0
    %1291 = vmatprep.subr.mxu0 0.0
    %1292 = vmatpush1.msra.mxu0 0.0
    %1293 = vmatprep.subr.mxu0 0.0
    %1294 = vmatpush1.msra.mxu0 0.0
    %1295 = vmatprep.subr.mxu0 0.0
    %1296 = vmatpush1.msra.mxu0 0.0
    %1297 = vmatprep.subr.mxu0 0.0
    %1298 = vmatpush1.msra.mxu0 0.0
    %1299 = vmatprep.subr.mxu0 0.0
    %1300 = vmatpush1.msra.mxu0 0.0
    %1301 = vmatprep.subr.mxu0 0.0
    %1302 = vmatpush1.msra.mxu0 0.0
    %1303 = vmatprep.subr.mxu0 0.0
    %1304 = vmatpush1.msra.mxu0 0.0
    %1305 = vmatprep.subr.mxu0 0.0
    %1306 = vmatpush1.msra.mxu0 0.0
    %1307 = vmatprep.subr.mxu0 0.0
    %1308 = vmatpush1.msra.mxu0 0.0
    %1309 = vmatprep.subr.mxu0 0.0
    %1310 = vmatpush1.msra.mxu0 0.0
    %1311 = vmatprep.mubr.f32.mxu0 0.0
    %1312 = vmatmul.mubr.f32.gmra.mrb[0].mxu0 %v1084
    %v1313 = vpop.f32.mrb[0].mxu0
    %v1314 = vadd.f32 0.0, %v1313
    %v1315 = vpop.f32.mrb[0].mxu0
    %1316 = vdwg.mxu0
    %v1317 = vmul.f32 %v1314, %v1245
    %v1318 = vmul.f32 %v1246, %v1246
    %v1319 = vsub.f32 %v1317, %v1318
    %v1320 = vld [vmem:[%s5] sm:$0x1]
    %v1321 = vadd.f32 %v1319, 1e-05
    %v1322 = vrsqrt.pop %v1321
    %v1323 = vmul.f32 %v1320, %v1322
    %v1324 = vld [vmem:[%s6] sm:$0x1]
    %v1325 = vmul.f32 %v1246, %v1323
    %v1326 = vsub.f32 %v1324, %v1325
    %vm1327 = vcmask 130048
    %v1329 = vsel %vm1327, %v1323, 0
    %1331 = vmatprep.subr.mxu0 0.0
    %1332 = vmatpush1.msra.mxu0 %v1173
    %1333 = vmatprep.subr.mxu0 0.0
    %1334 = vmatpush1.msra.mxu0 %v1174
    %1335 = vmatprep.subr.mxu0 0.0
    %1336 = vmatpush1.msra.mxu0 0.0
    %1337 = vmatprep.subr.mxu0 0.0
    %1338 = vmatpush1.msra.mxu0 0.0
    %1339 = vmatprep.subr.mxu0 0.0
    %1340 = vmatpush1.msra.mxu0 0.0
    %1341 = vmatprep.subr.mxu0 0.0
    %1342 = vmatpush1.msra.mxu0 0.0
    %1343 = vmatprep.subr.mxu0 0.0
    %1344 = vmatpush1.msra.mxu0 0.0
    %1345 = vmatprep.subr.mxu0 0.0
    %1346 = vmatpush1.msra.mxu0 0.0
    %1347 = vmatprep.subr.mxu0 0.0
    %1348 = vmatpush1.msra.mxu0 0.0
    %1349 = vmatprep.subr.mxu0 0.0
    %1350 = vmatpush1.msra.mxu0 0.0
    %1351 = vmatprep.subr.mxu0 0.0
    %1352 = vmatpush1.msra.mxu0 0.0
    %1353 = vmatprep.subr.mxu0 0.0
    %1354 = vmatpush1.msra.mxu0 0.0
    %1355 = vmatprep.subr.mxu0 0.0
    %1356 = vmatpush1.msra.mxu0 0.0
    %1357 = vmatprep.subr.mxu0 0.0
    %1358 = vmatpush1.msra.mxu0 0.0
    %1359 = vmatprep.subr.mxu0 0.0
    %1360 = vmatpush1.msra.mxu0 0.0
    %1361 = vmatprep.subr.mxu0 0.0
    %1362 = vmatpush1.msra.mxu0 0.0
    %1363 = vmatprep.subr.mxu0 0.0
    %1364 = vmatpush1.msra.mxu0 0.0
    %1365 = vmatprep.subr.mxu0 0.0
    %1366 = vmatpush1.msra.mxu0 0.0
    %1367 = vmatprep.subr.mxu0 0.0
    %1368 = vmatpush1.msra.mxu0 0.0
    %1369 = vmatprep.subr.mxu0 0.0
    %1370 = vmatpush1.msra.mxu0 0.0
    %1371 = vmatprep.subr.mxu0 0.0
    %1372 = vmatpush1.msra.mxu0 0.0
    %1373 = vmatprep.subr.mxu0 0.0
    %1374 = vmatpush1.msra.mxu0 0.0
    %1375 = vmatprep.subr.mxu0 0.0
    %1376 = vmatpush1.msra.mxu0 0.0
    %1377 = vmatprep.subr.mxu0 0.0
    %1378 = vmatpush1.msra.mxu0 0.0
    %1379 = vmatprep.subr.mxu0 0.0
    %1380 = vmatpush1.msra.mxu0 0.0
    %1381 = vmatprep.subr.mxu0 0.0
    %1382 = vmatpush1.msra.mxu0 0.0
    %1383 = vmatprep.subr.mxu0 0.0
    %1384 = vmatpush1.msra.mxu0 0.0
    %1385 = vmatprep.subr.mxu0 0.0
    %1386 = vmatpush1.msra.mxu0 0.0
    %1387 = vmatprep.subr.mxu0 0.0
    %1388 = vmatpush1.msra.mxu0 0.0
    %1389 = vmatprep.subr.mxu0 0.0
    %1390 = vmatpush1.msra.mxu0 0.0
    %1391 = vmatprep.subr.mxu0 0.0
    %1392 = vmatpush1.msra.mxu0 0.0
    %1393 = vmatprep.subr.mxu0 0.0
    %1394 = vmatpush1.msra.mxu0 0.0
    %1395 = vmatprep.mubr.f32.mxu0 0.0
    %1396 = vmatmul.mubr.f32.gmra.mrb[0].mxu0 %v1329
    %v1397 = vpop.f32.mrb[0].mxu0
    %v1398 = vadd.f32 0.0, %v1397
    %v1399 = vpop.f32.mrb[0].mxu0
    %1400 = vdwg.mxu0
    %v1402 = vsel %vm1327, %v1326, 0
    %1404 = vmatprep.subr.mxu0 0.0
    %1405 = vmatpush1.msra.mxu0 %v1173
    %1406 = vmatprep.subr.mxu0 0.0
    %1407 = vmatpush1.msra.mxu0 %v1174
    %1408 = vmatprep.subr.mxu0 0.0
    %1409 = vmatpush1.msra.mxu0 0.0
    %1410 = vmatprep.subr.mxu0 0.0
    %1411 = vmatpush1.msra.mxu0 0.0
    %1412 = vmatprep.subr.mxu0 0.0
    %1413 = vmatpush1.msra.mxu0 0.0
    %1414 = vmatprep.subr.mxu0 0.0
    %1415 = vmatpush1.msra.mxu0 0.0
    %1416 = vmatprep.subr.mxu0 0.0
    %1417 = vmatpush1.msra.mxu0 0.0
    %1418 = vmatprep.subr.mxu0 0.0
    %1419 = vmatpush1.msra.mxu0 0.0
    %1420 = vmatprep.subr.mxu0 0.0
    %1421 = vmatpush1.msra.mxu0 0.0
    %1422 = vmatprep.subr.mxu0 0.0
    %1423 = vmatpush1.msra.mxu0 0.0
    %1424 = vmatprep.subr.mxu0 0.0
    %1425 = vmatpush1.msra.mxu0 0.0
    %1426 = vmatprep.subr.mxu0 0.0
    %1427 = vmatpush1.msra.mxu0 0.0
    %1428 = vmatprep.subr.mxu0 0.0
    %1429 = vmatpush1.msra.mxu0 0.0
    %1430 = vmatprep.subr.mxu0 0.0
    %1431 = vmatpush1.msra.mxu0 0.0
    %1432 = vmatprep.subr.mxu0 0.0
    %1433 = vmatpush1.msra.mxu0 0.0
    %1434 = vmatprep.subr.mxu0 0.0
    %1435 = vmatpush1.msra.mxu0 0.0
    %1436 = vmatprep.subr.mxu0 0.0
    %1437 = vmatpush1.msra.mxu0 0.0
    %1438 = vmatprep.subr.mxu0 0.0
    %1439 = vmatpush1.msra.mxu0 0.0
    %1440 = vmatprep.subr.mxu0 0.0
    %1441 = vmatpush1.msra.mxu0 0.0
    %1442 = vmatprep.subr.mxu0 0.0
    %1443 = vmatpush1.msra.mxu0 0.0
    %1444 = vmatprep.subr.mxu0 0.0
    %1445 = vmatpush1.msra.mxu0 0.0
    %1446 = vmatprep.subr.mxu0 0.0
    %1447 = vmatpush1.msra.mxu0 0.0
    %1448 = vmatprep.subr.mxu0 0.0
    %1449 = vmatpush1.msra.mxu0 0.0
    %1450 = vmatprep.subr.mxu0 0.0
    %1451 = vmatpush1.msra.mxu0 0.0
    %1452 = vmatprep.subr.mxu0 0.0
    %1453 = vmatpush1.msra.mxu0 0.0
    %1454 = vmatprep.subr.mxu0 0.0
    %1455 = vmatpush1.msra.mxu0 0.0
    %1456 = vmatprep.subr.mxu0 0.0
    %1457 = vmatpush1.msra.mxu0 0.0
    %1458 = vmatprep.subr.mxu0 0.0
    %1459 = vmatpush1.msra.mxu0 0.0
    %1460 = vmatprep.subr.mxu0 0.0
    %1461 = vmatpush1.msra.mxu0 0.0
    %1462 = vmatprep.subr.mxu0 0.0
    %1463 = vmatpush1.msra.mxu0 0.0
    %1464 = vmatprep.subr.mxu0 0.0
    %1465 = vmatpush1.msra.mxu0 0.0
    %1466 = vmatprep.subr.mxu0 0.0
    %1467 = vmatpush1.msra.mxu0 0.0
    %1468 = vmatprep.mubr.f32.mxu0 0.0
    %1469 = vmatmul.mubr.f32.gmra.mrb[0].mxu0 %v1402
    %v1470 = vpop.f32.mrb[0].mxu0
    %v1471 = vadd.f32 0.0, %v1470
    %v1472 = vpop.f32.mrb[0].mxu0
    %1473 = vdwg.mxu0
    %v1474 = vlaneseq
    %v1475 = vshrl.u32 %v1474, 7
    %v1476 = vsub.s32 0, %v1475
    %v1477 = vrot.slane %v1398, %v1476
    %v1478 = vmul.f32 %v494, %v1477
    %v1479 = vlaneseq
    %v1480 = vshrl.u32 %v1479, 7
    %v1481 = vsub.s32 0, %v1480
    %v1482 = vrot.slane %v1471, %v1481
    %v1483 = vadd.f32 %v1478, %v1482
    %v1484 = vmax.f32 %v1483, 0.0
    %v1485 = vmul.u32 %v1119, 2
    %v1486 = vadd.s32 %v1485, 1
    %vm1487 = vcmp.eq.s32.totalorder %v1086, %v1486
    %vm1488 = vcmp.eq.s32.totalorder %v1087, %v1486
    %v1489 = vsel %vm1487, 1, 0
    %v1490 = vsel %vm1488, 1, 0
    %v1491 = vcvt.s32.f32 %v1489
    %v1492 = vcvt.s32.f32 %v1490
    %v1493 = vmul.f32 %v650, %v1477
    %v1494 = vadd.f32 %v1493, %v1482
    %v1495 = vmax.f32 %v1494, 0.0
    %v1496 = vadd.s32 %v1486, 1
    %vm1497 = vcmp.eq.s32.totalorder %v1086, %v1496
    %vm1498 = vcmp.eq.s32.totalorder %v1087, %v1496
    %v1499 = vsel %vm1497, 1, 0
    %v1500 = vsel %vm1498, 1, 0
    %v1501 = vcvt.s32.f32 %v1499
    %v1502 = vcvt.s32.f32 %v1500
    %vm1503 = vcmask 31744
    %v1505 = vsel %vm1503, %v1501, 0
    %v1508 = vsel %vm1503, %v1502, 0
    %v1511 = vsel %vm1016, %v1495, 0
    %1513 = vmatprep.subr.mxu0 0.0
    %1514 = vmatpush1.msra.mxu0 %v1511
    %1515 = vmatprep.subr.mxu0 0.0
    %1516 = vmatpush1.msra.mxu0 0.0
    %1517 = vmatprep.subr.mxu0 0.0
    %1518 = vmatpush1.msra.mxu0 0.0
    %1519 = vmatprep.subr.mxu0 0.0
    %1520 = vmatpush1.msra.mxu0 0.0
    %1521 = vmatprep.subr.mxu0 0.0
    %1522 = vmatpush1.msra.mxu0 0.0
    %1523 = vmatprep.subr.mxu0 0.0
    %1524 = vmatpush1.msra.mxu0 0.0
    %1525 = vmatprep.subr.mxu0 0.0
    %1526 = vmatpush1.msra.mxu0 0.0
    %1527 = vmatprep.subr.mxu0 0.0
    %1528 = vmatpush1.msra.mxu0 0.0
    %1529 = vmatprep.subr.mxu0 0.0
    %1530 = vmatpush1.msra.mxu0 0.0
    %1531 = vmatprep.subr.mxu0 0.0
    %1532 = vmatpush1.msra.mxu0 0.0
    %1533 = vmatprep.subr.mxu0 0.0
    %1534 = vmatpush1.msra.mxu0 0.0
    %1535 = vmatprep.subr.mxu0 0.0
    %1536 = vmatpush1.msra.mxu0 0.0
    %1537 = vmatprep.subr.mxu0 0.0
    %1538 = vmatpush1.msra.mxu0 0.0
    %1539 = vmatprep.subr.mxu0 0.0
    %1540 = vmatpush1.msra.mxu0 0.0
    %1541 = vmatprep.subr.mxu0 0.0
    %1542 = vmatpush1.msra.mxu0 0.0
    %1543 = vmatprep.subr.mxu0 0.0
    %1544 = vmatpush1.msra.mxu0 0.0
    %1545 = vmatprep.subr.mxu0 0.0
    %1546 = vmatpush1.msra.mxu0 0.0
    %1547 = vmatprep.subr.mxu0 0.0
    %1548 = vmatpush1.msra.mxu0 0.0
    %1549 = vmatprep.subr.mxu0 0.0
    %1550 = vmatpush1.msra.mxu0 0.0
    %1551 = vmatprep.subr.mxu0 0.0
    %1552 = vmatpush1.msra.mxu0 0.0
    %1553 = vmatprep.subr.mxu0 0.0
    %1554 = vmatpush1.msra.mxu0 0.0
    %1555 = vmatprep.subr.mxu0 0.0
    %1556 = vmatpush1.msra.mxu0 0.0
    %1557 = vmatprep.subr.mxu0 0.0
    %1558 = vmatpush1.msra.mxu0 0.0
    %1559 = vmatprep.subr.mxu0 0.0
    %1560 = vmatpush1.msra.mxu0 0.0
    %1561 = vmatprep.subr.mxu0 0.0
    %1562 = vmatpush1.msra.mxu0 0.0
    %1563 = vmatprep.subr.mxu0 0.0
    %1564 = vmatpush1.msra.mxu0 0.0
    %1565 = vmatprep.subr.mxu0 0.0
    %1566 = vmatpush1.msra.mxu0 0.0
    %1567 = vmatprep.subr.mxu0 0.0
    %1568 = vmatpush1.msra.mxu0 0.0
    %1569 = vmatprep.subr.mxu0 0.0
    %1570 = vmatpush1.msra.mxu0 0.0
    %1571 = vmatprep.subr.mxu0 0.0
    %1572 = vmatpush1.msra.mxu0 0.0
    %1573 = vmatprep.subr.mxu0 0.0
    %1574 = vmatpush1.msra.mxu0 0.0
    %1575 = vmatprep.subr.mxu0 0.0
    %1576 = vmatpush1.msra.mxu0 0.0
    %1577 = vmatprep.mubr.f32.mxu0 0.0
    %1578 = vmatmul.mubr.f32.gmra.mrb[0].mxu0 %v1505
    %v1579 = vpop.f32.mrb[0].mxu0
    %v1580 = vadd.f32 0.0, %v1579
    %v1581 = vpop.f32.mrb[0].mxu0
    %1582 = vmatprep.mubr.f32.mxu0 0.0
    %1583 = vmatmul.mubr.f32.gmra.mrb[0].mxu0 %v1508
    %v1584 = vpop.f32.mrb[0].mxu0
    %v1585 = vadd.f32 0.0, %v1584
    %v1586 = vpop.f32.mrb[0].mxu0
    %1587 = vdwg.mxu0
    %v1589 = vsel %vm1503, %v1491, 0
    %v1592 = vsel %vm1503, %v1492, 0
    %v1595 = vsel %vm1016, %v1484, 0
    %1597 = vmatprep.subr.mxu0 0.0
    %1598 = vmatpush1.msra.mxu0 %v1595
    %1599 = vmatprep.subr.mxu0 0.0
    %1600 = vmatpush1.msra.mxu0 0.0
    %1601 = vmatprep.subr.mxu0 0.0
    %1602 = vmatpush1.msra.mxu0 0.0
    %1603 = vmatprep.subr.mxu0 0.0
    %1604 = vmatpush1.msra.mxu0 0.0
    %1605 = vmatprep.subr.mxu0 0.0
    %1606 = vmatpush1.msra.mxu0 0.0
    %1607 = vmatprep.subr.mxu0 0.0
    %1608 = vmatpush1.msra.mxu0 0.0
    %1609 = vmatprep.subr.mxu0 0.0
    %1610 = vmatpush1.msra.mxu0 0.0
    %1611 = vmatprep.subr.mxu0 0.0
    %1612 = vmatpush1.msra.mxu0 0.0
    %1613 = vmatprep.subr.mxu0 0.0
    %1614 = vmatpush1.msra.mxu0 0.0
    %1615 = vmatprep.subr.mxu0 0.0
    %1616 = vmatpush1.msra.mxu0 0.0
    %1617 = vmatprep.subr.mxu0 0.0
    %1618 = vmatpush1.msra.mxu0 0.0
    %1619 = vmatprep.subr.mxu0 0.0
    %1620 = vmatpush1.msra.mxu0 0.0
    %1621 = vmatprep.subr.mxu0 0.0
    %1622 = vmatpush1.msra.mxu0 0.0
    %1623 = vmatprep.subr.mxu0 0.0
    %1624 = vmatpush1.msra.mxu0 0.0
    %1625 = vmatprep.subr.mxu0 0.0
    %1626 = vmatpush1.msra.mxu0 0.0
    %1627 = vmatprep.subr.mxu0 0.0
    %1628 = vmatpush1.msra.mxu0 0.0
    %1629 = vmatprep.subr.mxu0 0.0
    %1630 = vmatpush1.msra.mxu0 0.0
    %1631 = vmatprep.subr.mxu0 0.0
    %1632 = vmatpush1.msra.mxu0 0.0
    %1633 = vmatprep.subr.mxu0 0.0
    %1634 = vmatpush1.msra.mxu0 0.0
    %1635 = vmatprep.subr.mxu0 0.0
    %1636 = vmatpush1.msra.mxu0 0.0
    %1637 = vmatprep.subr.mxu0 0.0
    %1638 = vmatpush1.msra.mxu0 0.0
    %1639 = vmatprep.subr.mxu0 0.0
    %1640 = vmatpush1.msra.mxu0 0.0
    %1641 = vmatprep.subr.mxu0 0.0
    %1642 = vmatpush1.msra.mxu0 0.0
    %1643 = vmatprep.subr.mxu0 0.0
    %1644 = vmatpush1.msra.mxu0 0.0
    %1645 = vmatprep.subr.mxu0 0.0
    %1646 = vmatpush1.msra.mxu0 0.0
    %1647 = vmatprep.subr.mxu0 0.0
    %1648 = vmatpush1.msra.mxu0 0.0
    %1649 = vmatprep.subr.mxu0 0.0
    %1650 = vmatpush1.msra.mxu0 0.0
    %1651 = vmatprep.subr.mxu0 0.0
    %1652 = vmatpush1.msra.mxu0 0.0
    %1653 = vmatprep.subr.mxu0 0.0
    %1654 = vmatpush1.msra.mxu0 0.0
    %1655 = vmatprep.subr.mxu0 0.0
    %1656 = vmatpush1.msra.mxu0 0.0
    %1657 = vmatprep.subr.mxu0 0.0
    %1658 = vmatpush1.msra.mxu0 0.0
    %1659 = vmatprep.subr.mxu0 0.0
    %1660 = vmatpush1.msra.mxu0 0.0
    %1661 = vmatprep.mubr.f32.mxu0 0.0
    %1662 = vmatmul.mubr.f32.gmra.mrb[0].mxu0 %v1589
    %v1663 = vpop.f32.mrb[0].mxu0
    %v1664 = vadd.f32 %v1580, %v1663
    %v1665 = vpop.f32.mrb[0].mxu0
    %1666 = vmatprep.mubr.f32.mxu0 0.0
    %1667 = vmatmul.mubr.f32.gmra.mrb[0].mxu0 %v1592
    %v1668 = vpop.f32.mrb[0].mxu0
    %v1669 = vadd.f32 %v1585, %v1668
    %v1670 = vpop.f32.mrb[0].mxu0
    %1671 = vdwg.mxu0
    %v1672 = vmul.f32 %v875, %v1477
    %v1673 = vadd.f32 %v1672, %v1482
    %v1674 = vmax.f32 %v1673, 0.0
    %v1675 = vmul.f32 %v1013, %v1477
    %v1676 = vadd.f32 %v1675, %v1482
    %v1677 = vmax.f32 %v1676, 0.0
    %v1679 = vsel %vm1016, %v1677, 0
    %1681 = vmatprep.subr.mxu0 0.0
    %1682 = vmatpush1.msra.mxu0 %v1679
    %1683 = vmatprep.subr.mxu0 0.0
    %1684 = vmatpush1.msra.mxu0 0.0
    %1685 = vmatprep.subr.mxu0 0.0
    %1686 = vmatpush1.msra.mxu0 0.0
    %1687 = vmatprep.subr.mxu0 0.0
    %1688 = vmatpush1.msra.mxu0 0.0
    %1689 = vmatprep.subr.mxu0 0.0
    %1690 = vmatpush1.msra.mxu0 0.0
    %1691 = vmatprep.subr.mxu0 0.0
    %1692 = vmatpush1.msra.mxu0 0.0
    %1693 = vmatprep.subr.mxu0 0.0
    %1694 = vmatpush1.msra.mxu0 0.0
    %1695 = vmatprep.subr.mxu0 0.0
    %1696 = vmatpush1.msra.mxu0 0.0
    %1697 = vmatprep.subr.mxu0 0.0
    %1698 = vmatpush1.msra.mxu0 0.0
    %1699 = vmatprep.subr.mxu0 0.0
    %1700 = vmatpush1.msra.mxu0 0.0
    %1701 = vmatprep.subr.mxu0 0.0
    %1702 = vmatpush1.msra.mxu0 0.0
    %1703 = vmatprep.subr.mxu0 0.0
    %1704 = vmatpush1.msra.mxu0 0.0
    %1705 = vmatprep.subr.mxu0 0.0
    %1706 = vmatpush1.msra.mxu0 0.0
    %1707 = vmatprep.subr.mxu0 0.0
    %1708 = vmatpush1.msra.mxu0 0.0
    %1709 = vmatprep.subr.mxu0 0.0
    %1710 = vmatpush1.msra.mxu0 0.0
    %1711 = vmatprep.subr.mxu0 0.0
    %1712 = vmatpush1.msra.mxu0 0.0
    %1713 = vmatprep.subr.mxu0 0.0
    %1714 = vmatpush1.msra.mxu0 0.0
    %1715 = vmatprep.subr.mxu0 0.0
    %1716 = vmatpush1.msra.mxu0 0.0
    %1717 = vmatprep.subr.mxu0 0.0
    %1718 = vmatpush1.msra.mxu0 0.0
    %1719 = vmatprep.subr.mxu0 0.0
    %1720 = vmatpush1.msra.mxu0 0.0
    %1721 = vmatprep.subr.mxu0 0.0
    %1722 = vmatpush1.msra.mxu0 0.0
    %1723 = vmatprep.subr.mxu0 0.0
    %1724 = vmatpush1.msra.mxu0 0.0
    %1725 = vmatprep.subr.mxu0 0.0
    %1726 = vmatpush1.msra.mxu0 0.0
    %1727 = vmatprep.subr.mxu0 0.0
    %1728 = vmatpush1.msra.mxu0 0.0
    %1729 = vmatprep.subr.mxu0 0.0
    %1730 = vmatpush1.msra.mxu0 0.0
    %1731 = vmatprep.subr.mxu0 0.0
    %1732 = vmatpush1.msra.mxu0 0.0
    %1733 = vmatprep.subr.mxu0 0.0
    %1734 = vmatpush1.msra.mxu0 0.0
    %1735 = vmatprep.subr.mxu0 0.0
    %1736 = vmatpush1.msra.mxu0 0.0
    %1737 = vmatprep.subr.mxu0 0.0
    %1738 = vmatpush1.msra.mxu0 0.0
    %1739 = vmatprep.subr.mxu0 0.0
    %1740 = vmatpush1.msra.mxu0 0.0
    %1741 = vmatprep.subr.mxu0 0.0
    %1742 = vmatpush1.msra.mxu0 0.0
    %1743 = vmatprep.subr.mxu0 0.0
    %1744 = vmatpush1.msra.mxu0 0.0
    %1745 = vmatprep.mubr.f32.mxu0 0.0
    %1746 = vmatmul.mubr.f32.gmra.mrb[0].mxu0 %v1505
    %v1747 = vpop.f32.mrb[0].mxu0
    %v1748 = vadd.f32 0.0, %v1747
    %v1749 = vpop.f32.mrb[0].mxu0
    %1750 = vmatprep.mubr.f32.mxu0 0.0
    %1751 = vmatmul.mubr.f32.gmra.mrb[0].mxu0 %v1508
    %v1752 = vpop.f32.mrb[0].mxu0
    %v1753 = vadd.f32 0.0, %v1752
    %v1754 = vpop.f32.mrb[0].mxu0
    %1755 = vdwg.mxu0
    %v1757 = vsel %vm1016, %v1674, 0
    %1759 = vmatprep.subr.mxu0 0.0
    %1760 = vmatpush1.msra.mxu0 %v1757
    %1761 = vmatprep.subr.mxu0 0.0
    %1762 = vmatpush1.msra.mxu0 0.0
    %1763 = vmatprep.subr.mxu0 0.0
    %1764 = vmatpush1.msra.mxu0 0.0
    %1765 = vmatprep.subr.mxu0 0.0
    %1766 = vmatpush1.msra.mxu0 0.0
    %1767 = vmatprep.subr.mxu0 0.0
    %1768 = vmatpush1.msra.mxu0 0.0
    %1769 = vmatprep.subr.mxu0 0.0
    %1770 = vmatpush1.msra.mxu0 0.0
    %1771 = vmatprep.subr.mxu0 0.0
    %1772 = vmatpush1.msra.mxu0 0.0
    %1773 = vmatprep.subr.mxu0 0.0
    %1774 = vmatpush1.msra.mxu0 0.0
    %1775 = vmatprep.subr.mxu0 0.0
    %1776 = vmatpush1.msra.mxu0 0.0
    %1777 = vmatprep.subr.mxu0 0.0
    %1778 = vmatpush1.msra.mxu0 0.0
    %1779 = vmatprep.subr.mxu0 0.0
    %1780 = vmatpush1.msra.mxu0 0.0
    %1781 = vmatprep.subr.mxu0 0.0
    %1782 = vmatpush1.msra.mxu0 0.0
    %1783 = vmatprep.subr.mxu0 0.0
    %1784 = vmatpush1.msra.mxu0 0.0
    %1785 = vmatprep.subr.mxu0 0.0
    %1786 = vmatpush1.msra.mxu0 0.0
    %1787 = vmatprep.subr.mxu0 0.0
    %1788 = vmatpush1.msra.mxu0 0.0
    %1789 = vmatprep.subr.mxu0 0.0
    %1790 = vmatpush1.msra.mxu0 0.0
    %1791 = vmatprep.subr.mxu0 0.0
    %1792 = vmatpush1.msra.mxu0 0.0
    %1793 = vmatprep.subr.mxu0 0.0
    %1794 = vmatpush1.msra.mxu0 0.0
    %1795 = vmatprep.subr.mxu0 0.0
    %1796 = vmatpush1.msra.mxu0 0.0
    %1797 = vmatprep.subr.mxu0 0.0
    %1798 = vmatpush1.msra.mxu0 0.0
    %1799 = vmatprep.subr.mxu0 0.0
    %1800 = vmatpush1.msra.mxu0 0.0
    %1801 = vmatprep.subr.mxu0 0.0
    %1802 = vmatpush1.msra.mxu0 0.0
    %1803 = vmatprep.subr.mxu0 0.0
    %1804 = vmatpush1.msra.mxu0 0.0
    %1805 = vmatprep.subr.mxu0 0.0
    %1806 = vmatpush1.msra.mxu0 0.0
    %1807 = vmatprep.subr.mxu0 0.0
    %1808 = vmatpush1.msra.mxu0 0.0
    %1809 = vmatprep.subr.mxu0 0.0
    %1810 = vmatpush1.msra.mxu0 0.0
    %1811 = vmatprep.subr.mxu0 0.0
    %1812 = vmatpush1.msra.mxu0 0.0
    %1813 = vmatprep.subr.mxu0 0.0
    %1814 = vmatpush1.msra.mxu0 0.0
    %1815 = vmatprep.subr.mxu0 0.0
    %1816 = vmatpush1.msra.mxu0 0.0
    %1817 = vmatprep.subr.mxu0 0.0
    %1818 = vmatpush1.msra.mxu0 0.0
    %1819 = vmatprep.subr.mxu0 0.0
    %1820 = vmatpush1.msra.mxu0 0.0
    %1821 = vmatprep.subr.mxu0 0.0
    %1822 = vmatpush1.msra.mxu0 0.0
    %1823 = vmatprep.mubr.f32.mxu0 0.0
    %1824 = vmatmul.mubr.f32.gmra.mrb[0].mxu0 %v1589
    %v1825 = vpop.f32.mrb[0].mxu0
    %v1826 = vadd.f32 %v1748, %v1825
    %v1827 = vpop.f32.mrb[0].mxu0
    %1828 = vmatprep.mubr.f32.mxu0 0.0
    %1829 = vmatmul.mubr.f32.gmra.mrb[0].mxu0 %v1592
    %v1830 = vpop.f32.mrb[0].mxu0
    %v1831 = vadd.f32 %v1753, %v1830
    %v1832 = vpop.f32.mrb[0].mxu0
    %1833 = vdwg.mxu0
    %v1834 = vld [vmem:[#allocation3] sm:$0xff]
    %v1835 = vld [vmem:[#allocation3 + $0x8] sm:$0xff]
    %v1836 = vld [vmem:[#allocation3 + $0x10] sm:$0xff]
    %v1837 = vld [vmem:[#allocation3 + $0x18] sm:$0xff]
    %v1838 = vld [vmem:[#allocation3 + $0x20] sm:$0xff]
    %v1839 = vld [vmem:[#allocation3 + $0x28] sm:$0xff]
    %v1840 = vld [vmem:[#allocation3 + $0x30] sm:$0xff]
    %v1841 = vld [vmem:[#allocation3 + $0x38] sm:$0xff]
    %v1842 = vld [vmem:[#allocation3 + $0x40] sm:$0xff]
    %v1843 = vld [vmem:[#allocation3 + $0x48] sm:$0xff]
    %v1844 = vld [vmem:[#allocation3 + $0x50] sm:$0xff]
    %v1845 = vld [vmem:[#allocation3 + $0x58] sm:$0xff]
    %v1846 = vld [vmem:[#allocation3 + $0x60] sm:$0xff]
    %v1847 = vld [vmem:[#allocation3 + $0x68] sm:$0xff]
    %v1848 = vld [vmem:[#allocation3 + $0x70] sm:$0xff]
    %v1849 = vld [vmem:[#allocation3 + $0x78] sm:$0xff]
    %s1850 = scalar_lea.vmem [#allocation3], 128
    %v1851 = vld [vmem:[%s1850] sm:$0xff]
    %v1852 = vld [vmem:[%s1850 + $0x8] sm:$0xff]
    %v1853 = vld [vmem:[%s1850 + $0x10] sm:$0xff]
    %v1854 = vld [vmem:[%s1850 + $0x18] sm:$0xff]
    %v1855 = vld [vmem:[%s1850 + $0x20] sm:$0xff]
    %v1856 = vld [vmem:[%s1850 + $0x28] sm:$0xff]
    %v1857 = vld [vmem:[%s1850 + $0x30] sm:$0xff]
    %v1858 = vld [vmem:[%s1850 + $0x38] sm:$0xff]
    %v1859 = vld [vmem:[%s1850 + $0x40] sm:$0xff]
    %v1860 = vld [vmem:[%s1850 + $0x48] sm:$0xff]
    %v1861 = vld [vmem:[%s1850 + $0x50] sm:$0xff]
    %v1862 = vld [vmem:[%s1850 + $0x58] sm:$0xff]
    %v1863 = vld [vmem:[%s1850 + $0x60] sm:$0xff]
    %v1864 = vld [vmem:[%s1850 + $0x68] sm:$0xff]
    %v1865 = vld [vmem:[%s1850 + $0x70] sm:$0xff]
    %v1866 = vld [vmem:[%s1850 + $0x78] sm:$0xff]
    %vm1869 = vcmask 1046528
    %v1870 = vrot.slane %v1664, 1
    %v1871 = vrot.slane %v1669, 1
    %v1872 = vsel %vm1869, %v1870, %v1871
    %1874 = vmatprep.subr.mxu0 0.0
    %1875 = vmatpush1.msra.mxu0 %v1851
    %1876 = vmatprep.subr.mxu0 0.0
    %1877 = vmatpush1.msra.mxu0 %v1852
    %1878 = vmatprep.subr.mxu0 0.0
    %1879 = vmatpush1.msra.mxu0 %v1853
    %1880 = vmatprep.subr.mxu0 0.0
    %1881 = vmatpush1.msra.mxu0 %v1854
    %1882 = vmatprep.subr.mxu0 0.0
    %1883 = vmatpush1.msra.mxu0 %v1855
    %1884 = vmatprep.subr.mxu0 0.0
    %1885 = vmatpush1.msra.mxu0 %v1856
    %1886 = vmatprep.subr.mxu0 0.0
    %1887 = vmatpush1.msra.mxu0 %v1857
    %1888 = vmatprep.subr.mxu0 0.0
    %1889 = vmatpush1.msra.mxu0 %v1858
    %1890 = vmatprep.subr.mxu0 0.0
    %1891 = vmatpush1.msra.mxu0 %v1859
    %1892 = vmatprep.subr.mxu0 0.0
    %1893 = vmatpush1.msra.mxu0 %v1860
    %1894 = vmatprep.subr.mxu0 0.0
    %1895 = vmatpush1.msra.mxu0 %v1861
    %1896 = vmatprep.subr.mxu0 0.0
    %1897 = vmatpush1.msra.mxu0 %v1862
    %1898 = vmatprep.subr.mxu0 0.0
    %1899 = vmatpush1.msra.mxu0 %v1863
    %1900 = vmatprep.subr.mxu0 0.0
    %1901 = vmatpush1.msra.mxu0 %v1864
    %1902 = vmatprep.subr.mxu0 0.0
    %1903 = vmatpush1.msra.mxu0 %v1865
    %1904 = vmatprep.subr.mxu0 0.0
    %1905 = vmatpush1.msra.mxu0 %v1866
    %1906 = vmatprep.subr.mxu0 0.0
    %1907 = vmatpush1.msra.mxu0 0.0
    %1908 = vmatprep.subr.mxu0 0.0
    %1909 = vmatpush1.msra.mxu0 0.0
    %1910 = vmatprep.subr.mxu0 0.0
    %1911 = vmatpush1.msra.mxu0 0.0
    %1912 = vmatprep.subr.mxu0 0.0
    %1913 = vmatpush1.msra.mxu0 0.0
    %1914 = vmatprep.subr.mxu0 0.0
    %1915 = vmatpush1.msra.mxu0 0.0
    %1916 = vmatprep.subr.mxu0 0.0
    %1917 = vmatpush1.msra.mxu0 0.0
    %1918 = vmatprep.subr.mxu0 0.0
    %1919 = vmatpush1.msra.mxu0 0.0
    %1920 = vmatprep.subr.mxu0 0.0
    %1921 = vmatpush1.msra.mxu0 0.0
    %1922 = vmatprep.subr.mxu0 0.0
    %1923 = vmatpush1.msra.mxu0 0.0
    %1924 = vmatprep.subr.mxu0 0.0
    %1925 = vmatpush1.msra.mxu0 0.0
    %1926 = vmatprep.subr.mxu0 0.0
    %1927 = vmatpush1.msra.mxu0 0.0
    %1928 = vmatprep.subr.mxu0 0.0
    %1929 = vmatpush1.msra.mxu0 0.0
    %1930 = vmatprep.subr.mxu0 0.0
    %1931 = vmatpush1.msra.mxu0 0.0
    %1932 = vmatprep.subr.mxu0 0.0
    %1933 = vmatpush1.msra.mxu0 0.0
    %1934 = vmatprep.subr.mxu0 0.0
    %1935 = vmatpush1.msra.mxu0 0.0
    %1936 = vmatprep.subr.mxu0 0.0
    %1937 = vmatpush1.msra.mxu0 0.0
    %1938 = vmatprep.mubr.f32.mxu0 0.0
    %1939 = vmatmul.mubr.f32.gmra.mrb[0].mxu0 %v1872
    %v1940 = vpop.f32.mrb[0].mxu0
    %v1941 = vadd.f32 0.0, %v1940
    %v1942 = vpop.f32.mrb[0].mxu0
    %1943 = vdwg.mxu0
    %1944 = vmatprep.subr.mxu0 0.0
    %1945 = vmatpush1.msra.mxu0 %v1834
    %1946 = vmatprep.subr.mxu0 0.0
    %1947 = vmatpush1.msra.mxu0 %v1835
    %1948 = vmatprep.subr.mxu0 0.0
    %1949 = vmatpush1.msra.mxu0 %v1836
    %1950 = vmatprep.subr.mxu0 0.0
    %1951 = vmatpush1.msra.mxu0 %v1837
    %1952 = vmatprep.subr.mxu0 0.0
    %1953 = vmatpush1.msra.mxu0 %v1838
    %1954 = vmatprep.subr.mxu0 0.0
    %1955 = vmatpush1.msra.mxu0 %v1839
    %1956 = vmatprep.subr.mxu0 0.0
    %1957 = vmatpush1.msra.mxu0 %v1840
    %1958 = vmatprep.subr.mxu0 0.0
    %1959 = vmatpush1.msra.mxu0 %v1841
    %1960 = vmatprep.subr.mxu0 0.0
    %1961 = vmatpush1.msra.mxu0 %v1842
    %1962 = vmatprep.subr.mxu0 0.0
    %1963 = vmatpush1.msra.mxu0 %v1843
    %1964 = vmatprep.subr.mxu0 0.0
    %1965 = vmatpush1.msra.mxu0 %v1844
    %1966 = vmatprep.subr.mxu0 0.0
    %1967 = vmatpush1.msra.mxu0 %v1845
    %1968 = vmatprep.subr.mxu0 0.0
    %1969 = vmatpush1.msra.mxu0 %v1846
    %1970 = vmatprep.subr.mxu0 0.0
    %1971 = vmatpush1.msra.mxu0 %v1847
    %1972 = vmatprep.subr.mxu0 0.0
    %1973 = vmatpush1.msra.mxu0 %v1848
    %1974 = vmatprep.subr.mxu0 0.0
    %1975 = vmatpush1.msra.mxu0 %v1849
    %1976 = vmatprep.subr.mxu0 0.0
    %1977 = vmatpush1.msra.mxu0 0.0
    %1978 = vmatprep.subr.mxu0 0.0
    %1979 = vmatpush1.msra.mxu0 0.0
    %1980 = vmatprep.subr.mxu0 0.0
    %1981 = vmatpush1.msra.mxu0 0.0
    %1982 = vmatprep.subr.mxu0 0.0
    %1983 = vmatpush1.msra.mxu0 0.0
    %1984 = vmatprep.subr.mxu0 0.0
    %1985 = vmatpush1.msra.mxu0 0.0
    %1986 = vmatprep.subr.mxu0 0.0
    %1987 = vmatpush1.msra.mxu0 0.0
    %1988 = vmatprep.subr.mxu0 0.0
    %1989 = vmatpush1.msra.mxu0 0.0
    %1990 = vmatprep.subr.mxu0 0.0
    %1991 = vmatpush1.msra.mxu0 0.0
    %1992 = vmatprep.subr.mxu0 0.0
    %1993 = vmatpush1.msra.mxu0 0.0
    %1994 = vmatprep.subr.mxu0 0.0
    %1995 = vmatpush1.msra.mxu0 0.0
    %1996 = vmatprep.subr.mxu0 0.0
    %1997 = vmatpush1.msra.mxu0 0.0
    %1998 = vmatprep.subr.mxu0 0.0
    %1999 = vmatpush1.msra.mxu0 0.0
    %2000 = vmatprep.subr.mxu0 0.0
    %2001 = vmatpush1.msra.mxu0 0.0
    %2002 = vmatprep.subr.mxu0 0.0
    %2003 = vmatpush1.msra.mxu0 0.0
    %2004 = vmatprep.subr.mxu0 0.0
    %2005 = vmatpush1.msra.mxu0 0.0
    %2006 = vmatprep.subr.mxu0 0.0
    %2007 = vmatpush1.msra.mxu0 0.0
    %2008 = vmatprep.mubr.f32.mxu0 0.0
    %2009 = vmatmul.mubr.f32.gmra.mrb[0].mxu0 %v1664
    %v2010 = vpop.f32.mrb[0].mxu0
    %v2011 = vadd.f32 %v1941, %v2010
    %v2012 = vpop.f32.mrb[0].mxu0
    %2013 = vdwg.mxu0
    %s2014 = scalar_lea.vmem [#allocation3], 256
    %v2015 = vld [vmem:[%s2014] sm:$0xff]
    %v2016 = vld [vmem:[%s2014 + $0x8] sm:$0xff]
    %v2017 = vld [vmem:[%s2014 + $0x10] sm:$0xff]
    %v2018 = vld [vmem:[%s2014 + $0x18] sm:$0xff]
    %v2019 = vld [vmem:[%s2014 + $0x20] sm:$0xff]
    %v2020 = vld [vmem:[%s2014 + $0x28] sm:$0xff]
    %v2021 = vld [vmem:[%s2014 + $0x30] sm:$0xff]
    %v2022 = vld [vmem:[%s2014 + $0x38] sm:$0xff]
    %v2023 = vld [vmem:[%s2014 + $0x40] sm:$0xff]
    %v2024 = vld [vmem:[%s2014 + $0x48] sm:$0xff]
    %v2025 = vld [vmem:[%s2014 + $0x50] sm:$0xff]
    %v2026 = vld [vmem:[%s2014 + $0x58] sm:$0xff]
    %v2027 = vld [vmem:[%s2014 + $0x60] sm:$0xff]
    %v2028 = vld [vmem:[%s2014 + $0x68] sm:$0xff]
    %v2029 = vld [vmem:[%s2014 + $0x70] sm:$0xff]
    %v2030 = vld [vmem:[%s2014 + $0x78] sm:$0xff]
    %vm2031 = vcmask 1045504
    %v2032 = vrot.slane %v1664, 2
    %v2033 = vrot.slane %v1669, 2
    %v2034 = vsel %vm2031, %v2032, %v2033
    %2036 = vmatprep.subr.mxu0 0.0
    %2037 = vmatpush1.msra.mxu0 %v2015
    %2038 = vmatprep.subr.mxu0 0.0
    %2039 = vmatpush1.msra.mxu0 %v2016
    %2040 = vmatprep.subr.mxu0 0.0
    %2041 = vmatpush1.msra.mxu0 %v2017
    %2042 = vmatprep.subr.mxu0 0.0
    %2043 = vmatpush1.msra.mxu0 %v2018
    %2044 = vmatprep.subr.mxu0 0.0
    %2045 = vmatpush1.msra.mxu0 %v2019
    %2046 = vmatprep.subr.mxu0 0.0
    %2047 = vmatpush1.msra.mxu0 %v2020
    %2048 = vmatprep.subr.mxu0 0.0
    %2049 = vmatpush1.msra.mxu0 %v2021
    %2050 = vmatprep.subr.mxu0 0.0
    %2051 = vmatpush1.msra.mxu0 %v2022
    %2052 = vmatprep.subr.mxu0 0.0
    %2053 = vmatpush1.msra.mxu0 %v2023
    %2054 = vmatprep.subr.mxu0 0.0
    %2055 = vmatpush1.msra.mxu0 %v2024
    %2056 = vmatprep.subr.mxu0 0.0
    %2057 = vmatpush1.msra.mxu0 %v2025
    %2058 = vmatprep.subr.mxu0 0.0
    %2059 = vmatpush1.msra.mxu0 %v2026
    %2060 = vmatprep.subr.mxu0 0.0
    %2061 = vmatpush1.msra.mxu0 %v2027
    %2062 = vmatprep.subr.mxu0 0.0
    %2063 = vmatpush1.msra.mxu0 %v2028
    %2064 = vmatprep.subr.mxu0 0.0
    %2065 = vmatpush1.msra.mxu0 %v2029
    %2066 = vmatprep.subr.mxu0 0.0
    %2067 = vmatpush1.msra.mxu0 %v2030
    %2068 = vmatprep.subr.mxu0 0.0
    %2069 = vmatpush1.msra.mxu0 0.0
    %2070 = vmatprep.subr.mxu0 0.0
    %2071 = vmatpush1.msra.mxu0 0.0
    %2072 = vmatprep.subr.mxu0 0.0
    %2073 = vmatpush1.msra.mxu0 0.0
    %2074 = vmatprep.subr.mxu0 0.0
    %2075 = vmatpush1.msra.mxu0 0.0
    %2076 = vmatprep.subr.mxu0 0.0
    %2077 = vmatpush1.msra.mxu0 0.0
    %2078 = vmatprep.subr.mxu0 0.0
    %2079 = vmatpush1.msra.mxu0 0.0
    %2080 = vmatprep.subr.mxu0 0.0
    %2081 = vmatpush1.msra.mxu0 0.0
    %2082 = vmatprep.subr.mxu0 0.0
    %2083 = vmatpush1.msra.mxu0 0.0
    %2084 = vmatprep.subr.mxu0 0.0
    %2085 = vmatpush1.msra.mxu0 0.0
    %2086 = vmatprep.subr.mxu0 0.0
    %2087 = vmatpush1.msra.mxu0 0.0
    %2088 = vmatprep.subr.mxu0 0.0
    %2089 = vmatpush1.msra.mxu0 0.0
    %2090 = vmatprep.subr.mxu0 0.0
    %2091 = vmatpush1.msra.mxu0 0.0
    %2092 = vmatprep.subr.mxu0 0.0
    %2093 = vmatpush1.msra.mxu0 0.0
    %2094 = vmatprep.subr.mxu0 0.0
    %2095 = vmatpush1.msra.mxu0 0.0
    %2096 = vmatprep.subr.mxu0 0.0
    %2097 = vmatpush1.msra.mxu0 0.0
    %2098 = vmatprep.subr.mxu0 0.0
    %2099 = vmatpush1.msra.mxu0 0.0
    %2100 = vmatprep.mubr.f32.mxu0 0.0
    %2101 = vmatmul.mubr.f32.gmra.mrb[0].mxu0 %v2034
    %v2102 = vpop.f32.mrb[0].mxu0
    %v2103 = vadd.f32 0.0, %v2102
    %v2104 = vpop.f32.mrb[0].mxu0
    %2105 = vdwg.mxu0
    %v2106 = vadd.f32 %v2011, %v2103
    %s2107 = scalar_lea.vmem [#allocation3], 512
    %v2108 = vld [vmem:[%s2107] sm:$0xff]
    %v2109 = vld [vmem:[%s2107 + $0x8] sm:$0xff]
    %v2110 = vld [vmem:[%s2107 + $0x10] sm:$0xff]
    %v2111 = vld [vmem:[%s2107 + $0x18] sm:$0xff]
    %v2112 = vld [vmem:[%s2107 + $0x20] sm:$0xff]
    %v2113 = vld [vmem:[%s2107 + $0x28] sm:$0xff]
    %v2114 = vld [vmem:[%s2107 + $0x30] sm:$0xff]
    %v2115 = vld [vmem:[%s2107 + $0x38] sm:$0xff]
    %v2116 = vld [vmem:[%s2107 + $0x40] sm:$0xff]
    %v2117 = vld [vmem:[%s2107 + $0x48] sm:$0xff]
    %v2118 = vld [vmem:[%s2107 + $0x50] sm:$0xff]
    %v2119 = vld [vmem:[%s2107 + $0x58] sm:$0xff]
    %v2120 = vld [vmem:[%s2107 + $0x60] sm:$0xff]
    %v2121 = vld [vmem:[%s2107 + $0x68] sm:$0xff]
    %v2122 = vld [vmem:[%s2107 + $0x70] sm:$0xff]
    %v2123 = vld [vmem:[%s2107 + $0x78] sm:$0xff]
    %s2124 = scalar_lea.vmem [#allocation3], 640
    %v2125 = vld [vmem:[%s2124] sm:$0xff]
    %v2126 = vld [vmem:[%s2124 + $0x8] sm:$0xff]
    %v2127 = vld [vmem:[%s2124 + $0x10] sm:$0xff]
    %v2128 = vld [vmem:[%s2124 + $0x18] sm:$0xff]
    %v2129 = vld [vmem:[%s2124 + $0x20] sm:$0xff]
    %v2130 = vld [vmem:[%s2124 + $0x28] sm:$0xff]
    %v2131 = vld [vmem:[%s2124 + $0x30] sm:$0xff]
    %v2132 = vld [vmem:[%s2124 + $0x38] sm:$0xff]
    %v2133 = vld [vmem:[%s2124 + $0x40] sm:$0xff]
    %v2134 = vld [vmem:[%s2124 + $0x48] sm:$0xff]
    %v2135 = vld [vmem:[%s2124 + $0x50] sm:$0xff]
    %v2136 = vld [vmem:[%s2124 + $0x58] sm:$0xff]
    %v2137 = vld [vmem:[%s2124 + $0x60] sm:$0xff]
    %v2138 = vld [vmem:[%s2124 + $0x68] sm:$0xff]
    %v2139 = vld [vmem:[%s2124 + $0x70] sm:$0xff]
    %v2140 = vld [vmem:[%s2124 + $0x78] sm:$0xff]
    %2141 = vmatprep.subr.mxu0 0.0
    %2142 = vmatpush1.msra.mxu0 %v2125
    %2143 = vmatprep.subr.mxu0 0.0
    %2144 = vmatpush1.msra.mxu0 %v2126
    %2145 = vmatprep.subr.mxu0 0.0
    %2146 = vmatpush1.msra.mxu0 %v2127
    %2147 = vmatprep.subr.mxu0 0.0
    %2148 = vmatpush1.msra.mxu0 %v2128
    %2149 = vmatprep.subr.mxu0 0.0
    %2150 = vmatpush1.msra.mxu0 %v2129
    %2151 = vmatprep.subr.mxu0 0.0
    %2152 = vmatpush1.msra.mxu0 %v2130
    %2153 = vmatprep.subr.mxu0 0.0
    %2154 = vmatpush1.msra.mxu0 %v2131
    %2155 = vmatprep.subr.mxu0 0.0
    %2156 = vmatpush1.msra.mxu0 %v2132
    %2157 = vmatprep.subr.mxu0 0.0
    %2158 = vmatpush1.msra.mxu0 %v2133
    %2159 = vmatprep.subr.mxu0 0.0
    %2160 = vmatpush1.msra.mxu0 %v2134
    %2161 = vmatprep.subr.mxu0 0.0
    %2162 = vmatpush1.msra.mxu0 %v2135
    %2163 = vmatprep.subr.mxu0 0.0
    %2164 = vmatpush1.msra.mxu0 %v2136
    %2165 = vmatprep.subr.mxu0 0.0
    %2166 = vmatpush1.msra.mxu0 %v2137
    %2167 = vmatprep.subr.mxu0 0.0
    %2168 = vmatpush1.msra.mxu0 %v2138
    %2169 = vmatprep.subr.mxu0 0.0
    %2170 = vmatpush1.msra.mxu0 %v2139
    %2171 = vmatprep.subr.mxu0 0.0
    %2172 = vmatpush1.msra.mxu0 %v2140
    %2173 = vmatprep.subr.mxu0 0.0
    %2174 = vmatpush1.msra.mxu0 0.0
    %2175 = vmatprep.subr.mxu0 0.0
    %2176 = vmatpush1.msra.mxu0 0.0
    %2177 = vmatprep.subr.mxu0 0.0
    %2178 = vmatpush1.msra.mxu0 0.0
    %2179 = vmatprep.subr.mxu0 0.0
    %2180 = vmatpush1.msra.mxu0 0.0
    %2181 = vmatprep.subr.mxu0 0.0
    %2182 = vmatpush1.msra.mxu0 0.0
    %2183 = vmatprep.subr.mxu0 0.0
    %2184 = vmatpush1.msra.mxu0 0.0
    %2185 = vmatprep.subr.mxu0 0.0
    %2186 = vmatpush1.msra.mxu0 0.0
    %2187 = vmatprep.subr.mxu0 0.0
    %2188 = vmatpush1.msra.mxu0 0.0
    %2189 = vmatprep.subr.mxu0 0.0
    %2190 = vmatpush1.msra.mxu0 0.0
    %2191 = vmatprep.subr.mxu0 0.0
    %2192 = vmatpush1.msra.mxu0 0.0
    %2193 = vmatprep.subr.mxu0 0.0
    %2194 = vmatpush1.msra.mxu0 0.0
    %2195 = vmatprep.subr.mxu0 0.0
    %2196 = vmatpush1.msra.mxu0 0.0
    %2197 = vmatprep.subr.mxu0 0.0
    %2198 = vmatpush1.msra.mxu0 0.0
    %2199 = vmatprep.subr.mxu0 0.0
    %2200 = vmatpush1.msra.mxu0 0.0
    %2201 = vmatprep.subr.mxu0 0.0
    %2202 = vmatpush1.msra.mxu0 0.0
    %2203 = vmatprep.subr.mxu0 0.0
    %2204 = vmatpush1.msra.mxu0 0.0
    %2205 = vmatprep.mubr.f32.mxu0 0.0
    %2206 = vmatmul.mubr.f32.gmra.mrb[0].mxu0 %v2034
    %v2207 = vpop.f32.mrb[0].mxu0
    %v2208 = vadd.f32 0.0, %v2207
    %v2209 = vpop.f32.mrb[0].mxu0
    %2210 = vdwg.mxu0
    %2211 = vmatprep.subr.mxu0 0.0
    %2212 = vmatpush1.msra.mxu0 %v2108
    %2213 = vmatprep.subr.mxu0 0.0
    %2214 = vmatpush1.msra.mxu0 %v2109
    %2215 = vmatprep.subr.mxu0 0.0
    %2216 = vmatpush1.msra.mxu0 %v2110
    %2217 = vmatprep.subr.mxu0 0.0
    %2218 = vmatpush1.msra.mxu0 %v2111
    %2219 = vmatprep.subr.mxu0 0.0
    %2220 = vmatpush1.msra.mxu0 %v2112
    %2221 = vmatprep.subr.mxu0 0.0
    %2222 = vmatpush1.msra.mxu0 %v2113
    %2223 = vmatprep.subr.mxu0 0.0
    %2224 = vmatpush1.msra.mxu0 %v2114
    %2225 = vmatprep.subr.mxu0 0.0
    %2226 = vmatpush1.msra.mxu0 %v2115
    %2227 = vmatprep.subr.mxu0 0.0
    %2228 = vmatpush1.msra.mxu0 %v2116
    %2229 = vmatprep.subr.mxu0 0.0
    %2230 = vmatpush1.msra.mxu0 %v2117
    %2231 = vmatprep.subr.mxu0 0.0
    %2232 = vmatpush1.msra.mxu0 %v2118
    %2233 = vmatprep.subr.mxu0 0.0
    %2234 = vmatpush1.msra.mxu0 %v2119
    %2235 = vmatprep.subr.mxu0 0.0
    %2236 = vmatpush1.msra.mxu0 %v2120
    %2237 = vmatprep.subr.mxu0 0.0
    %2238 = vmatpush1.msra.mxu0 %v2121
    %2239 = vmatprep.subr.mxu0 0.0
    %2240 = vmatpush1.msra.mxu0 %v2122
    %2241 = vmatprep.subr.mxu0 0.0
    %2242 = vmatpush1.msra.mxu0 %v2123
    %2243 = vmatprep.subr.mxu0 0.0
    %2244 = vmatpush1.msra.mxu0 0.0
    %2245 = vmatprep.subr.mxu0 0.0
    %2246 = vmatpush1.msra.mxu0 0.0
    %2247 = vmatprep.subr.mxu0 0.0
    %2248 = vmatpush1.msra.mxu0 0.0
    %2249 = vmatprep.subr.mxu0 0.0
    %2250 = vmatpush1.msra.mxu0 0.0
    %2251 = vmatprep.subr.mxu0 0.0
    %2252 = vmatpush1.msra.mxu0 0.0
    %2253 = vmatprep.subr.mxu0 0.0
    %2254 = vmatpush1.msra.mxu0 0.0
    %2255 = vmatprep.subr.mxu0 0.0
    %2256 = vmatpush1.msra.mxu0 0.0
    %2257 = vmatprep.subr.mxu0 0.0
    %2258 = vmatpush1.msra.mxu0 0.0
    %2259 = vmatprep.subr.mxu0 0.0
    %2260 = vmatpush1.msra.mxu0 0.0
    %2261 = vmatprep.subr.mxu0 0.0
    %2262 = vmatpush1.msra.mxu0 0.0
    %2263 = vmatprep.subr.mxu0 0.0
    %2264 = vmatpush1.msra.mxu0 0.0
    %2265 = vmatprep.subr.mxu0 0.0
    %2266 = vmatpush1.msra.mxu0 0.0
    %2267 = vmatprep.subr.mxu0 0.0
    %2268 = vmatpush1.msra.mxu0 0.0
    %2269 = vmatprep.subr.mxu0 0.0
    %2270 = vmatpush1.msra.mxu0 0.0
    %2271 = vmatprep.subr.mxu0 0.0
    %2272 = vmatpush1.msra.mxu0 0.0
    %2273 = vmatprep.subr.mxu0 0.0
    %2274 = vmatpush1.msra.mxu0 0.0
    %2275 = vmatprep.mubr.f32.mxu0 0.0
    %2276 = vmatmul.mubr.f32.gmra.mrb[0].mxu0 %v1872
    %v2277 = vpop.f32.mrb[0].mxu0
    %v2278 = vadd.f32 %v2208, %v2277
    %v2279 = vpop.f32.mrb[0].mxu0
    %2280 = vdwg.mxu0
    %v2283 = vrot.slane %v1826, 1
    %v2284 = vrot.slane %v1831, 1
    %v2285 = vsel %vm1869, %v2283, %v2284
    %2287 = vmatprep.subr.mxu0 0.0
    %2288 = vmatpush1.msra.mxu0 %v1851
    %2289 = vmatprep.subr.mxu0 0.0
    %2290 = vmatpush1.msra.mxu0 %v1852
    %2291 = vmatprep.subr.mxu0 0.0
    %2292 = vmatpush1.msra.mxu0 %v1853
    %2293 = vmatprep.subr.mxu0 0.0
    %2294 = vmatpush1.msra.mxu0 %v1854
    %2295 = vmatprep.subr.mxu0 0.0
    %2296 = vmatpush1.msra.mxu0 %v1855
    %2297 = vmatprep.subr.mxu0 0.0
    %2298 = vmatpush1.msra.mxu0 %v1856
    %2299 = vmatprep.subr.mxu0 0.0
    %2300 = vmatpush1.msra.mxu0 %v1857
    %2301 = vmatprep.subr.mxu0 0.0
    %2302 = vmatpush1.msra.mxu0 %v1858
    %2303 = vmatprep.subr.mxu0 0.0
    %2304 = vmatpush1.msra.mxu0 %v1859
    %2305 = vmatprep.subr.mxu0 0.0
    %2306 = vmatpush1.msra.mxu0 %v1860
    %2307 = vmatprep.subr.mxu0 0.0
    %2308 = vmatpush1.msra.mxu0 %v1861
    %2309 = vmatprep.subr.mxu0 0.0
    %2310 = vmatpush1.msra.mxu0 %v1862
    %2311 = vmatprep.subr.mxu0 0.0
    %2312 = vmatpush1.msra.mxu0 %v1863
    %2313 = vmatprep.subr.mxu0 0.0
    %2314 = vmatpush1.msra.mxu0 %v1864
    %2315 = vmatprep.subr.mxu0 0.0
    %2316 = vmatpush1.msra.mxu0 %v1865
    %2317 = vmatprep.subr.mxu0 0.0
    %2318 = vmatpush1.msra.mxu0 %v1866
    %2319 = vmatprep.subr.mxu0 0.0
    %2320 = vmatpush1.msra.mxu0 0.0
    %2321 = vmatprep.subr.mxu0 0.0
    %2322 = vmatpush1.msra.mxu0 0.0
    %2323 = vmatprep.subr.mxu0 0.0
    %2324 = vmatpush1.msra.mxu0 0.0
    %2325 = vmatprep.subr.mxu0 0.0
    %2326 = vmatpush1.msra.mxu0 0.0
    %2327 = vmatprep.subr.mxu0 0.0
    %2328 = vmatpush1.msra.mxu0 0.0
    %2329 = vmatprep.subr.mxu0 0.0
    %2330 = vmatpush1.msra.mxu0 0.0
    %2331 = vmatprep.subr.mxu0 0.0
    %2332 = vmatpush1.msra.mxu0 0.0
    %2333 = vmatprep.subr.mxu0 0.0
    %2334 = vmatpush1.msra.mxu0 0.0
    %2335 = vmatprep.subr.mxu0 0.0
    %2336 = vmatpush1.msra.mxu0 0.0
    %2337 = vmatprep.subr.mxu0 0.0
    %2338 = vmatpush1.msra.mxu0 0.0
    %2339 = vmatprep.subr.mxu0 0.0
    %2340 = vmatpush1.msra.mxu0 0.0
    %2341 = vmatprep.subr.mxu0 0.0
    %2342 = vmatpush1.msra.mxu0 0.0
    %2343 = vmatprep.subr.mxu0 0.0
    %2344 = vmatpush1.msra.mxu0 0.0
    %2345 = vmatprep.subr.mxu0 0.0
    %2346 = vmatpush1.msra.mxu0 0.0
    %2347 = vmatprep.subr.mxu0 0.0
    %2348 = vmatpush1.msra.mxu0 0.0
    %2349 = vmatprep.subr.mxu0 0.0
    %2350 = vmatpush1.msra.mxu0 0.0
    %2351 = vmatprep.mubr.f32.mxu0 0.0
    %2352 = vmatmul.mubr.f32.gmra.mrb[0].mxu0 %v2285
    %v2353 = vpop.f32.mrb[0].mxu0
    %v2354 = vadd.f32 0.0, %v2353
    %v2355 = vpop.f32.mrb[0].mxu0
    %2356 = vdwg.mxu0
    %2357 = vmatprep.subr.mxu0 0.0
    %2358 = vmatpush1.msra.mxu0 %v1834
    %2359 = vmatprep.subr.mxu0 0.0
    %2360 = vmatpush1.msra.mxu0 %v1835
    %2361 = vmatprep.subr.mxu0 0.0
    %2362 = vmatpush1.msra.mxu0 %v1836
    %2363 = vmatprep.subr.mxu0 0.0
    %2364 = vmatpush1.msra.mxu0 %v1837
    %2365 = vmatprep.subr.mxu0 0.0
    %2366 = vmatpush1.msra.mxu0 %v1838
    %2367 = vmatprep.subr.mxu0 0.0
    %2368 = vmatpush1.msra.mxu0 %v1839
    %2369 = vmatprep.subr.mxu0 0.0
    %2370 = vmatpush1.msra.mxu0 %v1840
    %2371 = vmatprep.subr.mxu0 0.0
    %2372 = vmatpush1.msra.mxu0 %v1841
    %2373 = vmatprep.subr.mxu0 0.0
    %2374 = vmatpush1.msra.mxu0 %v1842
    %2375 = vmatprep.subr.mxu0 0.0
    %2376 = vmatpush1.msra.mxu0 %v1843
    %2377 = vmatprep.subr.mxu0 0.0
    %2378 = vmatpush1.msra.mxu0 %v1844
    %2379 = vmatprep.subr.mxu0 0.0
    %2380 = vmatpush1.msra.mxu0 %v1845
    %2381 = vmatprep.subr.mxu0 0.0
    %2382 = vmatpush1.msra.mxu0 %v1846
    %2383 = vmatprep.subr.mxu0 0.0
    %2384 = vmatpush1.msra.mxu0 %v1847
    %2385 = vmatprep.subr.mxu0 0.0
    %2386 = vmatpush1.msra.mxu0 %v1848
    %2387 = vmatprep.subr.mxu0 0.0
    %2388 = vmatpush1.msra.mxu0 %v1849
    %2389 = vmatprep.subr.mxu0 0.0
    %2390 = vmatpush1.msra.mxu0 0.0
    %2391 = vmatprep.subr.mxu0 0.0
    %2392 = vmatpush1.msra.mxu0 0.0
    %2393 = vmatprep.subr.mxu0 0.0
    %2394 = vmatpush1.msra.mxu0 0.0
    %2395 = vmatprep.subr.mxu0 0.0
    %2396 = vmatpush1.msra.mxu0 0.0
    %2397 = vmatprep.subr.mxu0 0.0
    %2398 = vmatpush1.msra.mxu0 0.0
    %2399 = vmatprep.subr.mxu0 0.0
    %2400 = vmatpush1.msra.mxu0 0.0
    %2401 = vmatprep.subr.mxu0 0.0
    %2402 = vmatpush1.msra.mxu0 0.0
    %2403 = vmatprep.subr.mxu0 0.0
    %2404 = vmatpush1.msra.mxu0 0.0
    %2405 = vmatprep.subr.mxu0 0.0
    %2406 = vmatpush1.msra.mxu0 0.0
    %2407 = vmatprep.subr.mxu0 0.0
    %2408 = vmatpush1.msra.mxu0 0.0
    %2409 = vmatprep.subr.mxu0 0.0
    %2410 = vmatpush1.msra.mxu0 0.0
    %2411 = vmatprep.subr.mxu0 0.0
    %2412 = vmatpush1.msra.mxu0 0.0
    %2413 = vmatprep.subr.mxu0 0.0
    %2414 = vmatpush1.msra.mxu0 0.0
    %2415 = vmatprep.subr.mxu0 0.0
    %2416 = vmatpush1.msra.mxu0 0.0
    %2417 = vmatprep.subr.mxu0 0.0
    %2418 = vmatpush1.msra.mxu0 0.0
    %2419 = vmatprep.subr.mxu0 0.0
    %2420 = vmatpush1.msra.mxu0 0.0
    %2421 = vmatprep.mubr.f32.mxu0 0.0
    %2422 = vmatmul.mubr.f32.gmra.mrb[0].mxu0 %v1826
    %v2423 = vpop.f32.mrb[0].mxu0
    %v2424 = vadd.f32 %v2354, %v2423
    %v2425 = vpop.f32.mrb[0].mxu0
    %2426 = vdwg.mxu0
    %v2427 = vrot.slane %v1826, 2
    %v2428 = vrot.slane %v1831, 2
    %v2429 = vsel %vm2031, %v2427, %v2428
    %2431 = vmatprep.subr.mxu0 0.0
    %2432 = vmatpush1.msra.mxu0 %v2015
    %2433 = vmatprep.subr.mxu0 0.0
    %2434 = vmatpush1.msra.mxu0 %v2016
    %2435 = vmatprep.subr.mxu0 0.0
    %2436 = vmatpush1.msra.mxu0 %v2017
    %2437 = vmatprep.subr.mxu0 0.0
    %2438 = vmatpush1.msra.mxu0 %v2018
    %2439 = vmatprep.subr.mxu0 0.0
    %2440 = vmatpush1.msra.mxu0 %v2019
    %2441 = vmatprep.subr.mxu0 0.0
    %2442 = vmatpush1.msra.mxu0 %v2020
    %2443 = vmatprep.subr.mxu0 0.0
    %2444 = vmatpush1.msra.mxu0 %v2021
    %2445 = vmatprep.subr.mxu0 0.0
    %2446 = vmatpush1.msra.mxu0 %v2022
    %2447 = vmatprep.subr.mxu0 0.0
    %2448 = vmatpush1.msra.mxu0 %v2023
    %2449 = vmatprep.subr.mxu0 0.0
    %2450 = vmatpush1.msra.mxu0 %v2024
    %2451 = vmatprep.subr.mxu0 0.0
    %2452 = vmatpush1.msra.mxu0 %v2025
    %2453 = vmatprep.subr.mxu0 0.0
    %2454 = vmatpush1.msra.mxu0 %v2026
    %2455 = vmatprep.subr.mxu0 0.0
    %2456 = vmatpush1.msra.mxu0 %v2027
    %2457 = vmatprep.subr.mxu0 0.0
    %2458 = vmatpush1.msra.mxu0 %v2028
    %2459 = vmatprep.subr.mxu0 0.0
    %2460 = vmatpush1.msra.mxu0 %v2029
    %2461 = vmatprep.subr.mxu0 0.0
    %2462 = vmatpush1.msra.mxu0 %v2030
    %2463 = vmatprep.subr.mxu0 0.0
    %2464 = vmatpush1.msra.mxu0 0.0
    %2465 = vmatprep.subr.mxu0 0.0
    %2466 = vmatpush1.msra.mxu0 0.0
    %2467 = vmatprep.subr.mxu0 0.0
    %2468 = vmatpush1.msra.mxu0 0.0
    %2469 = vmatprep.subr.mxu0 0.0
    %2470 = vmatpush1.msra.mxu0 0.0
    %2471 = vmatprep.subr.mxu0 0.0
    %2472 = vmatpush1.msra.mxu0 0.0
    %2473 = vmatprep.subr.mxu0 0.0
    %2474 = vmatpush1.msra.mxu0 0.0
    %2475 = vmatprep.subr.mxu0 0.0
    %2476 = vmatpush1.msra.mxu0 0.0
    %2477 = vmatprep.subr.mxu0 0.0
    %2478 = vmatpush1.msra.mxu0 0.0
    %2479 = vmatprep.subr.mxu0 0.0
    %2480 = vmatpush1.msra.mxu0 0.0
    %2481 = vmatprep.subr.mxu0 0.0
    %2482 = vmatpush1.msra.mxu0 0.0
    %2483 = vmatprep.subr.mxu0 0.0
    %2484 = vmatpush1.msra.mxu0 0.0
    %2485 = vmatprep.subr.mxu0 0.0
    %2486 = vmatpush1.msra.mxu0 0.0
    %2487 = vmatprep.subr.mxu0 0.0
    %2488 = vmatpush1.msra.mxu0 0.0
    %2489 = vmatprep.subr.mxu0 0.0
    %2490 = vmatpush1.msra.mxu0 0.0
    %2491 = vmatprep.subr.mxu0 0.0
    %2492 = vmatpush1.msra.mxu0 0.0
    %2493 = vmatprep.subr.mxu0 0.0
    %2494 = vmatpush1.msra.mxu0 0.0
    %2495 = vmatprep.mubr.f32.mxu0 0.0
    %2496 = vmatmul.mubr.f32.gmra.mrb[0].mxu0 %v2429
    %v2497 = vpop.f32.mrb[0].mxu0
    %v2498 = vadd.f32 0.0, %v2497
    %v2499 = vpop.f32.mrb[0].mxu0
    %2500 = vdwg.mxu0
    %v2501 = vadd.f32 %v2424, %v2498
    %2502 = vmatprep.subr.mxu0 0.0
    %2503 = vmatpush1.msra.mxu0 %v2125
    %2504 = vmatprep.subr.mxu0 0.0
    %2505 = vmatpush1.msra.mxu0 %v2126
    %2506 = vmatprep.subr.mxu0 0.0
    %2507 = vmatpush1.msra.mxu0 %v2127
    %2508 = vmatprep.subr.mxu0 0.0
    %2509 = vmatpush1.msra.mxu0 %v2128
    %2510 = vmatprep.subr.mxu0 0.0
    %2511 = vmatpush1.msra.mxu0 %v2129
    %2512 = vmatprep.subr.mxu0 0.0
    %2513 = vmatpush1.msra.mxu0 %v2130
    %2514 = vmatprep.subr.mxu0 0.0
    %2515 = vmatpush1.msra.mxu0 %v2131
    %2516 = vmatprep.subr.mxu0 0.0
    %2517 = vmatpush1.msra.mxu0 %v2132
    %2518 = vmatprep.subr.mxu0 0.0
    %2519 = vmatpush1.msra.mxu0 %v2133
    %2520 = vmatprep.subr.mxu0 0.0
    %2521 = vmatpush1.msra.mxu0 %v2134
    %2522 = vmatprep.subr.mxu0 0.0
    %2523 = vmatpush1.msra.mxu0 %v2135
    %2524 = vmatprep.subr.mxu0 0.0
    %2525 = vmatpush1.msra.mxu0 %v2136
    %2526 = vmatprep.subr.mxu0 0.0
    %2527 = vmatpush1.msra.mxu0 %v2137
    %2528 = vmatprep.subr.mxu0 0.0
    %2529 = vmatpush1.msra.mxu0 %v2138
    %2530 = vmatprep.subr.mxu0 0.0
    %2531 = vmatpush1.msra.mxu0 %v2139
    %2532 = vmatprep.subr.mxu0 0.0
    %2533 = vmatpush1.msra.mxu0 %v2140
    %2534 = vmatprep.subr.mxu0 0.0
    %2535 = vmatpush1.msra.mxu0 0.0
    %2536 = vmatprep.subr.mxu0 0.0
    %2537 = vmatpush1.msra.mxu0 0.0
    %2538 = vmatprep.subr.mxu0 0.0
    %2539 = vmatpush1.msra.mxu0 0.0
    %2540 = vmatprep.subr.mxu0 0.0
    %2541 = vmatpush1.msra.mxu0 0.0
    %2542 = vmatprep.subr.mxu0 0.0
    %2543 = vmatpush1.msra.mxu0 0.0
    %2544 = vmatprep.subr.mxu0 0.0
    %2545 = vmatpush1.msra.mxu0 0.0
    %2546 = vmatprep.subr.mxu0 0.0
    %2547 = vmatpush1.msra.mxu0 0.0
    %2548 = vmatprep.subr.mxu0 0.0
    %2549 = vmatpush1.msra.mxu0 0.0
    %2550 = vmatprep.subr.mxu0 0.0
    %2551 = vmatpush1.msra.mxu0 0.0
    %2552 = vmatprep.subr.mxu0 0.0
    %2553 = vmatpush1.msra.mxu0 0.0
    %2554 = vmatprep.subr.mxu0 0.0
    %2555 = vmatpush1.msra.mxu0 0.0
    %2556 = vmatprep.subr.mxu0 0.0
    %2557 = vmatpush1.msra.mxu0 0.0
    %2558 = vmatprep.subr.mxu0 0.0
    %2559 = vmatpush1.msra.mxu0 0.0
    %2560 = vmatprep.subr.mxu0 0.0
    %2561 = vmatpush1.msra.mxu0 0.0
    %2562 = vmatprep.subr.mxu0 0.0
    %2563 = vmatpush1.msra.mxu0 0.0
    %2564 = vmatprep.subr.mxu0 0.0
    %2565 = vmatpush1.msra.mxu0 0.0
    %2566 = vmatprep.mubr.f32.mxu0 0.0
    %2567 = vmatmul.mubr.f32.gmra.mrb[0].mxu0 %v2429
    %v2568 = vpop.f32.mrb[0].mxu0
    %v2569 = vadd.f32 0.0, %v2568
    %v2570 = vpop.f32.mrb[0].mxu0
    %2571 = vdwg.mxu0
    %2572 = vmatprep.subr.mxu0 0.0
    %2573 = vmatpush1.msra.mxu0 %v2108
    %2574 = vmatprep.subr.mxu0 0.0
    %2575 = vmatpush1.msra.mxu0 %v2109
    %2576 = vmatprep.subr.mxu0 0.0
    %2577 = vmatpush1.msra.mxu0 %v2110
    %2578 = vmatprep.subr.mxu0 0.0
    %2579 = vmatpush1.msra.mxu0 %v2111
    %2580 = vmatprep.subr.mxu0 0.0
    %2581 = vmatpush1.msra.mxu0 %v2112
    %2582 = vmatprep.subr.mxu0 0.0
    %2583 = vmatpush1.msra.mxu0 %v2113
    %2584 = vmatprep.subr.mxu0 0.0
    %2585 = vmatpush1.msra.mxu0 %v2114
    %2586 = vmatprep.subr.mxu0 0.0
    %2587 = vmatpush1.msra.mxu0 %v2115
    %2588 = vmatprep.subr.mxu0 0.0
    %2589 = vmatpush1.msra.mxu0 %v2116
    %2590 = vmatprep.subr.mxu0 0.0
    %2591 = vmatpush1.msra.mxu0 %v2117
    %2592 = vmatprep.subr.mxu0 0.0
    %2593 = vmatpush1.msra.mxu0 %v2118
    %2594 = vmatprep.subr.mxu0 0.0
    %2595 = vmatpush1.msra.mxu0 %v2119
    %2596 = vmatprep.subr.mxu0 0.0
    %2597 = vmatpush1.msra.mxu0 %v2120
    %2598 = vmatprep.subr.mxu0 0.0
    %2599 = vmatpush1.msra.mxu0 %v2121
    %2600 = vmatprep.subr.mxu0 0.0
    %2601 = vmatpush1.msra.mxu0 %v2122
    %2602 = vmatprep.subr.mxu0 0.0
    %2603 = vmatpush1.msra.mxu0 %v2123
    %2604 = vmatprep.subr.mxu0 0.0
    %2605 = vmatpush1.msra.mxu0 0.0
    %2606 = vmatprep.subr.mxu0 0.0
    %2607 = vmatpush1.msra.mxu0 0.0
    %2608 = vmatprep.subr.mxu0 0.0
    %2609 = vmatpush1.msra.mxu0 0.0
    %2610 = vmatprep.subr.mxu0 0.0
    %2611 = vmatpush1.msra.mxu0 0.0
    %2612 = vmatprep.subr.mxu0 0.0
    %2613 = vmatpush1.msra.mxu0 0.0
    %2614 = vmatprep.subr.mxu0 0.0
    %2615 = vmatpush1.msra.mxu0 0.0
    %2616 = vmatprep.subr.mxu0 0.0
    %2617 = vmatpush1.msra.mxu0 0.0
    %2618 = vmatprep.subr.mxu0 0.0
    %2619 = vmatpush1.msra.mxu0 0.0
    %2620 = vmatprep.subr.mxu0 0.0
    %2621 = vmatpush1.msra.mxu0 0.0
    %2622 = vmatprep.subr.mxu0 0.0
    %2623 = vmatpush1.msra.mxu0 0.0
    %2624 = vmatprep.subr.mxu0 0.0
    %2625 = vmatpush1.msra.mxu0 0.0
    %2626 = vmatprep.subr.mxu0 0.0
    %2627 = vmatpush1.msra.mxu0 0.0
    %2628 = vmatprep.subr.mxu0 0.0
    %2629 = vmatpush1.msra.mxu0 0.0
    %2630 = vmatprep.subr.mxu0 0.0
    %2631 = vmatpush1.msra.mxu0 0.0
    %2632 = vmatprep.subr.mxu0 0.0
    %2633 = vmatpush1.msra.mxu0 0.0
    %2634 = vmatprep.subr.mxu0 0.0
    %2635 = vmatpush1.msra.mxu0 0.0
    %2636 = vmatprep.mubr.f32.mxu0 0.0
    %2637 = vmatmul.mubr.f32.gmra.mrb[0].mxu0 %v2285
    %v2638 = vpop.f32.mrb[0].mxu0
    %v2639 = vadd.f32 %v2569, %v2638
    %v2640 = vpop.f32.mrb[0].mxu0
    %2641 = vdwg.mxu0
    %v2642 = vrot.slane %v2106, 4
    %v2643 = vadd.f32 %v2106, %v2642
    %v2644 = vrot.slane %v2643, 2
    %v2645 = vadd.f32 %v2643, %v2644
    %v2646 = vrot.slane %v2645, 1
    %v2647 = vadd.f32 %v2645, %v2646
    %v2648 = vadd.f32 %v2647, 0.0
    %v2649 = vmul.f32 %v2106, %v2106
    %v2650 = vrot.slane %v2649, 4
    %v2651 = vadd.f32 %v2649, %v2650
    %v2652 = vrot.slane %v2651, 2
    %v2653 = vadd.f32 %v2651, %v2652
    %v2654 = vrot.slane %v2653, 1
    %v2655 = vadd.f32 %v2653, %v2654
    %v2656 = vadd.f32 %v2655, 0.0
    %v2657 = vrot.slane %v2278, 4
    %v2658 = vadd.f32 %v2278, %v2657
    %v2659 = vrot.slane %v2658, 2
    %v2660 = vadd.f32 %v2658, %v2659
    %v2661 = vrot.slane %v2660, 1
    %v2662 = vadd.f32 %v2660, %v2661
    %v2663 = vadd.f32 %v2648, %v2662
    %v2664 = vmul.f32 %v2278, %v2278
    %v2665 = vrot.slane %v2664, 4
    %v2666 = vadd.f32 %v2664, %v2665
    %v2667 = vrot.slane %v2666, 2
    %v2668 = vadd.f32 %v2666, %v2667
    %v2669 = vrot.slane %v2668, 1
    %v2670 = vadd.f32 %v2668, %v2669
    %v2671 = vadd.f32 %v2656, %v2670
    %v2672 = vrot.slane %v2501, 4
    %v2673 = vadd.f32 %v2501, %v2672
    %v2674 = vrot.slane %v2673, 2
    %v2675 = vadd.f32 %v2673, %v2674
    %v2676 = vrot.slane %v2675, 1
    %v2677 = vadd.f32 %v2675, %v2676
    %v2678 = vadd.f32 %v2663, %v2677
    %v2679 = vmul.f32 %v2501, %v2501
    %v2680 = vrot.slane %v2679, 4
    %v2681 = vadd.f32 %v2679, %v2680
    %v2682 = vrot.slane %v2681, 2
    %v2683 = vadd.f32 %v2681, %v2682
    %v2684 = vrot.slane %v2683, 1
    %v2685 = vadd.f32 %v2683, %v2684
    %v2686 = vadd.f32 %v2671, %v2685
    %v2687 = vrot.slane %v2639, 4
    %v2688 = vadd.f32 %v2639, %v2687
    %v2689 = vrot.slane %v2688, 2
    %v2690 = vadd.f32 %v2688, %v2689
    %v2691 = vrot.slane %v2690, 1
    %v2692 = vadd.f32 %v2690, %v2691
    %v2693 = vadd.f32 %v2678, %v2692
    %v2694 = vmul.f32 %v2639, %v2639
    %v2695 = vrot.slane %v2694, 4
    %v2696 = vadd.f32 %v2694, %v2695
    %v2697 = vrot.slane %v2696, 2
    %v2698 = vadd.f32 %v2696, %v2697
    %v2699 = vrot.slane %v2698, 1
    %v2700 = vadd.f32 %v2698, %v2699
    %v2701 = vadd.f32 %v2686, %v2700
    %v2702 = vand.u32 %v1086, 7
    %v2703 = vand.u32 %v1087, 7
    %v2704 = vand.u32 %v1088, 7
    %v2705 = vand.u32 %v1089, 7
    %v2706 = vand.u32 %v1090, 7
    %v2707 = vand.u32 %v1091, 7
    %v2708 = vand.u32 %v1092, 7
    %v2709 = vand.u32 %v1093, 7
    %v2710 = vand.u32 %v1094, 7
    %v2711 = vand.u32 %v1095, 7
    %v2712 = vand.u32 %v1096, 7
    %v2713 = vand.u32 %v1097, 7
    %v2714 = vand.u32 %v1098, 7
    %v2715 = vand.u32 %v1099, 7
    %v2716 = vand.u32 %v1100, 7
    %v2717 = vand.u32 %v1101, 7
    %vm2718 = vcmp.eq.s32.totalorder %v2702, %v1119
    %vm2719 = vcmp.eq.s32.totalorder %v2703, %v1119
    %vm2720 = vcmp.eq.s32.totalorder %v2704, %v1119
    %vm2721 = vcmp.eq.s32.totalorder %v2705, %v1119
    %vm2722 = vcmp.eq.s32.totalorder %v2706, %v1119
    %vm2723 = vcmp.eq.s32.totalorder %v2707, %v1119
    %vm2724 = vcmp.eq.s32.totalorder %v2708, %v1119
    %vm2725 = vcmp.eq.s32.totalorder %v2709, %v1119
    %vm2726 = vcmp.eq.s32.totalorder %v2710, %v1119
    %vm2727 = vcmp.eq.s32.totalorder %v2711, %v1119
    %vm2728 = vcmp.eq.s32.totalorder %v2712, %v1119
    %vm2729 = vcmp.eq.s32.totalorder %v2713, %v1119
    %vm2730 = vcmp.eq.s32.totalorder %v2714, %v1119
    %vm2731 = vcmp.eq.s32.totalorder %v2715, %v1119
    %vm2732 = vcmp.eq.s32.totalorder %v2716, %v1119
    %vm2733 = vcmp.eq.s32.totalorder %v2717, %v1119
    %v2734 = vsel %vm2718, 1, 0
    %v2735 = vsel %vm2719, 1, 0
    %v2736 = vsel %vm2720, 1, 0
    %v2737 = vsel %vm2721, 1, 0
    %v2738 = vsel %vm2722, 1, 0
    %v2739 = vsel %vm2723, 1, 0
    %v2740 = vsel %vm2724, 1, 0
    %v2741 = vsel %vm2725, 1, 0
    %v2742 = vsel %vm2726, 1, 0
    %v2743 = vsel %vm2727, 1, 0
    %v2744 = vsel %vm2728, 1, 0
    %v2745 = vsel %vm2729, 1, 0
    %v2746 = vsel %vm2730, 1, 0
    %v2747 = vsel %vm2731, 1, 0
    %v2748 = vsel %vm2732, 1, 0
    %v2749 = vsel %vm2733, 1, 0
    %v2750 = vcvt.s32.f32 %v2734
    %v2751 = vcvt.s32.f32 %v2735
    %v2752 = vcvt.s32.f32 %v2736
    %v2753 = vcvt.s32.f32 %v2737
    %v2754 = vcvt.s32.f32 %v2738
    %v2755 = vcvt.s32.f32 %v2739
    %v2756 = vcvt.s32.f32 %v2740
    %v2757 = vcvt.s32.f32 %v2741
    %v2758 = vcvt.s32.f32 %v2742
    %v2759 = vcvt.s32.f32 %v2743
    %v2760 = vcvt.s32.f32 %v2744
    %v2761 = vcvt.s32.f32 %v2745
    %v2762 = vcvt.s32.f32 %v2746
    %v2763 = vcvt.s32.f32 %v2747
    %v2764 = vcvt.s32.f32 %v2748
    %v2765 = vcvt.s32.f32 %v2749
    %v2766 = vand.u32 %v1119, 7
    %vm2767 = vcmp.eq.s32.totalorder %v2766, %v1086
    %v2768 = vsel %vm2767, 1, 0
    %v2769 = vcvt.s32.f32 %v2768
    %2770 = vmatprep.subr.mxu0 0.0
    %2771 = vmatpush1.msra.mxu0 %v2750
    %2772 = vmatprep.subr.mxu0 0.0
    %2773 = vmatpush1.msra.mxu0 %v2751
    %2774 = vmatprep.subr.mxu0 0.0
    %2775 = vmatpush1.msra.mxu0 %v2752
    %2776 = vmatprep.subr.mxu0 0.0
    %2777 = vmatpush1.msra.mxu0 %v2753
    %2778 = vmatprep.subr.mxu0 0.0
    %2779 = vmatpush1.msra.mxu0 %v2754
    %2780 = vmatprep.subr.mxu0 0.0
    %2781 = vmatpush1.msra.mxu0 %v2755
    %2782 = vmatprep.subr.mxu0 0.0
    %2783 = vmatpush1.msra.mxu0 %v2756
    %2784 = vmatprep.subr.mxu0 0.0
    %2785 = vmatpush1.msra.mxu0 %v2757
    %2786 = vmatprep.subr.mxu0 0.0
    %2787 = vmatpush1.msra.mxu0 %v2758
    %2788 = vmatprep.subr.mxu0 0.0
    %2789 = vmatpush1.msra.mxu0 %v2759
    %2790 = vmatprep.subr.mxu0 0.0
    %2791 = vmatpush1.msra.mxu0 %v2760
    %2792 = vmatprep.subr.mxu0 0.0
    %2793 = vmatpush1.msra.mxu0 %v2761
    %2794 = vmatprep.subr.mxu0 0.0
    %2795 = vmatpush1.msra.mxu0 %v2762
    %2796 = vmatprep.subr.mxu0 0.0
    %2797 = vmatpush1.msra.mxu0 %v2763
    %2798 = vmatprep.subr.mxu0 0.0
    %2799 = vmatpush1.msra.mxu0 %v2764
    %2800 = vmatprep.subr.mxu0 0.0
    %2801 = vmatpush1.msra.mxu0 %v2765
    %2802 = vmatprep.subr.mxu0 0.0
    %2803 = vmatpush1.msra.mxu0 0.0
    %2804 = vmatprep.subr.mxu0 0.0
    %2805 = vmatpush1.msra.mxu0 0.0
    %2806 = vmatprep.subr.mxu0 0.0
    %2807 = vmatpush1.msra.mxu0 0.0
    %2808 = vmatprep.subr.mxu0 0.0
    %2809 = vmatpush1.msra.mxu0 0.0
    %2810 = vmatprep.subr.mxu0 0.0
    %2811 = vmatpush1.msra.mxu0 0.0
    %2812 = vmatprep.subr.mxu0 0.0
    %2813 = vmatpush1.msra.mxu0 0.0
    %2814 = vmatprep.subr.mxu0 0.0
    %2815 = vmatpush1.msra.mxu0 0.0
    %2816 = vmatprep.subr.mxu0 0.0
    %2817 = vmatpush1.msra.mxu0 0.0
    %2818 = vmatprep.subr.mxu0 0.0
    %2819 = vmatpush1.msra.mxu0 0.0
    %2820 = vmatprep.subr.mxu0 0.0
    %2821 = vmatpush1.msra.mxu0 0.0
    %2822 = vmatprep.subr.mxu0 0.0
    %2823 = vmatpush1.msra.mxu0 0.0
    %2824 = vmatprep.subr.mxu0 0.0
    %2825 = vmatpush1.msra.mxu0 0.0
    %2826 = vmatprep.subr.mxu0 0.0
    %2827 = vmatpush1.msra.mxu0 0.0
    %2828 = vmatprep.subr.mxu0 0.0
    %2829 = vmatpush1.msra.mxu0 0.0
    %2830 = vmatprep.subr.mxu0 0.0
    %2831 = vmatpush1.msra.mxu0 0.0
    %2832 = vmatprep.subr.mxu0 0.0
    %2833 = vmatpush1.msra.mxu0 0.0
    %2834 = vmatprep.mubr.f32.mxu0 0.0
    %2835 = vmatmul.mubr.f32.gmra.mrb[0].mxu0 %v2693
    %v2836 = vpop.f32.mrb[0].mxu0
    %v2837 = vadd.f32 0.0, %v2836
    %v2838 = vpop.f32.mrb[0].mxu0
    %2839 = vdwg.mxu0
    %v2840 = vrcp.pop 512.0
    %v2841 = vmul.f32 %v2837, %v2840
    %2842 = vmatprep.subr.mxu0 0.0
    %2843 = vmatpush1.msra.mxu0 %v2750
    %2844 = vmatprep.subr.mxu0 0.0
    %2845 = vmatpush1.msra.mxu0 %v2751
    %2846 = vmatprep.subr.mxu0 0.0
    %2847 = vmatpush1.msra.mxu0 %v2752
    %2848 = vmatprep.subr.mxu0 0.0
    %2849 = vmatpush1.msra.mxu0 %v2753
    %2850 = vmatprep.subr.mxu0 0.0
    %2851 = vmatpush1.msra.mxu0 %v2754
    %2852 = vmatprep.subr.mxu0 0.0
    %2853 = vmatpush1.msra.mxu0 %v2755
    %2854 = vmatprep.subr.mxu0 0.0
    %2855 = vmatpush1.msra.mxu0 %v2756
    %2856 = vmatprep.subr.mxu0 0.0
    %2857 = vmatpush1.msra.mxu0 %v2757
    %2858 = vmatprep.subr.mxu0 0.0
    %2859 = vmatpush1.msra.mxu0 %v2758
    %2860 = vmatprep.subr.mxu0 0.0
    %2861 = vmatpush1.msra.mxu0 %v2759
    %2862 = vmatprep.subr.mxu0 0.0
    %2863 = vmatpush1.msra.mxu0 %v2760
    %2864 = vmatprep.subr.mxu0 0.0
    %2865 = vmatpush1.msra.mxu0 %v2761
    %2866 = vmatprep.subr.mxu0 0.0
    %2867 = vmatpush1.msra.mxu0 %v2762
    %2868 = vmatprep.subr.mxu0 0.0
    %2869 = vmatpush1.msra.mxu0 %v2763
    %2870 = vmatprep.subr.mxu0 0.0
    %2871 = vmatpush1.msra.mxu0 %v2764
    %2872 = vmatprep.subr.mxu0 0.0
    %2873 = vmatpush1.msra.mxu0 %v2765
    %2874 = vmatprep.subr.mxu0 0.0
    %2875 = vmatpush1.msra.mxu0 0.0
    %2876 = vmatprep.subr.mxu0 0.0
    %2877 = vmatpush1.msra.mxu0 0.0
    %2878 = vmatprep.subr.mxu0 0.0
    %2879 = vmatpush1.msra.mxu0 0.0
    %2880 = vmatprep.subr.mxu0 0.0
    %2881 = vmatpush1.msra.mxu0 0.0
    %2882 = vmatprep.subr.mxu0 0.0
    %2883 = vmatpush1.msra.mxu0 0.0
    %2884 = vmatprep.subr.mxu0 0.0
    %2885 = vmatpush1.msra.mxu0 0.0
    %2886 = vmatprep.subr.mxu0 0.0
    %2887 = vmatpush1.msra.mxu0 0.0
    %2888 = vmatprep.subr.mxu0 0.0
    %2889 = vmatpush1.msra.mxu0 0.0
    %2890 = vmatprep.subr.mxu0 0.0
    %2891 = vmatpush1.msra.mxu0 0.0
    %2892 = vmatprep.subr.mxu0 0.0
    %2893 = vmatpush1.msra.mxu0 0.0
    %2894 = vmatprep.subr.mxu0 0.0
    %2895 = vmatpush1.msra.mxu0 0.0
    %2896 = vmatprep.subr.mxu0 0.0
    %2897 = vmatpush1.msra.mxu0 0.0
    %2898 = vmatprep.subr.mxu0 0.0
    %2899 = vmatpush1.msra.mxu0 0.0
    %2900 = vmatprep.subr.mxu0 0.0
    %2901 = vmatpush1.msra.mxu0 0.0
    %2902 = vmatprep.subr.mxu0 0.0
    %2903 = vmatpush1.msra.mxu0 0.0
    %2904 = vmatprep.subr.mxu0 0.0
    %2905 = vmatpush1.msra.mxu0 0.0
    %2906 = vmatprep.mubr.f32.mxu0 0.0
    %2907 = vmatmul.mubr.f32.gmra.mrb[0].mxu0 %v2701
    %v2908 = vpop.f32.mrb[0].mxu0
    %v2909 = vadd.f32 0.0, %v2908
    %v2910 = vpop.f32.mrb[0].mxu0
    %2911 = vdwg.mxu0
    %v2912 = vmul.f32 %v2909, %v2840
    %v2913 = vmul.f32 %v2841, %v2841
    %v2914 = vsub.f32 %v2912, %v2913
    %v2915 = vld [vmem:[%s8] sm:$0x1]
    %v2916 = vadd.f32 %v2914, 1e-05
    %v2917 = vrsqrt.pop %v2916
    %v2918 = vmul.f32 %v2915, %v2917
    %v2919 = vld [vmem:[%s9] sm:$0x1]
    %v2920 = vmul.f32 %v2841, %v2918
    %v2921 = vsub.f32 %v2919, %v2920
    %vm2922 = vcmask 64512
    %v2924 = vsel %vm2922, %v2918, 0
    %2926 = vmatprep.subr.mxu0 0.0
    %2927 = vmatpush1.msra.mxu0 %v2769
    %2928 = vmatprep.subr.mxu0 0.0
    %2929 = vmatpush1.msra.mxu0 0.0
    %2930 = vmatprep.subr.mxu0 0.0
    %2931 = vmatpush1.msra.mxu0 0.0
    %2932 = vmatprep.subr.mxu0 0.0
    %2933 = vmatpush1.msra.mxu0 0.0
    %2934 = vmatprep.subr.mxu0 0.0
    %2935 = vmatpush1.msra.mxu0 0.0
    %2936 = vmatprep.subr.mxu0 0.0
    %2937 = vmatpush1.msra.mxu0 0.0
    %2938 = vmatprep.subr.mxu0 0.0
    %2939 = vmatpush1.msra.mxu0 0.0
    %2940 = vmatprep.subr.mxu0 0.0
    %2941 = vmatpush1.msra.mxu0 0.0
    %2942 = vmatprep.subr.mxu0 0.0
    %2943 = vmatpush1.msra.mxu0 0.0
    %2944 = vmatprep.subr.mxu0 0.0
    %2945 = vmatpush1.msra.mxu0 0.0
    %2946 = vmatprep.subr.mxu0 0.0
    %2947 = vmatpush1.msra.mxu0 0.0
    %2948 = vmatprep.subr.mxu0 0.0
    %2949 = vmatpush1.msra.mxu0 0.0
    %2950 = vmatprep.subr.mxu0 0.0
    %2951 = vmatpush1.msra.mxu0 0.0
    %2952 = vmatprep.subr.mxu0 0.0
    %2953 = vmatpush1.msra.mxu0 0.0
    %2954 = vmatprep.subr.mxu0 0.0
    %2955 = vmatpush1.msra.mxu0 0.0
    %2956 = vmatprep.subr.mxu0 0.0
    %2957 = vmatpush1.msra.mxu0 0.0
    %2958 = vmatprep.subr.mxu0 0.0
    %2959 = vmatpush1.msra.mxu0 0.0
    %2960 = vmatprep.subr.mxu0 0.0
    %2961 = vmatpush1.msra.mxu0 0.0
    %2962 = vmatprep.subr.mxu0 0.0
    %2963 = vmatpush1.msra.mxu0 0.0
    %2964 = vmatprep.subr.mxu0 0.0
    %2965 = vmatpush1.msra.mxu0 0.0
    %2966 = vmatprep.subr.mxu0 0.0
    %2967 = vmatpush1.msra.mxu0 0.0
    %2968 = vmatprep.subr.mxu0 0.0
    %2969 = vmatpush1.msra.mxu0 0.0
    %2970 = vmatprep.subr.mxu0 0.0
    %2971 = vmatpush1.msra.mxu0 0.0
    %2972 = vmatprep.subr.mxu0 0.0
    %2973 = vmatpush1.msra.mxu0 0.0
    %2974 = vmatprep.subr.mxu0 0.0
    %2975 = vmatpush1.msra.mxu0 0.0
    %2976 = vmatprep.subr.mxu0 0.0
    %2977 = vmatpush1.msra.mxu0 0.0
    %2978 = vmatprep.subr.mxu0 0.0
    %2979 = vmatpush1.msra.mxu0 0.0
    %2980 = vmatprep.subr.mxu0 0.0
    %2981 = vmatpush1.msra.mxu0 0.0
    %2982 = vmatprep.subr.mxu0 0.0
    %2983 = vmatpush1.msra.mxu0 0.0
    %2984 = vmatprep.subr.mxu0 0.0
    %2985 = vmatpush1.msra.mxu0 0.0
    %2986 = vmatprep.subr.mxu0 0.0
    %2987 = vmatpush1.msra.mxu0 0.0
    %2988 = vmatprep.subr.mxu0 0.0
    %2989 = vmatpush1.msra.mxu0 0.0
    %2990 = vmatprep.mubr.f32.mxu0 0.0
    %2991 = vmatmul.mubr.f32.gmra.mrb[0].mxu0 %v2924
    %v2992 = vpop.f32.mrb[0].mxu0
    %v2993 = vadd.f32 0.0, %v2992
    %v2994 = vpop.f32.mrb[0].mxu0
    %2995 = vdwg.mxu0
    %v2997 = vsel %vm2922, %v2921, 0
    %2999 = vmatprep.subr.mxu0 0.0
    %3000 = vmatpush1.msra.mxu0 %v2769
    %3001 = vmatprep.subr.mxu0 0.0
    %3002 = vmatpush1.msra.mxu0 0.0
    %3003 = vmatprep.subr.mxu0 0.0
    %3004 = vmatpush1.msra.mxu0 0.0
    %3005 = vmatprep.subr.mxu0 0.0
    %3006 = vmatpush1.msra.mxu0 0.0
    %3007 = vmatprep.subr.mxu0 0.0
    %3008 = vmatpush1.msra.mxu0 0.0
    %3009 = vmatprep.subr.mxu0 0.0
    %3010 = vmatpush1.msra.mxu0 0.0
    %3011 = vmatprep.subr.mxu0 0.0
    %3012 = vmatpush1.msra.mxu0 0.0
    %3013 = vmatprep.subr.mxu0 0.0
    %3014 = vmatpush1.msra.mxu0 0.0
    %3015 = vmatprep.subr.mxu0 0.0
    %3016 = vmatpush1.msra.mxu0 0.0
    %3017 = vmatprep.subr.mxu0 0.0
    %3018 = vmatpush1.msra.mxu0 0.0
    %3019 = vmatprep.subr.mxu0 0.0
    %3020 = vmatpush1.msra.mxu0 0.0
    %3021 = vmatprep.subr.mxu0 0.0
    %3022 = vmatpush1.msra.mxu0 0.0
    %3023 = vmatprep.subr.mxu0 0.0
    %3024 = vmatpush1.msra.mxu0 0.0
    %3025 = vmatprep.subr.mxu0 0.0
    %3026 = vmatpush1.msra.mxu0 0.0
    %3027 = vmatprep.subr.mxu0 0.0
    %3028 = vmatpush1.msra.mxu0 0.0
    %3029 = vmatprep.subr.mxu0 0.0
    %3030 = vmatpush1.msra.mxu0 0.0
    %3031 = vmatprep.subr.mxu0 0.0
    %3032 = vmatpush1.msra.mxu0 0.0
    %3033 = vmatprep.subr.mxu0 0.0
    %3034 = vmatpush1.msra.mxu0 0.0
    %3035 = vmatprep.subr.mxu0 0.0
    %3036 = vmatpush1.msra.mxu0 0.0
    %3037 = vmatprep.subr.mxu0 0.0
    %3038 = vmatpush1.msra.mxu0 0.0
    %3039 = vmatprep.subr.mxu0 0.0
    %3040 = vmatpush1.msra.mxu0 0.0
    %3041 = vmatprep.subr.mxu0 0.0
    %3042 = vmatpush1.msra.mxu0 0.0
    %3043 = vmatprep.subr.mxu0 0.0
    %3044 = vmatpush1.msra.mxu0 0.0
    %3045 = vmatprep.subr.mxu0 0.0
    %3046 = vmatpush1.msra.mxu0 0.0
    %3047 = vmatprep.subr.mxu0 0.0
    %3048 = vmatpush1.msra.mxu0 0.0
    %3049 = vmatprep.subr.mxu0 0.0
    %3050 = vmatpush1.msra.mxu0 0.0
    %3051 = vmatprep.subr.mxu0 0.0
    %3052 = vmatpush1.msra.mxu0 0.0
    %3053 = vmatprep.subr.mxu0 0.0
    %3054 = vmatpush1.msra.mxu0 0.0
    %3055 = vmatprep.subr.mxu0 0.0
    %3056 = vmatpush1.msra.mxu0 0.0
    %3057 = vmatprep.subr.mxu0 0.0
    %3058 = vmatpush1.msra.mxu0 0.0
    %3059 = vmatprep.subr.mxu0 0.0
    %3060 = vmatpush1.msra.mxu0 0.0
    %3061 = vmatprep.subr.mxu0 0.0
    %3062 = vmatpush1.msra.mxu0 0.0
    %3063 = vmatprep.mubr.f32.mxu0 0.0
    %3064 = vmatmul.mubr.f32.gmra.mrb[0].mxu0 %v2997
    %v3065 = vpop.f32.mrb[0].mxu0
    %v3066 = vadd.f32 0.0, %v3065
    %v3067 = vpop.f32.mrb[0].mxu0
    %3068 = vdwg.mxu0
    %v3069 = vlaneseq
    %v3070 = vshrl.u32 %v3069, 7
    %v3071 = vsub.s32 0, %v3070
    %v3072 = vrot.slane %v2993, %v3071
    %v3073 = vmul.f32 %v2106, %v3072
    %v3074 = vlaneseq
    %v3075 = vshrl.u32 %v3074, 7
    %v3076 = vsub.s32 0, %v3075
    %v3077 = vrot.slane %v3066, %v3076
    %v3078 = vadd.f32 %v3073, %v3077
    %v3079 = vmax.f32 %v3078, 0.0
    %vm3080 = vcmp.eq.s32.totalorder %v1088, %v1486
    %v3081 = vsel %vm3080, 1, 0
    %v3082 = vcvt.s32.f32 %v3081
    %v3083 = vmul.f32 %v2278, %v3072
    %v3084 = vadd.f32 %v3083, %v3077
    %v3085 = vmax.f32 %v3084, 0.0
    %vm3086 = vcmp.eq.s32.totalorder %v1088, %v1496
    %v3087 = vsel %vm3086, 1, 0
    %v3088 = vcvt.s32.f32 %v3087
    %v3089 = vsel %vm2922, %v1501, 0
    %v3091 = vsel %vm2922, %v1502, 0
    %v3094 = vsel %vm2922, %v3088, 0
    %3096 = vmatprep.subr.mxu0 0.0
    %3097 = vmatpush1.msra.mxu0 %v3085
    %3098 = vmatprep.subr.mxu0 0.0
    %3099 = vmatpush1.msra.mxu0 0.0
    %3100 = vmatprep.subr.mxu0 0.0
    %3101 = vmatpush1.msra.mxu0 0.0
    %3102 = vmatprep.subr.mxu0 0.0
    %3103 = vmatpush1.msra.mxu0 0.0
    %3104 = vmatprep.subr.mxu0 0.0
    %3105 = vmatpush1.msra.mxu0 0.0
    %3106 = vmatprep.subr.mxu0 0.0
    %3107 = vmatpush1.msra.mxu0 0.0
    %3108 = vmatprep.subr.mxu0 0.0
    %3109 = vmatpush1.msra.mxu0 0.0
    %3110 = vmatprep.subr.mxu0 0.0
    %3111 = vmatpush1.msra.mxu0 0.0
    %3112 = vmatprep.subr.mxu0 0.0
    %3113 = vmatpush1.msra.mxu0 0.0
    %3114 = vmatprep.subr.mxu0 0.0
    %3115 = vmatpush1.msra.mxu0 0.0
    %3116 = vmatprep.subr.mxu0 0.0
    %3117 = vmatpush1.msra.mxu0 0.0
    %3118 = vmatprep.subr.mxu0 0.0
    %3119 = vmatpush1.msra.mxu0 0.0
    %3120 = vmatprep.subr.mxu0 0.0
    %3121 = vmatpush1.msra.mxu0 0.0
    %3122 = vmatprep.subr.mxu0 0.0
    %3123 = vmatpush1.msra.mxu0 0.0
    %3124 = vmatprep.subr.mxu0 0.0
    %3125 = vmatpush1.msra.mxu0 0.0
    %3126 = vmatprep.subr.mxu0 0.0
    %3127 = vmatpush1.msra.mxu0 0.0
    %3128 = vmatprep.subr.mxu0 0.0
    %3129 = vmatpush1.msra.mxu0 0.0
    %3130 = vmatprep.subr.mxu0 0.0
    %3131 = vmatpush1.msra.mxu0 0.0
    %3132 = vmatprep.subr.mxu0 0.0
    %3133 = vmatpush1.msra.mxu0 0.0
    %3134 = vmatprep.subr.mxu0 0.0
    %3135 = vmatpush1.msra.mxu0 0.0
    %3136 = vmatprep.subr.mxu0 0.0
    %3137 = vmatpush1.msra.mxu0 0.0
    %3138 = vmatprep.subr.mxu0 0.0
    %3139 = vmatpush1.msra.mxu0 0.0
    %3140 = vmatprep.subr.mxu0 0.0
    %3141 = vmatpush1.msra.mxu0 0.0
    %3142 = vmatprep.subr.mxu0 0.0
    %3143 = vmatpush1.msra.mxu0 0.0
    %3144 = vmatprep.subr.mxu0 0.0
    %3145 = vmatpush1.msra.mxu0 0.0
    %3146 = vmatprep.subr.mxu0 0.0
    %3147 = vmatpush1.msra.mxu0 0.0
    %3148 = vmatprep.subr.mxu0 0.0
    %3149 = vmatpush1.msra.mxu0 0.0
    %3150 = vmatprep.subr.mxu0 0.0
    %3151 = vmatpush1.msra.mxu0 0.0
    %3152 = vmatprep.subr.mxu0 0.0
    %3153 = vmatpush1.msra.mxu0 0.0
    %3154 = vmatprep.subr.mxu0 0.0
    %3155 = vmatpush1.msra.mxu0 0.0
    %3156 = vmatprep.subr.mxu0 0.0
    %3157 = vmatpush1.msra.mxu0 0.0
    %3158 = vmatprep.subr.mxu0 0.0
    %3159 = vmatpush1.msra.mxu0 0.0
    %3160 = vmatprep.mubr.f32.mxu0 0.0
    %3161 = vmatmul.mubr.f32.gmra.mrb[0].mxu0 %v3089
    %v3162 = vpop.f32.mrb[0].mxu0
    %v3163 = vadd.f32 0.0, %v3162
    %v3164 = vpop.f32.mrb[0].mxu0
    %3165 = vmatprep.mubr.f32.mxu0 0.0
    %3166 = vmatmul.mubr.f32.gmra.mrb[0].mxu0 %v3091
    %v3167 = vpop.f32.mrb[0].mxu0
    %v3168 = vadd.f32 0.0, %v3167
    %v3169 = vpop.f32.mrb[0].mxu0
    %3170 = vmatprep.mubr.f32.mxu0 0.0
    %3171 = vmatmul.mubr.f32.gmra.mrb[0].mxu0 %v3094
    %v3172 = vpop.f32.mrb[0].mxu0
    %v3173 = vadd.f32 0.0, %v3172
    %v3174 = vpop.f32.mrb[0].mxu0
    %3175 = vdwg.mxu0
    %v3176 = vsel %vm2922, %v1491, 0
    %v3178 = vsel %vm2922, %v1492, 0
    %v3181 = vsel %vm2922, %v3082, 0
    %3183 = vmatprep.subr.mxu0 0.0
    %3184 = vmatpush1.msra.mxu0 %v3079
    %3185 = vmatprep.subr.mxu0 0.0
    %3186 = vmatpush1.msra.mxu0 0.0
    %3187 = vmatprep.subr.mxu0 0.0
    %3188 = vmatpush1.msra.mxu0 0.0
    %3189 = vmatprep.subr.mxu0 0.0
    %3190 = vmatpush1.msra.mxu0 0.0
    %3191 = vmatprep.subr.mxu0 0.0
    %3192 = vmatpush1.msra.mxu0 0.0
    %3193 = vmatprep.subr.mxu0 0.0
    %3194 = vmatpush1.msra.mxu0 0.0
    %3195 = vmatprep.subr.mxu0 0.0
    %3196 = vmatpush1.msra.mxu0 0.0
    %3197 = vmatprep.subr.mxu0 0.0
    %3198 = vmatpush1.msra.mxu0 0.0
    %3199 = vmatprep.subr.mxu0 0.0
    %3200 = vmatpush1.msra.mxu0 0.0
    %3201 = vmatprep.subr.mxu0 0.0
    %3202 = vmatpush1.msra.mxu0 0.0
    %3203 = vmatprep.subr.mxu0 0.0
    %3204 = vmatpush1.msra.mxu0 0.0
    %3205 = vmatprep.subr.mxu0 0.0
    %3206 = vmatpush1.msra.mxu0 0.0
    %3207 = vmatprep.subr.mxu0 0.0
    %3208 = vmatpush1.msra.mxu0 0.0
    %3209 = vmatprep.subr.mxu0 0.0
    %3210 = vmatpush1.msra.mxu0 0.0
    %3211 = vmatprep.subr.mxu0 0.0
    %3212 = vmatpush1.msra.mxu0 0.0
    %3213 = vmatprep.subr.mxu0 0.0
    %3214 = vmatpush1.msra.mxu0 0.0
    %3215 = vmatprep.subr.mxu0 0.0
    %3216 = vmatpush1.msra.mxu0 0.0
    %3217 = vmatprep.subr.mxu0 0.0
    %3218 = vmatpush1.msra.mxu0 0.0
    %3219 = vmatprep.subr.mxu0 0.0
    %3220 = vmatpush1.msra.mxu0 0.0
    %3221 = vmatprep.subr.mxu0 0.0
    %3222 = vmatpush1.msra.mxu0 0.0
    %3223 = vmatprep.subr.mxu0 0.0
    %3224 = vmatpush1.msra.mxu0 0.0
    %3225 = vmatprep.subr.mxu0 0.0
    %3226 = vmatpush1.msra.mxu0 0.0
    %3227 = vmatprep.subr.mxu0 0.0
    %3228 = vmatpush1.msra.mxu0 0.0
    %3229 = vmatprep.subr.mxu0 0.0
    %3230 = vmatpush1.msra.mxu0 0.0
    %3231 = vmatprep.subr.mxu0 0.0
    %3232 = vmatpush1.msra.mxu0 0.0
    %3233 = vmatprep.subr.mxu0 0.0
    %3234 = vmatpush1.msra.mxu0 0.0
    %3235 = vmatprep.subr.mxu0 0.0
    %3236 = vmatpush1.msra.mxu0 0.0
    %3237 = vmatprep.subr.mxu0 0.0
    %3238 = vmatpush1.msra.mxu0 0.0
    %3239 = vmatprep.subr.mxu0 0.0
    %3240 = vmatpush1.msra.mxu0 0.0
    %3241 = vmatprep.subr.mxu0 0.0
    %3242 = vmatpush1.msra.mxu0 0.0
    %3243 = vmatprep.subr.mxu0 0.0
    %3244 = vmatpush1.msra.mxu0 0.0
    %3245 = vmatprep.subr.mxu0 0.0
    %3246 = vmatpush1.msra.mxu0 0.0
    %3247 = vmatprep.mubr.f32.mxu0 0.0
    %3248 = vmatmul.mubr.f32.gmra.mrb[0].mxu0 %v3176
    %v3249 = vpop.f32.mrb[0].mxu0
    %v3250 = vadd.f32 %v3163, %v3249
    %v3251 = vpop.f32.mrb[0].mxu0
    %3252 = vmatprep.mubr.f32.mxu0 0.0
    %3253 = vmatmul.mubr.f32.gmra.mrb[0].mxu0 %v3178
    %v3254 = vpop.f32.mrb[0].mxu0
    %v3255 = vadd.f32 %v3168, %v3254
    %v3256 = vpop.f32.mrb[0].mxu0
    %3257 = vmatprep.mubr.f32.mxu0 0.0
    %3258 = vmatmul.mubr.f32.gmra.mrb[0].mxu0 %v3181
    %v3259 = vpop.f32.mrb[0].mxu0
    %v3260 = vadd.f32 %v3173, %v3259
    %v3261 = vpop.f32.mrb[0].mxu0
    %3262 = vdwg.mxu0
    %v3263 = vmul.f32 %v2501, %v3072
    %v3264 = vadd.f32 %v3263, %v3077
    %v3265 = vmax.f32 %v3264, 0.0
    %v3266 = vmul.f32 %v2639, %v3072
    %v3267 = vadd.f32 %v3266, %v3077
    %v3268 = vmax.f32 %v3267, 0.0
    %3269 = vmatprep.subr.mxu0 0.0
    %3270 = vmatpush1.msra.mxu0 %v3268
    %3271 = vmatprep.subr.mxu0 0.0
    %3272 = vmatpush1.msra.mxu0 0.0
    %3273 = vmatprep.subr.mxu0 0.0
    %3274 = vmatpush1.msra.mxu0 0.0
    %3275 = vmatprep.subr.mxu0 0.0
    %3276 = vmatpush1.msra.mxu0 0.0
    %3277 = vmatprep.subr.mxu0 0.0
    %3278 = vmatpush1.msra.mxu0 0.0
    %3279 = vmatprep.subr.mxu0 0.0
    %3280 = vmatpush1.msra.mxu0 0.0
    %3281 = vmatprep.subr.mxu0 0.0
    %3282 = vmatpush1.msra.mxu0 0.0
    %3283 = vmatprep.subr.mxu0 0.0
    %3284 = vmatpush1.msra.mxu0 0.0
    %3285 = vmatprep.subr.mxu0 0.0
    %3286 = vmatpush1.msra.mxu0 0.0
    %3287 = vmatprep.subr.mxu0 0.0
    %3288 = vmatpush1.msra.mxu0 0.0
    %3289 = vmatprep.subr.mxu0 0.0
    %3290 = vmatpush1.msra.mxu0 0.0
    %3291 = vmatprep.subr.mxu0 0.0
    %3292 = vmatpush1.msra.mxu0 0.0
    %3293 = vmatprep.subr.mxu0 0.0
    %3294 = vmatpush1.msra.mxu0 0.0
    %3295 = vmatprep.subr.mxu0 0.0
    %3296 = vmatpush1.msra.mxu0 0.0
    %3297 = vmatprep.subr.mxu0 0.0
    %3298 = vmatpush1.msra.mxu0 0.0
    %3299 = vmatprep.subr.mxu0 0.0
    %3300 = vmatpush1.msra.mxu0 0.0
    %3301 = vmatprep.subr.mxu0 0.0
    %3302 = vmatpush1.msra.mxu0 0.0
    %3303 = vmatprep.subr.mxu0 0.0
    %3304 = vmatpush1.msra.mxu0 0.0
    %3305 = vmatprep.subr.mxu0 0.0
    %3306 = vmatpush1.msra.mxu0 0.0
    %3307 = vmatprep.subr.mxu0 0.0
    %3308 = vmatpush1.msra.mxu0 0.0
    %3309 = vmatprep.subr.mxu0 0.0
    %3310 = vmatpush1.msra.mxu0 0.0
    %3311 = vmatprep.subr.mxu0 0.0
    %3312 = vmatpush1.msra.mxu0 0.0
    %3313 = vmatprep.subr.mxu0 0.0
    %3314 = vmatpush1.msra.mxu0 0.0
    %3315 = vmatprep.subr.mxu0 0.0
    %3316 = vmatpush1.msra.mxu0 0.0
    %3317 = vmatprep.subr.mxu0 0.0
    %3318 = vmatpush1.msra.mxu0 0.0
    %3319 = vmatprep.subr.mxu0 0.0
    %3320 = vmatpush1.msra.mxu0 0.0
    %3321 = vmatprep.subr.mxu0 0.0
    %3322 = vmatpush1.msra.mxu0 0.0
    %3323 = vmatprep.subr.mxu0 0.0
    %3324 = vmatpush1.msra.mxu0 0.0
    %3325 = vmatprep.subr.mxu0 0.0
    %3326 = vmatpush1.msra.mxu0 0.0
    %3327 = vmatprep.subr.mxu0 0.0
    %3328 = vmatpush1.msra.mxu0 0.0
    %3329 = vmatprep.subr.mxu0 0.0
    %3330 = vmatpush1.msra.mxu0 0.0
    %3331 = vmatprep.subr.mxu0 0.0
    %3332 = vmatpush1.msra.mxu0 0.0
    %3333 = vmatprep.mubr.f32.mxu0 0.0
    %3334 = vmatmul.mubr.f32.gmra.mrb[0].mxu0 %v3089
    %v3335 = vpop.f32.mrb[0].mxu0
    %v3336 = vadd.f32 0.0, %v3335
    %v3337 = vpop.f32.mrb[0].mxu0
    %3338 = vmatprep.mubr.f32.mxu0 0.0
    %3339 = vmatmul.mubr.f32.gmra.mrb[0].mxu0 %v3091
    %v3340 = vpop.f32.mrb[0].mxu0
    %v3341 = vadd.f32 0.0, %v3340
    %v3342 = vpop.f32.mrb[0].mxu0
    %3343 = vmatprep.mubr.f32.mxu0 0.0
    %3344 = vmatmul.mubr.f32.gmra.mrb[0].mxu0 %v3094
    %v3345 = vpop.f32.mrb[0].mxu0
    %v3346 = vadd.f32 0.0, %v3345
    %v3347 = vpop.f32.mrb[0].mxu0
    %3348 = vdwg.mxu0
    %3349 = vmatprep.subr.mxu0 0.0
    %3350 = vmatpush1.msra.mxu0 %v3265
    %3351 = vmatprep.subr.mxu0 0.0
    %3352 = vmatpush1.msra.mxu0 0.0
    %3353 = vmatprep.subr.mxu0 0.0
    %3354 = vmatpush1.msra.mxu0 0.0
    %3355 = vmatprep.subr.mxu0 0.0
    %3356 = vmatpush1.msra.mxu0 0.0
    %3357 = vmatprep.subr.mxu0 0.0
    %3358 = vmatpush1.msra.mxu0 0.0
    %3359 = vmatprep.subr.mxu0 0.0
    %3360 = vmatpush1.msra.mxu0 0.0
    %3361 = vmatprep.subr.mxu0 0.0
    %3362 = vmatpush1.msra.mxu0 0.0
    %3363 = vmatprep.subr.mxu0 0.0
    %3364 = vmatpush1.msra.mxu0 0.0
    %3365 = vmatprep.subr.mxu0 0.0
    %3366 = vmatpush1.msra.mxu0 0.0
    %3367 = vmatprep.subr.mxu0 0.0
    %3368 = vmatpush1.msra.mxu0 0.0
    %3369 = vmatprep.subr.mxu0 0.0
    %3370 = vmatpush1.msra.mxu0 0.0
    %3371 = vmatprep.subr.mxu0 0.0
    %3372 = vmatpush1.msra.mxu0 0.0
    %3373 = vmatprep.subr.mxu0 0.0
    %3374 = vmatpush1.msra.mxu0 0.0
    %3375 = vmatprep.subr.mxu0 0.0
    %3376 = vmatpush1.msra.mxu0 0.0
    %3377 = vmatprep.subr.mxu0 0.0
    %3378 = vmatpush1.msra.mxu0 0.0
    %3379 = vmatprep.subr.mxu0 0.0
    %3380 = vmatpush1.msra.mxu0 0.0
    %3381 = vmatprep.subr.mxu0 0.0
    %3382 = vmatpush1.msra.mxu0 0.0
    %3383 = vmatprep.subr.mxu0 0.0
    %3384 = vmatpush1.msra.mxu0 0.0
    %3385 = vmatprep.subr.mxu0 0.0
    %3386 = vmatpush1.msra.mxu0 0.0
    %3387 = vmatprep.subr.mxu0 0.0
    %3388 = vmatpush1.msra.mxu0 0.0
    %3389 = vmatprep.subr.mxu0 0.0
    %3390 = vmatpush1.msra.mxu0 0.0
    %3391 = vmatprep.subr.mxu0 0.0
    %3392 = vmatpush1.msra.mxu0 0.0
    %3393 = vmatprep.subr.mxu0 0.0
    %3394 = vmatpush1.msra.mxu0 0.0
    %3395 = vmatprep.subr.mxu0 0.0
    %3396 = vmatpush1.msra.mxu0 0.0
    %3397 = vmatprep.subr.mxu0 0.0
    %3398 = vmatpush1.msra.mxu0 0.0
    %3399 = vmatprep.subr.mxu0 0.0
    %3400 = vmatpush1.msra.mxu0 0.0
    %3401 = vmatprep.subr.mxu0 0.0
    %3402 = vmatpush1.msra.mxu0 0.0
    %3403 = vmatprep.subr.mxu0 0.0
    %3404 = vmatpush1.msra.mxu0 0.0
    %3405 = vmatprep.subr.mxu0 0.0
    %3406 = vmatpush1.msra.mxu0 0.0
    %3407 = vmatprep.subr.mxu0 0.0
    %3408 = vmatpush1.msra.mxu0 0.0
    %3409 = vmatprep.subr.mxu0 0.0
    %3410 = vmatpush1.msra.mxu0 0.0
    %3411 = vmatprep.subr.mxu0 0.0
    %3412 = vmatpush1.msra.mxu0 0.0
    %3413 = vmatprep.mubr.f32.mxu0 0.0
    %3414 = vmatmul.mubr.f32.gmra.mrb[0].mxu0 %v3176
    %v3415 = vpop.f32.mrb[0].mxu0
    %v3416 = vadd.f32 %v3336, %v3415
    %v3417 = vpop.f32.mrb[0].mxu0
    %3418 = vmatprep.mubr.f32.mxu0 0.0
    %3419 = vmatmul.mubr.f32.gmra.mrb[0].mxu0 %v3178
    %v3420 = vpop.f32.mrb[0].mxu0
    %v3421 = vadd.f32 %v3341, %v3420
    %v3422 = vpop.f32.mrb[0].mxu0
    %3423 = vmatprep.mubr.f32.mxu0 0.0
    %3424 = vmatmul.mubr.f32.gmra.mrb[0].mxu0 %v3181
    %v3425 = vpop.f32.mrb[0].mxu0
    %v3426 = vadd.f32 %v3346, %v3425
    %v3427 = vpop.f32.mrb[0].mxu0
    %3428 = vdwg.mxu0
    %v3429 = vld [vmem:[%s10] sm:$0xff]
    %v3430 = vld [vmem:[%s10 + $0x8] sm:$0xff]
    %v3431 = vld [vmem:[%s10 + $0x10] sm:$0xff]
    %v3432 = vld [vmem:[%s10 + $0x18] sm:$0xff]
    %v3433 = vld [vmem:[%s10 + $0x20] sm:$0xff]
    %v3434 = vld [vmem:[%s10 + $0x28] sm:$0xff]
    %v3435 = vld [vmem:[%s10 + $0x30] sm:$0xff]
    %v3436 = vld [vmem:[%s10 + $0x38] sm:$0xff]
    %v3437 = vld [vmem:[%s10 + $0x40] sm:$0xff]
    %v3438 = vld [vmem:[%s10 + $0x48] sm:$0xff]
    %v3439 = vld [vmem:[%s10 + $0x50] sm:$0xff]
    %v3440 = vld [vmem:[%s10 + $0x58] sm:$0xff]
    %v3441 = vld [vmem:[%s10 + $0x60] sm:$0xff]
    %v3442 = vld [vmem:[%s10 + $0x68] sm:$0xff]
    %v3443 = vld [vmem:[%s10 + $0x70] sm:$0xff]
    %v3444 = vld [vmem:[%s10 + $0x78] sm:$0xff]
    %v3445 = vld [vmem:[%s10 + $0x80] sm:$0xff]
    %v3446 = vld [vmem:[%s10 + $0x88] sm:$0xff]
    %v3447 = vld [vmem:[%s10 + $0x90] sm:$0xff]
    %v3448 = vld [vmem:[%s10 + $0x98] sm:$0xff]
    %v3449 = vld [vmem:[%s10 + $0xa0] sm:$0xff]
    %v3450 = vld [vmem:[%s10 + $0xa8] sm:$0xff]
    %v3451 = vld [vmem:[%s10 + $0xb0] sm:$0xff]
    %v3452 = vld [vmem:[%s10 + $0xb8] sm:$0xff]
    %v3453 = vld [vmem:[%s10 + $0xc0] sm:$0xff]
    %v3454 = vld [vmem:[%s10 + $0xc8] sm:$0xff]
    %v3455 = vld [vmem:[%s10 + $0xd0] sm:$0xff]
    %v3456 = vld [vmem:[%s10 + $0xd8] sm:$0xff]
    %v3457 = vld [vmem:[%s10 + $0xe0] sm:$0xff]
    %v3458 = vld [vmem:[%s10 + $0xe8] sm:$0xff]
    %v3459 = vld [vmem:[%s10 + $0xf0] sm:$0xff]
    %v3460 = vld [vmem:[%s10 + $0xf8] sm:$0xff]
    %s3461 = scalar_lea.vmem %s10, 256
    %v3462 = vld [vmem:[%s3461] sm:$0xff]
    %v3463 = vld [vmem:[%s3461 + $0x8] sm:$0xff]
    %v3464 = vld [vmem:[%s3461 + $0x10] sm:$0xff]
    %v3465 = vld [vmem:[%s3461 + $0x18] sm:$0xff]
    %v3466 = vld [vmem:[%s3461 + $0x20] sm:$0xff]
    %v3467 = vld [vmem:[%s3461 + $0x28] sm:$0xff]
    %v3468 = vld [vmem:[%s3461 + $0x30] sm:$0xff]
    %v3469 = vld [vmem:[%s3461 + $0x38] sm:$0xff]
    %v3470 = vld [vmem:[%s3461 + $0x40] sm:$0xff]
    %v3471 = vld [vmem:[%s3461 + $0x48] sm:$0xff]
    %v3472 = vld [vmem:[%s3461 + $0x50] sm:$0xff]
    %v3473 = vld [vmem:[%s3461 + $0x58] sm:$0xff]
    %v3474 = vld [vmem:[%s3461 + $0x60] sm:$0xff]
    %v3475 = vld [vmem:[%s3461 + $0x68] sm:$0xff]
    %v3476 = vld [vmem:[%s3461 + $0x70] sm:$0xff]
    %v3477 = vld [vmem:[%s3461 + $0x78] sm:$0xff]
    %v3478 = vld [vmem:[%s3461 + $0x80] sm:$0xff]
    %v3479 = vld [vmem:[%s3461 + $0x88] sm:$0xff]
    %v3480 = vld [vmem:[%s3461 + $0x90] sm:$0xff]
    %v3481 = vld [vmem:[%s3461 + $0x98] sm:$0xff]
    %v3482 = vld [vmem:[%s3461 + $0xa0] sm:$0xff]
    %v3483 = vld [vmem:[%s3461 + $0xa8] sm:$0xff]
    %v3484 = vld [vmem:[%s3461 + $0xb0] sm:$0xff]
    %v3485 = vld [vmem:[%s3461 + $0xb8] sm:$0xff]
    %v3486 = vld [vmem:[%s3461 + $0xc0] sm:$0xff]
    %v3487 = vld [vmem:[%s3461 + $0xc8] sm:$0xff]
    %v3488 = vld [vmem:[%s3461 + $0xd0] sm:$0xff]
    %v3489 = vld [vmem:[%s3461 + $0xd8] sm:$0xff]
    %v3490 = vld [vmem:[%s3461 + $0xe0] sm:$0xff]
    %v3491 = vld [vmem:[%s3461 + $0xe8] sm:$0xff]
    %v3492 = vld [vmem:[%s3461 + $0xf0] sm:$0xff]
    %v3493 = vld [vmem:[%s3461 + $0xf8] sm:$0xff]
    %v3497 = vrot.slane %v3250, 1
    %v3498 = vrot.slane %v3255, 1
    %v3499 = vsel %vm1869, %v3497, %v3498
    %v3500 = vrot.slane %v3260, 1
    %v3501 = vsel %vm1869, %v3498, %v3500
    %3504 = vmatprep.subr.mxu0 %v3463
    %3505 = vmatpush1.msra.mxu0 %v3462
    %3506 = vmatprep.subr.mxu0 %v3465
    %3507 = vmatpush1.msra.mxu0 %v3464
    %3508 = vmatprep.subr.mxu0 %v3467
    %3509 = vmatpush1.msra.mxu0 %v3466
    %3510 = vmatprep.subr.mxu0 %v3469
    %3511 = vmatpush1.msra.mxu0 %v3468
    %3512 = vmatprep.subr.mxu0 %v3471
    %3513 = vmatpush1.msra.mxu0 %v3470
    %3514 = vmatprep.subr.mxu0 %v3473
    %3515 = vmatpush1.msra.mxu0 %v3472
    %3516 = vmatprep.subr.mxu0 %v3475
    %3517 = vmatpush1.msra.mxu0 %v3474
    %3518 = vmatprep.subr.mxu0 %v3477
    %3519 = vmatpush1.msra.mxu0 %v3476
    %3520 = vmatprep.subr.mxu0 %v3479
    %3521 = vmatpush1.msra.mxu0 %v3478
    %3522 = vmatprep.subr.mxu0 %v3481
    %3523 = vmatpush1.msra.mxu0 %v3480
    %3524 = vmatprep.subr.mxu0 %v3483
    %3525 = vmatpush1.msra.mxu0 %v3482
    %3526 = vmatprep.subr.mxu0 %v3485
    %3527 = vmatpush1.msra.mxu0 %v3484
    %3528 = vmatprep.subr.mxu0 %v3487
    %3529 = vmatpush1.msra.mxu0 %v3486
    %3530 = vmatprep.subr.mxu0 %v3489
    %3531 = vmatpush1.msra.mxu0 %v3488
    %3532 = vmatprep.subr.mxu0 %v3491
    %3533 = vmatpush1.msra.mxu0 %v3490
    %3534 = vmatprep.subr.mxu0 %v3493
    %3535 = vmatpush1.msra.mxu0 %v3492
    %3536 = vmatprep.subr.mxu0 0.0
    %3537 = vmatpush1.msra.mxu0 0.0
    %3538 = vmatprep.subr.mxu0 0.0
    %3539 = vmatpush1.msra.mxu0 0.0
    %3540 = vmatprep.subr.mxu0 0.0
    %3541 = vmatpush1.msra.mxu0 0.0
    %3542 = vmatprep.subr.mxu0 0.0
    %3543 = vmatpush1.msra.mxu0 0.0
    %3544 = vmatprep.subr.mxu0 0.0
    %3545 = vmatpush1.msra.mxu0 0.0
    %3546 = vmatprep.subr.mxu0 0.0
    %3547 = vmatpush1.msra.mxu0 0.0
    %3548 = vmatprep.subr.mxu0 0.0
    %3549 = vmatpush1.msra.mxu0 0.0
    %3550 = vmatprep.subr.mxu0 0.0
    %3551 = vmatpush1.msra.mxu0 0.0
    %3552 = vmatprep.subr.mxu0 0.0
    %3553 = vmatpush1.msra.mxu0 0.0
    %3554 = vmatprep.subr.mxu0 0.0
    %3555 = vmatpush1.msra.mxu0 0.0
    %3556 = vmatprep.subr.mxu0 0.0
    %3557 = vmatpush1.msra.mxu0 0.0
    %3558 = vmatprep.subr.mxu0 0.0
    %3559 = vmatpush1.msra.mxu0 0.0
    %3560 = vmatprep.subr.mxu0 0.0
    %3561 = vmatpush1.msra.mxu0 0.0
    %3562 = vmatprep.subr.mxu0 0.0
    %3563 = vmatpush1.msra.mxu0 0.0
    %3564 = vmatprep.subr.mxu0 0.0
    %3565 = vmatpush1.msra.mxu0 0.0
    %3566 = vmatprep.subr.mxu0 0.0
    %3567 = vmatpush1.msra.mxu0 0.0
    %3568 = vmatprep.mubr.f32.mxu0 0.0
    %3569 = vmatmul.mubr.f32.gmra.mrb[0].mxu0 %v3499
    %v3570 = vpop.f32.mrb[0].mxu0
    %v3571 = vadd.f32 0.0, %v3570
    %v3572 = vpop.f32.mrb[0].mxu0
    %v3573 = vadd.f32 0.0, %v3572
    %3574 = vmatprep.mubr.f32.mxu0 0.0
    %3575 = vmatmul.mubr.f32.gmra.mrb[0].mxu0 %v3501
    %v3576 = vpop.f32.mrb[0].mxu0
    %v3577 = vadd.f32 0.0, %v3576
    %v3578 = vpop.f32.mrb[0].mxu0
    %v3579 = vadd.f32 0.0, %v3578
    %3580 = vdwg.mxu0
    %3581 = vmatprep.subr.mxu0 %v3430
    %3582 = vmatpush1.msra.mxu0 %v3429
    %3583 = vmatprep.subr.mxu0 %v3432
    %3584 = vmatpush1.msra.mxu0 %v3431
    %3585 = vmatprep.subr.mxu0 %v3434
    %3586 = vmatpush1.msra.mxu0 %v3433
    %3587 = vmatprep.subr.mxu0 %v3436
    %3588 = vmatpush1.msra.mxu0 %v3435
    %3589 = vmatprep.subr.mxu0 %v3438
    %3590 = vmatpush1.msra.mxu0 %v3437
    %3591 = vmatprep.subr.mxu0 %v3440
    %3592 = vmatpush1.msra.mxu0 %v3439
    %3593 = vmatprep.subr.mxu0 %v3442
    %3594 = vmatpush1.msra.mxu0 %v3441
    %3595 = vmatprep.subr.mxu0 %v3444
    %3596 = vmatpush1.msra.mxu0 %v3443
    %3597 = vmatprep.subr.mxu0 %v3446
    %3598 = vmatpush1.msra.mxu0 %v3445
    %3599 = vmatprep.subr.mxu0 %v3448
    %3600 = vmatpush1.msra.mxu0 %v3447
    %3601 = vmatprep.subr.mxu0 %v3450
    %3602 = vmatpush1.msra.mxu0 %v3449
    %3603 = vmatprep.subr.mxu0 %v3452
    %3604 = vmatpush1.msra.mxu0 %v3451
    %3605 = vmatprep.subr.mxu0 %v3454
    %3606 = vmatpush1.msra.mxu0 %v3453
    %3607 = vmatprep.subr.mxu0 %v3456
    %3608 = vmatpush1.msra.mxu0 %v3455
    %3609 = vmatprep.subr.mxu0 %v3458
    %3610 = vmatpush1.msra.mxu0 %v3457
    %3611 = vmatprep.subr.mxu0 %v3460
    %3612 = vmatpush1.msra.mxu0 %v3459
    %3613 = vmatprep.subr.mxu0 0.0
    %3614 = vmatpush1.msra.mxu0 0.0
    %3615 = vmatprep.subr.mxu0 0.0
    %3616 = vmatpush1.msra.mxu0 0.0
    %3617 = vmatprep.subr.mxu0 0.0
    %3618 = vmatpush1.msra.mxu0 0.0
    %3619 = vmatprep.subr.mxu0 0.0
    %3620 = vmatpush1.msra.mxu0 0.0
    %3621 = vmatprep.subr.mxu0 0.0
    %3622 = vmatpush1.msra.mxu0 0.0
    %3623 = vmatprep.subr.mxu0 0.0
    %3624 = vmatpush1.msra.mxu0 0.0
    %3625 = vmatprep.subr.mxu0 0.0
    %3626 = vmatpush1.msra.mxu0 0.0
    %3627 = vmatprep.subr.mxu0 0.0
    %3628 = vmatpush1.msra.mxu0 0.0
    %3629 = vmatprep.subr.mxu0 0.0
    %3630 = vmatpush1.msra.mxu0 0.0
    %3631 = vmatprep.subr.mxu0 0.0
    %3632 = vmatpush1.msra.mxu0 0.0
    %3633 = vmatprep.subr.mxu0 0.0
    %3634 = vmatpush1.msra.mxu0 0.0
    %3635 = vmatprep.subr.mxu0 0.0
    %3636 = vmatpush1.msra.mxu0 0.0
    %3637 = vmatprep.subr.mxu0 0.0
    %3638 = vmatpush1.msra.mxu0 0.0
    %3639 = vmatprep.subr.mxu0 0.0
    %3640 = vmatpush1.msra.mxu0 0.0
    %3641 = vmatprep.subr.mxu0 0.0
    %3642 = vmatpush1.msra.mxu0 0.0
    %3643 = vmatprep.subr.mxu0 0.0
    %3644 = vmatpush1.msra.mxu0 0.0
    %3645 = vmatprep.mubr.f32.mxu0 0.0
    %3646 = vmatmul.mubr.f32.gmra.mrb[0].mxu0 %v3250
    %v3647 = vpop.f32.mrb[0].mxu0
    %v3648 = vadd.f32 %v3571, %v3647
    %v3649 = vpop.f32.mrb[0].mxu0
    %v3650 = vadd.f32 %v3573, %v3649
    %3651 = vmatprep.mubr.f32.mxu0 0.0
    %3652 = vmatmul.mubr.f32.gmra.mrb[0].mxu0 %v3255
    %v3653 = vpop.f32.mrb[0].mxu0
    %v3654 = vadd.f32 %v3577, %v3653
    %v3655 = vpop.f32.mrb[0].mxu0
    %v3656 = vadd.f32 %v3579, %v3655
    %3657 = vdwg.mxu0
    %s3658 = scalar_lea.vmem %s10, 512
    %v3659 = vld [vmem:[%s3658] sm:$0xff]
    %v3660 = vld [vmem:[%s3658 + $0x8] sm:$0xff]
    %v3661 = vld [vmem:[%s3658 + $0x10] sm:$0xff]
    %v3662 = vld [vmem:[%s3658 + $0x18] sm:$0xff]
    %v3663 = vld [vmem:[%s3658 + $0x20] sm:$0xff]
    %v3664 = vld [vmem:[%s3658 + $0x28] sm:$0xff]
    %v3665 = vld [vmem:[%s3658 + $0x30] sm:$0xff]
    %v3666 = vld [vmem:[%s3658 + $0x38] sm:$0xff]
    %v3667 = vld [vmem:[%s3658 + $0x40] sm:$0xff]
    %v3668 = vld [vmem:[%s3658 + $0x48] sm:$0xff]
    %v3669 = vld [vmem:[%s3658 + $0x50] sm:$0xff]
    %v3670 = vld [vmem:[%s3658 + $0x58] sm:$0xff]
    %v3671 = vld [vmem:[%s3658 + $0x60] sm:$0xff]
    %v3672 = vld [vmem:[%s3658 + $0x68] sm:$0xff]
    %v3673 = vld [vmem:[%s3658 + $0x70] sm:$0xff]
    %v3674 = vld [vmem:[%s3658 + $0x78] sm:$0xff]
    %v3675 = vld [vmem:[%s3658 + $0x80] sm:$0xff]
    %v3676 = vld [vmem:[%s3658 + $0x88] sm:$0xff]
    %v3677 = vld [vmem:[%s3658 + $0x90] sm:$0xff]
    %v3678 = vld [vmem:[%s3658 + $0x98] sm:$0xff]
    %v3679 = vld [vmem:[%s3658 + $0xa0] sm:$0xff]
    %v3680 = vld [vmem:[%s3658 + $0xa8] sm:$0xff]
    %v3681 = vld [vmem:[%s3658 + $0xb0] sm:$0xff]
    %v3682 = vld [vmem:[%s3658 + $0xb8] sm:$0xff]
    %v3683 = vld [vmem:[%s3658 + $0xc0] sm:$0xff]
    %v3684 = vld [vmem:[%s3658 + $0xc8] sm:$0xff]
    %v3685 = vld [vmem:[%s3658 + $0xd0] sm:$0xff]
    %v3686 = vld [vmem:[%s3658 + $0xd8] sm:$0xff]
    %v3687 = vld [vmem:[%s3658 + $0xe0] sm:$0xff]
    %v3688 = vld [vmem:[%s3658 + $0xe8] sm:$0xff]
    %v3689 = vld [vmem:[%s3658 + $0xf0] sm:$0xff]
    %v3690 = vld [vmem:[%s3658 + $0xf8] sm:$0xff]
    %v3691 = vrot.slane %v3250, 2
    %v3692 = vrot.slane %v3255, 2
    %v3693 = vsel %vm2031, %v3691, %v3692
    %v3694 = vrot.slane %v3260, 2
    %v3695 = vsel %vm2031, %v3692, %v3694
    %3698 = vmatprep.subr.mxu0 %v3660
    %3699 = vmatpush1.msra.mxu0 %v3659
    %3700 = vmatprep.subr.mxu0 %v3662
    %3701 = vmatpush1.msra.mxu0 %v3661
    %3702 = vmatprep.subr.mxu0 %v3664
    %3703 = vmatpush1.msra.mxu0 %v3663
    %3704 = vmatprep.subr.mxu0 %v3666
    %3705 = vmatpush1.msra.mxu0 %v3665
    %3706 = vmatprep.subr.mxu0 %v3668
    %3707 = vmatpush1.msra.mxu0 %v3667
    %3708 = vmatprep.subr.mxu0 %v3670
    %3709 = vmatpush1.msra.mxu0 %v3669
    %3710 = vmatprep.subr.mxu0 %v3672
    %3711 = vmatpush1.msra.mxu0 %v3671
    %3712 = vmatprep.subr.mxu0 %v3674
    %3713 = vmatpush1.msra.mxu0 %v3673
    %3714 = vmatprep.subr.mxu0 %v3676
    %3715 = vmatpush1.msra.mxu0 %v3675
    %3716 = vmatprep.subr.mxu0 %v3678
    %3717 = vmatpush1.msra.mxu0 %v3677
    %3718 = vmatprep.subr.mxu0 %v3680
    %3719 = vmatpush1.msra.mxu0 %v3679
    %3720 = vmatprep.subr.mxu0 %v3682
    %3721 = vmatpush1.msra.mxu0 %v3681
    %3722 = vmatprep.subr.mxu0 %v3684
    %3723 = vmatpush1.msra.mxu0 %v3683
    %3724 = vmatprep.subr.mxu0 %v3686
    %3725 = vmatpush1.msra.mxu0 %v3685
    %3726 = vmatprep.subr.mxu0 %v3688
    %3727 = vmatpush1.msra.mxu0 %v3687
    %3728 = vmatprep.subr.mxu0 %v3690
    %3729 = vmatpush1.msra.mxu0 %v3689
    %3730 = vmatprep.subr.mxu0 0.0
    %3731 = vmatpush1.msra.mxu0 0.0
    %3732 = vmatprep.subr.mxu0 0.0
    %3733 = vmatpush1.msra.mxu0 0.0
    %3734 = vmatprep.subr.mxu0 0.0
    %3735 = vmatpush1.msra.mxu0 0.0
    %3736 = vmatprep.subr.mxu0 0.0
    %3737 = vmatpush1.msra.mxu0 0.0
    %3738 = vmatprep.subr.mxu0 0.0
    %3739 = vmatpush1.msra.mxu0 0.0
    %3740 = vmatprep.subr.mxu0 0.0
    %3741 = vmatpush1.msra.mxu0 0.0
    %3742 = vmatprep.subr.mxu0 0.0
    %3743 = vmatpush1.msra.mxu0 0.0
    %3744 = vmatprep.subr.mxu0 0.0
    %3745 = vmatpush1.msra.mxu0 0.0
    %3746 = vmatprep.subr.mxu0 0.0
    %3747 = vmatpush1.msra.mxu0 0.0
    %3748 = vmatprep.subr.mxu0 0.0
    %3749 = vmatpush1.msra.mxu0 0.0
    %3750 = vmatprep.subr.mxu0 0.0
    %3751 = vmatpush1.msra.mxu0 0.0
    %3752 = vmatprep.subr.mxu0 0.0
    %3753 = vmatpush1.msra.mxu0 0.0
    %3754 = vmatprep.subr.mxu0 0.0
    %3755 = vmatpush1.msra.mxu0 0.0
    %3756 = vmatprep.subr.mxu0 0.0
    %3757 = vmatpush1.msra.mxu0 0.0
    %3758 = vmatprep.subr.mxu0 0.0
    %3759 = vmatpush1.msra.mxu0 0.0
    %3760 = vmatprep.subr.mxu0 0.0
    %3761 = vmatpush1.msra.mxu0 0.0
    %3762 = vmatprep.mubr.f32.mxu0 0.0
    %3763 = vmatmul.mubr.f32.gmra.mrb[0].mxu0 %v3693
    %v3764 = vpop.f32.mrb[0].mxu0
    %v3765 = vadd.f32 0.0, %v3764
    %v3766 = vpop.f32.mrb[0].mxu0
    %v3767 = vadd.f32 0.0, %v3766
    %3768 = vmatprep.mubr.f32.mxu0 0.0
    %3769 = vmatmul.mubr.f32.gmra.mrb[0].mxu0 %v3695
    %v3770 = vpop.f32.mrb[0].mxu0
    %v3771 = vadd.f32 0.0, %v3770
    %v3772 = vpop.f32.mrb[0].mxu0
    %v3773 = vadd.f32 0.0, %v3772
    %3774 = vdwg.mxu0
    %v3775 = vadd.f32 %v3648, %v3765
    %v3776 = vadd.f32 %v3650, %v3767
    %v3777 = vadd.f32 %v3654, %v3771
    %v3778 = vadd.f32 %v3656, %v3773
    %s3779 = scalar_lea.vmem %s10, 1024
    %v3780 = vld [vmem:[%s3779] sm:$0xff]
    %v3781 = vld [vmem:[%s3779 + $0x8] sm:$0xff]
    %v3782 = vld [vmem:[%s3779 + $0x10] sm:$0xff]
    %v3783 = vld [vmem:[%s3779 + $0x18] sm:$0xff]
    %v3784 = vld [vmem:[%s3779 + $0x20] sm:$0xff]
    %v3785 = vld [vmem:[%s3779 + $0x28] sm:$0xff]
    %v3786 = vld [vmem:[%s3779 + $0x30] sm:$0xff]
    %v3787 = vld [vmem:[%s3779 + $0x38] sm:$0xff]
    %v3788 = vld [vmem:[%s3779 + $0x40] sm:$0xff]
    %v3789 = vld [vmem:[%s3779 + $0x48] sm:$0xff]
    %v3790 = vld [vmem:[%s3779 + $0x50] sm:$0xff]
    %v3791 = vld [vmem:[%s3779 + $0x58] sm:$0xff]
    %v3792 = vld [vmem:[%s3779 + $0x60] sm:$0xff]
    %v3793 = vld [vmem:[%s3779 + $0x68] sm:$0xff]
    %v3794 = vld [vmem:[%s3779 + $0x70] sm:$0xff]
    %v3795 = vld [vmem:[%s3779 + $0x78] sm:$0xff]
    %v3796 = vld [vmem:[%s3779 + $0x80] sm:$0xff]
    %v3797 = vld [vmem:[%s3779 + $0x88] sm:$0xff]
    %v3798 = vld [vmem:[%s3779 + $0x90] sm:$0xff]
    %v3799 = vld [vmem:[%s3779 + $0x98] sm:$0xff]
    %v3800 = vld [vmem:[%s3779 + $0xa0] sm:$0xff]
    %v3801 = vld [vmem:[%s3779 + $0xa8] sm:$0xff]
    %v3802 = vld [vmem:[%s3779 + $0xb0] sm:$0xff]
    %v3803 = vld [vmem:[%s3779 + $0xb8] sm:$0xff]
    %v3804 = vld [vmem:[%s3779 + $0xc0] sm:$0xff]
    %v3805 = vld [vmem:[%s3779 + $0xc8] sm:$0xff]
    %v3806 = vld [vmem:[%s3779 + $0xd0] sm:$0xff]
    %v3807 = vld [vmem:[%s3779 + $0xd8] sm:$0xff]
    %v3808 = vld [vmem:[%s3779 + $0xe0] sm:$0xff]
    %v3809 = vld [vmem:[%s3779 + $0xe8] sm:$0xff]
    %v3810 = vld [vmem:[%s3779 + $0xf0] sm:$0xff]
    %v3811 = vld [vmem:[%s3779 + $0xf8] sm:$0xff]
    %s3812 = scalar_lea.vmem %s10, 1280
    %v3813 = vld [vmem:[%s3812] sm:$0xff]
    %v3814 = vld [vmem:[%s3812 + $0x8] sm:$0xff]
    %v3815 = vld [vmem:[%s3812 + $0x10] sm:$0xff]
    %v3816 = vld [vmem:[%s3812 + $0x18] sm:$0xff]
    %v3817 = vld [vmem:[%s3812 + $0x20] sm:$0xff]
    %v3818 = vld [vmem:[%s3812 + $0x28] sm:$0xff]
    %v3819 = vld [vmem:[%s3812 + $0x30] sm:$0xff]
    %v3820 = vld [vmem:[%s3812 + $0x38] sm:$0xff]
    %v3821 = vld [vmem:[%s3812 + $0x40] sm:$0xff]
    %v3822 = vld [vmem:[%s3812 + $0x48] sm:$0xff]
    %v3823 = vld [vmem:[%s3812 + $0x50] sm:$0xff]
    %v3824 = vld [vmem:[%s3812 + $0x58] sm:$0xff]
    %v3825 = vld [vmem:[%s3812 + $0x60] sm:$0xff]
    %v3826 = vld [vmem:[%s3812 + $0x68] sm:$0xff]
    %v3827 = vld [vmem:[%s3812 + $0x70] sm:$0xff]
    %v3828 = vld [vmem:[%s3812 + $0x78] sm:$0xff]
    %v3829 = vld [vmem:[%s3812 + $0x80] sm:$0xff]
    %v3830 = vld [vmem:[%s3812 + $0x88] sm:$0xff]
    %v3831 = vld [vmem:[%s3812 + $0x90] sm:$0xff]
    %v3832 = vld [vmem:[%s3812 + $0x98] sm:$0xff]
    %v3833 = vld [vmem:[%s3812 + $0xa0] sm:$0xff]
    %v3834 = vld [vmem:[%s3812 + $0xa8] sm:$0xff]
    %v3835 = vld [vmem:[%s3812 + $0xb0] sm:$0xff]
    %v3836 = vld [vmem:[%s3812 + $0xb8] sm:$0xff]
    %v3837 = vld [vmem:[%s3812 + $0xc0] sm:$0xff]
    %v3838 = vld [vmem:[%s3812 + $0xc8] sm:$0xff]
    %v3839 = vld [vmem:[%s3812 + $0xd0] sm:$0xff]
    %v3840 = vld [vmem:[%s3812 + $0xd8] sm:$0xff]
    %v3841 = vld [vmem:[%s3812 + $0xe0] sm:$0xff]
    %v3842 = vld [vmem:[%s3812 + $0xe8] sm:$0xff]
    %v3843 = vld [vmem:[%s3812 + $0xf0] sm:$0xff]
    %v3844 = vld [vmem:[%s3812 + $0xf8] sm:$0xff]
    %3845 = vmatprep.subr.mxu0 %v3814
    %3846 = vmatpush1.msra.mxu0 %v3813
    %3847 = vmatprep.subr.mxu0 %v3816
    %3848 = vmatpush1.msra.mxu0 %v3815
    %3849 = vmatprep.subr.mxu0 %v3818
    %3850 = vmatpush1.msra.mxu0 %v3817
    %3851 = vmatprep.subr.mxu0 %v3820
    %3852 = vmatpush1.msra.mxu0 %v3819
    %3853 = vmatprep.subr.mxu0 %v3822
    %3854 = vmatpush1.msra.mxu0 %v3821
    %3855 = vmatprep.subr.mxu0 %v3824
    %3856 = vmatpush1.msra.mxu0 %v3823
    %3857 = vmatprep.subr.mxu0 %v3826
    %3858 = vmatpush1.msra.mxu0 %v3825
    %3859 = vmatprep.subr.mxu0 %v3828
    %3860 = vmatpush1.msra.mxu0 %v3827
    %3861 = vmatprep.subr.mxu0 %v3830
    %3862 = vmatpush1.msra.mxu0 %v3829
    %3863 = vmatprep.subr.mxu0 %v3832
    %3864 = vmatpush1.msra.mxu0 %v3831
    %3865 = vmatprep.subr.mxu0 %v3834
    %3866 = vmatpush1.msra.mxu0 %v3833
    %3867 = vmatprep.subr.mxu0 %v3836
    %3868 = vmatpush1.msra.mxu0 %v3835
    %3869 = vmatprep.subr.mxu0 %v3838
    %3870 = vmatpush1.msra.mxu0 %v3837
    %3871 = vmatprep.subr.mxu0 %v3840
    %3872 = vmatpush1.msra.mxu0 %v3839
    %3873 = vmatprep.subr.mxu0 %v3842
    %3874 = vmatpush1.msra.mxu0 %v3841
    %3875 = vmatprep.subr.mxu0 %v3844
    %3876 = vmatpush1.msra.mxu0 %v3843
    %3877 = vmatprep.subr.mxu0 0.0
    %3878 = vmatpush1.msra.mxu0 0.0
    %3879 = vmatprep.subr.mxu0 0.0
    %3880 = vmatpush1.msra.mxu0 0.0
    %3881 = vmatprep.subr.mxu0 0.0
    %3882 = vmatpush1.msra.mxu0 0.0
    %3883 = vmatprep.subr.mxu0 0.0
    %3884 = vmatpush1.msra.mxu0 0.0
    %3885 = vmatprep.subr.mxu0 0.0
    %3886 = vmatpush1.msra.mxu0 0.0
    %3887 = vmatprep.subr.mxu0 0.0
    %3888 = vmatpush1.msra.mxu0 0.0
    %3889 = vmatprep.subr.mxu0 0.0
    %3890 = vmatpush1.msra.mxu0 0.0
    %3891 = vmatprep.subr.mxu0 0.0
    %3892 = vmatpush1.msra.mxu0 0.0
    %3893 = vmatprep.subr.mxu0 0.0
    %3894 = vmatpush1.msra.mxu0 0.0
    %3895 = vmatprep.subr.mxu0 0.0
    %3896 = vmatpush1.msra.mxu0 0.0
    %3897 = vmatprep.subr.mxu0 0.0
    %3898 = vmatpush1.msra.mxu0 0.0
    %3899 = vmatprep.subr.mxu0 0.0
    %3900 = vmatpush1.msra.mxu0 0.0
    %3901 = vmatprep.subr.mxu0 0.0
    %3902 = vmatpush1.msra.mxu0 0.0
    %3903 = vmatprep.subr.mxu0 0.0
    %3904 = vmatpush1.msra.mxu0 0.0
    %3905 = vmatprep.subr.mxu0 0.0
    %3906 = vmatpush1.msra.mxu0 0.0
    %3907 = vmatprep.subr.mxu0 0.0
    %3908 = vmatpush1.msra.mxu0 0.0
    %3909 = vmatprep.mubr.f32.mxu0 0.0
    %3910 = vmatmul.mubr.f32.gmra.mrb[0].mxu0 %v3693
    %v3911 = vpop.f32.mrb[0].mxu0
    %v3912 = vadd.f32 0.0, %v3911
    %v3913 = vpop.f32.mrb[0].mxu0
    %v3914 = vadd.f32 0.0, %v3913
    %3915 = vmatprep.mubr.f32.mxu0 0.0
    %3916 = vmatmul.mubr.f32.gmra.mrb[0].mxu0 %v3695
    %v3917 = vpop.f32.mrb[0].mxu0
    %v3918 = vadd.f32 0.0, %v3917
    %v3919 = vpop.f32.mrb[0].mxu0
    %v3920 = vadd.f32 0.0, %v3919
    %3921 = vdwg.mxu0
    %3922 = vmatprep.subr.mxu0 %v3781
    %3923 = vmatpush1.msra.mxu0 %v3780
    %3924 = vmatprep.subr.mxu0 %v3783
    %3925 = vmatpush1.msra.mxu0 %v3782
    %3926 = vmatprep.subr.mxu0 %v3785
    %3927 = vmatpush1.msra.mxu0 %v3784
    %3928 = vmatprep.subr.mxu0 %v3787
    %3929 = vmatpush1.msra.mxu0 %v3786
    %3930 = vmatprep.subr.mxu0 %v3789
    %3931 = vmatpush1.msra.mxu0 %v3788
    %3932 = vmatprep.subr.mxu0 %v3791
    %3933 = vmatpush1.msra.mxu0 %v3790
    %3934 = vmatprep.subr.mxu0 %v3793
    %3935 = vmatpush1.msra.mxu0 %v3792
    %3936 = vmatprep.subr.mxu0 %v3795
    %3937 = vmatpush1.msra.mxu0 %v3794
    %3938 = vmatprep.subr.mxu0 %v3797
    %3939 = vmatpush1.msra.mxu0 %v3796
    %3940 = vmatprep.subr.mxu0 %v3799
    %3941 = vmatpush1.msra.mxu0 %v3798
    %3942 = vmatprep.subr.mxu0 %v3801
    %3943 = vmatpush1.msra.mxu0 %v3800
    %3944 = vmatprep.subr.mxu0 %v3803
    %3945 = vmatpush1.msra.mxu0 %v3802
    %3946 = vmatprep.subr.mxu0 %v3805
    %3947 = vmatpush1.msra.mxu0 %v3804
    %3948 = vmatprep.subr.mxu0 %v3807
    %3949 = vmatpush1.msra.mxu0 %v3806
    %3950 = vmatprep.subr.mxu0 %v3809
    %3951 = vmatpush1.msra.mxu0 %v3808
    %3952 = vmatprep.subr.mxu0 %v3811
    %3953 = vmatpush1.msra.mxu0 %v3810
    %3954 = vmatprep.subr.mxu0 0.0
    %3955 = vmatpush1.msra.mxu0 0.0
    %3956 = vmatprep.subr.mxu0 0.0
    %3957 = vmatpush1.msra.mxu0 0.0
    %3958 = vmatprep.subr.mxu0 0.0
    %3959 = vmatpush1.msra.mxu0 0.0
    %3960 = vmatprep.subr.mxu0 0.0
    %3961 = vmatpush1.msra.mxu0 0.0
    %3962 = vmatprep.subr.mxu0 0.0
    %3963 = vmatpush1.msra.mxu0 0.0
    %3964 = vmatprep.subr.mxu0 0.0
    %3965 = vmatpush1.msra.mxu0 0.0
    %3966 = vmatprep.subr.mxu0 0.0
    %3967 = vmatpush1.msra.mxu0 0.0
    %3968 = vmatprep.subr.mxu0 0.0
    %3969 = vmatpush1.msra.mxu0 0.0
    %3970 = vmatprep.subr.mxu0 0.0
    %3971 = vmatpush1.msra.mxu0 0.0
    %3972 = vmatprep.subr.mxu0 0.0
    %3973 = vmatpush1.msra.mxu0 0.0
    %3974 = vmatprep.subr.mxu0 0.0
    %3975 = vmatpush1.msra.mxu0 0.0
    %3976 = vmatprep.subr.mxu0 0.0
    %3977 = vmatpush1.msra.mxu0 0.0
    %3978 = vmatprep.subr.mxu0 0.0
    %3979 = vmatpush1.msra.mxu0 0.0
    %3980 = vmatprep.subr.mxu0 0.0
    %3981 = vmatpush1.msra.mxu0 0.0
    %3982 = vmatprep.subr.mxu0 0.0
    %3983 = vmatpush1.msra.mxu0 0.0
    %3984 = vmatprep.subr.mxu0 0.0
    %3985 = vmatpush1.msra.mxu0 0.0
    %3986 = vmatprep.mubr.f32.mxu0 0.0
    %3987 = vmatmul.mubr.f32.gmra.mrb[0].mxu0 %v3499
    %v3988 = vpop.f32.mrb[0].mxu0
    %v3989 = vadd.f32 %v3912, %v3988
    %v3990 = vpop.f32.mrb[0].mxu0
    %v3991 = vadd.f32 %v3914, %v3990
    %3992 = vmatprep.mubr.f32.mxu0 0.0
    %3993 = vmatmul.mubr.f32.gmra.mrb[0].mxu0 %v3501
    %v3994 = vpop.f32.mrb[0].mxu0
    %v3995 = vadd.f32 %v3918, %v3994
    %v3996 = vpop.f32.mrb[0].mxu0
    %v3997 = vadd.f32 %v3920, %v3996
    %3998 = vdwg.mxu0
    %v4002 = vrot.slane %v3416, 1
    %v4003 = vrot.slane %v3421, 1
    %v4004 = vsel %vm1869, %v4002, %v4003
    %v4005 = vrot.slane %v3426, 1
    %v4006 = vsel %vm1869, %v4003, %v4005
    %4009 = vmatprep.subr.mxu0 %v3463
    %4010 = vmatpush1.msra.mxu0 %v3462
    %4011 = vmatprep.subr.mxu0 %v3465
    %4012 = vmatpush1.msra.mxu0 %v3464
    %4013 = vmatprep.subr.mxu0 %v3467
    %4014 = vmatpush1.msra.mxu0 %v3466
    %4015 = vmatprep.subr.mxu0 %v3469
    %4016 = vmatpush1.msra.mxu0 %v3468
    %4017 = vmatprep.subr.mxu0 %v3471
    %4018 = vmatpush1.msra.mxu0 %v3470
    %4019 = vmatprep.subr.mxu0 %v3473
    %4020 = vmatpush1.msra.mxu0 %v3472
    %4021 = vmatprep.subr.mxu0 %v3475
    %4022 = vmatpush1.msra.mxu0 %v3474
    %4023 = vmatprep.subr.mxu0 %v3477
    %4024 = vmatpush1.msra.mxu0 %v3476
    %4025 = vmatprep.subr.mxu0 %v3479
    %4026 = vmatpush1.msra.mxu0 %v3478
    %4027 = vmatprep.subr.mxu0 %v3481
    %4028 = vmatpush1.msra.mxu0 %v3480
    %4029 = vmatprep.subr.mxu0 %v3483
    %4030 = vmatpush1.msra.mxu0 %v3482
    %4031 = vmatprep.subr.mxu0 %v3485
    %4032 = vmatpush1.msra.mxu0 %v3484
    %4033 = vmatprep.subr.mxu0 %v3487
    %4034 = vmatpush1.msra.mxu0 %v3486
    %4035 = vmatprep.subr.mxu0 %v3489
    %4036 = vmatpush1.msra.mxu0 %v3488
    %4037 = vmatprep.subr.mxu0 %v3491
    %4038 = vmatpush1.msra.mxu0 %v3490
    %4039 = vmatprep.subr.mxu0 %v3493
    %4040 = vmatpush1.msra.mxu0 %v3492
    %4041 = vmatprep.subr.mxu0 0.0
    %4042 = vmatpush1.msra.mxu0 0.0
    %4043 = vmatprep.subr.mxu0 0.0
    %4044 = vmatpush1.msra.mxu0 0.0
    %4045 = vmatprep.subr.mxu0 0.0
    %4046 = vmatpush1.msra.mxu0 0.0
    %4047 = vmatprep.subr.mxu0 0.0
    %4048 = vmatpush1.msra.mxu0 0.0
    %4049 = vmatprep.subr.mxu0 0.0
    %4050 = vmatpush1.msra.mxu0 0.0
    %4051 = vmatprep.subr.mxu0 0.0
    %4052 = vmatpush1.msra.mxu0 0.0
    %4053 = vmatprep.subr.mxu0 0.0
    %4054 = vmatpush1.msra.mxu0 0.0
    %4055 = vmatprep.subr.mxu0 0.0
    %4056 = vmatpush1.msra.mxu0 0.0
    %4057 = vmatprep.subr.mxu0 0.0
    %4058 = vmatpush1.msra.mxu0 0.0
    %4059 = vmatprep.subr.mxu0 0.0
    %4060 = vmatpush1.msra.mxu0 0.0
    %4061 = vmatprep.subr.mxu0 0.0
    %4062 = vmatpush1.msra.mxu0 0.0
    %4063 = vmatprep.subr.mxu0 0.0
    %4064 = vmatpush1.msra.mxu0 0.0
    %4065 = vmatprep.subr.mxu0 0.0
    %4066 = vmatpush1.msra.mxu0 0.0
    %4067 = vmatprep.subr.mxu0 0.0
    %4068 = vmatpush1.msra.mxu0 0.0
    %4069 = vmatprep.subr.mxu0 0.0
    %4070 = vmatpush1.msra.mxu0 0.0
    %4071 = vmatprep.subr.mxu0 0.0
    %4072 = vmatpush1.msra.mxu0 0.0
    %4073 = vmatprep.mubr.f32.mxu0 0.0
    %4074 = vmatmul.mubr.f32.gmra.mrb[0].mxu0 %v4004
    %v4075 = vpop.f32.mrb[0].mxu0
    %v4076 = vadd.f32 0.0, %v4075
    %v4077 = vpop.f32.mrb[0].mxu0
    %v4078 = vadd.f32 0.0, %v4077
    %4079 = vmatprep.mubr.f32.mxu0 0.0
    %4080 = vmatmul.mubr.f32.gmra.mrb[0].mxu0 %v4006
    %v4081 = vpop.f32.mrb[0].mxu0
    %v4082 = vadd.f32 0.0, %v4081
    %v4083 = vpop.f32.mrb[0].mxu0
    %v4084 = vadd.f32 0.0, %v4083
    %4085 = vdwg.mxu0
    %4086 = vmatprep.subr.mxu0 %v3430
    %4087 = vmatpush1.msra.mxu0 %v3429
    %4088 = vmatprep.subr.mxu0 %v3432
    %4089 = vmatpush1.msra.mxu0 %v3431
    %4090 = vmatprep.subr.mxu0 %v3434
    %4091 = vmatpush1.msra.mxu0 %v3433
    %4092 = vmatprep.subr.mxu0 %v3436
    %4093 = vmatpush1.msra.mxu0 %v3435
    %4094 = vmatprep.subr.mxu0 %v3438
    %4095 = vmatpush1.msra.mxu0 %v3437
    %4096 = vmatprep.subr.mxu0 %v3440
    %4097 = vmatpush1.msra.mxu0 %v3439
    %4098 = vmatprep.subr.mxu0 %v3442
    %4099 = vmatpush1.msra.mxu0 %v3441
    %4100 = vmatprep.subr.mxu0 %v3444
    %4101 = vmatpush1.msra.mxu0 %v3443
    %4102 = vmatprep.subr.mxu0 %v3446
    %4103 = vmatpush1.msra.mxu0 %v3445
    %4104 = vmatprep.subr.mxu0 %v3448
    %4105 = vmatpush1.msra.mxu0 %v3447
    %4106 = vmatprep.subr.mxu0 %v3450
    %4107 = vmatpush1.msra.mxu0 %v3449
    %4108 = vmatprep.subr.mxu0 %v3452
    %4109 = vmatpush1.msra.mxu0 %v3451
    %4110 = vmatprep.subr.mxu0 %v3454
    %4111 = vmatpush1.msra.mxu0 %v3453
    %4112 = vmatprep.subr.mxu0 %v3456
    %4113 = vmatpush1.msra.mxu0 %v3455
    %4114 = vmatprep.subr.mxu0 %v3458
    %4115 = vmatpush1.msra.mxu0 %v3457
    %4116 = vmatprep.subr.mxu0 %v3460
    %4117 = vmatpush1.msra.mxu0 %v3459
    %4118 = vmatprep.subr.mxu0 0.0
    %4119 = vmatpush1.msra.mxu0 0.0
    %4120 = vmatprep.subr.mxu0 0.0
    %4121 = vmatpush1.msra.mxu0 0.0
    %4122 = vmatprep.subr.mxu0 0.0
    %4123 = vmatpush1.msra.mxu0 0.0
    %4124 = vmatprep.subr.mxu0 0.0
    %4125 = vmatpush1.msra.mxu0 0.0
    %4126 = vmatprep.subr.mxu0 0.0
    %4127 = vmatpush1.msra.mxu0 0.0
    %4128 = vmatprep.subr.mxu0 0.0
    %4129 = vmatpush1.msra.mxu0 0.0
    %4130 = vmatprep.subr.mxu0 0.0
    %4131 = vmatpush1.msra.mxu0 0.0
    %4132 = vmatprep.subr.mxu0 0.0
    %4133 = vmatpush1.msra.mxu0 0.0
    %4134 = vmatprep.subr.mxu0 0.0
    %4135 = vmatpush1.msra.mxu0 0.0
    %4136 = vmatprep.subr.mxu0 0.0
    %4137 = vmatpush1.msra.mxu0 0.0
    %4138 = vmatprep.subr.mxu0 0.0
    %4139 = vmatpush1.msra.mxu0 0.0
    %4140 = vmatprep.subr.mxu0 0.0
    %4141 = vmatpush1.msra.mxu0 0.0
    %4142 = vmatprep.subr.mxu0 0.0
    %4143 = vmatpush1.msra.mxu0 0.0
    %4144 = vmatprep.subr.mxu0 0.0
    %4145 = vmatpush1.msra.mxu0 0.0
    %4146 = vmatprep.subr.mxu0 0.0
    %4147 = vmatpush1.msra.mxu0 0.0
    %4148 = vmatprep.subr.mxu0 0.0
    %4149 = vmatpush1.msra.mxu0 0.0
    %4150 = vmatprep.mubr.f32.mxu0 0.0
    %4151 = vmatmul.mubr.f32.gmra.mrb[0].mxu0 %v3416
    %v4152 = vpop.f32.mrb[0].mxu0
    %v4153 = vadd.f32 %v4076, %v4152
    %v4154 = vpop.f32.mrb[0].mxu0
    %v4155 = vadd.f32 %v4078, %v4154
    %4156 = vmatprep.mubr.f32.mxu0 0.0
    %4157 = vmatmul.mubr.f32.gmra.mrb[0].mxu0 %v3421
    %v4158 = vpop.f32.mrb[0].mxu0
    %v4159 = vadd.f32 %v4082, %v4158
    %v4160 = vpop.f32.mrb[0].mxu0
    %v4161 = vadd.f32 %v4084, %v4160
    %4162 = vdwg.mxu0
    %v4163 = vrot.slane %v3416, 2
    %v4164 = vrot.slane %v3421, 2
    %v4165 = vsel %vm2031, %v4163, %v4164
    %v4166 = vrot.slane %v3426, 2
    %v4167 = vsel %vm2031, %v4164, %v4166
    %4170 = vmatprep.subr.mxu0 %v3660
    %4171 = vmatpush1.msra.mxu0 %v3659
    %4172 = vmatprep.subr.mxu0 %v3662
    %4173 = vmatpush1.msra.mxu0 %v3661
    %4174 = vmatprep.subr.mxu0 %v3664
    %4175 = vmatpush1.msra.mxu0 %v3663
    %4176 = vmatprep.subr.mxu0 %v3666
    %4177 = vmatpush1.msra.mxu0 %v3665
    %4178 = vmatprep.subr.mxu0 %v3668
    %4179 = vmatpush1.msra.mxu0 %v3667
    %4180 = vmatprep.subr.mxu0 %v3670
    %4181 = vmatpush1.msra.mxu0 %v3669
    %4182 = vmatprep.subr.mxu0 %v3672
    %4183 = vmatpush1.msra.mxu0 %v3671
    %4184 = vmatprep.subr.mxu0 %v3674
    %4185 = vmatpush1.msra.mxu0 %v3673
    %4186 = vmatprep.subr.mxu0 %v3676
    %4187 = vmatpush1.msra.mxu0 %v3675
    %4188 = vmatprep.subr.mxu0 %v3678
    %4189 = vmatpush1.msra.mxu0 %v3677
    %4190 = vmatprep.subr.mxu0 %v3680
    %4191 = vmatpush1.msra.mxu0 %v3679
    %4192 = vmatprep.subr.mxu0 %v3682
    %4193 = vmatpush1.msra.mxu0 %v3681
    %4194 = vmatprep.subr.mxu0 %v3684
    %4195 = vmatpush1.msra.mxu0 %v3683
    %4196 = vmatprep.subr.mxu0 %v3686
    %4197 = vmatpush1.msra.mxu0 %v3685
    %4198 = vmatprep.subr.mxu0 %v3688
    %4199 = vmatpush1.msra.mxu0 %v3687
    %4200 = vmatprep.subr.mxu0 %v3690
    %4201 = vmatpush1.msra.mxu0 %v3689
    %4202 = vmatprep.subr.mxu0 0.0
    %4203 = vmatpush1.msra.mxu0 0.0
    %4204 = vmatprep.subr.mxu0 0.0
    %4205 = vmatpush1.msra.mxu0 0.0
    %4206 = vmatprep.subr.mxu0 0.0
    %4207 = vmatpush1.msra.mxu0 0.0
    %4208 = vmatprep.subr.mxu0 0.0
    %4209 = vmatpush1.msra.mxu0 0.0
    %4210 = vmatprep.subr.mxu0 0.0
    %4211 = vmatpush1.msra.mxu0 0.0
    %4212 = vmatprep.subr.mxu0 0.0
    %4213 = vmatpush1.msra.mxu0 0.0
    %4214 = vmatprep.subr.mxu0 0.0
    %4215 = vmatpush1.msra.mxu0 0.0
    %4216 = vmatprep.subr.mxu0 0.0
    %4217 = vmatpush1.msra.mxu0 0.0
    %4218 = vmatprep.subr.mxu0 0.0
    %4219 = vmatpush1.msra.mxu0 0.0
    %4220 = vmatprep.subr.mxu0 0.0
    %4221 = vmatpush1.msra.mxu0 0.0
    %4222 = vmatprep.subr.mxu0 0.0
    %4223 = vmatpush1.msra.mxu0 0.0
    %4224 = vmatprep.subr.mxu0 0.0
    %4225 = vmatpush1.msra.mxu0 0.0
    %4226 = vmatprep.subr.mxu0 0.0
    %4227 = vmatpush1.msra.mxu0 0.0
    %4228 = vmatprep.subr.mxu0 0.0
    %4229 = vmatpush1.msra.mxu0 0.0
    %4230 = vmatprep.subr.mxu0 0.0
    %4231 = vmatpush1.msra.mxu0 0.0
    %4232 = vmatprep.subr.mxu0 0.0
    %4233 = vmatpush1.msra.mxu0 0.0
    %4234 = vmatprep.mubr.f32.mxu0 0.0
    %4235 = vmatmul.mubr.f32.gmra.mrb[0].mxu0 %v4165
    %v4236 = vpop.f32.mrb[0].mxu0
    %v4237 = vadd.f32 0.0, %v4236
    %v4238 = vpop.f32.mrb[0].mxu0
    %v4239 = vadd.f32 0.0, %v4238
    %4240 = vmatprep.mubr.f32.mxu0 0.0
    %4241 = vmatmul.mubr.f32.gmra.mrb[0].mxu0 %v4167
    %v4242 = vpop.f32.mrb[0].mxu0
    %v4243 = vadd.f32 0.0, %v4242
    %v4244 = vpop.f32.mrb[0].mxu0
    %v4245 = vadd.f32 0.0, %v4244
    %4246 = vdwg.mxu0
    %v4247 = vadd.f32 %v4153, %v4237
    %v4248 = vadd.f32 %v4155, %v4239
    %v4249 = vadd.f32 %v4159, %v4243
    %v4250 = vadd.f32 %v4161, %v4245
    %4251 = vmatprep.subr.mxu0 %v3814
    %4252 = vmatpush1.msra.mxu0 %v3813
    %4253 = vmatprep.subr.mxu0 %v3816
    %4254 = vmatpush1.msra.mxu0 %v3815
    %4255 = vmatprep.subr.mxu0 %v3818
    %4256 = vmatpush1.msra.mxu0 %v3817
    %4257 = vmatprep.subr.mxu0 %v3820
    %4258 = vmatpush1.msra.mxu0 %v3819
    %4259 = vmatprep.subr.mxu0 %v3822
    %4260 = vmatpush1.msra.mxu0 %v3821
    %4261 = vmatprep.subr.mxu0 %v3824
    %4262 = vmatpush1.msra.mxu0 %v3823
    %4263 = vmatprep.subr.mxu0 %v3826
    %4264 = vmatpush1.msra.mxu0 %v3825
    %4265 = vmatprep.subr.mxu0 %v3828
    %4266 = vmatpush1.msra.mxu0 %v3827
    %4267 = vmatprep.subr.mxu0 %v3830
    %4268 = vmatpush1.msra.mxu0 %v3829
    %4269 = vmatprep.subr.mxu0 %v3832
    %4270 = vmatpush1.msra.mxu0 %v3831
    %4271 = vmatprep.subr.mxu0 %v3834
    %4272 = vmatpush1.msra.mxu0 %v3833
    %4273 = vmatprep.subr.mxu0 %v3836
    %4274 = vmatpush1.msra.mxu0 %v3835
    %4275 = vmatprep.subr.mxu0 %v3838
    %4276 = vmatpush1.msra.mxu0 %v3837
    %4277 = vmatprep.subr.mxu0 %v3840
    %4278 = vmatpush1.msra.mxu0 %v3839
    %4279 = vmatprep.subr.mxu0 %v3842
    %4280 = vmatpush1.msra.mxu0 %v3841
    %4281 = vmatprep.subr.mxu0 %v3844
    %4282 = vmatpush1.msra.mxu0 %v3843
    %4283 = vmatprep.subr.mxu0 0.0
    %4284 = vmatpush1.msra.mxu0 0.0
    %4285 = vmatprep.subr.mxu0 0.0
    %4286 = vmatpush1.msra.mxu0 0.0
    %4287 = vmatprep.subr.mxu0 0.0
    %4288 = vmatpush1.msra.mxu0 0.0
    %4289 = vmatprep.subr.mxu0 0.0
    %4290 = vmatpush1.msra.mxu0 0.0
    %4291 = vmatprep.subr.mxu0 0.0
    %4292 = vmatpush1.msra.mxu0 0.0
    %4293 = vmatprep.subr.mxu0 0.0
    %4294 = vmatpush1.msra.mxu0 0.0
    %4295 = vmatprep.subr.mxu0 0.0
    %4296 = vmatpush1.msra.mxu0 0.0
    %4297 = vmatprep.subr.mxu0 0.0
    %4298 = vmatpush1.msra.mxu0 0.0
    %4299 = vmatprep.subr.mxu0 0.0
    %4300 = vmatpush1.msra.mxu0 0.0
    %4301 = vmatprep.subr.mxu0 0.0
    %4302 = vmatpush1.msra.mxu0 0.0
    %4303 = vmatprep.subr.mxu0 0.0
    %4304 = vmatpush1.msra.mxu0 0.0
    %4305 = vmatprep.subr.mxu0 0.0
    %4306 = vmatpush1.msra.mxu0 0.0
    %4307 = vmatprep.subr.mxu0 0.0
    %4308 = vmatpush1.msra.mxu0 0.0
    %4309 = vmatprep.subr.mxu0 0.0
    %4310 = vmatpush1.msra.mxu0 0.0
    %4311 = vmatprep.subr.mxu0 0.0
    %4312 = vmatpush1.msra.mxu0 0.0
    %4313 = vmatprep.subr.mxu0 0.0
    %4314 = vmatpush1.msra.mxu0 0.0
    %4315 = vmatprep.mubr.f32.mxu0 0.0
    %4316 = vmatmul.mubr.f32.gmra.mrb[0].mxu0 %v4165
    %v4317 = vpop.f32.mrb[0].mxu0
    %v4318 = vadd.f32 0.0, %v4317
    %v4319 = vpop.f32.mrb[0].mxu0
    %v4320 = vadd.f32 0.0, %v4319
    %4321 = vmatprep.mubr.f32.mxu0 0.0
    %4322 = vmatmul.mubr.f32.gmra.mrb[0].mxu0 %v4167
    %v4323 = vpop.f32.mrb[0].mxu0
    %v4324 = vadd.f32 0.0, %v4323
    %v4325 = vpop.f32.mrb[0].mxu0
    %v4326 = vadd.f32 0.0, %v4325
    %4327 = vdwg.mxu0
    %4328 = vmatprep.subr.mxu0 %v3781
    %4329 = vmatpush1.msra.mxu0 %v3780
    %4330 = vmatprep.subr.mxu0 %v3783
    %4331 = vmatpush1.msra.mxu0 %v3782
    %4332 = vmatprep.subr.mxu0 %v3785
    %4333 = vmatpush1.msra.mxu0 %v3784
    %4334 = vmatprep.subr.mxu0 %v3787
    %4335 = vmatpush1.msra.mxu0 %v3786
    %4336 = vmatprep.subr.mxu0 %v3789
    %4337 = vmatpush1.msra.mxu0 %v3788
    %4338 = vmatprep.subr.mxu0 %v3791
    %4339 = vmatpush1.msra.mxu0 %v3790
    %4340 = vmatprep.subr.mxu0 %v3793
    %4341 = vmatpush1.msra.mxu0 %v3792
    %4342 = vmatprep.subr.mxu0 %v3795
    %4343 = vmatpush1.msra.mxu0 %v3794
    %4344 = vmatprep.subr.mxu0 %v3797
    %4345 = vmatpush1.msra.mxu0 %v3796
    %4346 = vmatprep.subr.mxu0 %v3799
    %4347 = vmatpush1.msra.mxu0 %v3798
    %4348 = vmatprep.subr.mxu0 %v3801
    %4349 = vmatpush1.msra.mxu0 %v3800
    %4350 = vmatprep.subr.mxu0 %v3803
    %4351 = vmatpush1.msra.mxu0 %v3802
    %4352 = vmatprep.subr.mxu0 %v3805
    %4353 = vmatpush1.msra.mxu0 %v3804
    %4354 = vmatprep.subr.mxu0 %v3807
    %4355 = vmatpush1.msra.mxu0 %v3806
    %4356 = vmatprep.subr.mxu0 %v3809
    %4357 = vmatpush1.msra.mxu0 %v3808
    %4358 = vmatprep.subr.mxu0 %v3811
    %4359 = vmatpush1.msra.mxu0 %v3810
    %4360 = vmatprep.subr.mxu0 0.0
    %4361 = vmatpush1.msra.mxu0 0.0
    %4362 = vmatprep.subr.mxu0 0.0
    %4363 = vmatpush1.msra.mxu0 0.0
    %4364 = vmatprep.subr.mxu0 0.0
    %4365 = vmatpush1.msra.mxu0 0.0
    %4366 = vmatprep.subr.mxu0 0.0
    %4367 = vmatpush1.msra.mxu0 0.0
    %4368 = vmatprep.subr.mxu0 0.0
    %4369 = vmatpush1.msra.mxu0 0.0
    %4370 = vmatprep.subr.mxu0 0.0
    %4371 = vmatpush1.msra.mxu0 0.0
    %4372 = vmatprep.subr.mxu0 0.0
    %4373 = vmatpush1.msra.mxu0 0.0
    %4374 = vmatprep.subr.mxu0 0.0
    %4375 = vmatpush1.msra.mxu0 0.0
    %4376 = vmatprep.subr.mxu0 0.0
    %4377 = vmatpush1.msra.mxu0 0.0
    %4378 = vmatprep.subr.mxu0 0.0
    %4379 = vmatpush1.msra.mxu0 0.0
    %4380 = vmatprep.subr.mxu0 0.0
    %4381 = vmatpush1.msra.mxu0 0.0
    %4382 = vmatprep.subr.mxu0 0.0
    %4383 = vmatpush1.msra.mxu0 0.0
    %4384 = vmatprep.subr.mxu0 0.0
    %4385 = vmatpush1.msra.mxu0 0.0
    %4386 = vmatprep.subr.mxu0 0.0
    %4387 = vmatpush1.msra.mxu0 0.0
    %4388 = vmatprep.subr.mxu0 0.0
    %4389 = vmatpush1.msra.mxu0 0.0
    %4390 = vmatprep.subr.mxu0 0.0
    %4391 = vmatpush1.msra.mxu0 0.0
    %4392 = vmatprep.mubr.f32.mxu0 0.0
    %4393 = vmatmul.mubr.f32.gmra.mrb[0].mxu0 %v4004
    %v4394 = vpop.f32.mrb[0].mxu0
    %v4395 = vadd.f32 %v4318, %v4394
    %v4396 = vpop.f32.mrb[0].mxu0
    %v4397 = vadd.f32 %v4320, %v4396
    %4398 = vmatprep.mubr.f32.mxu0 0.0
    %4399 = vmatmul.mubr.f32.gmra.mrb[0].mxu0 %v4006
    %v4400 = vpop.f32.mrb[0].mxu0
    %v4401 = vadd.f32 %v4324, %v4400
    %v4402 = vpop.f32.mrb[0].mxu0
    %v4403 = vadd.f32 %v4326, %v4402
    %4404 = vdwg.mxu0
    %v4405 = vadd.f32 %v3775, %v3777
    %v4406 = vrot.slane %v4405, 4
    %v4407 = vadd.f32 %v4405, %v4406
    %v4408 = vrot.slane %v4407, 2
    %v4409 = vadd.f32 %v4407, %v4408
    %v4410 = vrot.slane %v4409, 1
    %v4411 = vadd.f32 %v4409, %v4410
    %v4412 = vadd.f32 %v3776, %v3778
    %v4413 = vrot.slane %v4412, 4
    %v4414 = vadd.f32 %v4412, %v4413
    %v4415 = vrot.slane %v4414, 2
    %v4416 = vadd.f32 %v4414, %v4415
    %v4417 = vrot.slane %v4416, 1
    %v4418 = vadd.f32 %v4416, %v4417
    %v4419 = vadd.f32 %v4411, 0.0
    %v4420 = vadd.f32 %v4418, 0.0
    %v4421 = vmul.f32 %v3775, %v3775
    %v4422 = vmul.f32 %v3776, %v3776
    %v4423 = vmul.f32 %v3777, %v3777
    %v4424 = vmul.f32 %v3778, %v3778
    %v4425 = vadd.f32 %v4421, %v4423
    %v4426 = vrot.slane %v4425, 4
    %v4427 = vadd.f32 %v4425, %v4426
    %v4428 = vrot.slane %v4427, 2
    %v4429 = vadd.f32 %v4427, %v4428
    %v4430 = vrot.slane %v4429, 1
    %v4431 = vadd.f32 %v4429, %v4430
    %v4432 = vadd.f32 %v4422, %v4424
    %v4433 = vrot.slane %v4432, 4
    %v4434 = vadd.f32 %v4432, %v4433
    %v4435 = vrot.slane %v4434, 2
    %v4436 = vadd.f32 %v4434, %v4435
    %v4437 = vrot.slane %v4436, 1
    %v4438 = vadd.f32 %v4436, %v4437
    %v4439 = vadd.f32 %v4431, 0.0
    %v4440 = vadd.f32 %v4438, 0.0
    %v4441 = vadd.f32 %v3989, %v3995
    %v4442 = vrot.slane %v4441, 4
    %v4443 = vadd.f32 %v4441, %v4442
    %v4444 = vrot.slane %v4443, 2
    %v4445 = vadd.f32 %v4443, %v4444
    %v4446 = vrot.slane %v4445, 1
    %v4447 = vadd.f32 %v4445, %v4446
    %v4448 = vadd.f32 %v3991, %v3997
    %v4449 = vrot.slane %v4448, 4
    %v4450 = vadd.f32 %v4448, %v4449
    %v4451 = vrot.slane %v4450, 2
    %v4452 = vadd.f32 %v4450, %v4451
    %v4453 = vrot.slane %v4452, 1
    %v4454 = vadd.f32 %v4452, %v4453
    %v4455 = vadd.f32 %v4419, %v4447
    %v4456 = vadd.f32 %v4420, %v4454
    %v4457 = vmul.f32 %v3989, %v3989
    %v4458 = vmul.f32 %v3991, %v3991
    %v4459 = vmul.f32 %v3995, %v3995
    %v4460 = vmul.f32 %v3997, %v3997
    %v4461 = vadd.f32 %v4457, %v4459
    %v4462 = vrot.slane %v4461, 4
    %v4463 = vadd.f32 %v4461, %v4462
    %v4464 = vrot.slane %v4463, 2
    %v4465 = vadd.f32 %v4463, %v4464
    %v4466 = vrot.slane %v4465, 1
    %v4467 = vadd.f32 %v4465, %v4466
    %v4468 = vadd.f32 %v4458, %v4460
    %v4469 = vrot.slane %v4468, 4
    %v4470 = vadd.f32 %v4468, %v4469
    %v4471 = vrot.slane %v4470, 2
    %v4472 = vadd.f32 %v4470, %v4471
    %v4473 = vrot.slane %v4472, 1
    %v4474 = vadd.f32 %v4472, %v4473
    %v4475 = vadd.f32 %v4439, %v4467
    %v4476 = vadd.f32 %v4440, %v4474
    %v4477 = vadd.f32 %v4247, %v4249
    %v4478 = vrot.slane %v4477, 4
    %v4479 = vadd.f32 %v4477, %v4478
    %v4480 = vrot.slane %v4479, 2
    %v4481 = vadd.f32 %v4479, %v4480
    %v4482 = vrot.slane %v4481, 1
    %v4483 = vadd.f32 %v4481, %v4482
    %v4484 = vadd.f32 %v4248, %v4250
    %v4485 = vrot.slane %v4484, 4
    %v4486 = vadd.f32 %v4484, %v4485
    %v4487 = vrot.slane %v4486, 2
    %v4488 = vadd.f32 %v4486, %v4487
    %v4489 = vrot.slane %v4488, 1
    %v4490 = vadd.f32 %v4488, %v4489
    %v4491 = vadd.f32 %v4455, %v4483
    %v4492 = vadd.f32 %v4456, %v4490
    %v4493 = vmul.f32 %v4247, %v4247
    %v4494 = vmul.f32 %v4248, %v4248
    %v4495 = vmul.f32 %v4249, %v4249
    %v4496 = vmul.f32 %v4250, %v4250
    %v4497 = vadd.f32 %v4493, %v4495
    %v4498 = vrot.slane %v4497, 4
    %v4499 = vadd.f32 %v4497, %v4498
    %v4500 = vrot.slane %v4499, 2
    %v4501 = vadd.f32 %v4499, %v4500
    %v4502 = vrot.slane %v4501, 1
    %v4503 = vadd.f32 %v4501, %v4502
    %v4504 = vadd.f32 %v4494, %v4496
    %v4505 = vrot.slane %v4504, 4
    %v4506 = vadd.f32 %v4504, %v4505
    %v4507 = vrot.slane %v4506, 2
    %v4508 = vadd.f32 %v4506, %v4507
    %v4509 = vrot.slane %v4508, 1
    %v4510 = vadd.f32 %v4508, %v4509
    %v4511 = vadd.f32 %v4475, %v4503
    %v4512 = vadd.f32 %v4476, %v4510
    %v4513 = vadd.f32 %v4395, %v4401
    %v4514 = vrot.slane %v4513, 4
    %v4515 = vadd.f32 %v4513, %v4514
    %v4516 = vrot.slane %v4515, 2
    %v4517 = vadd.f32 %v4515, %v4516
    %v4518 = vrot.slane %v4517, 1
    %v4519 = vadd.f32 %v4517, %v4518
    %v4520 = vadd.f32 %v4397, %v4403
    %v4521 = vrot.slane %v4520, 4
    %v4522 = vadd.f32 %v4520, %v4521
    %v4523 = vrot.slane %v4522, 2
    %v4524 = vadd.f32 %v4522, %v4523
    %v4525 = vrot.slane %v4524, 1
    %v4526 = vadd.f32 %v4524, %v4525
    %v4527 = vadd.f32 %v4491, %v4519
    %v4528 = vadd.f32 %v4492, %v4526
    %v4529 = vmul.f32 %v4395, %v4395
    %v4530 = vmul.f32 %v4397, %v4397
    %v4531 = vmul.f32 %v4401, %v4401
    %v4532 = vmul.f32 %v4403, %v4403
    %v4533 = vadd.f32 %v4529, %v4531
    %v4534 = vrot.slane %v4533, 4
    %v4535 = vadd.f32 %v4533, %v4534
    %v4536 = vrot.slane %v4535, 2
    %v4537 = vadd.f32 %v4535, %v4536
    %v4538 = vrot.slane %v4537, 1
    %v4539 = vadd.f32 %v4537, %v4538
    %v4540 = vadd.f32 %v4530, %v4532
    %v4541 = vrot.slane %v4540, 4
    %v4542 = vadd.f32 %v4540, %v4541
    %v4543 = vrot.slane %v4542, 2
    %v4544 = vadd.f32 %v4542, %v4543
    %v4545 = vrot.slane %v4544, 1
    %v4546 = vadd.f32 %v4544, %v4545
    %v4547 = vadd.f32 %v4511, %v4539
    %v4548 = vadd.f32 %v4512, %v4546
    %v4549 = vadd.s32 %v1086, 128
    %v4550 = vadd.s32 %v1086, 136
    %v4551 = vadd.s32 %v1086, 144
    %v4552 = vadd.s32 %v1086, 152
    %v4553 = vadd.s32 %v1086, 160
    %v4554 = vadd.s32 %v1086, 168
    %v4555 = vadd.s32 %v1086, 176
    %v4556 = vadd.s32 %v1086, 184
    %v4557 = vadd.s32 %v1086, 192
    %v4558 = vadd.s32 %v1086, 200
    %v4559 = vadd.s32 %v1086, 208
    %v4560 = vadd.s32 %v1086, 216
    %v4561 = vadd.s32 %v1086, 224
    %v4562 = vadd.s32 %v1086, 232
    %v4563 = vadd.s32 %v1086, 240
    %v4564 = vadd.s32 %v1086, 248
    %v4565 = vand.u32 %v4549, 7
    %v4566 = vand.u32 %v4550, 7
    %v4567 = vand.u32 %v4551, 7
    %v4568 = vand.u32 %v4552, 7
    %v4569 = vand.u32 %v4553, 7
    %v4570 = vand.u32 %v4554, 7
    %v4571 = vand.u32 %v4555, 7
    %v4572 = vand.u32 %v4556, 7
    %v4573 = vand.u32 %v4557, 7
    %v4574 = vand.u32 %v4558, 7
    %v4575 = vand.u32 %v4559, 7
    %v4576 = vand.u32 %v4560, 7
    %v4577 = vand.u32 %v4561, 7
    %v4578 = vand.u32 %v4562, 7
    %v4579 = vand.u32 %v4563, 7
    %v4580 = vand.u32 %v4564, 7
    %vm4581 = vcmp.eq.s32.totalorder %v4565, %v1119
    %vm4582 = vcmp.eq.s32.totalorder %v4566, %v1119
    %vm4583 = vcmp.eq.s32.totalorder %v4567, %v1119
    %vm4584 = vcmp.eq.s32.totalorder %v4568, %v1119
    %vm4585 = vcmp.eq.s32.totalorder %v4569, %v1119
    %vm4586 = vcmp.eq.s32.totalorder %v4570, %v1119
    %vm4587 = vcmp.eq.s32.totalorder %v4571, %v1119
    %vm4588 = vcmp.eq.s32.totalorder %v4572, %v1119
    %vm4589 = vcmp.eq.s32.totalorder %v4573, %v1119
    %vm4590 = vcmp.eq.s32.totalorder %v4574, %v1119
    %vm4591 = vcmp.eq.s32.totalorder %v4575, %v1119
    %vm4592 = vcmp.eq.s32.totalorder %v4576, %v1119
    %vm4593 = vcmp.eq.s32.totalorder %v4577, %v1119
    %vm4594 = vcmp.eq.s32.totalorder %v4578, %v1119
    %vm4595 = vcmp.eq.s32.totalorder %v4579, %v1119
    %vm4596 = vcmp.eq.s32.totalorder %v4580, %v1119
    %v4597 = vsel %vm4581, 1, 0
    %v4598 = vsel %vm4582, 1, 0
    %v4599 = vsel %vm4583, 1, 0
    %v4600 = vsel %vm4584, 1, 0
    %v4601 = vsel %vm4585, 1, 0
    %v4602 = vsel %vm4586, 1, 0
    %v4603 = vsel %vm4587, 1, 0
    %v4604 = vsel %vm4588, 1, 0
    %v4605 = vsel %vm4589, 1, 0
    %v4606 = vsel %vm4590, 1, 0
    %v4607 = vsel %vm4591, 1, 0
    %v4608 = vsel %vm4592, 1, 0
    %v4609 = vsel %vm4593, 1, 0
    %v4610 = vsel %vm4594, 1, 0
    %v4611 = vsel %vm4595, 1, 0
    %v4612 = vsel %vm4596, 1, 0
    %v4613 = vcvt.s32.f32 %v4597
    %v4614 = vcvt.s32.f32 %v4598
    %v4615 = vcvt.s32.f32 %v4599
    %v4616 = vcvt.s32.f32 %v4600
    %v4617 = vcvt.s32.f32 %v4601
    %v4618 = vcvt.s32.f32 %v4602
    %v4619 = vcvt.s32.f32 %v4603
    %v4620 = vcvt.s32.f32 %v4604
    %v4621 = vcvt.s32.f32 %v4605
    %v4622 = vcvt.s32.f32 %v4606
    %v4623 = vcvt.s32.f32 %v4607
    %v4624 = vcvt.s32.f32 %v4608
    %v4625 = vcvt.s32.f32 %v4609
    %v4626 = vcvt.s32.f32 %v4610
    %v4627 = vcvt.s32.f32 %v4611
    %v4628 = vcvt.s32.f32 %v4612
    %v4629 = vadd.s32 %v1119, 128
    %v4630 = vand.u32 %v4629, 7
    %vm4631 = vcmp.eq.s32.totalorder %v4630, %v1086
    %v4632 = vsel %vm4631, 1, 0
    %v4633 = vcvt.s32.f32 %v4632
    %4634 = vmatprep.subr.mxu0 0.0
    %4635 = vmatpush1.msra.mxu0 %v2750
    %4636 = vmatprep.subr.mxu0 0.0
    %4637 = vmatpush1.msra.mxu0 %v2751
    %4638 = vmatprep.subr.mxu0 0.0
    %4639 = vmatpush1.msra.mxu0 %v2752
    %4640 = vmatprep.subr.mxu0 0.0
    %4641 = vmatpush1.msra.mxu0 %v2753
    %4642 = vmatprep.subr.mxu0 0.0
    %4643 = vmatpush1.msra.mxu0 %v2754
    %4644 = vmatprep.subr.mxu0 0.0
    %4645 = vmatpush1.msra.mxu0 %v2755
    %4646 = vmatprep.subr.mxu0 0.0
    %4647 = vmatpush1.msra.mxu0 %v2756
    %4648 = vmatprep.subr.mxu0 0.0
    %4649 = vmatpush1.msra.mxu0 %v2757
    %4650 = vmatprep.subr.mxu0 0.0
    %4651 = vmatpush1.msra.mxu0 %v2758
    %4652 = vmatprep.subr.mxu0 0.0
    %4653 = vmatpush1.msra.mxu0 %v2759
    %4654 = vmatprep.subr.mxu0 0.0
    %4655 = vmatpush1.msra.mxu0 %v2760
    %4656 = vmatprep.subr.mxu0 0.0
    %4657 = vmatpush1.msra.mxu0 %v2761
    %4658 = vmatprep.subr.mxu0 0.0
    %4659 = vmatpush1.msra.mxu0 %v2762
    %4660 = vmatprep.subr.mxu0 0.0
    %4661 = vmatpush1.msra.mxu0 %v2763
    %4662 = vmatprep.subr.mxu0 0.0
    %4663 = vmatpush1.msra.mxu0 %v2764
    %4664 = vmatprep.subr.mxu0 0.0
    %4665 = vmatpush1.msra.mxu0 %v2765
    %4666 = vmatprep.subr.mxu0 0.0
    %4667 = vmatpush1.msra.mxu0 %v4613
    %4668 = vmatprep.subr.mxu0 0.0
    %4669 = vmatpush1.msra.mxu0 %v4614
    %4670 = vmatprep.subr.mxu0 0.0
    %4671 = vmatpush1.msra.mxu0 %v4615
    %4672 = vmatprep.subr.mxu0 0.0
    %4673 = vmatpush1.msra.mxu0 %v4616
    %4674 = vmatprep.subr.mxu0 0.0
    %4675 = vmatpush1.msra.mxu0 %v4617
    %4676 = vmatprep.subr.mxu0 0.0
    %4677 = vmatpush1.msra.mxu0 %v4618
    %4678 = vmatprep.subr.mxu0 0.0
    %4679 = vmatpush1.msra.mxu0 %v4619
    %4680 = vmatprep.subr.mxu0 0.0
    %4681 = vmatpush1.msra.mxu0 %v4620
    %4682 = vmatprep.subr.mxu0 0.0
    %4683 = vmatpush1.msra.mxu0 %v4621
    %4684 = vmatprep.subr.mxu0 0.0
    %4685 = vmatpush1.msra.mxu0 %v4622
    %4686 = vmatprep.subr.mxu0 0.0
    %4687 = vmatpush1.msra.mxu0 %v4623
    %4688 = vmatprep.subr.mxu0 0.0
    %4689 = vmatpush1.msra.mxu0 %v4624
    %4690 = vmatprep.subr.mxu0 0.0
    %4691 = vmatpush1.msra.mxu0 %v4625
    %4692 = vmatprep.subr.mxu0 0.0
    %4693 = vmatpush1.msra.mxu0 %v4626
    %4694 = vmatprep.subr.mxu0 0.0
    %4695 = vmatpush1.msra.mxu0 %v4627
    %4696 = vmatprep.subr.mxu0 0.0
    %4697 = vmatpush1.msra.mxu0 %v4628
    %4698 = vmatprep.mubr.f32.mxu0 %v4528
    %4699 = vmatmul.mubr.f32.gmra.mrb[0].mxu0 %v4527
    %v4700 = vpop.f32.mrb[0].mxu0
    %v4701 = vadd.f32 0.0, %v4700
    %v4702 = vpop.f32.mrb[0].mxu0
    %4703 = vdwg.mxu0
    %v4704 = vrcp.pop 2048.0
    %v4705 = vmul.f32 %v4701, %v4704
    %4706 = vmatprep.subr.mxu0 0.0
    %4707 = vmatpush1.msra.mxu0 %v2750
    %4708 = vmatprep.subr.mxu0 0.0
    %4709 = vmatpush1.msra.mxu0 %v2751
    %4710 = vmatprep.subr.mxu0 0.0
    %4711 = vmatpush1.msra.mxu0 %v2752
    %4712 = vmatprep.subr.mxu0 0.0
    %4713 = vmatpush1.msra.mxu0 %v2753
    %4714 = vmatprep.subr.mxu0 0.0
    %4715 = vmatpush1.msra.mxu0 %v2754
    %4716 = vmatprep.subr.mxu0 0.0
    %4717 = vmatpush1.msra.mxu0 %v2755
    %4718 = vmatprep.subr.mxu0 0.0
    %4719 = vmatpush1.msra.mxu0 %v2756
    %4720 = vmatprep.subr.mxu0 0.0
    %4721 = vmatpush1.msra.mxu0 %v2757
    %4722 = vmatprep.subr.mxu0 0.0
    %4723 = vmatpush1.msra.mxu0 %v2758
    %4724 = vmatprep.subr.mxu0 0.0
    %4725 = vmatpush1.msra.mxu0 %v2759
    %4726 = vmatprep.subr.mxu0 0.0
    %4727 = vmatpush1.msra.mxu0 %v2760
    %4728 = vmatprep.subr.mxu0 0.0
    %4729 = vmatpush1.msra.mxu0 %v2761
    %4730 = vmatprep.subr.mxu0 0.0
    %4731 = vmatpush1.msra.mxu0 %v2762
    %4732 = vmatprep.subr.mxu0 0.0
    %4733 = vmatpush1.msra.mxu0 %v2763
    %4734 = vmatprep.subr.mxu0 0.0
    %4735 = vmatpush1.msra.mxu0 %v2764
    %4736 = vmatprep.subr.mxu0 0.0
    %4737 = vmatpush1.msra.mxu0 %v2765
    %4738 = vmatprep.subr.mxu0 0.0
    %4739 = vmatpush1.msra.mxu0 %v4613
    %4740 = vmatprep.subr.mxu0 0.0
    %4741 = vmatpush1.msra.mxu0 %v4614
    %4742 = vmatprep.subr.mxu0 0.0
    %4743 = vmatpush1.msra.mxu0 %v4615
    %4744 = vmatprep.subr.mxu0 0.0
    %4745 = vmatpush1.msra.mxu0 %v4616
    %4746 = vmatprep.subr.mxu0 0.0
    %4747 = vmatpush1.msra.mxu0 %v4617
    %4748 = vmatprep.subr.mxu0 0.0
    %4749 = vmatpush1.msra.mxu0 %v4618
    %4750 = vmatprep.subr.mxu0 0.0
    %4751 = vmatpush1.msra.mxu0 %v4619
    %4752 = vmatprep.subr.mxu0 0.0
    %4753 = vmatpush1.msra.mxu0 %v4620
    %4754 = vmatprep.subr.mxu0 0.0
    %4755 = vmatpush1.msra.mxu0 %v4621
    %4756 = vmatprep.subr.mxu0 0.0
    %4757 = vmatpush1.msra.mxu0 %v4622
    %4758 = vmatprep.subr.mxu0 0.0
    %4759 = vmatpush1.msra.mxu0 %v4623
    %4760 = vmatprep.subr.mxu0 0.0
    %4761 = vmatpush1.msra.mxu0 %v4624
    %4762 = vmatprep.subr.mxu0 0.0
    %4763 = vmatpush1.msra.mxu0 %v4625
    %4764 = vmatprep.subr.mxu0 0.0
    %4765 = vmatpush1.msra.mxu0 %v4626
    %4766 = vmatprep.subr.mxu0 0.0
    %4767 = vmatpush1.msra.mxu0 %v4627
    %4768 = vmatprep.subr.mxu0 0.0
    %4769 = vmatpush1.msra.mxu0 %v4628
    %4770 = vmatprep.mubr.f32.mxu0 %v4548
    %4771 = vmatmul.mubr.f32.gmra.mrb[0].mxu0 %v4547
    %v4772 = vpop.f32.mrb[0].mxu0
    %v4773 = vadd.f32 0.0, %v4772
    %v4774 = vpop.f32.mrb[0].mxu0
    %4775 = vdwg.mxu0
    %v4776 = vmul.f32 %v4773, %v4704
    %v4777 = vmul.f32 %v4705, %v4705
    %v4778 = vsub.f32 %v4776, %v4777
    %v4779 = vld [vmem:[%s11] sm:$0x1]
    %v4780 = vadd.f32 %v4778, 1e-05
    %v4781 = vrsqrt.pop %v4780
    %v4782 = vmul.f32 %v4779, %v4781
    %v4783 = vld [vmem:[%s12] sm:$0x1]
    %v4784 = vmul.f32 %v4705, %v4782
    %v4785 = vsub.f32 %v4783, %v4784
    %v4787 = vsel %vm2922, %v4782, 0
    %4789 = vmatprep.subr.mxu0 %v4633
    %4790 = vmatpush1.msra.mxu0 %v2769
    %4791 = vmatprep.subr.mxu0 0.0
    %4792 = vmatpush1.msra.mxu0 0.0
    %4793 = vmatprep.subr.mxu0 0.0
    %4794 = vmatpush1.msra.mxu0 0.0
    %4795 = vmatprep.subr.mxu0 0.0
    %4796 = vmatpush1.msra.mxu0 0.0
    %4797 = vmatprep.subr.mxu0 0.0
    %4798 = vmatpush1.msra.mxu0 0.0
    %4799 = vmatprep.subr.mxu0 0.0
    %4800 = vmatpush1.msra.mxu0 0.0
    %4801 = vmatprep.subr.mxu0 0.0
    %4802 = vmatpush1.msra.mxu0 0.0
    %4803 = vmatprep.subr.mxu0 0.0
    %4804 = vmatpush1.msra.mxu0 0.0
    %4805 = vmatprep.subr.mxu0 0.0
    %4806 = vmatpush1.msra.mxu0 0.0
    %4807 = vmatprep.subr.mxu0 0.0
    %4808 = vmatpush1.msra.mxu0 0.0
    %4809 = vmatprep.subr.mxu0 0.0
    %4810 = vmatpush1.msra.mxu0 0.0
    %4811 = vmatprep.subr.mxu0 0.0
    %4812 = vmatpush1.msra.mxu0 0.0
    %4813 = vmatprep.subr.mxu0 0.0
    %4814 = vmatpush1.msra.mxu0 0.0
    %4815 = vmatprep.subr.mxu0 0.0
    %4816 = vmatpush1.msra.mxu0 0.0
    %4817 = vmatprep.subr.mxu0 0.0
    %4818 = vmatpush1.msra.mxu0 0.0
    %4819 = vmatprep.subr.mxu0 0.0
    %4820 = vmatpush1.msra.mxu0 0.0
    %4821 = vmatprep.subr.mxu0 0.0
    %4822 = vmatpush1.msra.mxu0 0.0
    %4823 = vmatprep.subr.mxu0 0.0
    %4824 = vmatpush1.msra.mxu0 0.0
    %4825 = vmatprep.subr.mxu0 0.0
    %4826 = vmatpush1.msra.mxu0 0.0
    %4827 = vmatprep.subr.mxu0 0.0
    %4828 = vmatpush1.msra.mxu0 0.0
    %4829 = vmatprep.subr.mxu0 0.0
    %4830 = vmatpush1.msra.mxu0 0.0
    %4831 = vmatprep.subr.mxu0 0.0
    %4832 = vmatpush1.msra.mxu0 0.0
    %4833 = vmatprep.subr.mxu0 0.0
    %4834 = vmatpush1.msra.mxu0 0.0
    %4835 = vmatprep.subr.mxu0 0.0
    %4836 = vmatpush1.msra.mxu0 0.0
    %4837 = vmatprep.subr.mxu0 0.0
    %4838 = vmatpush1.msra.mxu0 0.0
    %4839 = vmatprep.subr.mxu0 0.0
    %4840 = vmatpush1.msra.mxu0 0.0
    %4841 = vmatprep.subr.mxu0 0.0
    %4842 = vmatpush1.msra.mxu0 0.0
    %4843 = vmatprep.subr.mxu0 0.0
    %4844 = vmatpush1.msra.mxu0 0.0
    %4845 = vmatprep.subr.mxu0 0.0
    %4846 = vmatpush1.msra.mxu0 0.0
    %4847 = vmatprep.subr.mxu0 0.0
    %4848 = vmatpush1.msra.mxu0 0.0
    %4849 = vmatprep.subr.mxu0 0.0
    %4850 = vmatpush1.msra.mxu0 0.0
    %4851 = vmatprep.subr.mxu0 0.0
    %4852 = vmatpush1.msra.mxu0 0.0
    %4853 = vmatprep.mubr.f32.mxu0 0.0
    %4854 = vmatmul.mubr.f32.gmra.mrb[0].mxu0 %v4787
    %v4855 = vpop.f32.mrb[0].mxu0
    %v4856 = vadd.f32 0.0, %v4855
    %v4857 = vpop.f32.mrb[0].mxu0
    %v4858 = vadd.f32 0.0, %v4857
    %4859 = vdwg.mxu0
    %v4861 = vsel %vm2922, %v4785, 0
    %4863 = vmatprep.subr.mxu0 %v4633
    %4864 = vmatpush1.msra.mxu0 %v2769
    %4865 = vmatprep.subr.mxu0 0.0
    %4866 = vmatpush1.msra.mxu0 0.0
    %4867 = vmatprep.subr.mxu0 0.0
    %4868 = vmatpush1.msra.mxu0 0.0
    %4869 = vmatprep.subr.mxu0 0.0
    %4870 = vmatpush1.msra.mxu0 0.0
    %4871 = vmatprep.subr.mxu0 0.0
    %4872 = vmatpush1.msra.mxu0 0.0
    %4873 = vmatprep.subr.mxu0 0.0
    %4874 = vmatpush1.msra.mxu0 0.0
    %4875 = vmatprep.subr.mxu0 0.0
    %4876 = vmatpush1.msra.mxu0 0.0
    %4877 = vmatprep.subr.mxu0 0.0
    %4878 = vmatpush1.msra.mxu0 0.0
    %4879 = vmatprep.subr.mxu0 0.0
    %4880 = vmatpush1.msra.mxu0 0.0
    %4881 = vmatprep.subr.mxu0 0.0
    %4882 = vmatpush1.msra.mxu0 0.0
    %4883 = vmatprep.subr.mxu0 0.0
    %4884 = vmatpush1.msra.mxu0 0.0
    %4885 = vmatprep.subr.mxu0 0.0
    %4886 = vmatpush1.msra.mxu0 0.0
    %4887 = vmatprep.subr.mxu0 0.0
    %4888 = vmatpush1.msra.mxu0 0.0
    %4889 = vmatprep.subr.mxu0 0.0
    %4890 = vmatpush1.msra.mxu0 0.0
    %4891 = vmatprep.subr.mxu0 0.0
    %4892 = vmatpush1.msra.mxu0 0.0
    %4893 = vmatprep.subr.mxu0 0.0
    %4894 = vmatpush1.msra.mxu0 0.0
    %4895 = vmatprep.subr.mxu0 0.0
    %4896 = vmatpush1.msra.mxu0 0.0
    %4897 = vmatprep.subr.mxu0 0.0
    %4898 = vmatpush1.msra.mxu0 0.0
    %4899 = vmatprep.subr.mxu0 0.0
    %4900 = vmatpush1.msra.mxu0 0.0
    %4901 = vmatprep.subr.mxu0 0.0
    %4902 = vmatpush1.msra.mxu0 0.0
    %4903 = vmatprep.subr.mxu0 0.0
    %4904 = vmatpush1.msra.mxu0 0.0
    %4905 = vmatprep.subr.mxu0 0.0
    %4906 = vmatpush1.msra.mxu0 0.0
    %4907 = vmatprep.subr.mxu0 0.0
    %4908 = vmatpush1.msra.mxu0 0.0
    %4909 = vmatprep.subr.mxu0 0.0
    %4910 = vmatpush1.msra.mxu0 0.0
    %4911 = vmatprep.subr.mxu0 0.0
    %4912 = vmatpush1.msra.mxu0 0.0
    %4913 = vmatprep.subr.mxu0 0.0
    %4914 = vmatpush1.msra.mxu0 0.0
    %4915 = vmatprep.subr.mxu0 0.0
    %4916 = vmatpush1.msra.mxu0 0.0
    %4917 = vmatprep.subr.mxu0 0.0
    %4918 = vmatpush1.msra.mxu0 0.0
    %4919 = vmatprep.subr.mxu0 0.0
    %4920 = vmatpush1.msra.mxu0 0.0
    %4921 = vmatprep.subr.mxu0 0.0
    %4922 = vmatpush1.msra.mxu0 0.0
    %4923 = vmatprep.subr.mxu0 0.0
    %4924 = vmatpush1.msra.mxu0 0.0
    %4925 = vmatprep.subr.mxu0 0.0
    %4926 = vmatpush1.msra.mxu0 0.0
    %4927 = vmatprep.mubr.f32.mxu0 0.0
    %4928 = vmatmul.mubr.f32.gmra.mrb[0].mxu0 %v4861
    %v4929 = vpop.f32.mrb[0].mxu0
    %v4930 = vadd.f32 0.0, %v4929
    %v4931 = vpop.f32.mrb[0].mxu0
    %v4932 = vadd.f32 0.0, %v4931
    %4933 = vdwg.mxu0
    %v4934 = vlaneseq
    %v4935 = vshrl.u32 %v4934, 7
    %v4936 = vsub.s32 0, %v4935
    %v4937 = vrot.slane %v4856, %v4936
    %v4938 = vlaneseq
    %v4939 = vshrl.u32 %v4938, 7
    %v4940 = vsub.s32 0, %v4939
    %v4941 = vrot.slane %v4858, %v4940
    %v4942 = vmul.f32 %v3775, %v4937
    %v4943 = vmul.f32 %v3776, %v4941
    %v4944 = vmul.f32 %v3777, %v4937
    %v4945 = vmul.f32 %v3778, %v4941
    %v4946 = vlaneseq
    %v4947 = vshrl.u32 %v4946, 7
    %v4948 = vsub.s32 0, %v4947
    %v4949 = vrot.slane %v4930, %v4948
    %v4950 = vlaneseq
    %v4951 = vshrl.u32 %v4950, 7
    %v4952 = vsub.s32 0, %v4951
    %v4953 = vrot.slane %v4932, %v4952
    %v4954 = vadd.f32 %v4942, %v4949
    %v4955 = vadd.f32 %v4943, %v4953
    %v4956 = vadd.f32 %v4944, %v4949
    %v4957 = vadd.f32 %v4945, %v4953
    %v4958 = vmax.f32 %v4954, 0.0
    %v4959 = vmax.f32 %v4955, 0.0
    %v4960 = vmax.f32 %v4956, 0.0
    %v4961 = vmax.f32 %v4957, 0.0
    %v4962 = vadd.s32 %v1485, 2
    %vm4963 = vcmp.eq.s32.totalorder %v1086, %v4962
    %vm4964 = vcmp.eq.s32.totalorder %v1087, %v4962
    %vm4965 = vcmp.eq.s32.totalorder %v1088, %v4962
    %vm4966 = vcmp.eq.s32.totalorder %v1089, %v4962
    %vm4967 = vcmp.eq.s32.totalorder %v1090, %v4962
    %v4968 = vsel %vm4963, 1, 0
    %v4969 = vsel %vm4964, 1, 0
    %v4970 = vsel %vm4965, 1, 0
    %v4971 = vsel %vm4966, 1, 0
    %v4972 = vsel %vm4967, 1, 0
    %v4973 = vcvt.s32.f32 %v4968
    %v4974 = vcvt.s32.f32 %v4969
    %v4975 = vcvt.s32.f32 %v4970
    %v4976 = vcvt.s32.f32 %v4971
    %v4977 = vcvt.s32.f32 %v4972
    %v4978 = vmul.f32 %v3989, %v4937
    %v4979 = vmul.f32 %v3991, %v4941
    %v4980 = vmul.f32 %v3995, %v4937
    %v4981 = vmul.f32 %v3997, %v4941
    %v4982 = vadd.f32 %v4978, %v4949
    %v4983 = vadd.f32 %v4979, %v4953
    %v4984 = vadd.f32 %v4980, %v4949
    %v4985 = vadd.f32 %v4981, %v4953
    %v4986 = vmax.f32 %v4982, 0.0
    %v4987 = vmax.f32 %v4983, 0.0
    %v4988 = vmax.f32 %v4984, 0.0
    %v4989 = vmax.f32 %v4985, 0.0
    %v4990 = vadd.s32 %v1486, 2
    %vm4991 = vcmp.eq.s32.totalorder %v1086, %v4990
    %vm4992 = vcmp.eq.s32.totalorder %v1087, %v4990
    %vm4993 = vcmp.eq.s32.totalorder %v1088, %v4990
    %vm4994 = vcmp.eq.s32.totalorder %v1089, %v4990
    %vm4995 = vcmp.eq.s32.totalorder %v1090, %v4990
    %v4996 = vsel %vm4991, 1, 0
    %v4997 = vsel %vm4992, 1, 0
    %v4998 = vsel %vm4993, 1, 0
    %v4999 = vsel %vm4994, 1, 0
    %v5000 = vsel %vm4995, 1, 0
    %v5001 = vcvt.s32.f32 %v4996
    %v5002 = vcvt.s32.f32 %v4997
    %v5003 = vcvt.s32.f32 %v4998
    %v5004 = vcvt.s32.f32 %v4999
    %v5005 = vcvt.s32.f32 %v5000
    %v5007 = vsel %vm1327, %v5001, 0
    %v5010 = vsel %vm1327, %v5002, 0
    %v5013 = vsel %vm1327, %v5003, 0
    %v5016 = vsel %vm1327, %v5004, 0
    %v5019 = vsel %vm1327, %v5005, 0
    %5021 = vmatprep.subr.mxu0 %v4987
    %5022 = vmatpush1.msra.mxu0 %v4986
    %5023 = vmatprep.subr.mxu0 %v4989
    %5024 = vmatpush1.msra.mxu0 %v4988
    %5025 = vmatprep.subr.mxu0 0.0
    %5026 = vmatpush1.msra.mxu0 0.0
    %5027 = vmatprep.subr.mxu0 0.0
    %5028 = vmatpush1.msra.mxu0 0.0
    %5029 = vmatprep.subr.mxu0 0.0
    %5030 = vmatpush1.msra.mxu0 0.0
    %5031 = vmatprep.subr.mxu0 0.0
    %5032 = vmatpush1.msra.mxu0 0.0
    %5033 = vmatprep.subr.mxu0 0.0
    %5034 = vmatpush1.msra.mxu0 0.0
    %5035 = vmatprep.subr.mxu0 0.0
    %5036 = vmatpush1.msra.mxu0 0.0
    %5037 = vmatprep.subr.mxu0 0.0
    %5038 = vmatpush1.msra.mxu0 0.0
    %5039 = vmatprep.subr.mxu0 0.0
    %5040 = vmatpush1.msra.mxu0 0.0
    %5041 = vmatprep.subr.mxu0 0.0
    %5042 = vmatpush1.msra.mxu0 0.0
    %5043 = vmatprep.subr.mxu0 0.0
    %5044 = vmatpush1.msra.mxu0 0.0
    %5045 = vmatprep.subr.mxu0 0.0
    %5046 = vmatpush1.msra.mxu0 0.0
    %5047 = vmatprep.subr.mxu0 0.0
    %5048 = vmatpush1.msra.mxu0 0.0
    %5049 = vmatprep.subr.mxu0 0.0
    %5050 = vmatpush1.msra.mxu0 0.0
    %5051 = vmatprep.subr.mxu0 0.0
    %5052 = vmatpush1.msra.mxu0 0.0
    %5053 = vmatprep.subr.mxu0 0.0
    %5054 = vmatpush1.msra.mxu0 0.0
    %5055 = vmatprep.subr.mxu0 0.0
    %5056 = vmatpush1.msra.mxu0 0.0
    %5057 = vmatprep.subr.mxu0 0.0
    %5058 = vmatpush1.msra.mxu0 0.0
    %5059 = vmatprep.subr.mxu0 0.0
    %5060 = vmatpush1.msra.mxu0 0.0
    %5061 = vmatprep.subr.mxu0 0.0
    %5062 = vmatpush1.msra.mxu0 0.0
    %5063 = vmatprep.subr.mxu0 0.0
    %5064 = vmatpush1.msra.mxu0 0.0
    %5065 = vmatprep.subr.mxu0 0.0
    %5066 = vmatpush1.msra.mxu0 0.0
    %5067 = vmatprep.subr.mxu0 0.0
    %5068 = vmatpush1.msra.mxu0 0.0
    %5069 = vmatprep.subr.mxu0 0.0
    %5070 = vmatpush1.msra.mxu0 0.0
    %5071 = vmatprep.subr.mxu0 0.0
    %5072 = vmatpush1.msra.mxu0 0.0
    %5073 = vmatprep.subr.mxu0 0.0
    %5074 = vmatpush1.msra.mxu0 0.0
    %5075 = vmatprep.subr.mxu0 0.0
    %5076 = vmatpush1.msra.mxu0 0.0
    %5077 = vmatprep.subr.mxu0 0.0
    %5078 = vmatpush1.msra.mxu0 0.0
    %5079 = vmatprep.subr.mxu0 0.0
    %5080 = vmatpush1.msra.mxu0 0.0
    %5081 = vmatprep.subr.mxu0 0.0
    %5082 = vmatpush1.msra.mxu0 0.0
    %5083 = vmatprep.subr.mxu0 0.0
    %5084 = vmatpush1.msra.mxu0 0.0
    %5085 = vmatprep.mubr.f32.mxu0 0.0
    %5086 = vmatmul.mubr.f32.gmra.mrb[0].mxu0 %v5007
    %v5087 = vpop.f32.mrb[0].mxu0
    %v5088 = vadd.f32 0.0, %v5087
    %v5089 = vpop.f32.mrb[0].mxu0
    %v5090 = vadd.f32 0.0, %v5089
    %5091 = vmatprep.mubr.f32.mxu0 0.0
    %5092 = vmatmul.mubr.f32.gmra.mrb[0].mxu0 %v5010
    %v5093 = vpop.f32.mrb[0].mxu0
    %v5094 = vadd.f32 0.0, %v5093
    %v5095 = vpop.f32.mrb[0].mxu0
    %v5096 = vadd.f32 0.0, %v5095
    %5097 = vmatprep.mubr.f32.mxu0 0.0
    %5098 = vmatmul.mubr.f32.gmra.mrb[0].mxu0 %v5013
    %v5099 = vpop.f32.mrb[0].mxu0
    %v5100 = vadd.f32 0.0, %v5099
    %v5101 = vpop.f32.mrb[0].mxu0
    %v5102 = vadd.f32 0.0, %v5101
    %5103 = vmatprep.mubr.f32.mxu0 0.0
    %5104 = vmatmul.mubr.f32.gmra.mrb[0].mxu0 %v5016
    %v5105 = vpop.f32.mrb[0].mxu0
    %v5106 = vadd.f32 0.0, %v5105
    %v5107 = vpop.f32.mrb[0].mxu0
    %v5108 = vadd.f32 0.0, %v5107
    %5109 = vmatprep.mubr.f32.mxu0 0.0
    %5110 = vmatmul.mubr.f32.gmra.mrb[0].mxu0 %v5019
    %v5111 = vpop.f32.mrb[0].mxu0
    %v5112 = vadd.f32 0.0, %v5111
    %v5113 = vpop.f32.mrb[0].mxu0
    %v5114 = vadd.f32 0.0, %v5113
    %5115 = vdwg.mxu0
    %v5117 = vsel %vm1327, %v4973, 0
    %v5120 = vsel %vm1327, %v4974, 0
    %v5123 = vsel %vm1327, %v4975, 0
    %v5126 = vsel %vm1327, %v4976, 0
    %v5129 = vsel %vm1327, %v4977, 0
    %5131 = vmatprep.subr.mxu0 %v4959
    %5132 = vmatpush1.msra.mxu0 %v4958
    %5133 = vmatprep.subr.mxu0 %v4961
    %5134 = vmatpush1.msra.mxu0 %v4960
    %5135 = vmatprep.subr.mxu0 0.0
    %5136 = vmatpush1.msra.mxu0 0.0
    %5137 = vmatprep.subr.mxu0 0.0
    %5138 = vmatpush1.msra.mxu0 0.0
    %5139 = vmatprep.subr.mxu0 0.0
    %5140 = vmatpush1.msra.mxu0 0.0
    %5141 = vmatprep.subr.mxu0 0.0
    %5142 = vmatpush1.msra.mxu0 0.0
    %5143 = vmatprep.subr.mxu0 0.0
    %5144 = vmatpush1.msra.mxu0 0.0
    %5145 = vmatprep.subr.mxu0 0.0
    %5146 = vmatpush1.msra.mxu0 0.0
    %5147 = vmatprep.subr.mxu0 0.0
    %5148 = vmatpush1.msra.mxu0 0.0
    %5149 = vmatprep.subr.mxu0 0.0
    %5150 = vmatpush1.msra.mxu0 0.0
    %5151 = vmatprep.subr.mxu0 0.0
    %5152 = vmatpush1.msra.mxu0 0.0
    %5153 = vmatprep.subr.mxu0 0.0
    %5154 = vmatpush1.msra.mxu0 0.0
    %5155 = vmatprep.subr.mxu0 0.0
    %5156 = vmatpush1.msra.mxu0 0.0
    %5157 = vmatprep.subr.mxu0 0.0
    %5158 = vmatpush1.msra.mxu0 0.0
    %5159 = vmatprep.subr.mxu0 0.0
    %5160 = vmatpush1.msra.mxu0 0.0
    %5161 = vmatprep.subr.mxu0 0.0
    %5162 = vmatpush1.msra.mxu0 0.0
    %5163 = vmatprep.subr.mxu0 0.0
    %5164 = vmatpush1.msra.mxu0 0.0
    %5165 = vmatprep.subr.mxu0 0.0
    %5166 = vmatpush1.msra.mxu0 0.0
    %5167 = vmatprep.subr.mxu0 0.0
    %5168 = vmatpush1.msra.mxu0 0.0
    %5169 = vmatprep.subr.mxu0 0.0
    %5170 = vmatpush1.msra.mxu0 0.0
    %5171 = vmatprep.subr.mxu0 0.0
    %5172 = vmatpush1.msra.mxu0 0.0
    %5173 = vmatprep.subr.mxu0 0.0
    %5174 = vmatpush1.msra.mxu0 0.0
    %5175 = vmatprep.subr.mxu0 0.0
    %5176 = vmatpush1.msra.mxu0 0.0
    %5177 = vmatprep.subr.mxu0 0.0
    %5178 = vmatpush1.msra.mxu0 0.0
    %5179 = vmatprep.subr.mxu0 0.0
    %5180 = vmatpush1.msra.mxu0 0.0
    %5181 = vmatprep.subr.mxu0 0.0
    %5182 = vmatpush1.msra.mxu0 0.0
    %5183 = vmatprep.subr.mxu0 0.0
    %5184 = vmatpush1.msra.mxu0 0.0
    %5185 = vmatprep.subr.mxu0 0.0
    %5186 = vmatpush1.msra.mxu0 0.0
    %5187 = vmatprep.subr.mxu0 0.0
    %5188 = vmatpush1.msra.mxu0 0.0
    %5189 = vmatprep.subr.mxu0 0.0
    %5190 = vmatpush1.msra.mxu0 0.0
    %5191 = vmatprep.subr.mxu0 0.0
    %5192 = vmatpush1.msra.mxu0 0.0
    %5193 = vmatprep.subr.mxu0 0.0
    %5194 = vmatpush1.msra.mxu0 0.0
    %5195 = vmatprep.mubr.f32.mxu0 0.0
    %5196 = vmatmul.mubr.f32.gmra.mrb[0].mxu0 %v5117
    %v5197 = vpop.f32.mrb[0].mxu0
    %v5198 = vadd.f32 %v5088, %v5197
    %v5199 = vpop.f32.mrb[0].mxu0
    %v5200 = vadd.f32 %v5090, %v5199
    %5201 = vmatprep.mubr.f32.mxu0 0.0
    %5202 = vmatmul.mubr.f32.gmra.mrb[0].mxu0 %v5120
    %v5203 = vpop.f32.mrb[0].mxu0
    %v5204 = vadd.f32 %v5094, %v5203
    %v5205 = vpop.f32.mrb[0].mxu0
    %v5206 = vadd.f32 %v5096, %v5205
    %5207 = vmatprep.mubr.f32.mxu0 0.0
    %5208 = vmatmul.mubr.f32.gmra.mrb[0].mxu0 %v5123
    %v5209 = vpop.f32.mrb[0].mxu0
    %v5210 = vadd.f32 %v5100, %v5209
    %v5211 = vpop.f32.mrb[0].mxu0
    %v5212 = vadd.f32 %v5102, %v5211
    %5213 = vmatprep.mubr.f32.mxu0 0.0
    %5214 = vmatmul.mubr.f32.gmra.mrb[0].mxu0 %v5126
    %v5215 = vpop.f32.mrb[0].mxu0
    %v5216 = vadd.f32 %v5106, %v5215
    %v5217 = vpop.f32.mrb[0].mxu0
    %v5218 = vadd.f32 %v5108, %v5217
    %5219 = vmatprep.mubr.f32.mxu0 0.0
    %5220 = vmatmul.mubr.f32.gmra.mrb[0].mxu0 %v5129
    %v5221 = vpop.f32.mrb[0].mxu0
    %v5222 = vadd.f32 %v5112, %v5221
    %v5223 = vpop.f32.mrb[0].mxu0
    %v5224 = vadd.f32 %v5114, %v5223
    %5225 = vdwg.mxu0
    %v5226 = vmul.f32 %v4247, %v4937
    %v5227 = vmul.f32 %v4248, %v4941
    %v5228 = vmul.f32 %v4249, %v4937
    %v5229 = vmul.f32 %v4250, %v4941
    %v5230 = vadd.f32 %v5226, %v4949
    %v5231 = vadd.f32 %v5227, %v4953
    %v5232 = vadd.f32 %v5228, %v4949
    %v5233 = vadd.f32 %v5229, %v4953
    %v5234 = vmax.f32 %v5230, 0.0
    %v5235 = vmax.f32 %v5231, 0.0
    %v5236 = vmax.f32 %v5232, 0.0
    %v5237 = vmax.f32 %v5233, 0.0
    %v5238 = vmul.f32 %v4395, %v4937
    %v5239 = vmul.f32 %v4397, %v4941
    %v5240 = vmul.f32 %v4401, %v4937
    %v5241 = vmul.f32 %v4403, %v4941
    %v5242 = vadd.f32 %v5238, %v4949
    %v5243 = vadd.f32 %v5239, %v4953
    %v5244 = vadd.f32 %v5240, %v4949
    %v5245 = vadd.f32 %v5241, %v4953
    %v5246 = vmax.f32 %v5242, 0.0
    %v5247 = vmax.f32 %v5243, 0.0
    %v5248 = vmax.f32 %v5244, 0.0
    %v5249 = vmax.f32 %v5245, 0.0
    %5250 = vmatprep.subr.mxu0 %v5247
    %5251 = vmatpush1.msra.mxu0 %v5246
    %5252 = vmatprep.subr.mxu0 %v5249
    %5253 = vmatpush1.msra.mxu0 %v5248
    %5254 = vmatprep.subr.mxu0 0.0
    %5255 = vmatpush1.msra.mxu0 0.0
    %5256 = vmatprep.subr.mxu0 0.0
    %5257 = vmatpush1.msra.mxu0 0.0
    %5258 = vmatprep.subr.mxu0 0.0
    %5259 = vmatpush1.msra.mxu0 0.0
    %5260 = vmatprep.subr.mxu0 0.0
    %5261 = vmatpush1.msra.mxu0 0.0
    %5262 = vmatprep.subr.mxu0 0.0
    %5263 = vmatpush1.msra.mxu0 0.0
    %5264 = vmatprep.subr.mxu0 0.0
    %5265 = vmatpush1.msra.mxu0 0.0
    %5266 = vmatprep.subr.mxu0 0.0
    %5267 = vmatpush1.msra.mxu0 0.0
    %5268 = vmatprep.subr.mxu0 0.0
    %5269 = vmatpush1.msra.mxu0 0.0
    %5270 = vmatprep.subr.mxu0 0.0
    %5271 = vmatpush1.msra.mxu0 0.0
    %5272 = vmatprep.subr.mxu0 0.0
    %5273 = vmatpush1.msra.mxu0 0.0
    %5274 = vmatprep.subr.mxu0 0.0
    %5275 = vmatpush1.msra.mxu0 0.0
    %5276 = vmatprep.subr.mxu0 0.0
    %5277 = vmatpush1.msra.mxu0 0.0
    %5278 = vmatprep.subr.mxu0 0.0
    %5279 = vmatpush1.msra.mxu0 0.0
    %5280 = vmatprep.subr.mxu0 0.0
    %5281 = vmatpush1.msra.mxu0 0.0
    %5282 = vmatprep.subr.mxu0 0.0
    %5283 = vmatpush1.msra.mxu0 0.0
    %5284 = vmatprep.subr.mxu0 0.0
    %5285 = vmatpush1.msra.mxu0 0.0
    %5286 = vmatprep.subr.mxu0 0.0
    %5287 = vmatpush1.msra.mxu0 0.0
    %5288 = vmatprep.subr.mxu0 0.0
    %5289 = vmatpush1.msra.mxu0 0.0
    %5290 = vmatprep.subr.mxu0 0.0
    %5291 = vmatpush1.msra.mxu0 0.0
    %5292 = vmatprep.subr.mxu0 0.0
    %5293 = vmatpush1.msra.mxu0 0.0
    %5294 = vmatprep.subr.mxu0 0.0
    %5295 = vmatpush1.msra.mxu0 0.0
    %5296 = vmatprep.subr.mxu0 0.0
    %5297 = vmatpush1.msra.mxu0 0.0
    %5298 = vmatprep.subr.mxu0 0.0
    %5299 = vmatpush1.msra.mxu0 0.0
    %5300 = vmatprep.subr.mxu0 0.0
    %5301 = vmatpush1.msra.mxu0 0.0
    %5302 = vmatprep.subr.mxu0 0.0
    %5303 = vmatpush1.msra.mxu0 0.0
    %5304 = vmatprep.subr.mxu0 0.0
    %5305 = vmatpush1.msra.mxu0 0.0
    %5306 = vmatprep.subr.mxu0 0.0
    %5307 = vmatpush1.msra.mxu0 0.0
    %5308 = vmatprep.subr.mxu0 0.0
    %5309 = vmatpush1.msra.mxu0 0.0
    %5310 = vmatprep.subr.mxu0 0.0
    %5311 = vmatpush1.msra.mxu0 0.0
    %5312 = vmatprep.subr.mxu0 0.0
    %5313 = vmatpush1.msra.mxu0 0.0
    %5314 = vmatprep.mubr.f32.mxu0 0.0
    %5315 = vmatmul.mubr.f32.gmra.mrb[0].mxu0 %v5007
    %v5316 = vpop.f32.mrb[0].mxu0
    %v5317 = vadd.f32 0.0, %v5316
    %v5318 = vpop.f32.mrb[0].mxu0
    %v5319 = vadd.f32 0.0, %v5318
    %5320 = vmatprep.mubr.f32.mxu0 0.0
    %5321 = vmatmul.mubr.f32.gmra.mrb[0].mxu0 %v5010
    %v5322 = vpop.f32.mrb[0].mxu0
    %v5323 = vadd.f32 0.0, %v5322
    %v5324 = vpop.f32.mrb[0].mxu0
    %v5325 = vadd.f32 0.0, %v5324
    %5326 = vmatprep.mubr.f32.mxu0 0.0
    %5327 = vmatmul.mubr.f32.gmra.mrb[0].mxu0 %v5013
    %v5328 = vpop.f32.mrb[0].mxu0
    %v5329 = vadd.f32 0.0, %v5328
    %v5330 = vpop.f32.mrb[0].mxu0
    %v5331 = vadd.f32 0.0, %v5330
    %5332 = vmatprep.mubr.f32.mxu0 0.0
    %5333 = vmatmul.mubr.f32.gmra.mrb[0].mxu0 %v5016
    %v5334 = vpop.f32.mrb[0].mxu0
    %v5335 = vadd.f32 0.0, %v5334
    %v5336 = vpop.f32.mrb[0].mxu0
    %v5337 = vadd.f32 0.0, %v5336
    %5338 = vmatprep.mubr.f32.mxu0 0.0
    %5339 = vmatmul.mubr.f32.gmra.mrb[0].mxu0 %v5019
    %v5340 = vpop.f32.mrb[0].mxu0
    %v5341 = vadd.f32 0.0, %v5340
    %v5342 = vpop.f32.mrb[0].mxu0
    %v5343 = vadd.f32 0.0, %v5342
    %5344 = vdwg.mxu0
    %5345 = vmatprep.subr.mxu0 %v5235
    %5346 = vmatpush1.msra.mxu0 %v5234
    %5347 = vmatprep.subr.mxu0 %v5237
    %5348 = vmatpush1.msra.mxu0 %v5236
    %5349 = vmatprep.subr.mxu0 0.0
    %5350 = vmatpush1.msra.mxu0 0.0
    %5351 = vmatprep.subr.mxu0 0.0
    %5352 = vmatpush1.msra.mxu0 0.0
    %5353 = vmatprep.subr.mxu0 0.0
    %5354 = vmatpush1.msra.mxu0 0.0
    %5355 = vmatprep.subr.mxu0 0.0
    %5356 = vmatpush1.msra.mxu0 0.0
    %5357 = vmatprep.subr.mxu0 0.0
    %5358 = vmatpush1.msra.mxu0 0.0
    %5359 = vmatprep.subr.mxu0 0.0
    %5360 = vmatpush1.msra.mxu0 0.0
    %5361 = vmatprep.subr.mxu0 0.0
    %5362 = vmatpush1.msra.mxu0 0.0
    %5363 = vmatprep.subr.mxu0 0.0
    %5364 = vmatpush1.msra.mxu0 0.0
    %5365 = vmatprep.subr.mxu0 0.0
    %5366 = vmatpush1.msra.mxu0 0.0
    %5367 = vmatprep.subr.mxu0 0.0
    %5368 = vmatpush1.msra.mxu0 0.0
    %5369 = vmatprep.subr.mxu0 0.0
    %5370 = vmatpush1.msra.mxu0 0.0
    %5371 = vmatprep.subr.mxu0 0.0
    %5372 = vmatpush1.msra.mxu0 0.0
    %5373 = vmatprep.subr.mxu0 0.0
    %5374 = vmatpush1.msra.mxu0 0.0
    %5375 = vmatprep.subr.mxu0 0.0
    %5376 = vmatpush1.msra.mxu0 0.0
    %5377 = vmatprep.subr.mxu0 0.0
    %5378 = vmatpush1.msra.mxu0 0.0
    %5379 = vmatprep.subr.mxu0 0.0
    %5380 = vmatpush1.msra.mxu0 0.0
    %5381 = vmatprep.subr.mxu0 0.0
    %5382 = vmatpush1.msra.mxu0 0.0
    %5383 = vmatprep.subr.mxu0 0.0
    %5384 = vmatpush1.msra.mxu0 0.0
    %5385 = vmatprep.subr.mxu0 0.0
    %5386 = vmatpush1.msra.mxu0 0.0
    %5387 = vmatprep.subr.mxu0 0.0
    %5388 = vmatpush1.msra.mxu0 0.0
    %5389 = vmatprep.subr.mxu0 0.0
    %5390 = vmatpush1.msra.mxu0 0.0
    %5391 = vmatprep.subr.mxu0 0.0
    %5392 = vmatpush1.msra.mxu0 0.0
    %5393 = vmatprep.subr.mxu0 0.0
    %5394 = vmatpush1.msra.mxu0 0.0
    %5395 = vmatprep.subr.mxu0 0.0
    %5396 = vmatpush1.msra.mxu0 0.0
    %5397 = vmatprep.subr.mxu0 0.0
    %5398 = vmatpush1.msra.mxu0 0.0
    %5399 = vmatprep.subr.mxu0 0.0
    %5400 = vmatpush1.msra.mxu0 0.0
    %5401 = vmatprep.subr.mxu0 0.0
    %5402 = vmatpush1.msra.mxu0 0.0
    %5403 = vmatprep.subr.mxu0 0.0
    %5404 = vmatpush1.msra.mxu0 0.0
    %5405 = vmatprep.subr.mxu0 0.0
    %5406 = vmatpush1.msra.mxu0 0.0
    %5407 = vmatprep.subr.mxu0 0.0
    %5408 = vmatpush1.msra.mxu0 0.0
    %5409 = vmatprep.mubr.f32.mxu0 0.0
    %5410 = vmatmul.mubr.f32.gmra.mrb[0].mxu0 %v5117
    %v5411 = vpop.f32.mrb[0].mxu0
    %v5412 = vadd.f32 %v5317, %v5411
    %v5413 = vpop.f32.mrb[0].mxu0
    %v5414 = vadd.f32 %v5319, %v5413
    %5415 = vmatprep.mubr.f32.mxu0 0.0
    %5416 = vmatmul.mubr.f32.gmra.mrb[0].mxu0 %v5120
    %v5417 = vpop.f32.mrb[0].mxu0
    %v5418 = vadd.f32 %v5323, %v5417
    %v5419 = vpop.f32.mrb[0].mxu0
    %v5420 = vadd.f32 %v5325, %v5419
    %5421 = vmatprep.mubr.f32.mxu0 0.0
    %5422 = vmatmul.mubr.f32.gmra.mrb[0].mxu0 %v5123
    %v5423 = vpop.f32.mrb[0].mxu0
    %v5424 = vadd.f32 %v5329, %v5423
    %v5425 = vpop.f32.mrb[0].mxu0
    %v5426 = vadd.f32 %v5331, %v5425
    %5427 = vmatprep.mubr.f32.mxu0 0.0
    %5428 = vmatmul.mubr.f32.gmra.mrb[0].mxu0 %v5126
    %v5429 = vpop.f32.mrb[0].mxu0
    %v5430 = vadd.f32 %v5335, %v5429
    %v5431 = vpop.f32.mrb[0].mxu0
    %v5432 = vadd.f32 %v5337, %v5431
    %5433 = vmatprep.mubr.f32.mxu0 0.0
    %5434 = vmatmul.mubr.f32.gmra.mrb[0].mxu0 %v5129
    %v5435 = vpop.f32.mrb[0].mxu0
    %v5436 = vadd.f32 %v5341, %v5435
    %v5437 = vpop.f32.mrb[0].mxu0
    %v5438 = vadd.f32 %v5343, %v5437
    %5439 = vdwg.mxu0
    %v5440 = vld [vmem:[%s13] sm:$0xff]
    %v5441 = vld [vmem:[%s13 + $0x8] sm:$0xff]
    %v5442 = vld [vmem:[%s13 + $0x10] sm:$0xff]
    %v5443 = vld [vmem:[%s13 + $0x18] sm:$0xff]
    %v5444 = vld [vmem:[%s13 + $0x20] sm:$0xff]
    %v5445 = vld [vmem:[%s13 + $0x28] sm:$0xff]
    %v5446 = vld [vmem:[%s13 + $0x30] sm:$0xff]
    %v5447 = vld [vmem:[%s13 + $0x38] sm:$0xff]
    %v5448 = vld [vmem:[%s13 + $0x40] sm:$0xff]
    %v5449 = vld [vmem:[%s13 + $0x48] sm:$0xff]
    %v5450 = vld [vmem:[%s13 + $0x50] sm:$0xff]
    %v5451 = vld [vmem:[%s13 + $0x58] sm:$0xff]
    %v5452 = vld [vmem:[%s13 + $0x60] sm:$0xff]
    %v5453 = vld [vmem:[%s13 + $0x68] sm:$0xff]
    %v5454 = vld [vmem:[%s13 + $0x70] sm:$0xff]
    %v5455 = vld [vmem:[%s13 + $0x78] sm:$0xff]
    %v5456 = vld [vmem:[%s13 + $0x80] sm:$0xff]
    %v5457 = vld [vmem:[%s13 + $0x88] sm:$0xff]
    %v5458 = vld [vmem:[%s13 + $0x90] sm:$0xff]
    %v5459 = vld [vmem:[%s13 + $0x98] sm:$0xff]
    %v5460 = vld [vmem:[%s13 + $0xa0] sm:$0xff]
    %v5461 = vld [vmem:[%s13 + $0xa8] sm:$0xff]
    %v5462 = vld [vmem:[%s13 + $0xb0] sm:$0xff]
    %v5463 = vld [vmem:[%s13 + $0xb8] sm:$0xff]
    %v5464 = vld [vmem:[%s13 + $0xc0] sm:$0xff]
    %v5465 = vld [vmem:[%s13 + $0xc8] sm:$0xff]
    %v5466 = vld [vmem:[%s13 + $0xd0] sm:$0xff]
    %v5467 = vld [vmem:[%s13 + $0xd8] sm:$0xff]
    %v5468 = vld [vmem:[%s13 + $0xe0] sm:$0xff]
    %v5469 = vld [vmem:[%s13 + $0xe8] sm:$0xff]
    %v5470 = vld [vmem:[%s13 + $0xf0] sm:$0xff]
    %v5471 = vld [vmem:[%s13 + $0xf8] sm:$0xff]
    %s5472 = scalar_lea.vmem %s13, 256
    %v5473 = vld [vmem:[%s5472] sm:$0xff]
    %v5474 = vld [vmem:[%s5472 + $0x8] sm:$0xff]
    %v5475 = vld [vmem:[%s5472 + $0x10] sm:$0xff]
    %v5476 = vld [vmem:[%s5472 + $0x18] sm:$0xff]
    %v5477 = vld [vmem:[%s5472 + $0x20] sm:$0xff]
    %v5478 = vld [vmem:[%s5472 + $0x28] sm:$0xff]
    %v5479 = vld [vmem:[%s5472 + $0x30] sm:$0xff]
    %v5480 = vld [vmem:[%s5472 + $0x38] sm:$0xff]
    %v5481 = vld [vmem:[%s5472 + $0x40] sm:$0xff]
    %v5482 = vld [vmem:[%s5472 + $0x48] sm:$0xff]
    %v5483 = vld [vmem:[%s5472 + $0x50] sm:$0xff]
    %v5484 = vld [vmem:[%s5472 + $0x58] sm:$0xff]
    %v5485 = vld [vmem:[%s5472 + $0x60] sm:$0xff]
    %v5486 = vld [vmem:[%s5472 + $0x68] sm:$0xff]
    %v5487 = vld [vmem:[%s5472 + $0x70] sm:$0xff]
    %v5488 = vld [vmem:[%s5472 + $0x78] sm:$0xff]
    %v5489 = vld [vmem:[%s5472 + $0x80] sm:$0xff]
    %v5490 = vld [vmem:[%s5472 + $0x88] sm:$0xff]
    %v5491 = vld [vmem:[%s5472 + $0x90] sm:$0xff]
    %v5492 = vld [vmem:[%s5472 + $0x98] sm:$0xff]
    %v5493 = vld [vmem:[%s5472 + $0xa0] sm:$0xff]
    %v5494 = vld [vmem:[%s5472 + $0xa8] sm:$0xff]
    %v5495 = vld [vmem:[%s5472 + $0xb0] sm:$0xff]
    %v5496 = vld [vmem:[%s5472 + $0xb8] sm:$0xff]
    %v5497 = vld [vmem:[%s5472 + $0xc0] sm:$0xff]
    %v5498 = vld [vmem:[%s5472 + $0xc8] sm:$0xff]
    %v5499 = vld [vmem:[%s5472 + $0xd0] sm:$0xff]
    %v5500 = vld [vmem:[%s5472 + $0xd8] sm:$0xff]
    %v5501 = vld [vmem:[%s5472 + $0xe0] sm:$0xff]
    %v5502 = vld [vmem:[%s5472 + $0xe8] sm:$0xff]
    %v5503 = vld [vmem:[%s5472 + $0xf0] sm:$0xff]
    %v5504 = vld [vmem:[%s5472 + $0xf8] sm:$0xff]
    %v5515 = vrot.slane %v5198, 1
    %v5516 = vrot.slane %v5204, 1
    %v5517 = vsel %vm1869, %v5515, %v5516
    %v5518 = vrot.slane %v5200, 1
    %v5519 = vrot.slane %v5206, 1
    %v5520 = vsel %vm1869, %v5518, %v5519
    %v5521 = vrot.slane %v5210, 1
    %v5522 = vsel %vm1869, %v5516, %v5521
    %v5523 = vrot.slane %v5212, 1
    %v5524 = vsel %vm1869, %v5519, %v5523
    %v5525 = vrot.slane %v5216, 1
    %v5526 = vsel %vm1869, %v5521, %v5525
    %v5527 = vrot.slane %v5218, 1
    %v5528 = vsel %vm1869, %v5523, %v5527
    %v5529 = vrot.slane %v5222, 1
    %v5530 = vsel %vm1869, %v5525, %v5529
    %v5531 = vrot.slane %v5224, 1
    %v5532 = vsel %vm1869, %v5527, %v5531
    %5541 = vmatprep.subr.mxu0 0.0
    %5542 = vmatpush1.msra.mxu0 %v5473
    %5543 = vmatprep.subr.mxu0 0.0
    %5544 = vmatpush1.msra.mxu0 %v5474
    %5545 = vmatprep.subr.mxu0 0.0
    %5546 = vmatpush1.msra.mxu0 %v5475
    %5547 = vmatprep.subr.mxu0 0.0
    %5548 = vmatpush1.msra.mxu0 %v5476
    %5549 = vmatprep.subr.mxu0 0.0
    %5550 = vmatpush1.msra.mxu0 %v5477
    %5551 = vmatprep.subr.mxu0 0.0
    %5552 = vmatpush1.msra.mxu0 %v5478
    %5553 = vmatprep.subr.mxu0 0.0
    %5554 = vmatpush1.msra.mxu0 %v5479
    %5555 = vmatprep.subr.mxu0 0.0
    %5556 = vmatpush1.msra.mxu0 %v5480
    %5557 = vmatprep.subr.mxu0 0.0
    %5558 = vmatpush1.msra.mxu0 %v5481
    %5559 = vmatprep.subr.mxu0 0.0
    %5560 = vmatpush1.msra.mxu0 %v5482
    %5561 = vmatprep.subr.mxu0 0.0
    %5562 = vmatpush1.msra.mxu0 %v5483
    %5563 = vmatprep.subr.mxu0 0.0
    %5564 = vmatpush1.msra.mxu0 %v5484
    %5565 = vmatprep.subr.mxu0 0.0
    %5566 = vmatpush1.msra.mxu0 %v5485
    %5567 = vmatprep.subr.mxu0 0.0
    %5568 = vmatpush1.msra.mxu0 %v5486
    %5569 = vmatprep.subr.mxu0 0.0
    %5570 = vmatpush1.msra.mxu0 %v5487
    %5571 = vmatprep.subr.mxu0 0.0
    %5572 = vmatpush1.msra.mxu0 %v5488
    %5573 = vmatprep.subr.mxu0 0.0
    %5574 = vmatpush1.msra.mxu0 %v5489
    %5575 = vmatprep.subr.mxu0 0.0
    %5576 = vmatpush1.msra.mxu0 %v5490
    %5577 = vmatprep.subr.mxu0 0.0
    %5578 = vmatpush1.msra.mxu0 %v5491
    %5579 = vmatprep.subr.mxu0 0.0
    %5580 = vmatpush1.msra.mxu0 %v5492
    %5581 = vmatprep.subr.mxu0 0.0
    %5582 = vmatpush1.msra.mxu0 %v5493
    %5583 = vmatprep.subr.mxu0 0.0
    %5584 = vmatpush1.msra.mxu0 %v5494
    %5585 = vmatprep.subr.mxu0 0.0
    %5586 = vmatpush1.msra.mxu0 %v5495
    %5587 = vmatprep.subr.mxu0 0.0
    %5588 = vmatpush1.msra.mxu0 %v5496
    %5589 = vmatprep.subr.mxu0 0.0
    %5590 = vmatpush1.msra.mxu0 %v5497
    %5591 = vmatprep.subr.mxu0 0.0
    %5592 = vmatpush1.msra.mxu0 %v5498
    %5593 = vmatprep.subr.mxu0 0.0
    %5594 = vmatpush1.msra.mxu0 %v5499
    %5595 = vmatprep.subr.mxu0 0.0
    %5596 = vmatpush1.msra.mxu0 %v5500
    %5597 = vmatprep.subr.mxu0 0.0
    %5598 = vmatpush1.msra.mxu0 %v5501
    %5599 = vmatprep.subr.mxu0 0.0
    %5600 = vmatpush1.msra.mxu0 %v5502
    %5601 = vmatprep.subr.mxu0 0.0
    %5602 = vmatpush1.msra.mxu0 %v5503
    %5603 = vmatprep.subr.mxu0 0.0
    %5604 = vmatpush1.msra.mxu0 %v5504
    %5605 = vmatprep.mubr.f32.mxu0 %v5520
    %5606 = vmatmul.mubr.f32.gmra.mrb[0].mxu0 %v5517
    %v5607 = vpop.f32.mrb[0].mxu0
    %v5608 = vadd.f32 0.0, %v5607
    %v5609 = vpop.f32.mrb[0].mxu0
    %5610 = vmatprep.mubr.f32.mxu0 %v5524
    %5611 = vmatmul.mubr.f32.gmra.mrb[0].mxu0 %v5522
    %v5612 = vpop.f32.mrb[0].mxu0
    %v5613 = vadd.f32 0.0, %v5612
    %v5614 = vpop.f32.mrb[0].mxu0
    %5615 = vmatprep.mubr.f32.mxu0 %v5528
    %5616 = vmatmul.mubr.f32.gmra.mrb[0].mxu0 %v5526
    %v5617 = vpop.f32.mrb[0].mxu0
    %v5618 = vadd.f32 0.0, %v5617
    %v5619 = vpop.f32.mrb[0].mxu0
    %5620 = vmatprep.mubr.f32.mxu0 %v5532
    %5621 = vmatmul.mubr.f32.gmra.mrb[0].mxu0 %v5530
    %v5622 = vpop.f32.mrb[0].mxu0
    %v5623 = vadd.f32 0.0, %v5622
    %v5624 = vpop.f32.mrb[0].mxu0
    %5625 = vdwg.mxu0
    %5626 = vmatprep.subr.mxu0 0.0
    %5627 = vmatpush1.msra.mxu0 %v5440
    %5628 = vmatprep.subr.mxu0 0.0
    %5629 = vmatpush1.msra.mxu0 %v5441
    %5630 = vmatprep.subr.mxu0 0.0
    %5631 = vmatpush1.msra.mxu0 %v5442
    %5632 = vmatprep.subr.mxu0 0.0
    %5633 = vmatpush1.msra.mxu0 %v5443
    %5634 = vmatprep.subr.mxu0 0.0
    %5635 = vmatpush1.msra.mxu0 %v5444
    %5636 = vmatprep.subr.mxu0 0.0
    %5637 = vmatpush1.msra.mxu0 %v5445
    %5638 = vmatprep.subr.mxu0 0.0
    %5639 = vmatpush1.msra.mxu0 %v5446
    %5640 = vmatprep.subr.mxu0 0.0
    %5641 = vmatpush1.msra.mxu0 %v5447
    %5642 = vmatprep.subr.mxu0 0.0
    %5643 = vmatpush1.msra.mxu0 %v5448
    %5644 = vmatprep.subr.mxu0 0.0
    %5645 = vmatpush1.msra.mxu0 %v5449
    %5646 = vmatprep.subr.mxu0 0.0
    %5647 = vmatpush1.msra.mxu0 %v5450
    %5648 = vmatprep.subr.mxu0 0.0
    %5649 = vmatpush1.msra.mxu0 %v5451
    %5650 = vmatprep.subr.mxu0 0.0
    %5651 = vmatpush1.msra.mxu0 %v5452
    %5652 = vmatprep.subr.mxu0 0.0
    %5653 = vmatpush1.msra.mxu0 %v5453
    %5654 = vmatprep.subr.mxu0 0.0
    %5655 = vmatpush1.msra.mxu0 %v5454
    %5656 = vmatprep.subr.mxu0 0.0
    %5657 = vmatpush1.msra.mxu0 %v5455
    %5658 = vmatprep.subr.mxu0 0.0
    %5659 = vmatpush1.msra.mxu0 %v5456
    %5660 = vmatprep.subr.mxu0 0.0
    %5661 = vmatpush1.msra.mxu0 %v5457
    %5662 = vmatprep.subr.mxu0 0.0
    %5663 = vmatpush1.msra.mxu0 %v5458
    %5664 = vmatprep.subr.mxu0 0.0
    %5665 = vmatpush1.msra.mxu0 %v5459
    %5666 = vmatprep.subr.mxu0 0.0
    %5667 = vmatpush1.msra.mxu0 %v5460
    %5668 = vmatprep.subr.mxu0 0.0
    %5669 = vmatpush1.msra.mxu0 %v5461
    %5670 = vmatprep.subr.mxu0 0.0
    %5671 = vmatpush1.msra.mxu0 %v5462
    %5672 = vmatprep.subr.mxu0 0.0
    %5673 = vmatpush1.msra.mxu0 %v5463
    %5674 = vmatprep.subr.mxu0 0.0
    %5675 = vmatpush1.msra.mxu0 %v5464
    %5676 = vmatprep.subr.mxu0 0.0
    %5677 = vmatpush1.msra.mxu0 %v5465
    %5678 = vmatprep.subr.mxu0 0.0
    %5679 = vmatpush1.msra.mxu0 %v5466
    %5680 = vmatprep.subr.mxu0 0.0
    %5681 = vmatpush1.msra.mxu0 %v5467
    %5682 = vmatprep.subr.mxu0 0.0
    %5683 = vmatpush1.msra.mxu0 %v5468
    %5684 = vmatprep.subr.mxu0 0.0
    %5685 = vmatpush1.msra.mxu0 %v5469
    %5686 = vmatprep.subr.mxu0 0.0
    %5687 = vmatpush1.msra.mxu0 %v5470
    %5688 = vmatprep.subr.mxu0 0.0
    %5689 = vmatpush1.msra.mxu0 %v5471
    %5690 = vmatprep.mubr.f32.mxu0 %v5200
    %5691 = vmatmul.mubr.f32.gmra.mrb[0].mxu0 %v5198
    %v5692 = vpop.f32.mrb[0].mxu0
    %v5693 = vadd.f32 %v5608, %v5692
    %v5694 = vpop.f32.mrb[0].mxu0
    %5695 = vmatprep.mubr.f32.mxu0 %v5206
    %5696 = vmatmul.mubr.f32.gmra.mrb[0].mxu0 %v5204
    %v5697 = vpop.f32.mrb[0].mxu0
    %v5698 = vadd.f32 %v5613, %v5697
    %v5699 = vpop.f32.mrb[0].mxu0
    %5700 = vmatprep.mubr.f32.mxu0 %v5212
    %5701 = vmatmul.mubr.f32.gmra.mrb[0].mxu0 %v5210
    %v5702 = vpop.f32.mrb[0].mxu0
    %v5703 = vadd.f32 %v5618, %v5702
    %v5704 = vpop.f32.mrb[0].mxu0
    %5705 = vmatprep.mubr.f32.mxu0 %v5218
    %5706 = vmatmul.mubr.f32.gmra.mrb[0].mxu0 %v5216
    %v5707 = vpop.f32.mrb[0].mxu0
    %v5708 = vadd.f32 %v5623, %v5707
    %v5709 = vpop.f32.mrb[0].mxu0
    %5710 = vdwg.mxu0
    %s5711 = scalar_lea.vmem %s13, 512
    %v5712 = vld [vmem:[%s5711] sm:$0xff]
    %v5713 = vld [vmem:[%s5711 + $0x8] sm:$0xff]
    %v5714 = vld [vmem:[%s5711 + $0x10] sm:$0xff]
    %v5715 = vld [vmem:[%s5711 + $0x18] sm:$0xff]
    %v5716 = vld [vmem:[%s5711 + $0x20] sm:$0xff]
    %v5717 = vld [vmem:[%s5711 + $0x28] sm:$0xff]
    %v5718 = vld [vmem:[%s5711 + $0x30] sm:$0xff]
    %v5719 = vld [vmem:[%s5711 + $0x38] sm:$0xff]
    %v5720 = vld [vmem:[%s5711 + $0x40] sm:$0xff]
    %v5721 = vld [vmem:[%s5711 + $0x48] sm:$0xff]
    %v5722 = vld [vmem:[%s5711 + $0x50] sm:$0xff]
    %v5723 = vld [vmem:[%s5711 + $0x58] sm:$0xff]
    %v5724 = vld [vmem:[%s5711 + $0x60] sm:$0xff]
    %v5725 = vld [vmem:[%s5711 + $0x68] sm:$0xff]
    %v5726 = vld [vmem:[%s5711 + $0x70] sm:$0xff]
    %v5727 = vld [vmem:[%s5711 + $0x78] sm:$0xff]
    %v5728 = vld [vmem:[%s5711 + $0x80] sm:$0xff]
    %v5729 = vld [vmem:[%s5711 + $0x88] sm:$0xff]
    %v5730 = vld [vmem:[%s5711 + $0x90] sm:$0xff]
    %v5731 = vld [vmem:[%s5711 + $0x98] sm:$0xff]
    %v5732 = vld [vmem:[%s5711 + $0xa0] sm:$0xff]
    %v5733 = vld [vmem:[%s5711 + $0xa8] sm:$0xff]
    %v5734 = vld [vmem:[%s5711 + $0xb0] sm:$0xff]
    %v5735 = vld [vmem:[%s5711 + $0xb8] sm:$0xff]
    %v5736 = vld [vmem:[%s5711 + $0xc0] sm:$0xff]
    %v5737 = vld [vmem:[%s5711 + $0xc8] sm:$0xff]
    %v5738 = vld [vmem:[%s5711 + $0xd0] sm:$0xff]
    %v5739 = vld [vmem:[%s5711 + $0xd8] sm:$0xff]
    %v5740 = vld [vmem:[%s5711 + $0xe0] sm:$0xff]
    %v5741 = vld [vmem:[%s5711 + $0xe8] sm:$0xff]
    %v5742 = vld [vmem:[%s5711 + $0xf0] sm:$0xff]
    %v5743 = vld [vmem:[%s5711 + $0xf8] sm:$0xff]
    %v5744 = vrot.slane %v5198, 2
    %v5745 = vrot.slane %v5204, 2
    %v5746 = vsel %vm2031, %v5744, %v5745
    %v5747 = vrot.slane %v5200, 2
    %v5748 = vrot.slane %v5206, 2
    %v5749 = vsel %vm2031, %v5747, %v5748
    %v5750 = vrot.slane %v5210, 2
    %v5751 = vsel %vm2031, %v5745, %v5750
    %v5752 = vrot.slane %v5212, 2
    %v5753 = vsel %vm2031, %v5748, %v5752
    %v5754 = vrot.slane %v5216, 2
    %v5755 = vsel %vm2031, %v5750, %v5754
    %v5756 = vrot.slane %v5218, 2
    %v5757 = vsel %vm2031, %v5752, %v5756
    %v5758 = vrot.slane %v5222, 2
    %v5759 = vsel %vm2031, %v5754, %v5758
    %v5760 = vrot.slane %v5224, 2
    %v5761 = vsel %vm2031, %v5756, %v5760
    %5770 = vmatprep.subr.mxu0 0.0
    %5771 = vmatpush1.msra.mxu0 %v5712
    %5772 = vmatprep.subr.mxu0 0.0
    %5773 = vmatpush1.msra.mxu0 %v5713
    %5774 = vmatprep.subr.mxu0 0.0
    %5775 = vmatpush1.msra.mxu0 %v5714
    %5776 = vmatprep.subr.mxu0 0.0
    %5777 = vmatpush1.msra.mxu0 %v5715
    %5778 = vmatprep.subr.mxu0 0.0
    %5779 = vmatpush1.msra.mxu0 %v5716
    %5780 = vmatprep.subr.mxu0 0.0
    %5781 = vmatpush1.msra.mxu0 %v5717
    %5782 = vmatprep.subr.mxu0 0.0
    %5783 = vmatpush1.msra.mxu0 %v5718
    %5784 = vmatprep.subr.mxu0 0.0
    %5785 = vmatpush1.msra.mxu0 %v5719
    %5786 = vmatprep.subr.mxu0 0.0
    %5787 = vmatpush1.msra.mxu0 %v5720
    %5788 = vmatprep.subr.mxu0 0.0
    %5789 = vmatpush1.msra.mxu0 %v5721
    %5790 = vmatprep.subr.mxu0 0.0
    %5791 = vmatpush1.msra.mxu0 %v5722
    %5792 = vmatprep.subr.mxu0 0.0
    %5793 = vmatpush1.msra.mxu0 %v5723
    %5794 = vmatprep.subr.mxu0 0.0
    %5795 = vmatpush1.msra.mxu0 %v5724
    %5796 = vmatprep.subr.mxu0 0.0
    %5797 = vmatpush1.msra.mxu0 %v5725
    %5798 = vmatprep.subr.mxu0 0.0
    %5799 = vmatpush1.msra.mxu0 %v5726
    %5800 = vmatprep.subr.mxu0 0.0
    %5801 = vmatpush1.msra.mxu0 %v5727
    %5802 = vmatprep.subr.mxu0 0.0
    %5803 = vmatpush1.msra.mxu0 %v5728
    %5804 = vmatprep.subr.mxu0 0.0
    %5805 = vmatpush1.msra.mxu0 %v5729
    %5806 = vmatprep.subr.mxu0 0.0
    %5807 = vmatpush1.msra.mxu0 %v5730
    %5808 = vmatprep.subr.mxu0 0.0
    %5809 = vmatpush1.msra.mxu0 %v5731
    %5810 = vmatprep.subr.mxu0 0.0
    %5811 = vmatpush1.msra.mxu0 %v5732
    %5812 = vmatprep.subr.mxu0 0.0
    %5813 = vmatpush1.msra.mxu0 %v5733
    %5814 = vmatprep.subr.mxu0 0.0
    %5815 = vmatpush1.msra.mxu0 %v5734
    %5816 = vmatprep.subr.mxu0 0.0
    %5817 = vmatpush1.msra.mxu0 %v5735
    %5818 = vmatprep.subr.mxu0 0.0
    %5819 = vmatpush1.msra.mxu0 %v5736
    %5820 = vmatprep.subr.mxu0 0.0
    %5821 = vmatpush1.msra.mxu0 %v5737
    %5822 = vmatprep.subr.mxu0 0.0
    %5823 = vmatpush1.msra.mxu0 %v5738
    %5824 = vmatprep.subr.mxu0 0.0
    %5825 = vmatpush1.msra.mxu0 %v5739
    %5826 = vmatprep.subr.mxu0 0.0
    %5827 = vmatpush1.msra.mxu0 %v5740
    %5828 = vmatprep.subr.mxu0 0.0
    %5829 = vmatpush1.msra.mxu0 %v5741
    %5830 = vmatprep.subr.mxu0 0.0
    %5831 = vmatpush1.msra.mxu0 %v5742
    %5832 = vmatprep.subr.mxu0 0.0
    %5833 = vmatpush1.msra.mxu0 %v5743
    %5834 = vmatprep.mubr.f32.mxu0 %v5749
    %5835 = vmatmul.mubr.f32.gmra.mrb[0].mxu0 %v5746
    %v5836 = vpop.f32.mrb[0].mxu0
    %v5837 = vadd.f32 0.0, %v5836
    %v5838 = vpop.f32.mrb[0].mxu0
    %5839 = vmatprep.mubr.f32.mxu0 %v5753
    %5840 = vmatmul.mubr.f32.gmra.mrb[0].mxu0 %v5751
    %v5841 = vpop.f32.mrb[0].mxu0
    %v5842 = vadd.f32 0.0, %v5841
    %v5843 = vpop.f32.mrb[0].mxu0
    %5844 = vmatprep.mubr.f32.mxu0 %v5757
    %5845 = vmatmul.mubr.f32.gmra.mrb[0].mxu0 %v5755
    %v5846 = vpop.f32.mrb[0].mxu0
    %v5847 = vadd.f32 0.0, %v5846
    %v5848 = vpop.f32.mrb[0].mxu0
    %5849 = vmatprep.mubr.f32.mxu0 %v5761
    %5850 = vmatmul.mubr.f32.gmra.mrb[0].mxu0 %v5759
    %v5851 = vpop.f32.mrb[0].mxu0
    %v5852 = vadd.f32 0.0, %v5851
    %v5853 = vpop.f32.mrb[0].mxu0
    %5854 = vdwg.mxu0
    %v5855 = vadd.f32 %v5693, %v5837
    %v5856 = vadd.f32 %v5698, %v5842
    %v5857 = vadd.f32 %v5703, %v5847
    %v5858 = vadd.f32 %v5708, %v5852
    %s5859 = scalar_lea.vmem %s13, 768
    %v5860 = vld [vmem:[%s5859] sm:$0xff]
    %v5861 = vld [vmem:[%s5859 + $0x8] sm:$0xff]
    %v5862 = vld [vmem:[%s5859 + $0x10] sm:$0xff]
    %v5863 = vld [vmem:[%s5859 + $0x18] sm:$0xff]
    %v5864 = vld [vmem:[%s5859 + $0x20] sm:$0xff]
    %v5865 = vld [vmem:[%s5859 + $0x28] sm:$0xff]
    %v5866 = vld [vmem:[%s5859 + $0x30] sm:$0xff]
    %v5867 = vld [vmem:[%s5859 + $0x38] sm:$0xff]
    %v5868 = vld [vmem:[%s5859 + $0x40] sm:$0xff]
    %v5869 = vld [vmem:[%s5859 + $0x48] sm:$0xff]
    %v5870 = vld [vmem:[%s5859 + $0x50] sm:$0xff]
    %v5871 = vld [vmem:[%s5859 + $0x58] sm:$0xff]
    %v5872 = vld [vmem:[%s5859 + $0x60] sm:$0xff]
    %v5873 = vld [vmem:[%s5859 + $0x68] sm:$0xff]
    %v5874 = vld [vmem:[%s5859 + $0x70] sm:$0xff]
    %v5875 = vld [vmem:[%s5859 + $0x78] sm:$0xff]
    %v5876 = vld [vmem:[%s5859 + $0x80] sm:$0xff]
    %v5877 = vld [vmem:[%s5859 + $0x88] sm:$0xff]
    %v5878 = vld [vmem:[%s5859 + $0x90] sm:$0xff]
    %v5879 = vld [vmem:[%s5859 + $0x98] sm:$0xff]
    %v5880 = vld [vmem:[%s5859 + $0xa0] sm:$0xff]
    %v5881 = vld [vmem:[%s5859 + $0xa8] sm:$0xff]
    %v5882 = vld [vmem:[%s5859 + $0xb0] sm:$0xff]
    %v5883 = vld [vmem:[%s5859 + $0xb8] sm:$0xff]
    %v5884 = vld [vmem:[%s5859 + $0xc0] sm:$0xff]
    %v5885 = vld [vmem:[%s5859 + $0xc8] sm:$0xff]
    %v5886 = vld [vmem:[%s5859 + $0xd0] sm:$0xff]
    %v5887 = vld [vmem:[%s5859 + $0xd8] sm:$0xff]
    %v5888 = vld [vmem:[%s5859 + $0xe0] sm:$0xff]
    %v5889 = vld [vmem:[%s5859 + $0xe8] sm:$0xff]
    %v5890 = vld [vmem:[%s5859 + $0xf0] sm:$0xff]
    %v5891 = vld [vmem:[%s5859 + $0xf8] sm:$0xff]
    %vm5892 = vcmask 1044480
    %v5893 = vrot.slane %v5198, 3
    %v5894 = vrot.slane %v5204, 3
    %v5895 = vsel %vm5892, %v5893, %v5894
    %v5896 = vrot.slane %v5200, 3
    %v5897 = vrot.slane %v5206, 3
    %v5898 = vsel %vm5892, %v5896, %v5897
    %v5899 = vrot.slane %v5210, 3
    %v5900 = vsel %vm5892, %v5894, %v5899
    %v5901 = vrot.slane %v5212, 3
    %v5902 = vsel %vm5892, %v5897, %v5901
    %v5903 = vrot.slane %v5216, 3
    %v5904 = vsel %vm5892, %v5899, %v5903
    %v5905 = vrot.slane %v5218, 3
    %v5906 = vsel %vm5892, %v5901, %v5905
    %v5907 = vrot.slane %v5222, 3
    %v5908 = vsel %vm5892, %v5903, %v5907
    %v5909 = vrot.slane %v5224, 3
    %v5910 = vsel %vm5892, %v5905, %v5909
    %5919 = vmatprep.subr.mxu0 0.0
    %5920 = vmatpush1.msra.mxu0 %v5860
    %5921 = vmatprep.subr.mxu0 0.0
    %5922 = vmatpush1.msra.mxu0 %v5861
    %5923 = vmatprep.subr.mxu0 0.0
    %5924 = vmatpush1.msra.mxu0 %v5862
    %5925 = vmatprep.subr.mxu0 0.0
    %5926 = vmatpush1.msra.mxu0 %v5863
    %5927 = vmatprep.subr.mxu0 0.0
    %5928 = vmatpush1.msra.mxu0 %v5864
    %5929 = vmatprep.subr.mxu0 0.0
    %5930 = vmatpush1.msra.mxu0 %v5865
    %5931 = vmatprep.subr.mxu0 0.0
    %5932 = vmatpush1.msra.mxu0 %v5866
    %5933 = vmatprep.subr.mxu0 0.0
    %5934 = vmatpush1.msra.mxu0 %v5867
    %5935 = vmatprep.subr.mxu0 0.0
    %5936 = vmatpush1.msra.mxu0 %v5868
    %5937 = vmatprep.subr.mxu0 0.0
    %5938 = vmatpush1.msra.mxu0 %v5869
    %5939 = vmatprep.subr.mxu0 0.0
    %5940 = vmatpush1.msra.mxu0 %v5870
    %5941 = vmatprep.subr.mxu0 0.0
    %5942 = vmatpush1.msra.mxu0 %v5871
    %5943 = vmatprep.subr.mxu0 0.0
    %5944 = vmatpush1.msra.mxu0 %v5872
    %5945 = vmatprep.subr.mxu0 0.0
    %5946 = vmatpush1.msra.mxu0 %v5873
    %5947 = vmatprep.subr.mxu0 0.0
    %5948 = vmatpush1.msra.mxu0 %v5874
    %5949 = vmatprep.subr.mxu0 0.0
    %5950 = vmatpush1.msra.mxu0 %v5875
    %5951 = vmatprep.subr.mxu0 0.0
    %5952 = vmatpush1.msra.mxu0 %v5876
    %5953 = vmatprep.subr.mxu0 0.0
    %5954 = vmatpush1.msra.mxu0 %v5877
    %5955 = vmatprep.subr.mxu0 0.0
    %5956 = vmatpush1.msra.mxu0 %v5878
    %5957 = vmatprep.subr.mxu0 0.0
    %5958 = vmatpush1.msra.mxu0 %v5879
    %5959 = vmatprep.subr.mxu0 0.0
    %5960 = vmatpush1.msra.mxu0 %v5880
    %5961 = vmatprep.subr.mxu0 0.0
    %5962 = vmatpush1.msra.mxu0 %v5881
    %5963 = vmatprep.subr.mxu0 0.0
    %5964 = vmatpush1.msra.mxu0 %v5882
    %5965 = vmatprep.subr.mxu0 0.0
    %5966 = vmatpush1.msra.mxu0 %v5883
    %5967 = vmatprep.subr.mxu0 0.0
    %5968 = vmatpush1.msra.mxu0 %v5884
    %5969 = vmatprep.subr.mxu0 0.0
    %5970 = vmatpush1.msra.mxu0 %v5885
    %5971 = vmatprep.subr.mxu0 0.0
    %5972 = vmatpush1.msra.mxu0 %v5886
    %5973 = vmatprep.subr.mxu0 0.0
    %5974 = vmatpush1.msra.mxu0 %v5887
    %5975 = vmatprep.subr.mxu0 0.0
    %5976 = vmatpush1.msra.mxu0 %v5888
    %5977 = vmatprep.subr.mxu0 0.0
    %5978 = vmatpush1.msra.mxu0 %v5889
    %5979 = vmatprep.subr.mxu0 0.0
    %5980 = vmatpush1.msra.mxu0 %v5890
    %5981 = vmatprep.subr.mxu0 0.0
    %5982 = vmatpush1.msra.mxu0 %v5891
    %5983 = vmatprep.mubr.f32.mxu0 %v5898
    %5984 = vmatmul.mubr.f32.gmra.mrb[0].mxu0 %v5895
    %v5985 = vpop.f32.mrb[0].mxu0
    %v5986 = vadd.f32 0.0, %v5985
    %v5987 = vpop.f32.mrb[0].mxu0
    %5988 = vmatprep.mubr.f32.mxu0 %v5902
    %5989 = vmatmul.mubr.f32.gmra.mrb[0].mxu0 %v5900
    %v5990 = vpop.f32.mrb[0].mxu0
    %v5991 = vadd.f32 0.0, %v5990
    %v5992 = vpop.f32.mrb[0].mxu0
    %5993 = vmatprep.mubr.f32.mxu0 %v5906
    %5994 = vmatmul.mubr.f32.gmra.mrb[0].mxu0 %v5904
    %v5995 = vpop.f32.mrb[0].mxu0
    %v5996 = vadd.f32 0.0, %v5995
    %v5997 = vpop.f32.mrb[0].mxu0
    %5998 = vmatprep.mubr.f32.mxu0 %v5910
    %5999 = vmatmul.mubr.f32.gmra.mrb[0].mxu0 %v5908
    %v6000 = vpop.f32.mrb[0].mxu0
    %v6001 = vadd.f32 0.0, %v6000
    %v6002 = vpop.f32.mrb[0].mxu0
    %6003 = vdwg.mxu0
    %v6004 = vadd.f32 %v5855, %v5986
    %v6005 = vadd.f32 %v5856, %v5991
    %v6006 = vadd.f32 %v5857, %v5996
    %v6007 = vadd.f32 %v5858, %v6001
    %s6008 = scalar_lea.vmem %s13, 1024
    %v6009 = vld [vmem:[%s6008] sm:$0xff]
    %v6010 = vld [vmem:[%s6008 + $0x8] sm:$0xff]
    %v6011 = vld [vmem:[%s6008 + $0x10] sm:$0xff]
    %v6012 = vld [vmem:[%s6008 + $0x18] sm:$0xff]
    %v6013 = vld [vmem:[%s6008 + $0x20] sm:$0xff]
    %v6014 = vld [vmem:[%s6008 + $0x28] sm:$0xff]
    %v6015 = vld [vmem:[%s6008 + $0x30] sm:$0xff]
    %v6016 = vld [vmem:[%s6008 + $0x38] sm:$0xff]
    %v6017 = vld [vmem:[%s6008 + $0x40] sm:$0xff]
    %v6018 = vld [vmem:[%s6008 + $0x48] sm:$0xff]
    %v6019 = vld [vmem:[%s6008 + $0x50] sm:$0xff]
    %v6020 = vld [vmem:[%s6008 + $0x58] sm:$0xff]
    %v6021 = vld [vmem:[%s6008 + $0x60] sm:$0xff]
    %v6022 = vld [vmem:[%s6008 + $0x68] sm:$0xff]
    %v6023 = vld [vmem:[%s6008 + $0x70] sm:$0xff]
    %v6024 = vld [vmem:[%s6008 + $0x78] sm:$0xff]
    %v6025 = vld [vmem:[%s6008 + $0x80] sm:$0xff]
    %v6026 = vld [vmem:[%s6008 + $0x88] sm:$0xff]
    %v6027 = vld [vmem:[%s6008 + $0x90] sm:$0xff]
    %v6028 = vld [vmem:[%s6008 + $0x98] sm:$0xff]
    %v6029 = vld [vmem:[%s6008 + $0xa0] sm:$0xff]
    %v6030 = vld [vmem:[%s6008 + $0xa8] sm:$0xff]
    %v6031 = vld [vmem:[%s6008 + $0xb0] sm:$0xff]
    %v6032 = vld [vmem:[%s6008 + $0xb8] sm:$0xff]
    %v6033 = vld [vmem:[%s6008 + $0xc0] sm:$0xff]
    %v6034 = vld [vmem:[%s6008 + $0xc8] sm:$0xff]
    %v6035 = vld [vmem:[%s6008 + $0xd0] sm:$0xff]
    %v6036 = vld [vmem:[%s6008 + $0xd8] sm:$0xff]
    %v6037 = vld [vmem:[%s6008 + $0xe0] sm:$0xff]
    %v6038 = vld [vmem:[%s6008 + $0xe8] sm:$0xff]
    %v6039 = vld [vmem:[%s6008 + $0xf0] sm:$0xff]
    %v6040 = vld [vmem:[%s6008 + $0xf8] sm:$0xff]
    %v6041 = vrot.slane %v5198, 4
    %v6042 = vrot.slane %v5204, 4
    %v6043 = vsel %vm1016, %v6041, %v6042
    %v6044 = vrot.slane %v5200, 4
    %v6045 = vrot.slane %v5206, 4
    %v6046 = vsel %vm1016, %v6044, %v6045
    %v6047 = vrot.slane %v5210, 4
    %v6048 = vsel %vm1016, %v6042, %v6047
    %v6049 = vrot.slane %v5212, 4
    %v6050 = vsel %vm1016, %v6045, %v6049
    %v6051 = vrot.slane %v5216, 4
    %v6052 = vsel %vm1016, %v6047, %v6051
    %v6053 = vrot.slane %v5218, 4
    %v6054 = vsel %vm1016, %v6049, %v6053
    %v6055 = vrot.slane %v5222, 4
    %v6056 = vsel %vm1016, %v6051, %v6055
    %v6057 = vrot.slane %v5224, 4
    %v6058 = vsel %vm1016, %v6053, %v6057
    %6067 = vmatprep.subr.mxu0 0.0
    %6068 = vmatpush1.msra.mxu0 %v6009
    %6069 = vmatprep.subr.mxu0 0.0
    %6070 = vmatpush1.msra.mxu0 %v6010
    %6071 = vmatprep.subr.mxu0 0.0
    %6072 = vmatpush1.msra.mxu0 %v6011
    %6073 = vmatprep.subr.mxu0 0.0
    %6074 = vmatpush1.msra.mxu0 %v6012
    %6075 = vmatprep.subr.mxu0 0.0
    %6076 = vmatpush1.msra.mxu0 %v6013
    %6077 = vmatprep.subr.mxu0 0.0
    %6078 = vmatpush1.msra.mxu0 %v6014
    %6079 = vmatprep.subr.mxu0 0.0
    %6080 = vmatpush1.msra.mxu0 %v6015
    %6081 = vmatprep.subr.mxu0 0.0
    %6082 = vmatpush1.msra.mxu0 %v6016
    %6083 = vmatprep.subr.mxu0 0.0
    %6084 = vmatpush1.msra.mxu0 %v6017
    %6085 = vmatprep.subr.mxu0 0.0
    %6086 = vmatpush1.msra.mxu0 %v6018
    %6087 = vmatprep.subr.mxu0 0.0
    %6088 = vmatpush1.msra.mxu0 %v6019
    %6089 = vmatprep.subr.mxu0 0.0
    %6090 = vmatpush1.msra.mxu0 %v6020
    %6091 = vmatprep.subr.mxu0 0.0
    %6092 = vmatpush1.msra.mxu0 %v6021
    %6093 = vmatprep.subr.mxu0 0.0
    %6094 = vmatpush1.msra.mxu0 %v6022
    %6095 = vmatprep.subr.mxu0 0.0
    %6096 = vmatpush1.msra.mxu0 %v6023
    %6097 = vmatprep.subr.mxu0 0.0
    %6098 = vmatpush1.msra.mxu0 %v6024
    %6099 = vmatprep.subr.mxu0 0.0
    %6100 = vmatpush1.msra.mxu0 %v6025
    %6101 = vmatprep.subr.mxu0 0.0
    %6102 = vmatpush1.msra.mxu0 %v6026
    %6103 = vmatprep.subr.mxu0 0.0
    %6104 = vmatpush1.msra.mxu0 %v6027
    %6105 = vmatprep.subr.mxu0 0.0
    %6106 = vmatpush1.msra.mxu0 %v6028
    %6107 = vmatprep.subr.mxu0 0.0
    %6108 = vmatpush1.msra.mxu0 %v6029
    %6109 = vmatprep.subr.mxu0 0.0
    %6110 = vmatpush1.msra.mxu0 %v6030
    %6111 = vmatprep.subr.mxu0 0.0
    %6112 = vmatpush1.msra.mxu0 %v6031
    %6113 = vmatprep.subr.mxu0 0.0
    %6114 = vmatpush1.msra.mxu0 %v6032
    %6115 = vmatprep.subr.mxu0 0.0
    %6116 = vmatpush1.msra.mxu0 %v6033
    %6117 = vmatprep.subr.mxu0 0.0
    %6118 = vmatpush1.msra.mxu0 %v6034
    %6119 = vmatprep.subr.mxu0 0.0
    %6120 = vmatpush1.msra.mxu0 %v6035
    %6121 = vmatprep.subr.mxu0 0.0
    %6122 = vmatpush1.msra.mxu0 %v6036
    %6123 = vmatprep.subr.mxu0 0.0
    %6124 = vmatpush1.msra.mxu0 %v6037
    %6125 = vmatprep.subr.mxu0 0.0
    %6126 = vmatpush1.msra.mxu0 %v6038
    %6127 = vmatprep.subr.mxu0 0.0
    %6128 = vmatpush1.msra.mxu0 %v6039
    %6129 = vmatprep.subr.mxu0 0.0
    %6130 = vmatpush1.msra.mxu0 %v6040
    %6131 = vmatprep.mubr.f32.mxu0 %v6046
    %6132 = vmatmul.mubr.f32.gmra.mrb[0].mxu0 %v6043
    %v6133 = vpop.f32.mrb[0].mxu0
    %v6134 = vadd.f32 0.0, %v6133
    %v6135 = vpop.f32.mrb[0].mxu0
    %6136 = vmatprep.mubr.f32.mxu0 %v6050
    %6137 = vmatmul.mubr.f32.gmra.mrb[0].mxu0 %v6048
    %v6138 = vpop.f32.mrb[0].mxu0
    %v6139 = vadd.f32 0.0, %v6138
    %v6140 = vpop.f32.mrb[0].mxu0
    %6141 = vmatprep.mubr.f32.mxu0 %v6054
    %6142 = vmatmul.mubr.f32.gmra.mrb[0].mxu0 %v6052
    %v6143 = vpop.f32.mrb[0].mxu0
    %v6144 = vadd.f32 0.0, %v6143
    %v6145 = vpop.f32.mrb[0].mxu0
    %6146 = vmatprep.mubr.f32.mxu0 %v6058
    %6147 = vmatmul.mubr.f32.gmra.mrb[0].mxu0 %v6056
    %v6148 = vpop.f32.mrb[0].mxu0
    %v6149 = vadd.f32 0.0, %v6148
    %v6150 = vpop.f32.mrb[0].mxu0
    %6151 = vdwg.mxu0
    %v6152 = vadd.f32 %v6004, %v6134
    %v6153 = vadd.f32 %v6005, %v6139
    %v6154 = vadd.f32 %v6006, %v6144
    %v6155 = vadd.f32 %v6007, %v6149
    %v6156 = vld [vmem:[%s14] sm:$0x1]
    %v6158 = vlaneseq
    %v6159 = vshrl.u32 %v6158, 7
    %v6160 = vsub.s32 0, %v6159
    %v6161 = vrot.slane %v6156, %v6160
    %v6163 = vadd.f32 %v6152, %v6161
    %v6164 = vadd.f32 %v6153, %v6161
    %v6165 = vadd.f32 %v6154, %v6161
    %v6166 = vadd.f32 %v6155, %v6161
    %v6167 = vtanh.pop %v6163
    %v6168 = vtanh.pop %v6164
    %v6169 = vtanh.pop %v6165
    %v6170 = vtanh.pop %v6166
    %6171 = vst.msk [vmem:[#allocation6] sm:$0xff] %vm74, %v6167
    %6172 = vst.msk [vmem:[#allocation6 + $0x8] sm:$0xff] %vm74, %v6168
    %6173 = vst.msk [vmem:[#allocation6 + $0x10] sm:$0xff] %vm74, %v6169
    %6174 = vst.msk [vmem:[#allocation6 + $0x18] sm:$0xff] %vm74, %v6170
    %6179 = vrot.lane.b32.xlu0 %v6167, 96
    %v6180 = vpop.permute.xlu0 %6179
    %6181 = vrot.lane.b32.xlu0 %v6168, 96
    %v6182 = vpop.permute.xlu0 %6181
    %6183 = vrot.lane.b32.xlu0 %v6169, 96
    %v6184 = vpop.permute.xlu0 %6183
    %6185 = vrot.lane.b32.xlu0 %v6170, 96
    %v6186 = vpop.permute.xlu0 %6185
    %s6191 = scalar_lea.vmem [#allocation6], 32
    %6192 = vst.msk [vmem:[%s6191] sm:$0xff] %vm74, %v6180
    %6193 = vst.msk [vmem:[%s6191 + $0x8] sm:$0xff] %vm74, %v6182
    %6194 = vst.msk [vmem:[%s6191 + $0x10] sm:$0xff] %vm74, %v6184
    %6195 = vst.msk [vmem:[%s6191 + $0x18] sm:$0xff] %vm74, %v6186
    %6196 = vrot.lane.b32.xlu0 %v6167, 64
    %v6197 = vpop.permute.xlu0 %6196
    %6198 = vrot.lane.b32.xlu0 %v6168, 64
    %v6199 = vpop.permute.xlu0 %6198
    %6200 = vrot.lane.b32.xlu0 %v6169, 64
    %v6201 = vpop.permute.xlu0 %6200
    %6202 = vrot.lane.b32.xlu0 %v6170, 64
    %v6203 = vpop.permute.xlu0 %6202
    %s6208 = scalar_lea.vmem [#allocation6], 64
    %6209 = vst.msk [vmem:[%s6208] sm:$0xff] %vm74, %v6197
    %6210 = vst.msk [vmem:[%s6208 + $0x8] sm:$0xff] %vm74, %v6199
    %6211 = vst.msk [vmem:[%s6208 + $0x10] sm:$0xff] %vm74, %v6201
    %6212 = vst.msk [vmem:[%s6208 + $0x18] sm:$0xff] %vm74, %v6203
    %v6213 = vld [vmem:[%s13] sm:$0xff]
    %v6214 = vld [vmem:[%s13 + $0x8] sm:$0xff]
    %v6215 = vld [vmem:[%s13 + $0x10] sm:$0xff]
    %v6216 = vld [vmem:[%s13 + $0x18] sm:$0xff]
    %v6217 = vld [vmem:[%s13 + $0x20] sm:$0xff]
    %v6218 = vld [vmem:[%s13 + $0x28] sm:$0xff]
    %v6219 = vld [vmem:[%s13 + $0x30] sm:$0xff]
    %v6220 = vld [vmem:[%s13 + $0x38] sm:$0xff]
    %v6221 = vld [vmem:[%s13 + $0x40] sm:$0xff]
    %v6222 = vld [vmem:[%s13 + $0x48] sm:$0xff]
    %v6223 = vld [vmem:[%s13 + $0x50] sm:$0xff]
    %v6224 = vld [vmem:[%s13 + $0x58] sm:$0xff]
    %v6225 = vld [vmem:[%s13 + $0x60] sm:$0xff]
    %v6226 = vld [vmem:[%s13 + $0x68] sm:$0xff]
    %v6227 = vld [vmem:[%s13 + $0x70] sm:$0xff]
    %v6228 = vld [vmem:[%s13 + $0x78] sm:$0xff]
    %v6229 = vld [vmem:[%s13 + $0x80] sm:$0xff]
    %v6230 = vld [vmem:[%s13 + $0x88] sm:$0xff]
    %v6231 = vld [vmem:[%s13 + $0x90] sm:$0xff]
    %v6232 = vld [vmem:[%s13 + $0x98] sm:$0xff]
    %v6233 = vld [vmem:[%s13 + $0xa0] sm:$0xff]
    %v6234 = vld [vmem:[%s13 + $0xa8] sm:$0xff]
    %v6235 = vld [vmem:[%s13 + $0xb0] sm:$0xff]
    %v6236 = vld [vmem:[%s13 + $0xb8] sm:$0xff]
    %v6237 = vld [vmem:[%s13 + $0xc0] sm:$0xff]
    %v6238 = vld [vmem:[%s13 + $0xc8] sm:$0xff]
    %v6239 = vld [vmem:[%s13 + $0xd0] sm:$0xff]
    %v6240 = vld [vmem:[%s13 + $0xd8] sm:$0xff]
    %v6241 = vld [vmem:[%s13 + $0xe0] sm:$0xff]
    %v6242 = vld [vmem:[%s13 + $0xe8] sm:$0xff]
    %v6243 = vld [vmem:[%s13 + $0xf0] sm:$0xff]
    %v6244 = vld [vmem:[%s13 + $0xf8] sm:$0xff]
    %v6245 = vld [vmem:[%s5472] sm:$0xff]
    %v6246 = vld [vmem:[%s5472 + $0x8] sm:$0xff]
    %v6247 = vld [vmem:[%s5472 + $0x10] sm:$0xff]
    %v6248 = vld [vmem:[%s5472 + $0x18] sm:$0xff]
    %v6249 = vld [vmem:[%s5472 + $0x20] sm:$0xff]
    %v6250 = vld [vmem:[%s5472 + $0x28] sm:$0xff]
    %v6251 = vld [vmem:[%s5472 + $0x30] sm:$0xff]
    %v6252 = vld [vmem:[%s5472 + $0x38] sm:$0xff]
    %v6253 = vld [vmem:[%s5472 + $0x40] sm:$0xff]
    %v6254 = vld [vmem:[%s5472 + $0x48] sm:$0xff]
    %v6255 = vld [vmem:[%s5472 + $0x50] sm:$0xff]
    %v6256 = vld [vmem:[%s5472 + $0x58] sm:$0xff]
    %v6257 = vld [vmem:[%s5472 + $0x60] sm:$0xff]
    %v6258 = vld [vmem:[%s5472 + $0x68] sm:$0xff]
    %v6259 = vld [vmem:[%s5472 + $0x70] sm:$0xff]
    %v6260 = vld [vmem:[%s5472 + $0x78] sm:$0xff]
    %v6261 = vld [vmem:[%s5472 + $0x80] sm:$0xff]
    %v6262 = vld [vmem:[%s5472 + $0x88] sm:$0xff]
    %v6263 = vld [vmem:[%s5472 + $0x90] sm:$0xff]
    %v6264 = vld [vmem:[%s5472 + $0x98] sm:$0xff]
    %v6265 = vld [vmem:[%s5472 + $0xa0] sm:$0xff]
    %v6266 = vld [vmem:[%s5472 + $0xa8] sm:$0xff]
    %v6267 = vld [vmem:[%s5472 + $0xb0] sm:$0xff]
    %v6268 = vld [vmem:[%s5472 + $0xb8] sm:$0xff]
    %v6269 = vld [vmem:[%s5472 + $0xc0] sm:$0xff]
    %v6270 = vld [vmem:[%s5472 + $0xc8] sm:$0xff]
    %v6271 = vld [vmem:[%s5472 + $0xd0] sm:$0xff]
    %v6272 = vld [vmem:[%s5472 + $0xd8] sm:$0xff]
    %v6273 = vld [vmem:[%s5472 + $0xe0] sm:$0xff]
    %v6274 = vld [vmem:[%s5472 + $0xe8] sm:$0xff]
    %v6275 = vld [vmem:[%s5472 + $0xf0] sm:$0xff]
    %v6276 = vld [vmem:[%s5472 + $0xf8] sm:$0xff]
    %v6287 = vrot.slane %v5412, 1
    %v6288 = vrot.slane %v5418, 1
    %v6289 = vsel %vm1869, %v6287, %v6288
    %v6290 = vrot.slane %v5414, 1
    %v6291 = vrot.slane %v5420, 1
    %v6292 = vsel %vm1869, %v6290, %v6291
    %v6293 = vrot.slane %v5424, 1
    %v6294 = vsel %vm1869, %v6288, %v6293
    %v6295 = vrot.slane %v5426, 1
    %v6296 = vsel %vm1869, %v6291, %v6295
    %v6297 = vrot.slane %v5430, 1
    %v6298 = vsel %vm1869, %v6293, %v6297
    %v6299 = vrot.slane %v5432, 1
    %v6300 = vsel %vm1869, %v6295, %v6299
    %v6301 = vrot.slane %v5436, 1
    %v6302 = vsel %vm1869, %v6297, %v6301
    %v6303 = vrot.slane %v5438, 1
    %v6304 = vsel %vm1869, %v6299, %v6303
    %6313 = vmatprep.subr.mxu0 0.0
    %6314 = vmatpush1.msra.mxu0 %v6245
    %6315 = vmatprep.subr.mxu0 0.0
    %6316 = vmatpush1.msra.mxu0 %v6246
    %6317 = vmatprep.subr.mxu0 0.0
    %6318 = vmatpush1.msra.mxu0 %v6247
    %6319 = vmatprep.subr.mxu0 0.0
    %6320 = vmatpush1.msra.mxu0 %v6248
    %6321 = vmatprep.subr.mxu0 0.0
    %6322 = vmatpush1.msra.mxu0 %v6249
    %6323 = vmatprep.subr.mxu0 0.0
    %6324 = vmatpush1.msra.mxu0 %v6250
    %6325 = vmatprep.subr.mxu0 0.0
    %6326 = vmatpush1.msra.mxu0 %v6251
    %6327 = vmatprep.subr.mxu0 0.0
    %6328 = vmatpush1.msra.mxu0 %v6252
    %6329 = vmatprep.subr.mxu0 0.0
    %6330 = vmatpush1.msra.mxu0 %v6253
    %6331 = vmatprep.subr.mxu0 0.0
    %6332 = vmatpush1.msra.mxu0 %v6254
    %6333 = vmatprep.subr.mxu0 0.0
    %6334 = vmatpush1.msra.mxu0 %v6255
    %6335 = vmatprep.subr.mxu0 0.0
    %6336 = vmatpush1.msra.mxu0 %v6256
    %6337 = vmatprep.subr.mxu0 0.0
    %6338 = vmatpush1.msra.mxu0 %v6257
    %6339 = vmatprep.subr.mxu0 0.0
    %6340 = vmatpush1.msra.mxu0 %v6258
    %6341 = vmatprep.subr.mxu0 0.0
    %6342 = vmatpush1.msra.mxu0 %v6259
    %6343 = vmatprep.subr.mxu0 0.0
    %6344 = vmatpush1.msra.mxu0 %v6260
    %6345 = vmatprep.subr.mxu0 0.0
    %6346 = vmatpush1.msra.mxu0 %v6261
    %6347 = vmatprep.subr.mxu0 0.0
    %6348 = vmatpush1.msra.mxu0 %v6262
    %6349 = vmatprep.subr.mxu0 0.0
    %6350 = vmatpush1.msra.mxu0 %v6263
    %6351 = vmatprep.subr.mxu0 0.0
    %6352 = vmatpush1.msra.mxu0 %v6264
    %6353 = vmatprep.subr.mxu0 0.0
    %6354 = vmatpush1.msra.mxu0 %v6265
    %6355 = vmatprep.subr.mxu0 0.0
    %6356 = vmatpush1.msra.mxu0 %v6266
    %6357 = vmatprep.subr.mxu0 0.0
    %6358 = vmatpush1.msra.mxu0 %v6267
    %6359 = vmatprep.subr.mxu0 0.0
    %6360 = vmatpush1.msra.mxu0 %v6268
    %6361 = vmatprep.subr.mxu0 0.0
    %6362 = vmatpush1.msra.mxu0 %v6269
    %6363 = vmatprep.subr.mxu0 0.0
    %6364 = vmatpush1.msra.mxu0 %v6270
    %6365 = vmatprep.subr.mxu0 0.0
    %6366 = vmatpush1.msra.mxu0 %v6271
    %6367 = vmatprep.subr.mxu0 0.0
    %6368 = vmatpush1.msra.mxu0 %v6272
    %6369 = vmatprep.subr.mxu0 0.0
    %6370 = vmatpush1.msra.mxu0 %v6273
    %6371 = vmatprep.subr.mxu0 0.0
    %6372 = vmatpush1.msra.mxu0 %v6274
    %6373 = vmatprep.subr.mxu0 0.0
    %6374 = vmatpush1.msra.mxu0 %v6275
    %6375 = vmatprep.subr.mxu0 0.0
    %6376 = vmatpush1.msra.mxu0 %v6276
    %6377 = vmatprep.mubr.f32.mxu0 %v6292
    %6378 = vmatmul.mubr.f32.gmra.mrb[0].mxu0 %v6289
    %v6379 = vpop.f32.mrb[0].mxu0
    %v6380 = vadd.f32 0.0, %v6379
    %v6381 = vpop.f32.mrb[0].mxu0
    %6382 = vmatprep.mubr.f32.mxu0 %v6296
    %6383 = vmatmul.mubr.f32.gmra.mrb[0].mxu0 %v6294
    %v6384 = vpop.f32.mrb[0].mxu0
    %v6385 = vadd.f32 0.0, %v6384
    %v6386 = vpop.f32.mrb[0].mxu0
    %6387 = vmatprep.mubr.f32.mxu0 %v6300
    %6388 = vmatmul.mubr.f32.gmra.mrb[0].mxu0 %v6298
    %v6389 = vpop.f32.mrb[0].mxu0
    %v6390 = vadd.f32 0.0, %v6389
    %v6391 = vpop.f32.mrb[0].mxu0
    %6392 = vmatprep.mubr.f32.mxu0 %v6304
    %6393 = vmatmul.mubr.f32.gmra.mrb[0].mxu0 %v6302
    %v6394 = vpop.f32.mrb[0].mxu0
    %v6395 = vadd.f32 0.0, %v6394
    %v6396 = vpop.f32.mrb[0].mxu0
    %6397 = vdwg.mxu0
    %6398 = vmatprep.subr.mxu0 0.0
    %6399 = vmatpush1.msra.mxu0 %v6213
    %6400 = vmatprep.subr.mxu0 0.0
    %6401 = vmatpush1.msra.mxu0 %v6214
    %6402 = vmatprep.subr.mxu0 0.0
    %6403 = vmatpush1.msra.mxu0 %v6215
    %6404 = vmatprep.subr.mxu0 0.0
    %6405 = vmatpush1.msra.mxu0 %v6216
    %6406 = vmatprep.subr.mxu0 0.0
    %6407 = vmatpush1.msra.mxu0 %v6217
    %6408 = vmatprep.subr.mxu0 0.0
    %6409 = vmatpush1.msra.mxu0 %v6218
    %6410 = vmatprep.subr.mxu0 0.0
    %6411 = vmatpush1.msra.mxu0 %v6219
    %6412 = vmatprep.subr.mxu0 0.0
    %6413 = vmatpush1.msra.mxu0 %v6220
    %6414 = vmatprep.subr.mxu0 0.0
    %6415 = vmatpush1.msra.mxu0 %v6221
    %6416 = vmatprep.subr.mxu0 0.0
    %6417 = vmatpush1.msra.mxu0 %v6222
    %6418 = vmatprep.subr.mxu0 0.0
    %6419 = vmatpush1.msra.mxu0 %v6223
    %6420 = vmatprep.subr.mxu0 0.0
    %6421 = vmatpush1.msra.mxu0 %v6224
    %6422 = vmatprep.subr.mxu0 0.0
    %6423 = vmatpush1.msra.mxu0 %v6225
    %6424 = vmatprep.subr.mxu0 0.0
    %6425 = vmatpush1.msra.mxu0 %v6226
    %6426 = vmatprep.subr.mxu0 0.0
    %6427 = vmatpush1.msra.mxu0 %v6227
    %6428 = vmatprep.subr.mxu0 0.0
    %6429 = vmatpush1.msra.mxu0 %v6228
    %6430 = vmatprep.subr.mxu0 0.0
    %6431 = vmatpush1.msra.mxu0 %v6229
    %6432 = vmatprep.subr.mxu0 0.0
    %6433 = vmatpush1.msra.mxu0 %v6230
    %6434 = vmatprep.subr.mxu0 0.0
    %6435 = vmatpush1.msra.mxu0 %v6231
    %6436 = vmatprep.subr.mxu0 0.0
    %6437 = vmatpush1.msra.mxu0 %v6232
    %6438 = vmatprep.subr.mxu0 0.0
    %6439 = vmatpush1.msra.mxu0 %v6233
    %6440 = vmatprep.subr.mxu0 0.0
    %6441 = vmatpush1.msra.mxu0 %v6234
    %6442 = vmatprep.subr.mxu0 0.0
    %6443 = vmatpush1.msra.mxu0 %v6235
    %6444 = vmatprep.subr.mxu0 0.0
    %6445 = vmatpush1.msra.mxu0 %v6236
    %6446 = vmatprep.subr.mxu0 0.0
    %6447 = vmatpush1.msra.mxu0 %v6237
    %6448 = vmatprep.subr.mxu0 0.0
    %6449 = vmatpush1.msra.mxu0 %v6238
    %6450 = vmatprep.subr.mxu0 0.0
    %6451 = vmatpush1.msra.mxu0 %v6239
    %6452 = vmatprep.subr.mxu0 0.0
    %6453 = vmatpush1.msra.mxu0 %v6240
    %6454 = vmatprep.subr.mxu0 0.0
    %6455 = vmatpush1.msra.mxu0 %v6241
    %6456 = vmatprep.subr.mxu0 0.0
    %6457 = vmatpush1.msra.mxu0 %v6242
    %6458 = vmatprep.subr.mxu0 0.0
    %6459 = vmatpush1.msra.mxu0 %v6243
    %6460 = vmatprep.subr.mxu0 0.0
    %6461 = vmatpush1.msra.mxu0 %v6244
    %6462 = vmatprep.mubr.f32.mxu0 %v5414
    %6463 = vmatmul.mubr.f32.gmra.mrb[0].mxu0 %v5412
    %v6464 = vpop.f32.mrb[0].mxu0
    %v6465 = vadd.f32 %v6380, %v6464
    %v6466 = vpop.f32.mrb[0].mxu0
    %6467 = vmatprep.mubr.f32.mxu0 %v5420
    %6468 = vmatmul.mubr.f32.gmra.mrb[0].mxu0 %v5418
    %v6469 = vpop.f32.mrb[0].mxu0
    %v6470 = vadd.f32 %v6385, %v6469
    %v6471 = vpop.f32.mrb[0].mxu0
    %6472 = vmatprep.mubr.f32.mxu0 %v5426
    %6473 = vmatmul.mubr.f32.gmra.mrb[0].mxu0 %v5424
    %v6474 = vpop.f32.mrb[0].mxu0
    %v6475 = vadd.f32 %v6390, %v6474
    %v6476 = vpop.f32.mrb[0].mxu0
    %6477 = vmatprep.mubr.f32.mxu0 %v5432
    %6478 = vmatmul.mubr.f32.gmra.mrb[0].mxu0 %v5430
    %v6479 = vpop.f32.mrb[0].mxu0
    %v6480 = vadd.f32 %v6395, %v6479
    %v6481 = vpop.f32.mrb[0].mxu0
    %6482 = vdwg.mxu0
    %v6483 = vld [vmem:[%s5711] sm:$0xff]
    %v6484 = vld [vmem:[%s5711 + $0x8] sm:$0xff]
    %v6485 = vld [vmem:[%s5711 + $0x10] sm:$0xff]
    %v6486 = vld [vmem:[%s5711 + $0x18] sm:$0xff]
    %v6487 = vld [vmem:[%s5711 + $0x20] sm:$0xff]
    %v6488 = vld [vmem:[%s5711 + $0x28] sm:$0xff]
    %v6489 = vld [vmem:[%s5711 + $0x30] sm:$0xff]
    %v6490 = vld [vmem:[%s5711 + $0x38] sm:$0xff]
    %v6491 = vld [vmem:[%s5711 + $0x40] sm:$0xff]
    %v6492 = vld [vmem:[%s5711 + $0x48] sm:$0xff]
    %v6493 = vld [vmem:[%s5711 + $0x50] sm:$0xff]
    %v6494 = vld [vmem:[%s5711 + $0x58] sm:$0xff]
    %v6495 = vld [vmem:[%s5711 + $0x60] sm:$0xff]
    %v6496 = vld [vmem:[%s5711 + $0x68] sm:$0xff]
    %v6497 = vld [vmem:[%s5711 + $0x70] sm:$0xff]
    %v6498 = vld [vmem:[%s5711 + $0x78] sm:$0xff]
    %v6499 = vld [vmem:[%s5711 + $0x80] sm:$0xff]
    %v6500 = vld [vmem:[%s5711 + $0x88] sm:$0xff]
    %v6501 = vld [vmem:[%s5711 + $0x90] sm:$0xff]
    %v6502 = vld [vmem:[%s5711 + $0x98] sm:$0xff]
    %v6503 = vld [vmem:[%s5711 + $0xa0] sm:$0xff]
    %v6504 = vld [vmem:[%s5711 + $0xa8] sm:$0xff]
    %v6505 = vld [vmem:[%s5711 + $0xb0] sm:$0xff]
    %v6506 = vld [vmem:[%s5711 + $0xb8] sm:$0xff]
    %v6507 = vld [vmem:[%s5711 + $0xc0] sm:$0xff]
    %v6508 = vld [vmem:[%s5711 + $0xc8] sm:$0xff]
    %v6509 = vld [vmem:[%s5711 + $0xd0] sm:$0xff]
    %v6510 = vld [vmem:[%s5711 + $0xd8] sm:$0xff]
    %v6511 = vld [vmem:[%s5711 + $0xe0] sm:$0xff]
    %v6512 = vld [vmem:[%s5711 + $0xe8] sm:$0xff]
    %v6513 = vld [vmem:[%s5711 + $0xf0] sm:$0xff]
    %v6514 = vld [vmem:[%s5711 + $0xf8] sm:$0xff]
    %v6515 = vrot.slane %v5412, 2
    %v6516 = vrot.slane %v5418, 2
    %v6517 = vsel %vm2031, %v6515, %v6516
    %v6518 = vrot.slane %v5414, 2
    %v6519 = vrot.slane %v5420, 2
    %v6520 = vsel %vm2031, %v6518, %v6519
    %v6521 = vrot.slane %v5424, 2
    %v6522 = vsel %vm2031, %v6516, %v6521
    %v6523 = vrot.slane %v5426, 2
    %v6524 = vsel %vm2031, %v6519, %v6523
    %v6525 = vrot.slane %v5430, 2
    %v6526 = vsel %vm2031, %v6521, %v6525
    %v6527 = vrot.slane %v5432, 2
    %v6528 = vsel %vm2031, %v6523, %v6527
    %v6529 = vrot.slane %v5436, 2
    %v6530 = vsel %vm2031, %v6525, %v6529
    %v6531 = vrot.slane %v5438, 2
    %v6532 = vsel %vm2031, %v6527, %v6531
    %6541 = vmatprep.subr.mxu0 0.0
    %6542 = vmatpush1.msra.mxu0 %v6483
    %6543 = vmatprep.subr.mxu0 0.0
    %6544 = vmatpush1.msra.mxu0 %v6484
    %6545 = vmatprep.subr.mxu0 0.0
    %6546 = vmatpush1.msra.mxu0 %v6485
    %6547 = vmatprep.subr.mxu0 0.0
    %6548 = vmatpush1.msra.mxu0 %v6486
    %6549 = vmatprep.subr.mxu0 0.0
    %6550 = vmatpush1.msra.mxu0 %v6487
    %6551 = vmatprep.subr.mxu0 0.0
    %6552 = vmatpush1.msra.mxu0 %v6488
    %6553 = vmatprep.subr.mxu0 0.0
    %6554 = vmatpush1.msra.mxu0 %v6489
    %6555 = vmatprep.subr.mxu0 0.0
    %6556 = vmatpush1.msra.mxu0 %v6490
    %6557 = vmatprep.subr.mxu0 0.0
    %6558 = vmatpush1.msra.mxu0 %v6491
    %6559 = vmatprep.subr.mxu0 0.0
    %6560 = vmatpush1.msra.mxu0 %v6492
    %6561 = vmatprep.subr.mxu0 0.0
    %6562 = vmatpush1.msra.mxu0 %v6493
    %6563 = vmatprep.subr.mxu0 0.0
    %6564 = vmatpush1.msra.mxu0 %v6494
    %6565 = vmatprep.subr.mxu0 0.0
    %6566 = vmatpush1.msra.mxu0 %v6495
    %6567 = vmatprep.subr.mxu0 0.0
    %6568 = vmatpush1.msra.mxu0 %v6496
    %6569 = vmatprep.subr.mxu0 0.0
    %6570 = vmatpush1.msra.mxu0 %v6497
    %6571 = vmatprep.subr.mxu0 0.0
    %6572 = vmatpush1.msra.mxu0 %v6498
    %6573 = vmatprep.subr.mxu0 0.0
    %6574 = vmatpush1.msra.mxu0 %v6499
    %6575 = vmatprep.subr.mxu0 0.0
    %6576 = vmatpush1.msra.mxu0 %v6500
    %6577 = vmatprep.subr.mxu0 0.0
    %6578 = vmatpush1.msra.mxu0 %v6501
    %6579 = vmatprep.subr.mxu0 0.0
    %6580 = vmatpush1.msra.mxu0 %v6502
    %6581 = vmatprep.subr.mxu0 0.0
    %6582 = vmatpush1.msra.mxu0 %v6503
    %6583 = vmatprep.subr.mxu0 0.0
    %6584 = vmatpush1.msra.mxu0 %v6504
    %6585 = vmatprep.subr.mxu0 0.0
    %6586 = vmatpush1.msra.mxu0 %v6505
    %6587 = vmatprep.subr.mxu0 0.0
    %6588 = vmatpush1.msra.mxu0 %v6506
    %6589 = vmatprep.subr.mxu0 0.0
    %6590 = vmatpush1.msra.mxu0 %v6507
    %6591 = vmatprep.subr.mxu0 0.0
    %6592 = vmatpush1.msra.mxu0 %v6508
    %6593 = vmatprep.subr.mxu0 0.0
    %6594 = vmatpush1.msra.mxu0 %v6509
    %6595 = vmatprep.subr.mxu0 0.0
    %6596 = vmatpush1.msra.mxu0 %v6510
    %6597 = vmatprep.subr.mxu0 0.0
    %6598 = vmatpush1.msra.mxu0 %v6511
    %6599 = vmatprep.subr.mxu0 0.0
    %6600 = vmatpush1.msra.mxu0 %v6512
    %6601 = vmatprep.subr.mxu0 0.0
    %6602 = vmatpush1.msra.mxu0 %v6513
    %6603 = vmatprep.subr.mxu0 0.0
    %6604 = vmatpush1.msra.mxu0 %v6514
    %6605 = vmatprep.mubr.f32.mxu0 %v6520
    %6606 = vmatmul.mubr.f32.gmra.mrb[0].mxu0 %v6517
    %v6607 = vpop.f32.mrb[0].mxu0
    %v6608 = vadd.f32 0.0, %v6607
    %v6609 = vpop.f32.mrb[0].mxu0
    %6610 = vmatprep.mubr.f32.mxu0 %v6524
    %6611 = vmatmul.mubr.f32.gmra.mrb[0].mxu0 %v6522
    %v6612 = vpop.f32.mrb[0].mxu0
    %v6613 = vadd.f32 0.0, %v6612
    %v6614 = vpop.f32.mrb[0].mxu0
    %6615 = vmatprep.mubr.f32.mxu0 %v6528
    %6616 = vmatmul.mubr.f32.gmra.mrb[0].mxu0 %v6526
    %v6617 = vpop.f32.mrb[0].mxu0
    %v6618 = vadd.f32 0.0, %v6617
    %v6619 = vpop.f32.mrb[0].mxu0
    %6620 = vmatprep.mubr.f32.mxu0 %v6532
    %6621 = vmatmul.mubr.f32.gmra.mrb[0].mxu0 %v6530
    %v6622 = vpop.f32.mrb[0].mxu0
    %v6623 = vadd.f32 0.0, %v6622
    %v6624 = vpop.f32.mrb[0].mxu0
    %6625 = vdwg.mxu0
    %v6626 = vadd.f32 %v6465, %v6608
    %v6627 = vadd.f32 %v6470, %v6613
    %v6628 = vadd.f32 %v6475, %v6618
    %v6629 = vadd.f32 %v6480, %v6623
    %v6630 = vld [vmem:[%s5859] sm:$0xff]
    %v6631 = vld [vmem:[%s5859 + $0x8] sm:$0xff]
    %v6632 = vld [vmem:[%s5859 + $0x10] sm:$0xff]
    %v6633 = vld [vmem:[%s5859 + $0x18] sm:$0xff]
    %v6634 = vld [vmem:[%s5859 + $0x20] sm:$0xff]
    %v6635 = vld [vmem:[%s5859 + $0x28] sm:$0xff]
    %v6636 = vld [vmem:[%s5859 + $0x30] sm:$0xff]
    %v6637 = vld [vmem:[%s5859 + $0x38] sm:$0xff]
    %v6638 = vld [vmem:[%s5859 + $0x40] sm:$0xff]
    %v6639 = vld [vmem:[%s5859 + $0x48] sm:$0xff]
    %v6640 = vld [vmem:[%s5859 + $0x50] sm:$0xff]
    %v6641 = vld [vmem:[%s5859 + $0x58] sm:$0xff]
    %v6642 = vld [vmem:[%s5859 + $0x60] sm:$0xff]
    %v6643 = vld [vmem:[%s5859 + $0x68] sm:$0xff]
    %v6644 = vld [vmem:[%s5859 + $0x70] sm:$0xff]
    %v6645 = vld [vmem:[%s5859 + $0x78] sm:$0xff]
    %v6646 = vld [vmem:[%s5859 + $0x80] sm:$0xff]
    %v6647 = vld [vmem:[%s5859 + $0x88] sm:$0xff]
    %v6648 = vld [vmem:[%s5859 + $0x90] sm:$0xff]
    %v6649 = vld [vmem:[%s5859 + $0x98] sm:$0xff]
    %v6650 = vld [vmem:[%s5859 + $0xa0] sm:$0xff]
    %v6651 = vld [vmem:[%s5859 + $0xa8] sm:$0xff]
    %v6652 = vld [vmem:[%s5859 + $0xb0] sm:$0xff]
    %v6653 = vld [vmem:[%s5859 + $0xb8] sm:$0xff]
    %v6654 = vld [vmem:[%s5859 + $0xc0] sm:$0xff]
    %v6655 = vld [vmem:[%s5859 + $0xc8] sm:$0xff]
    %v6656 = vld [vmem:[%s5859 + $0xd0] sm:$0xff]
    %v6657 = vld [vmem:[%s5859 + $0xd8] sm:$0xff]
    %v6658 = vld [vmem:[%s5859 + $0xe0] sm:$0xff]
    %v6659 = vld [vmem:[%s5859 + $0xe8] sm:$0xff]
    %v6660 = vld [vmem:[%s5859 + $0xf0] sm:$0xff]
    %v6661 = vld [vmem:[%s5859 + $0xf8] sm:$0xff]
    %v6662 = vrot.slane %v5412, 3
    %v6663 = vrot.slane %v5418, 3
    %v6664 = vsel %vm5892, %v6662, %v6663
    %v6665 = vrot.slane %v5414, 3
    %v6666 = vrot.slane %v5420, 3
    %v6667 = vsel %vm5892, %v6665, %v6666
    %v6668 = vrot.slane %v5424, 3
    %v6669 = vsel %vm5892, %v6663, %v6668
    %v6670 = vrot.slane %v5426, 3
    %v6671 = vsel %vm5892, %v6666, %v6670
    %v6672 = vrot.slane %v5430, 3
    %v6673 = vsel %vm5892, %v6668, %v6672
    %v6674 = vrot.slane %v5432, 3
    %v6675 = vsel %vm5892, %v6670, %v6674
    %v6676 = vrot.slane %v5436, 3
    %v6677 = vsel %vm5892, %v6672, %v6676
    %v6678 = vrot.slane %v5438, 3
    %v6679 = vsel %vm5892, %v6674, %v6678
    %6688 = vmatprep.subr.mxu0 0.0
    %6689 = vmatpush1.msra.mxu0 %v6630
    %6690 = vmatprep.subr.mxu0 0.0
    %6691 = vmatpush1.msra.mxu0 %v6631
    %6692 = vmatprep.subr.mxu0 0.0
    %6693 = vmatpush1.msra.mxu0 %v6632
    %6694 = vmatprep.subr.mxu0 0.0
    %6695 = vmatpush1.msra.mxu0 %v6633
    %6696 = vmatprep.subr.mxu0 0.0
    %6697 = vmatpush1.msra.mxu0 %v6634
    %6698 = vmatprep.subr.mxu0 0.0
    %6699 = vmatpush1.msra.mxu0 %v6635
    %6700 = vmatprep.subr.mxu0 0.0
    %6701 = vmatpush1.msra.mxu0 %v6636
    %6702 = vmatprep.subr.mxu0 0.0
    %6703 = vmatpush1.msra.mxu0 %v6637
    %6704 = vmatprep.subr.mxu0 0.0
    %6705 = vmatpush1.msra.mxu0 %v6638
    %6706 = vmatprep.subr.mxu0 0.0
    %6707 = vmatpush1.msra.mxu0 %v6639
    %6708 = vmatprep.subr.mxu0 0.0
    %6709 = vmatpush1.msra.mxu0 %v6640
    %6710 = vmatprep.subr.mxu0 0.0
    %6711 = vmatpush1.msra.mxu0 %v6641
    %6712 = vmatprep.subr.mxu0 0.0
    %6713 = vmatpush1.msra.mxu0 %v6642
    %6714 = vmatprep.subr.mxu0 0.0
    %6715 = vmatpush1.msra.mxu0 %v6643
    %6716 = vmatprep.subr.mxu0 0.0
    %6717 = vmatpush1.msra.mxu0 %v6644
    %6718 = vmatprep.subr.mxu0 0.0
    %6719 = vmatpush1.msra.mxu0 %v6645
    %6720 = vmatprep.subr.mxu0 0.0
    %6721 = vmatpush1.msra.mxu0 %v6646
    %6722 = vmatprep.subr.mxu0 0.0
    %6723 = vmatpush1.msra.mxu0 %v6647
    %6724 = vmatprep.subr.mxu0 0.0
    %6725 = vmatpush1.msra.mxu0 %v6648
    %6726 = vmatprep.subr.mxu0 0.0
    %6727 = vmatpush1.msra.mxu0 %v6649
    %6728 = vmatprep.subr.mxu0 0.0
    %6729 = vmatpush1.msra.mxu0 %v6650
    %6730 = vmatprep.subr.mxu0 0.0
    %6731 = vmatpush1.msra.mxu0 %v6651
    %6732 = vmatprep.subr.mxu0 0.0
    %6733 = vmatpush1.msra.mxu0 %v6652
    %6734 = vmatprep.subr.mxu0 0.0
    %6735 = vmatpush1.msra.mxu0 %v6653
    %6736 = vmatprep.subr.mxu0 0.0
    %6737 = vmatpush1.msra.mxu0 %v6654
    %6738 = vmatprep.subr.mxu0 0.0
    %6739 = vmatpush1.msra.mxu0 %v6655
    %6740 = vmatprep.subr.mxu0 0.0
    %6741 = vmatpush1.msra.mxu0 %v6656
    %6742 = vmatprep.subr.mxu0 0.0
    %6743 = vmatpush1.msra.mxu0 %v6657
    %6744 = vmatprep.subr.mxu0 0.0
    %6745 = vmatpush1.msra.mxu0 %v6658
    %6746 = vmatprep.subr.mxu0 0.0
    %6747 = vmatpush1.msra.mxu0 %v6659
    %6748 = vmatprep.subr.mxu0 0.0
    %6749 = vmatpush1.msra.mxu0 %v6660
    %6750 = vmatprep.subr.mxu0 0.0
    %6751 = vmatpush1.msra.mxu0 %v6661
    %6752 = vmatprep.mubr.f32.mxu0 %v6667
    %6753 = vmatmul.mubr.f32.gmra.mrb[0].mxu0 %v6664
    %v6754 = vpop.f32.mrb[0].mxu0
    %v6755 = vadd.f32 0.0, %v6754
    %v6756 = vpop.f32.mrb[0].mxu0
    %6757 = vmatprep.mubr.f32.mxu0 %v6671
    %6758 = vmatmul.mubr.f32.gmra.mrb[0].mxu0 %v6669
    %v6759 = vpop.f32.mrb[0].mxu0
    %v6760 = vadd.f32 0.0, %v6759
    %v6761 = vpop.f32.mrb[0].mxu0
    %6762 = vmatprep.mubr.f32.mxu0 %v6675
    %6763 = vmatmul.mubr.f32.gmra.mrb[0].mxu0 %v6673
    %v6764 = vpop.f32.mrb[0].mxu0
    %v6765 = vadd.f32 0.0, %v6764
    %v6766 = vpop.f32.mrb[0].mxu0
    %6767 = vmatprep.mubr.f32.mxu0 %v6679
    %6768 = vmatmul.mubr.f32.gmra.mrb[0].mxu0 %v6677
    %v6769 = vpop.f32.mrb[0].mxu0
    %v6770 = vadd.f32 0.0, %v6769
    %v6771 = vpop.f32.mrb[0].mxu0
    %6772 = vdwg.mxu0
    %v6773 = vadd.f32 %v6626, %v6755
    %v6774 = vadd.f32 %v6627, %v6760
    %v6775 = vadd.f32 %v6628, %v6765
    %v6776 = vadd.f32 %v6629, %v6770
    %v6777 = vld [vmem:[%s6008] sm:$0xff]
    %v6778 = vld [vmem:[%s6008 + $0x8] sm:$0xff]
    %v6779 = vld [vmem:[%s6008 + $0x10] sm:$0xff]
    %v6780 = vld [vmem:[%s6008 + $0x18] sm:$0xff]
    %v6781 = vld [vmem:[%s6008 + $0x20] sm:$0xff]
    %v6782 = vld [vmem:[%s6008 + $0x28] sm:$0xff]
    %v6783 = vld [vmem:[%s6008 + $0x30] sm:$0xff]
    %v6784 = vld [vmem:[%s6008 + $0x38] sm:$0xff]
    %v6785 = vld [vmem:[%s6008 + $0x40] sm:$0xff]
    %v6786 = vld [vmem:[%s6008 + $0x48] sm:$0xff]
    %v6787 = vld [vmem:[%s6008 + $0x50] sm:$0xff]
    %v6788 = vld [vmem:[%s6008 + $0x58] sm:$0xff]
    %v6789 = vld [vmem:[%s6008 + $0x60] sm:$0xff]
    %v6790 = vld [vmem:[%s6008 + $0x68] sm:$0xff]
    %v6791 = vld [vmem:[%s6008 + $0x70] sm:$0xff]
    %v6792 = vld [vmem:[%s6008 + $0x78] sm:$0xff]
    %v6793 = vld [vmem:[%s6008 + $0x80] sm:$0xff]
    %v6794 = vld [vmem:[%s6008 + $0x88] sm:$0xff]
    %v6795 = vld [vmem:[%s6008 + $0x90] sm:$0xff]
    %v6796 = vld [vmem:[%s6008 + $0x98] sm:$0xff]
    %v6797 = vld [vmem:[%s6008 + $0xa0] sm:$0xff]
    %v6798 = vld [vmem:[%s6008 + $0xa8] sm:$0xff]
    %v6799 = vld [vmem:[%s6008 + $0xb0] sm:$0xff]
    %v6800 = vld [vmem:[%s6008 + $0xb8] sm:$0xff]
    %v6801 = vld [vmem:[%s6008 + $0xc0] sm:$0xff]
    %v6802 = vld [vmem:[%s6008 + $0xc8] sm:$0xff]
    %v6803 = vld [vmem:[%s6008 + $0xd0] sm:$0xff]
    %v6804 = vld [vmem:[%s6008 + $0xd8] sm:$0xff]
    %v6805 = vld [vmem:[%s6008 + $0xe0] sm:$0xff]
    %v6806 = vld [vmem:[%s6008 + $0xe8] sm:$0xff]
    %v6807 = vld [vmem:[%s6008 + $0xf0] sm:$0xff]
    %v6808 = vld [vmem:[%s6008 + $0xf8] sm:$0xff]
    %v6809 = vrot.slane %v5412, 4
    %v6810 = vrot.slane %v5418, 4
    %v6811 = vsel %vm1016, %v6809, %v6810
    %v6812 = vrot.slane %v5414, 4
    %v6813 = vrot.slane %v5420, 4
    %v6814 = vsel %vm1016, %v6812, %v6813
    %v6815 = vrot.slane %v5424, 4
    %v6816 = vsel %vm1016, %v6810, %v6815
    %v6817 = vrot.slane %v5426, 4
    %v6818 = vsel %vm1016, %v6813, %v6817
    %v6819 = vrot.slane %v5430, 4
    %v6820 = vsel %vm1016, %v6815, %v6819
    %v6821 = vrot.slane %v5432, 4
    %v6822 = vsel %vm1016, %v6817, %v6821
    %v6823 = vrot.slane %v5436, 4
    %v6824 = vsel %vm1016, %v6819, %v6823
    %v6825 = vrot.slane %v5438, 4
    %v6826 = vsel %vm1016, %v6821, %v6825
    %6835 = vmatprep.subr.mxu0 0.0
    %6836 = vmatpush1.msra.mxu0 %v6777
    %6837 = vmatprep.subr.mxu0 0.0
    %6838 = vmatpush1.msra.mxu0 %v6778
    %6839 = vmatprep.subr.mxu0 0.0
    %6840 = vmatpush1.msra.mxu0 %v6779
    %6841 = vmatprep.subr.mxu0 0.0
    %6842 = vmatpush1.msra.mxu0 %v6780
    %6843 = vmatprep.subr.mxu0 0.0
    %6844 = vmatpush1.msra.mxu0 %v6781
    %6845 = vmatprep.subr.mxu0 0.0
    %6846 = vmatpush1.msra.mxu0 %v6782
    %6847 = vmatprep.subr.mxu0 0.0
    %6848 = vmatpush1.msra.mxu0 %v6783
    %6849 = vmatprep.subr.mxu0 0.0
    %6850 = vmatpush1.msra.mxu0 %v6784
    %6851 = vmatprep.subr.mxu0 0.0
    %6852 = vmatpush1.msra.mxu0 %v6785
    %6853 = vmatprep.subr.mxu0 0.0
    %6854 = vmatpush1.msra.mxu0 %v6786
    %6855 = vmatprep.subr.mxu0 0.0
    %6856 = vmatpush1.msra.mxu0 %v6787
    %6857 = vmatprep.subr.mxu0 0.0
    %6858 = vmatpush1.msra.mxu0 %v6788
    %6859 = vmatprep.subr.mxu0 0.0
    %6860 = vmatpush1.msra.mxu0 %v6789
    %6861 = vmatprep.subr.mxu0 0.0
    %6862 = vmatpush1.msra.mxu0 %v6790
    %6863 = vmatprep.subr.mxu0 0.0
    %6864 = vmatpush1.msra.mxu0 %v6791
    %6865 = vmatprep.subr.mxu0 0.0
    %6866 = vmatpush1.msra.mxu0 %v6792
    %6867 = vmatprep.subr.mxu0 0.0
    %6868 = vmatpush1.msra.mxu0 %v6793
    %6869 = vmatprep.subr.mxu0 0.0
    %6870 = vmatpush1.msra.mxu0 %v6794
    %6871 = vmatprep.subr.mxu0 0.0
    %6872 = vmatpush1.msra.mxu0 %v6795
    %6873 = vmatprep.subr.mxu0 0.0
    %6874 = vmatpush1.msra.mxu0 %v6796
    %6875 = vmatprep.subr.mxu0 0.0
    %6876 = vmatpush1.msra.mxu0 %v6797
    %6877 = vmatprep.subr.mxu0 0.0
    %6878 = vmatpush1.msra.mxu0 %v6798
    %6879 = vmatprep.subr.mxu0 0.0
    %6880 = vmatpush1.msra.mxu0 %v6799
    %6881 = vmatprep.subr.mxu0 0.0
    %6882 = vmatpush1.msra.mxu0 %v6800
    %6883 = vmatprep.subr.mxu0 0.0
    %6884 = vmatpush1.msra.mxu0 %v6801
    %6885 = vmatprep.subr.mxu0 0.0
    %6886 = vmatpush1.msra.mxu0 %v6802
    %6887 = vmatprep.subr.mxu0 0.0
    %6888 = vmatpush1.msra.mxu0 %v6803
    %6889 = vmatprep.subr.mxu0 0.0
    %6890 = vmatpush1.msra.mxu0 %v6804
    %6891 = vmatprep.subr.mxu0 0.0
    %6892 = vmatpush1.msra.mxu0 %v6805
    %6893 = vmatprep.subr.mxu0 0.0
    %6894 = vmatpush1.msra.mxu0 %v6806
    %6895 = vmatprep.subr.mxu0 0.0
    %6896 = vmatpush1.msra.mxu0 %v6807
    %6897 = vmatprep.subr.mxu0 0.0
    %6898 = vmatpush1.msra.mxu0 %v6808
    %6899 = vmatprep.mubr.f32.mxu0 %v6814
    %6900 = vmatmul.mubr.f32.gmra.mrb[0].mxu0 %v6811
    %v6901 = vpop.f32.mrb[0].mxu0
    %v6902 = vadd.f32 0.0, %v6901
    %v6903 = vpop.f32.mrb[0].mxu0
    %6904 = vmatprep.mubr.f32.mxu0 %v6818
    %6905 = vmatmul.mubr.f32.gmra.mrb[0].mxu0 %v6816
    %v6906 = vpop.f32.mrb[0].mxu0
    %v6907 = vadd.f32 0.0, %v6906
    %v6908 = vpop.f32.mrb[0].mxu0
    %6909 = vmatprep.mubr.f32.mxu0 %v6822
    %6910 = vmatmul.mubr.f32.gmra.mrb[0].mxu0 %v6820
    %v6911 = vpop.f32.mrb[0].mxu0
    %v6912 = vadd.f32 0.0, %v6911
    %v6913 = vpop.f32.mrb[0].mxu0
    %6914 = vmatprep.mubr.f32.mxu0 %v6826
    %6915 = vmatmul.mubr.f32.gmra.mrb[0].mxu0 %v6824
    %v6916 = vpop.f32.mrb[0].mxu0
    %v6917 = vadd.f32 0.0, %v6916
    %v6918 = vpop.f32.mrb[0].mxu0
    %6919 = vdwg.mxu0
    %v6920 = vadd.f32 %v6773, %v6902
    %v6921 = vadd.f32 %v6774, %v6907
    %v6922 = vadd.f32 %v6775, %v6912
    %v6923 = vadd.f32 %v6776, %v6917
    %v6924 = vld [vmem:[%s14] sm:$0x1]
    %v6926 = vlaneseq
    %v6927 = vshrl.u32 %v6926, 7
    %v6928 = vsub.s32 0, %v6927
    %v6929 = vrot.slane %v6924, %v6928
    %v6931 = vadd.f32 %v6920, %v6929
    %v6932 = vadd.f32 %v6921, %v6929
    %v6933 = vadd.f32 %v6922, %v6929
    %v6934 = vadd.f32 %v6923, %v6929
    %v6935 = vtanh.pop %v6931
    %v6936 = vtanh.pop %v6932
    %v6937 = vtanh.pop %v6933
    %v6938 = vtanh.pop %v6934
    %s6939 = scalar_lea.vmem [#allocation6], 96
    %6940 = vst.msk [vmem:[%s6939] sm:$0xff] %vm74, %v6935
    %6941 = vst.msk [vmem:[%s6939 + $0x8] sm:$0xff] %vm74, %v6936
    %6942 = vst.msk [vmem:[%s6939 + $0x10] sm:$0xff] %vm74, %v6937
    %6943 = vst.msk [vmem:[%s6939 + $0x18] sm:$0xff] %vm74, %v6938
    %6948 = vrot.lane.b32.xlu0 %v6935, 96
    %v6949 = vpop.permute.xlu0 %6948
    %6950 = vrot.lane.b32.xlu0 %v6936, 96
    %v6951 = vpop.permute.xlu0 %6950
    %6952 = vrot.lane.b32.xlu0 %v6937, 96
    %v6953 = vpop.permute.xlu0 %6952
    %6954 = vrot.lane.b32.xlu0 %v6938, 96
    %v6955 = vpop.permute.xlu0 %6954
    %s6960 = scalar_lea.vmem [#allocation6], 128
    %6961 = vst.msk [vmem:[%s6960] sm:$0xff] %vm74, %v6949
    %6962 = vst.msk [vmem:[%s6960 + $0x8] sm:$0xff] %vm74, %v6951
    %6963 = vst.msk [vmem:[%s6960 + $0x10] sm:$0xff] %vm74, %v6953
    %6964 = vst.msk [vmem:[%s6960 + $0x18] sm:$0xff] %vm74, %v6955
    %6965 = vrot.lane.b32.xlu0 %v6935, 64
    %v6966 = vpop.permute.xlu0 %6965
    %6967 = vrot.lane.b32.xlu0 %v6936, 64
    %v6968 = vpop.permute.xlu0 %6967
    %6969 = vrot.lane.b32.xlu0 %v6937, 64
    %v6970 = vpop.permute.xlu0 %6969
    %6971 = vrot.lane.b32.xlu0 %v6938, 64
    %v6972 = vpop.permute.xlu0 %6971
    %s6977 = scalar_lea.vmem [#allocation6], 160
    %6978 = vst.msk [vmem:[%s6977] sm:$0xff] %vm74, %v6966
    %6979 = vst.msk [vmem:[%s6977 + $0x8] sm:$0xff] %vm74, %v6968
    %6980 = vst.msk [vmem:[%s6977 + $0x10] sm:$0xff] %vm74, %v6970
    %6981 = vst.msk [vmem:[%s6977 + $0x18] sm:$0xff] %vm74, %v6972
    // Predicated region
    $region66: #{tpu_custom_call.1} parent=1 // pred_check
      _
    $region67: #{tpu_custom_call.1} parent=1 // pred_check_branch
      %6983 = sbr.rel (0) target = $region69
    $region68: #{tpu_custom_call.1} parent=1 // pred_region
      %s6985 = ssub.s32 3072, 3072
      %6986 = vsyncadd [#allocation5], %s6985
      %s6987 = sshll.u32 [#allocation6], 4
      %s6988 = int_to_ptr.vmem [resolvable:$true] %s6987
      %6993 = dma.vmem_to_hbm [thread:$0]  %s6988, 3072, %s15, [#allocation5], 128, 128, 8
    $region69: #{tpu_custom_call.1} parent=1 // pred_fallthru
      _
    // Predicated region
    $region70: #{tpu_custom_call.1} parent=1 // pred_check
      _
    $region71: #{tpu_custom_call.1} parent=1 // pred_check_branch
      %6995 = sbr.rel (0) target = $region73
    $region72: #{tpu_custom_call.1} parent=1 // pred_region
      %6996 = dma.done [#allocation5], 3072
    $region73: #{tpu_custom_call.1} parent=1 // pred_fallthru
      _
    %6997 = vsyncpa [#allocation4], 1
    %6998 = vsyncpa [#allocation5], 1

</llo_original>
